<compile_context>
chip_gen: v6e
topology: v6e:2x2x1
jax: 0.10.0
libtpu: 0.0.40
codegen_flags: <defaults>
</compile_context>

<pallas_src>
import functools
import numpy as np
import jax
import jax.numpy as jnp
from jax.experimental import pallas as pl
from jax.experimental.pallas import tpu as pltpu


def _round_up(x, m):
    return (x + m - 1) // m * m


# ----------------------------------------------------------------------------
# fused Pallas kernel: title + body conv/attn, cate/subcate FC, final attention
# ----------------------------------------------------------------------------
def fused_news_kernel(title_ref, body_ref, cate2_ref,
                      wf_ref, wq_ref, bf_ref, bq_ref, o_ref, *,
                      bt, window, emb_dim, cate_dim, filt, query,
                      t_title, t_body, tp_title, tp_body):
    f32, bf16 = jnp.float32, jnp.bfloat16
    K, E, F, Q, Ce = window, emb_dim, filt, query, cate_dim
    KE, pad = K * E, window // 2

    # ---- static slices of the consolidated weight / bias slabs -------------
    twc = wf_ref[0:KE, :]                       # title conv  (K*E, F) bf16
    bwc = wf_ref[KE:2 * KE, :]                  # body  conv  (K*E, F) bf16
    cw = wf_ref[2 * KE:2 * KE + Ce, :]          # cate  fc    (Ce, F)  bf16
    scw = wf_ref[2 * KE + Ce:2 * KE + 2 * Ce, :]  # subcate fc (Ce, F) bf16
    tw1 = wq_ref[0:F, :]                        # title attn fc1 (F, Q) bf16
    bw1 = wq_ref[F:2 * F, :]                    # body  attn fc1
    fw1 = wq_ref[2 * F:3 * F, :]                # final attn fc1
    tbc = bf_ref[0:1, :]                        # f32 bias rows, width F
    bbc = bf_ref[1:2, :]
    cb = bf_ref[2:3, :]
    scb = bf_ref[3:4, :]
    tb1 = bq_ref[0:1, :]                        # f32 bias / fc2 rows, width Q
    tw2 = bq_ref[1:2, :]
    bb1 = bq_ref[2:3, :]
    bw2 = bq_ref[3:4, :]
    fb1 = bq_ref[4:5, :]
    fw2 = bq_ref[5:6, :]

    def text_branch(emb_ref, wc, bc, w1, b1, w2row, t_valid, t_pad):
        rows = bt * t_pad
        # in-kernel im2col: +-pad sublane rotations (XLU) + lane concat.
        # Rows t in [T, t_pad) of every item are zero in the input, so the
        # rotation never mixes adjacent news items (wraparound hits a pad row).
        x32 = emb_ref[...].astype(f32)                                # (rows, E)
        parts = []
        for k in range(K):
            s = (pad - k) % rows
            parts.append(x32 if s == 0 else pltpu.roll(x32, shift=s, axis=0))
        win = jnp.concatenate(parts, axis=-1).astype(bf16)            # (rows, K*E)
        conv = jnp.dot(win, wc, preferred_element_type=f32) + bc      # (rows, F)

        # attention fc1 on the MXU, fc2 as a lane reduce on the VPU
        h = jnp.tanh(jnp.dot(conv.astype(bf16), w1,
                             preferred_element_type=f32) + b1)        # (rows, Q)
        a = jnp.sum(h * w2row, axis=-1, keepdims=True)                # (rows, 1)
        # broadcast logits across the F lanes *before* reshaping so that every
        # in-kernel reshape keeps its minor dim unchanged (cheap retiling; same
        # vreg count as the (rows, 1) layout).
        a3 = jnp.broadcast_to(a, (rows, F)).reshape(bt, t_pad, F)
        conv3 = conv.reshape(bt, t_pad, F)
        t_idx = jax.lax.broadcasted_iota(jnp.int32, (bt, t_pad, F), 1)
        a3 = jnp.where(t_idx < t_valid, a3, -1e9)                     # mask pad rows
        a3 = a3 - jnp.max(a3, axis=1, keepdims=True)
        e3 = jnp.exp(a3)
        alpha = e3 * pl.reciprocal(jnp.sum(e3, axis=1, keepdims=True), approx=True)
        return jnp.sum(alpha * conv3, axis=1)                         # (bt, F)

    # ---- title / body TextEncoders ------------------------------------------
    r_t = text_branch(title_ref, twc, tbc, tw1, tb1, tw2, t_title, tp_title)
    r_b = text_branch(body_ref, bwc, bbc, bw1, bb1, bw2, t_body, tp_body)

    # ---- cate / subcate encoders: relu(x @ W + b) ---------------------------
    cate2 = cate2_ref[...]                                            # (bt, 2*Ce) bf16
    r_c = jnp.maximum(jnp.dot(cate2[:, :Ce], cw,
                              preferred_element_type=f32) + cb, 0.0)
    r_sc = jnp.maximum(jnp.dot(cate2[:, Ce:], scw,
                               preferred_element_type=f32) + scb, 0.0)

    # ---- final AttentionPooling over the 4 stacked representations ---------
    r_all = jnp.concatenate([r_t, r_b, r_c, r_sc], axis=0)            # (4*bt, F)
    h = jnp.tanh(jnp.dot(r_all.astype(bf16), fw1,
                         preferred_element_type=f32) + fb1)           # (4*bt, Q)
    a = jnp.sum(h * fw2, axis=-1, keepdims=True)                      # (4*bt, 1)
    a_t, a_b = a[0 * bt:1 * bt], a[1 * bt:2 * bt]
    a_c, a_s = a[2 * bt:3 * bt], a[3 * bt:4 * bt]
    m = jnp.maximum(jnp.maximum(a_t, a_b), jnp.maximum(a_c, a_s))
    e_t, e_b = jnp.exp(a_t - m), jnp.exp(a_b - m)
    e_c, e_s = jnp.exp(a_c - m), jnp.exp(a_s - m)
    # exact reciprocal here: only (bt, 1) values, essentially free
    out = (e_t * r_t + e_b * r_b + e_c * r_c + e_s * r_sc) / (e_t + e_b + e_c + e_s)

    # ---- lane-dense packed store: 4 news items per (4*F)-wide row ----------
    bt4 = bt // 4
    packed = jnp.concatenate([out[0 * bt4:1 * bt4], out[1 * bt4:2 * bt4],
                              out[2 * bt4:3 * bt4], out[3 * bt4:4 * bt4]],
                             axis=-1)                                 # (bt//4, 4*F)
    o_ref[...] = packed.astype(o_ref.dtype)


# ----------------------------------------------------------------------------
# wrapper glue: block_b / VMEM budgeting, embedding gather, slabs, BlockSpecs
# ----------------------------------------------------------------------------
def _vmem_estimate_bytes(bt, tp_t, tp_b, E, Ce, F, Q, K):
    """Rough per-grid-step VMEM working set (double-buffered I/O + dominant
    in-kernel intermediates)."""
    seq_in = 2 * bt * (tp_t + tp_b) * E * 2                    # bf16, 2 buffers
    cate_in = 2 * bt * 2 * Ce * 2
    out = 2 * (bt // 4) * 4 * F * 4
    weights = 2 * ((2 * K * E + 2 * Ce) * F + 3 * F * Q) * 2 + 2 * 8 * (F + Q) * 4
    inter = bt * (tp_t + tp_b) * (E * 4 + K * E * 6 + F * 8 + Q * 4)
    return seq_in + cate_in + out + weights + inter


def _pick_block_b(B, requested, tp_t, tp_b, E, Ce, F, Q, K, budget):
    bb = max(32, (int(requested) // 32) * 32)
    Bp0 = _round_up(B, 32)
    bb = min(bb, Bp0)
    # keep >= 2 grid steps when the batch allows it: v7x shards the "parallel"
    # grid axis across its 2 TensorCores (v5e/v6e have 1 TC, no harm there).
    if Bp0 > 32 and Bp0 // bb < 2:
        bb = max(32, (Bp0 // 2) // 32 * 32)
    # cap the tile so the per-step working set stays inside the VMEM budget
    # (chosen well under the 32 MiB default scoped limit / v7x's 64 MiB total).
    while bb > 32 and _vmem_estimate_bytes(bb, tp_t, tp_b, E, Ce, F, Q, K) > budget:
        bb -= 32
    return bb


def conv_news_encoder(news, params, *, window, block_b=128, title_len=30,
                      vmem_budget_bytes=20 * 1024 * 1024, seq_buffers=None):
    B = news.shape[0]
    title_ids = news[:, :title_len].astype(jnp.int32)
    body_ids = news[:, title_len:-2].astype(jnp.int32)
    cate_ids = news[:, -2].astype(jnp.int32)
    subcate_ids = news[:, -1].astype(jnp.int32)

    word_emb, cate_emb = params["word_emb"], params["cate_emb"]
    E, Ce = word_emb.shape[1], cate_emb.shape[1]
    K = window
    F = params["title"]["wconv"].shape[-1]
    Q = params["title"]["w1"].shape[-1]
    T_t, T_b = title_ids.shape[1], body_ids.shape[1]
    # per-item sequence padding: >= K//2 trailing zero rows so the in-kernel
    # +-roll halo never crosses into the next news item (body: 16 -> 24).
    Tp_t = _round_up(T_t + K // 2, 8)
    Tp_b = _round_up(T_b + K // 2, 8)

    block_b = _pick_block_b(B, block_b, Tp_t, Tp_b, E, Ce, F, Q, K,
                            vmem_budget_bytes)
    Bp = _round_up(B, block_b)
    if Bp != B:
        padn = Bp - B
        title_ids = jnp.pad(title_ids, ((0, padn), (0, 0)))
        body_ids = jnp.pad(body_ids, ((0, padn), (0, 0)))
        cate_ids = jnp.pad(cate_ids, ((0, padn),))
        subcate_ids = jnp.pad(subcate_ids, ((0, padn),))

    # bf16 word-emb table with an extra zero row used for the sequence padding
    V = word_emb.shape[0]
    word_emb_z = jnp.concatenate(
        [word_emb, jnp.zeros((1, E), word_emb.dtype)], axis=0).astype(jnp.bfloat16)

    def embed(ids, T, Tp):
        ids_p = jnp.full((Bp, Tp), V, dtype=jnp.int32).at[:, :T].set(ids)
        return jnp.take(word_emb_z, ids_p, axis=0).reshape(Bp * Tp, E)

    # TODO(synk): fuse this embedding gather into the kernel (scalar-prefetch
    # token ids + manual DMA gather from an HBM word_emb ref) so the embedded
    # sequences never round-trip through HBM at all.
    title_emb = embed(title_ids, T_t, Tp_t)                    # (Bp*Tp_t, E) bf16
    body_emb = embed(body_ids, T_b, Tp_b)                      # (Bp*Tp_b, E) bf16
    cate2_e = jnp.concatenate([jnp.take(cate_emb, cate_ids, axis=0),
                               jnp.take(cate_emb, subcate_ids, axis=0)],
                              axis=-1).astype(jnp.bfloat16)    # (Bp, 2*Ce) bf16

    # consolidated weight / bias slabs (fewer BlockSpecs / DMA descriptors)
    t, b_, fa = params["title"], params["body"], params["final_attn"]
    bf16 = jnp.bfloat16
    wF = jnp.concatenate([t["wconv"].reshape(K * E, F),
                          b_["wconv"].reshape(K * E, F),
                          params["cate_fc_w"], params["subcate_fc_w"]],
                         axis=0).astype(bf16)                  # (2*K*E + 2*Ce, F)
    wQ = jnp.concatenate([t["w1"], b_["w1"], fa["w1"]],
                         axis=0).astype(bf16)                  # (3*F, Q)
    bF = jnp.concatenate([t["bconv"], b_["bconv"],
                          params["cate_fc_b"], params["subcate_fc_b"],
                          jnp.zeros((4, F), jnp.float32)], axis=0)   # (8, F) f32
    bQ = jnp.concatenate([t["b1"], t["w2"].reshape(1, Q),
                          b_["b1"], b_["w2"].reshape(1, Q),
                          fa["b1"], fa["w2"].reshape(1, Q),
                          jnp.zeros((2, Q), jnp.float32)], axis=0)   # (8, Q) f32

    kern = functools.partial(fused_news_kernel, bt=block_b, window=K, emb_dim=E,
                             cate_dim=Ce, filt=F, query=Q,
                             t_title=T_t, t_body=T_b,
                             tp_title=Tp_t, tp_body=Tp_b)

    def seq_spec(shape):
        if seq_buffers is None:
            return pl.BlockSpec(shape, lambda g: (g, 0))
        return pl.BlockSpec(shape, lambda g: (g, 0),
                            pipeline_mode=pl.Buffered(seq_buffers))

    const = lambda g: (0, 0)
    grid = (Bp // block_b,)

    packed = pl.pallas_call(
        kern,
        out_shape=jax.ShapeDtypeStruct((Bp // 4, 4 * F), jnp.float32),
        grid=grid,
        in_specs=[
            seq_spec((block_b * Tp_t, E)),
            seq_spec((block_b * Tp_b, E)),
            pl.BlockSpec((block_b, 2 * Ce), lambda g: (g, 0)),
            pl.BlockSpec(wF.shape, const),
            pl.BlockSpec(wQ.shape, const),
            pl.BlockSpec(bF.shape, const),
            pl.BlockSpec(bQ.shape, const),
        ],
        out_specs=pl.BlockSpec((block_b // 4, 4 * F), lambda g: (g, 0)),
        compiler_params=pltpu.CompilerParams(
            dimension_semantics=("parallel",),
            vmem_limit_bytes=32 * 1024 * 1024),
    )(title_emb, body_emb, cate2_e, wF, wQ, bF, bQ)

    # unpack the lane-dense (4 items / row) layout back to (B, F)
    G, bt4 = Bp // block_b, block_b // 4
    out = packed.reshape(G, bt4, 4, F).transpose(0, 2, 1, 3).reshape(Bp, F)
    return out[:B]


# ----------------------------------------------------------------------------
# pure-JAX f32 reference (faithful to the PyTorch module) for correctness check
# ----------------------------------------------------------------------------
def _ref_attn(x, w1, b1, w2, b2):
    h = jnp.tanh(x @ w1 + b1)
    a = h @ w2 + b2
    alpha = jax.nn.softmax(a, axis=-2)
    return jnp.sum(alpha * x, axis=-2)


def _ref_text(x_emb, wconv, bconv, w1, b1, w2, b2, window):
    pad = window // 2
    T = x_emb.shape[1]
    xp = jnp.pad(x_emb, ((0, 0), (pad, pad), (0, 0)))
    conv = bconv[None]
    for k in range(window):
        conv = conv + xp[:, k:k + T, :] @ wconv[k]
    return _ref_attn(conv, w1, b1, w2, b2)


def conv_news_encoder_ref(news, params, *, window):
    title, body = news[:, :30], news[:, 30:-2]
    cate, subcate = news[:, -2], news[:, -1]
    we, ce = params["word_emb"], params["cate_emb"]
    t, b_ = params["title"], params["body"]
    r_t = _ref_text(jnp.take(we, title, axis=0), t["wconv"], t["bconv"],
                    t["w1"], t["b1"], t["w2"], t["b2"], window)
    r_b = _ref_text(jnp.take(we, body, axis=0), b_["wconv"], b_["bconv"],
                    b_["w1"], b_["b1"], b_["w2"], b_["b2"], window)
    r_c = jnp.maximum(jnp.take(ce, cate, axis=0) @ params["cate_fc_w"]
                      + params["cate_fc_b"], 0.0)
    r_sc = jnp.maximum(jnp.take(ce, subcate, axis=0) @ params["subcate_fc_w"]
                       + params["subcate_fc_b"], 0.0)
    r = jnp.stack((r_t, r_b, r_c, r_sc), axis=1)
    a = params["final_attn"]
    return _ref_attn(r, a["w1"], a["b1"], a["w2"], a["b2"])


# ----------------------------------------------------------------------------
# deterministic parameter construction
# ----------------------------------------------------------------------------
def make_params(key, *, vocab_w, vocab_c, word_emb_dim, cate_emb_dim,
                filter_num, window, query_dim):
    keys = jax.random.split(key, 24)
    i = iter(range(24))
    n = lambda shape: 0.1 * jax.random.normal(keys[next(i)], shape, jnp.float32)

    def text_params():
        return dict(
            wconv=n((window, word_emb_dim, filter_num)),
            bconv=n((1, filter_num)),
            w1=n((filter_num, query_dim)), b1=n((1, query_dim)),
            w2=n((query_dim, 1)), b2=n((1, 1)),
        )

    return dict(
        word_emb=n((vocab_w, word_emb_dim)),
        cate_emb=n((vocab_c, cate_emb_dim)),
        title=text_params(),
        body=text_params(),
        cate_fc_w=n((cate_emb_dim, filter_num)), cate_fc_b=n((1, filter_num)),
        subcate_fc_w=n((cate_emb_dim, filter_num)), subcate_fc_b=n((1, filter_num)),
        final_attn=dict(w1=n((filter_num, query_dim)), b1=n((1, query_dim)),
                        w2=n((query_dim, 1)), b2=n((1, 1))),
    )


# ----------------------------------------------------------------------------
if __name__ == "__main__":
    B = 70                                   # -> Bp=96, block_b auto=32, grid=(3,)
    TITLE_LEN, BODY_LEN = 30, 16             # title length fixed by module slicing
    VOCAB_W, VOCAB_C = 100, 20
    WORD_EMB_DIM, CATE_EMB_DIM = 32, 16
    FILTER_NUM, WINDOW, QUERY_DIM = 32, 3, 32

    key = jax.random.PRNGKey(0)
    k_p, k_t, k_b, k_c, k_sc = jax.random.split(key, 5)

    params = make_params(k_p, vocab_w=VOCAB_W, vocab_c=VOCAB_C,
                         word_emb_dim=WORD_EMB_DIM, cate_emb_dim=CATE_EMB_DIM,
                         filter_num=FILTER_NUM, window=WINDOW,
                         query_dim=QUERY_DIM)

    title_ids = jax.random.randint(k_t, (B, TITLE_LEN), 0, VOCAB_W)
    body_ids = jax.random.randint(k_b, (B, BODY_LEN), 0, VOCAB_W)
    cate_ids = jax.random.randint(k_c, (B, 1), 0, VOCAB_C)
    subcate_ids = jax.random.randint(k_sc, (B, 1), 0, VOCAB_C)
    news = jnp.concatenate([title_ids, body_ids, cate_ids, subcate_ids], axis=1)

    out = jax.block_until_ready(conv_news_encoder(news, params, window=WINDOW))
    ref = jax.block_until_ready(conv_news_encoder_ref(news, params, window=WINDOW))

    # bf16 MXU inputs (f32 accumulation) -> slightly looser tolerance than pure f32
    np.testing.assert_allclose(np.asarray(out), np.asarray(ref),
                               rtol=2e-2, atol=2e-2)
    assert out.shape == (B, FILTER_NUM)
    print("KERNEL_OK")
</pallas_src>

<mosaic_0001>
module attributes {stable_mosaic.version = 11 : i64} {
  func.func @fused_news_kernel(%arg0: i32, %arg1: memref<1024x32xbf16, #tpu.memory_space<vmem>>, %arg2: memref<768x32xbf16, #tpu.memory_space<vmem>>, %arg3: memref<32x32xbf16, #tpu.memory_space<vmem>>, %arg4: memref<224x32xbf16, #tpu.memory_space<vmem>>, %arg5: memref<96x32xbf16, #tpu.memory_space<vmem>>, %arg6: memref<8x32xf32, #tpu.memory_space<vmem>>, %arg7: memref<8x32xf32, #tpu.memory_space<vmem>>, %arg8: memref<8x128xf32, #tpu.memory_space<vmem>>) attributes {dimension_semantics = [#tpu.dimension_semantics<parallel>], iteration_bounds = array<i64: 3>, scalar_prefetch = 0 : i64, scratch_operands = 0 : i64, tpu.core_type = #tpu.core_type<tc>, window_params = [{transform_indices = @transform_0, window_bounds = array<i64: 1024, 32>}, {transform_indices = @transform_1, window_bounds = array<i64: 768, 32>}, {transform_indices = @transform_2, window_bounds = array<i64: 32, 32>}, {pipeline_mode = #tpu.pipeline_mode<synchronous>, transform_indices = @transform_3, window_bounds = array<i64: 224, 32>}, {pipeline_mode = #tpu.pipeline_mode<synchronous>, transform_indices = @transform_4, window_bounds = array<i64: 96, 32>}, {pipeline_mode = #tpu.pipeline_mode<synchronous>, transform_indices = @transform_5, window_bounds = array<i64: 8, 32>}, {pipeline_mode = #tpu.pipeline_mode<synchronous>, transform_indices = @transform_6, window_bounds = array<i64: 8, 32>}, {transform_indices = @transform_7, window_bounds = array<i64: 8, 128>}]} {
    %c0 = arith.constant 0 : index
    %c0_0 = arith.constant 0 : index
    %0 = vector.load %arg4[%c0, %c0_0] : memref<224x32xbf16, #tpu.memory_space<vmem>>, vector<96x32xbf16>
    %c96 = arith.constant 96 : index
    %c0_1 = arith.constant 0 : index
    %1 = vector.load %arg4[%c96, %c0_1] : memref<224x32xbf16, #tpu.memory_space<vmem>>, vector<96x32xbf16>
    %c192 = arith.constant 192 : index
    %c0_2 = arith.constant 0 : index
    %2 = vector.load %arg4[%c192, %c0_2] : memref<224x32xbf16, #tpu.memory_space<vmem>>, vector<16x32xbf16>
    %c208 = arith.constant 208 : index
    %c0_3 = arith.constant 0 : index
    %3 = vector.load %arg4[%c208, %c0_3] : memref<224x32xbf16, #tpu.memory_space<vmem>>, vector<16x32xbf16>
    %c0_4 = arith.constant 0 : index
    %c0_5 = arith.constant 0 : index
    %4 = vector.load %arg5[%c0_4, %c0_5] : memref<96x32xbf16, #tpu.memory_space<vmem>>, vector<32x32xbf16>
    %c32 = arith.constant 32 : index
    %c0_6 = arith.constant 0 : index
    %5 = vector.load %arg5[%c32, %c0_6] : memref<96x32xbf16, #tpu.memory_space<vmem>>, vector<32x32xbf16>
    %c64 = arith.constant 64 : index
    %c0_7 = arith.constant 0 : index
    %6 = vector.load %arg5[%c64, %c0_7] : memref<96x32xbf16, #tpu.memory_space<vmem>>, vector<32x32xbf16>
    %c0_8 = arith.constant 0 : index
    %c0_9 = arith.constant 0 : index
    %7 = vector.load %arg6[%c0_8, %c0_9] : memref<8x32xf32, #tpu.memory_space<vmem>>, vector<1x32xf32>
    %c1 = arith.constant 1 : index
    %c0_10 = arith.constant 0 : index
    %8 = vector.load %arg6[%c1, %c0_10] : memref<8x32xf32, #tpu.memory_space<vmem>>, vector<1x32xf32>
    %c2 = arith.constant 2 : index
    %c0_11 = arith.constant 0 : index
    %9 = vector.load %arg6[%c2, %c0_11] : memref<8x32xf32, #tpu.memory_space<vmem>>, vector<1x32xf32>
    %c3 = arith.constant 3 : index
    %c0_12 = arith.constant 0 : index
    %10 = vector.load %arg6[%c3, %c0_12] : memref<8x32xf32, #tpu.memory_space<vmem>>, vector<1x32xf32>
    %c0_13 = arith.constant 0 : index
    %c0_14 = arith.constant 0 : index
    %11 = vector.load %arg7[%c0_13, %c0_14] : memref<8x32xf32, #tpu.memory_space<vmem>>, vector<1x32xf32>
    %c1_15 = arith.constant 1 : index
    %c0_16 = arith.constant 0 : index
    %12 = vector.load %arg7[%c1_15, %c0_16] : memref<8x32xf32, #tpu.memory_space<vmem>>, vector<1x32xf32>
    %c2_17 = arith.constant 2 : index
    %c0_18 = arith.constant 0 : index
    %13 = vector.load %arg7[%c2_17, %c0_18] : memref<8x32xf32, #tpu.memory_space<vmem>>, vector<1x32xf32>
    %c3_19 = arith.constant 3 : index
    %c0_20 = arith.constant 0 : index
    %14 = vector.load %arg7[%c3_19, %c0_20] : memref<8x32xf32, #tpu.memory_space<vmem>>, vector<1x32xf32>
    %c4 = arith.constant 4 : index
    %c0_21 = arith.constant 0 : index
    %15 = vector.load %arg7[%c4, %c0_21] : memref<8x32xf32, #tpu.memory_space<vmem>>, vector<1x32xf32>
    %c5 = arith.constant 5 : index
    %c0_22 = arith.constant 0 : index
    %16 = vector.load %arg7[%c5, %c0_22] : memref<8x32xf32, #tpu.memory_space<vmem>>, vector<1x32xf32>
    %c0_23 = arith.constant 0 : index
    %c0_24 = arith.constant 0 : index
    %17 = vector.load %arg1[%c0_23, %c0_24] : memref<1024x32xbf16, #tpu.memory_space<vmem>>, vector<1024x32xbf16>
    %18 = arith.extf %17 : vector<1024x32xbf16> to vector<1024x32xf32>
    %c1_i32 = arith.constant 1 : i32
    %19 = tpu.dynamic_rotate %18 by %c1_i32 dim 0 : vector<1024x32xf32>, i32 -> vector<1024x32xf32>
    %c1023_i32 = arith.constant 1023 : i32
    %20 = tpu.dynamic_rotate %18 by %c1023_i32 dim 0 : vector<1024x32xf32>, i32 -> vector<1024x32xf32>
    %21 = tpu.concatenate %19, %18, %20 in 1 : vector<1024x32xf32>, vector<1024x32xf32>, vector<1024x32xf32> -> vector<1024x96xf32>
    %22 = arith.truncf %21 : vector<1024x96xf32> to vector<1024x96xbf16>
    %cst = arith.constant dense<0.000000e+00> : vector<1024x32xf32>
    %23 = tpu.matmul %22, %0, %cst {dimension_numbers = #tpu.dot_dimension_numbers<[1], [0], [0], [1], [0, 0, 1, 1], [], []>} : vector<1024x96xbf16>, vector<96x32xbf16>, vector<1024x32xf32> -> vector<1024x32xf32>
    %24 = vector.broadcast %7 : vector<1x32xf32> to vector<1024x32xf32>
    %25 = arith.addf %23, %24 : vector<1024x32xf32>
    %26 = arith.truncf %25 : vector<1024x32xf32> to vector<1024x32xbf16>
    %cst_25 = arith.constant dense<0.000000e+00> : vector<1024x32xf32>
    %27 = tpu.matmul %26, %4, %cst_25 {dimension_numbers = #tpu.dot_dimension_numbers<[1], [0], [0], [1], [0, 0, 1, 1], [], []>} : vector<1024x32xbf16>, vector<32x32xbf16>, vector<1024x32xf32> -> vector<1024x32xf32>
    %28 = vector.broadcast %11 : vector<1x32xf32> to vector<1024x32xf32>
    %29 = arith.addf %27, %28 : vector<1024x32xf32>
    %30 = math.tanh %29 : vector<1024x32xf32>
    %31 = vector.broadcast %12 : vector<1x32xf32> to vector<1024x32xf32>
    %32 = arith.mulf %30, %31 : vector<1024x32xf32>
    %cst_26 = arith.constant dense<0.000000e+00> : vector<1024xf32>
    %33 = vector.multi_reduction <add>, %32, %cst_26 [1] : vector<1024x32xf32> to vector<1024xf32>
    %34 = vector.shape_cast %33 : vector<1024xf32> to vector<1024x1xf32>
    %35 = vector.shape_cast %34 : vector<1024x1xf32> to vector<1024x1xf32>
    %36 = vector.broadcast %35 : vector<1024x1xf32> to vector<1024x32xf32>
    %37 = vector.shape_cast %36 : vector<1024x32xf32> to vector<32x32x32xf32>
    %38 = vector.shape_cast %25 : vector<1024x32xf32> to vector<32x32x32xf32>
    %39 = tpu.iota {dimensions = array<i32: 1>} : vector<32x32x32xi32>
    %c30_i32 = arith.constant 30 : i32
    %40 = vector.broadcast %c30_i32 : i32 to vector<32x32x32xi32>
    %41 = arith.cmpi slt, %39, %40 : vector<32x32x32xi32>
    %cst_27 = arith.constant -1.000000e+09 : f32
    %42 = vector.broadcast %cst_27 : f32 to vector<32x32x32xf32>
    %43 = arith.select %41, %37, %42 : vector<32x32x32xi1>, vector<32x32x32xf32>
    %cst_28 = arith.constant dense<0xFF800000> : vector<32x32xf32>
    %44 = vector.multi_reduction <maximumf>, %43, %cst_28 [1] : vector<32x32x32xf32> to vector<32x32xf32>
    %45 = vector.shape_cast %44 : vector<32x32xf32> to vector<32x1x32xf32>
    %46 = vector.broadcast %45 : vector<32x1x32xf32> to vector<32x32x32xf32>
    %47 = arith.subf %43, %46 : vector<32x32x32xf32>
    %48 = math.exp %47 : vector<32x32x32xf32>
    %cst_29 = arith.constant dense<0.000000e+00> : vector<32x32xf32>
    %49 = vector.multi_reduction <add>, %48, %cst_29 [1] : vector<32x32x32xf32> to vector<32x32xf32>
    %50 = vector.shape_cast %49 : vector<32x32xf32> to vector<32x1x32xf32>
    %51 = tpu.reciprocal %50 {approx = true} : vector<32x1x32xf32> -> vector<32x1x32xf32>
    %52 = vector.broadcast %51 : vector<32x1x32xf32> to vector<32x32x32xf32>
    %53 = arith.mulf %48, %52 : vector<32x32x32xf32>
    %54 = arith.mulf %53, %38 : vector<32x32x32xf32>
    %cst_30 = arith.constant dense<0.000000e+00> : vector<32x32xf32>
    %55 = vector.multi_reduction <add>, %54, %cst_30 [1] : vector<32x32x32xf32> to vector<32x32xf32>
    %c0_31 = arith.constant 0 : index
    %c0_32 = arith.constant 0 : index
    %56 = vector.load %arg2[%c0_31, %c0_32] : memref<768x32xbf16, #tpu.memory_space<vmem>>, vector<768x32xbf16>
    %57 = arith.extf %56 : vector<768x32xbf16> to vector<768x32xf32>
    %c1_i32_33 = arith.constant 1 : i32
    %58 = tpu.dynamic_rotate %57 by %c1_i32_33 dim 0 : vector<768x32xf32>, i32 -> vector<768x32xf32>
    %c767_i32 = arith.constant 767 : i32
    %59 = tpu.dynamic_rotate %57 by %c767_i32 dim 0 : vector<768x32xf32>, i32 -> vector<768x32xf32>
    %60 = tpu.concatenate %58, %57, %59 in 1 : vector<768x32xf32>, vector<768x32xf32>, vector<768x32xf32> -> vector<768x96xf32>
    %61 = arith.truncf %60 : vector<768x96xf32> to vector<768x96xbf16>
    %cst_34 = arith.constant dense<0.000000e+00> : vector<768x32xf32>
    %62 = tpu.matmul %61, %1, %cst_34 {dimension_numbers = #tpu.dot_dimension_numbers<[1], [0], [0], [1], [0, 0, 1, 1], [], []>} : vector<768x96xbf16>, vector<96x32xbf16>, vector<768x32xf32> -> vector<768x32xf32>
    %63 = vector.broadcast %8 : vector<1x32xf32> to vector<768x32xf32>
    %64 = arith.addf %62, %63 : vector<768x32xf32>
    %65 = arith.truncf %64 : vector<768x32xf32> to vector<768x32xbf16>
    %cst_35 = arith.constant dense<0.000000e+00> : vector<768x32xf32>
    %66 = tpu.matmul %65, %5, %cst_35 {dimension_numbers = #tpu.dot_dimension_numbers<[1], [0], [0], [1], [0, 0, 1, 1], [], []>} : vector<768x32xbf16>, vector<32x32xbf16>, vector<768x32xf32> -> vector<768x32xf32>
    %67 = vector.broadcast %13 : vector<1x32xf32> to vector<768x32xf32>
    %68 = arith.addf %66, %67 : vector<768x32xf32>
    %69 = math.tanh %68 : vector<768x32xf32>
    %70 = vector.broadcast %14 : vector<1x32xf32> to vector<768x32xf32>
    %71 = arith.mulf %69, %70 : vector<768x32xf32>
    %cst_36 = arith.constant dense<0.000000e+00> : vector<768xf32>
    %72 = vector.multi_reduction <add>, %71, %cst_36 [1] : vector<768x32xf32> to vector<768xf32>
    %73 = vector.shape_cast %72 : vector<768xf32> to vector<768x1xf32>
    %74 = vector.shape_cast %73 : vector<768x1xf32> to vector<768x1xf32>
    %75 = vector.broadcast %74 : vector<768x1xf32> to vector<768x32xf32>
    %76 = vector.shape_cast %75 : vector<768x32xf32> to vector<32x24x32xf32>
    %77 = vector.shape_cast %64 : vector<768x32xf32> to vector<32x24x32xf32>
    %78 = tpu.iota {dimensions = array<i32: 1>} : vector<32x24x32xi32>
    %c16_i32 = arith.constant 16 : i32
    %79 = vector.broadcast %c16_i32 : i32 to vector<32x24x32xi32>
    %80 = arith.cmpi slt, %78, %79 : vector<32x24x32xi32>
    %cst_37 = arith.constant -1.000000e+09 : f32
    %81 = vector.broadcast %cst_37 : f32 to vector<32x24x32xf32>
    %82 = arith.select %80, %76, %81 : vector<32x24x32xi1>, vector<32x24x32xf32>
    %cst_38 = arith.constant dense<0xFF800000> : vector<32x32xf32>
    %83 = vector.multi_reduction <maximumf>, %82, %cst_38 [1] : vector<32x24x32xf32> to vector<32x32xf32>
    %84 = vector.shape_cast %83 : vector<32x32xf32> to vector<32x1x32xf32>
    %85 = vector.broadcast %84 : vector<32x1x32xf32> to vector<32x24x32xf32>
    %86 = arith.subf %82, %85 : vector<32x24x32xf32>
    %87 = math.exp %86 : vector<32x24x32xf32>
    %cst_39 = arith.constant dense<0.000000e+00> : vector<32x32xf32>
    %88 = vector.multi_reduction <add>, %87, %cst_39 [1] : vector<32x24x32xf32> to vector<32x32xf32>
    %89 = vector.shape_cast %88 : vector<32x32xf32> to vector<32x1x32xf32>
    %90 = tpu.reciprocal %89 {approx = true} : vector<32x1x32xf32> -> vector<32x1x32xf32>
    %91 = vector.broadcast %90 : vector<32x1x32xf32> to vector<32x24x32xf32>
    %92 = arith.mulf %87, %91 : vector<32x24x32xf32>
    %93 = arith.mulf %92, %77 : vector<32x24x32xf32>
    %cst_40 = arith.constant dense<0.000000e+00> : vector<32x32xf32>
    %94 = vector.multi_reduction <add>, %93, %cst_40 [1] : vector<32x24x32xf32> to vector<32x32xf32>
    %c0_41 = arith.constant 0 : index
    %c0_42 = arith.constant 0 : index
    %95 = vector.load %arg3[%c0_41, %c0_42] : memref<32x32xbf16, #tpu.memory_space<vmem>>, vector<32x32xbf16>
    %96 = vector.extract_strided_slice %95 {offsets = [0, 0], sizes = [32, 16], strides = [1, 1]} : vector<32x32xbf16> to vector<32x16xbf16>
    %cst_43 = arith.constant dense<0.000000e+00> : vector<32x32xf32>
    %97 = tpu.matmul %96, %2, %cst_43 {dimension_numbers = #tpu.dot_dimension_numbers<[1], [0], [0], [1], [0, 0, 1, 1], [], []>} : vector<32x16xbf16>, vector<16x32xbf16>, vector<32x32xf32> -> vector<32x32xf32>
    %98 = vector.broadcast %9 : vector<1x32xf32> to vector<32x32xf32>
    %99 = arith.addf %97, %98 : vector<32x32xf32>
    %cst_44 = arith.constant 0.000000e+00 : f32
    %100 = vector.broadcast %cst_44 : f32 to vector<32x32xf32>
    %101 = arith.maximumf %99, %100 : vector<32x32xf32>
    %102 = vector.extract_strided_slice %95 {offsets = [0, 16], sizes = [32, 16], strides = [1, 1]} : vector<32x32xbf16> to vector<32x16xbf16>
    %cst_45 = arith.constant dense<0.000000e+00> : vector<32x32xf32>
    %103 = tpu.matmul %102, %3, %cst_45 {dimension_numbers = #tpu.dot_dimension_numbers<[1], [0], [0], [1], [0, 0, 1, 1], [], []>} : vector<32x16xbf16>, vector<16x32xbf16>, vector<32x32xf32> -> vector<32x32xf32>
    %104 = vector.broadcast %10 : vector<1x32xf32> to vector<32x32xf32>
    %105 = arith.addf %103, %104 : vector<32x32xf32>
    %cst_46 = arith.constant 0.000000e+00 : f32
    %106 = vector.broadcast %cst_46 : f32 to vector<32x32xf32>
    %107 = arith.maximumf %105, %106 : vector<32x32xf32>
    %108 = tpu.concatenate %55, %94, %101, %107 in 0 : vector<32x32xf32>, vector<32x32xf32>, vector<32x32xf32>, vector<32x32xf32> -> vector<128x32xf32>
    %109 = arith.truncf %108 : vector<128x32xf32> to vector<128x32xbf16>
    %cst_47 = arith.constant dense<0.000000e+00> : vector<128x32xf32>
    %110 = tpu.matmul %109, %6, %cst_47 {dimension_numbers = #tpu.dot_dimension_numbers<[1], [0], [0], [1], [0, 0, 1, 1], [], []>} : vector<128x32xbf16>, vector<32x32xbf16>, vector<128x32xf32> -> vector<128x32xf32>
    %111 = vector.broadcast %15 : vector<1x32xf32> to vector<128x32xf32>
    %112 = arith.addf %110, %111 : vector<128x32xf32>
    %113 = math.tanh %112 : vector<128x32xf32>
    %114 = vector.broadcast %16 : vector<1x32xf32> to vector<128x32xf32>
    %115 = arith.mulf %113, %114 : vector<128x32xf32>
    %cst_48 = arith.constant dense<0.000000e+00> : vector<128xf32>
    %116 = vector.multi_reduction <add>, %115, %cst_48 [1] : vector<128x32xf32> to vector<128xf32>
    %117 = vector.shape_cast %116 : vector<128xf32> to vector<128x1xf32>
    %118 = vector.extract_strided_slice %117 {offsets = [0, 0], sizes = [32, 1], strides = [1, 1]} : vector<128x1xf32> to vector<32x1xf32>
    %119 = vector.extract_strided_slice %117 {offsets = [32, 0], sizes = [32, 1], strides = [1, 1]} : vector<128x1xf32> to vector<32x1xf32>
    %120 = vector.extract_strided_slice %117 {offsets = [64, 0], sizes = [32, 1], strides = [1, 1]} : vector<128x1xf32> to vector<32x1xf32>
    %121 = vector.extract_strided_slice %117 {offsets = [96, 0], sizes = [32, 1], strides = [1, 1]} : vector<128x1xf32> to vector<32x1xf32>
    %122 = arith.maximumf %118, %119 : vector<32x1xf32>
    %123 = arith.maximumf %120, %121 : vector<32x1xf32>
    %124 = arith.maximumf %122, %123 : vector<32x1xf32>
    %125 = arith.subf %118, %124 : vector<32x1xf32>
    %126 = math.exp %125 : vector<32x1xf32>
    %127 = arith.subf %119, %124 : vector<32x1xf32>
    %128 = math.exp %127 : vector<32x1xf32>
    %129 = arith.subf %120, %124 : vector<32x1xf32>
    %130 = math.exp %129 : vector<32x1xf32>
    %131 = arith.subf %121, %124 : vector<32x1xf32>
    %132 = math.exp %131 : vector<32x1xf32>
    %133 = vector.broadcast %126 : vector<32x1xf32> to vector<32x32xf32>
    %134 = arith.mulf %133, %55 : vector<32x32xf32>
    %135 = vector.broadcast %128 : vector<32x1xf32> to vector<32x32xf32>
    %136 = arith.mulf %135, %94 : vector<32x32xf32>
    %137 = arith.addf %134, %136 : vector<32x32xf32>
    %138 = vector.broadcast %130 : vector<32x1xf32> to vector<32x32xf32>
    %139 = arith.mulf %138, %101 : vector<32x32xf32>
    %140 = arith.addf %137, %139 : vector<32x32xf32>
    %141 = vector.broadcast %132 : vector<32x1xf32> to vector<32x32xf32>
    %142 = arith.mulf %141, %107 : vector<32x32xf32>
    %143 = arith.addf %140, %142 : vector<32x32xf32>
    %144 = arith.addf %126, %128 : vector<32x1xf32>
    %145 = arith.addf %144, %130 : vector<32x1xf32>
    %146 = arith.addf %145, %132 : vector<32x1xf32>
    %147 = vector.broadcast %146 : vector<32x1xf32> to vector<32x32xf32>
    %148 = arith.divf %143, %147 : vector<32x32xf32>
    %149 = vector.extract_strided_slice %148 {offsets = [0, 0], sizes = [8, 32], strides = [1, 1]} : vector<32x32xf32> to vector<8x32xf32>
    %150 = vector.extract_strided_slice %148 {offsets = [8, 0], sizes = [8, 32], strides = [1, 1]} : vector<32x32xf32> to vector<8x32xf32>
    %151 = vector.extract_strided_slice %148 {offsets = [16, 0], sizes = [8, 32], strides = [1, 1]} : vector<32x32xf32> to vector<8x32xf32>
    %152 = vector.extract_strided_slice %148 {offsets = [24, 0], sizes = [8, 32], strides = [1, 1]} : vector<32x32xf32> to vector<8x32xf32>
    %153 = tpu.concatenate %149, %150, %151, %152 in 1 : vector<8x32xf32>, vector<8x32xf32>, vector<8x32xf32>, vector<8x32xf32> -> vector<8x128xf32>
    %c0_49 = arith.constant 0 : index
    %c0_50 = arith.constant 0 : index
    %154 = vector.load %arg8[%c0_49, %c0_50] : memref<8x128xf32, #tpu.memory_space<vmem>>, vector<8x128xf32>
    tpu.vector_store %arg8[%c0_49, %c0_50], %153 {strides = array<i32>} : memref<8x128xf32, #tpu.memory_space<vmem>>, vector<8x128xf32>,
    return
  }
  func.func @transform_0(%arg0: i32) -> (i32, i32) {
    %c0_i32 = arith.constant 0 : i32
    %c0_i32_0 = arith.constant 0 : i32
    return %arg0, %c0_i32 : i32, i32
  }
  func.func @transform_1(%arg0: i32) -> (i32, i32) {
    %c0_i32 = arith.constant 0 : i32
    %c0_i32_0 = arith.constant 0 : i32
    return %arg0, %c0_i32 : i32, i32
  }
  func.func @transform_2(%arg0: i32) -> (i32, i32) {
    %c0_i32 = arith.constant 0 : i32
    %c0_i32_0 = arith.constant 0 : i32
    return %arg0, %c0_i32 : i32, i32
  }
  func.func @transform_3(%arg0: i32) -> (i32, i32) {
    %c0_i32 = arith.constant 0 : i32
    %c0_i32_0 = arith.constant 0 : i32
    %c0_i32_1 = arith.constant 0 : i32
    return %c0_i32, %c0_i32_0 : i32, i32
  }
  func.func @transform_4(%arg0: i32) -> (i32, i32) {
    %c0_i32 = arith.constant 0 : i32
    %c0_i32_0 = arith.constant 0 : i32
    %c0_i32_1 = arith.constant 0 : i32
    return %c0_i32, %c0_i32_0 : i32, i32
  }
  func.func @transform_5(%arg0: i32) -> (i32, i32) {
    %c0_i32 = arith.constant 0 : i32
    %c0_i32_0 = arith.constant 0 : i32
    %c0_i32_1 = arith.constant 0 : i32
    return %c0_i32, %c0_i32_0 : i32, i32
  }
  func.func @transform_6(%arg0: i32) -> (i32, i32) {
    %c0_i32 = arith.constant 0 : i32
    %c0_i32_0 = arith.constant 0 : i32
    %c0_i32_1 = arith.constant 0 : i32
    return %c0_i32, %c0_i32_0 : i32, i32
  }
  func.func @transform_7(%arg0: i32) -> (i32, i32) {
    %c0_i32 = arith.constant 0 : i32
    %c0_i32_0 = arith.constant 0 : i32
    return %arg0, %c0_i32 : i32, i32
  }
}

</mosaic_0001>

<llo_original>
// kernel: tpu_custom_call.1
$region0: #{tpu_custom_call.1}
  #allocation0 [shape = 'u32[]', space=smem, size = 0x4, offset = 0x4, fixed_abs, tag = 'smem constant byte address 0x4 - core index']
  #allocation1 [shape = 'u32[144,128]{1,0:T(1,128)}', space=vmem, size = 0x12000, scoped, tag = 'internal scratch']
  %s0 = inlined_call_operand.vmem [shape: bf16[3072,32], index: 0, kind: input, shape index: {}]
  %s1 = inlined_call_operand.vmem [shape: bf16[2304,32], index: 1, kind: input, shape index: {}]
  %s2 = inlined_call_operand.vmem [shape: bf16[96,32], index: 2, kind: input, shape index: {}]
  %s3 = inlined_call_operand.vmem [shape: bf16[224,32], index: 3, kind: input, shape index: {}]
  %s4 = inlined_call_operand.vmem [shape: bf16[96,32], index: 4, kind: input, shape index: {}]
  %s5 = inlined_call_operand.vmem [shape: f32[8,32], index: 5, kind: input, shape index: {}]
  %s6 = inlined_call_operand.vmem [shape: f32[8,32], index: 6, kind: input, shape index: {}]
  %s7 = inlined_call_operand.hbm [shape: f32[24,128], index: 7, kind: output, shape index: {}]
  %s8 = sld [smem:[#allocation0]]
  $region61: #{tpu_custom_call.1} parent=0
    _
  %s10 = ssub.s32 1, %s8
  %s11 = scalar_select 0, %s10, %s8
  $region1: #{tpu_custom_call.1} parent=0
    #allocation2 [shape = 'u8[8192]{0}', space=vmem, size = 0x2000, scoped, tag = 'output window, operand 0']
    #allocation3 [shape = 's32[2]{0}', space=sflag, size = 0x8, scoped, tag = 'scoped memory for tpu_custom_call.1']
    %12 = vsyncpa [#allocation3], 0
    %s13 = scalar_lea.sflag [#allocation3], 1
    %14 = vsyncpa %s13, 0
    loop: start=0, step=1, limit=5
    $region2: #{tpu_custom_call.1} parent=1 // loop_pre_header
      _
    $region3: #{tpu_custom_call.1} parent=1 // loop_header
      %s16 = sphi 0, %s20
      %p17 = scmp.ge.s32.totalorder %s16, 5
      %s26 = sphi 0, %s28
      %s29 = sphi 0, %s26
      %s30 = sphi 0, %s29
      %s46 = sphi 0, %s30
      %s52 = sphi 0, %s54
      %s55 = sphi 0, %s52
      %s56 = sphi 0, %s55
      %s72 = sphi 0, %s56
      %s78 = sphi 0, %s80
      %s81 = sphi 0, %s78
      %s82 = sphi 0, %s81
      %s98 = sphi 0, %s82
      %s102 = sphi 0, %s102
      %s104 = sphi 0, %s102
      %s105 = sphi 0, %s104
      %s119 = sphi 0, %s105
      %s123 = sphi 0, %s123
      %s125 = sphi 0, %s123
      %s126 = sphi 0, %s125
      %s140 = sphi 0, %s126
      %s144 = sphi 0, %s144
      %s146 = sphi 0, %s144
      %s147 = sphi 0, %s146
      %s161 = sphi 0, %s147
      %s165 = sphi 0, %s165
      %s167 = sphi 0, %s165
      %s168 = sphi 0, %s167
      %s182 = sphi 0, %s168
      %s188 = sphi 0, %s190
      %s191 = sphi 0, %s188
      %s192 = sphi 0, %s191
      %s208 = sphi 0, %s192
    $region4: #{tpu_custom_call.1} parent=1 // loop_header_branch
      %19 = sbr.rel (%p17) target = $region8
    $region5: #{tpu_custom_call.1} parent=1 // loop_body
      %s21 = ssub.s32 %s16, 1
      %s22 = ssub.s32 %s16, 2
      %s23 = sadd.s32 %s16, 1
      %s24 = ssub.s32 %s16, %s23
      %p25 = scmp.eq.s32.totalorder %s24, 0
      %s27 = sadd.s32 %s26, 1
      %s28 = scalar_select %p25, %s26, %s27
      %p31 = pneg %p25
      %p32 = scmp.eq.s32.totalorder %s16, 2
      %p33 = por %p31, %p32
      %p34 = scmp.ne.s32.totalorder %s26, %s29
      %p35 = scmp.eq.s32.totalorder %s16, 0
      %p36 = por %p34, %p35
      %p37 = scmp.ne.s32.totalorder %s26, %s29
      %p38 = scmp.eq.s32.totalorder %s21, 2
      %p39 = por %p37, %p38
      %p40 = scmp.ne.s32.totalorder %s29, %s30
      %p41 = scmp.eq.s32.totalorder %s21, 0
      %p42 = por %p40, %p41
      %p43 = scmp.ne.s32.totalorder %s29, %s30
      %p44 = scmp.eq.s32.totalorder %s22, 2
      %p45 = por %p43, %p44
      %p47 = scmp.ne.s32.totalorder %s30, %s46
      %p48 = scmp.eq.s32.totalorder %s22, 0
      %p49 = por %p47, %p48
      %s50 = ssub.s32 %s16, %s23
      %p51 = scmp.eq.s32.totalorder %s50, 0
      %s53 = sadd.s32 %s52, 1
      %s54 = scalar_select %p51, %s52, %s53
      %p57 = pneg %p51
      %p58 = scmp.eq.s32.totalorder %s16, 2
      %p59 = por %p57, %p58
      %p60 = scmp.ne.s32.totalorder %s52, %s55
      %p61 = scmp.eq.s32.totalorder %s16, 0
      %p62 = por %p60, %p61
      %p63 = scmp.ne.s32.totalorder %s52, %s55
      %p64 = scmp.eq.s32.totalorder %s21, 2
      %p65 = por %p63, %p64
      %p66 = scmp.ne.s32.totalorder %s55, %s56
      %p67 = scmp.eq.s32.totalorder %s21, 0
      %p68 = por %p66, %p67
      %p69 = scmp.ne.s32.totalorder %s55, %s56
      %p70 = scmp.eq.s32.totalorder %s22, 2
      %p71 = por %p69, %p70
      %p73 = scmp.ne.s32.totalorder %s56, %s72
      %p74 = scmp.eq.s32.totalorder %s22, 0
      %p75 = por %p73, %p74
      %s76 = ssub.s32 %s16, %s23
      %p77 = scmp.eq.s32.totalorder %s76, 0
      %s79 = sadd.s32 %s78, 1
      %s80 = scalar_select %p77, %s78, %s79
      %p83 = pneg %p77
      %p84 = scmp.eq.s32.totalorder %s16, 2
      %p85 = por %p83, %p84
      %p86 = scmp.ne.s32.totalorder %s78, %s81
      %p87 = scmp.eq.s32.totalorder %s16, 0
      %p88 = por %p86, %p87
      %p89 = scmp.ne.s32.totalorder %s78, %s81
      %p90 = scmp.eq.s32.totalorder %s21, 2
      %p91 = por %p89, %p90
      %p92 = scmp.ne.s32.totalorder %s81, %s82
      %p93 = scmp.eq.s32.totalorder %s21, 0
      %p94 = por %p92, %p93
      %p95 = scmp.ne.s32.totalorder %s81, %s82
      %p96 = scmp.eq.s32.totalorder %s22, 2
      %p97 = por %p95, %p96
      %p99 = scmp.ne.s32.totalorder %s82, %s98
      %p100 = scmp.eq.s32.totalorder %s22, 0
      %p101 = por %p99, %p100
      %s103 = sadd.s32 %s102, 1
      %p106 = scmp.eq.s32.totalorder %s16, 2
      %p107 = scmp.ne.s32.totalorder %s102, %s104
      %p108 = scmp.eq.s32.totalorder %s16, 0
      %p109 = por %p107, %p108
      %p110 = scmp.ne.s32.totalorder %s102, %s104
      %p111 = scmp.eq.s32.totalorder %s21, 2
      %p112 = por %p110, %p111
      %p113 = scmp.ne.s32.totalorder %s104, %s105
      %p114 = scmp.eq.s32.totalorder %s21, 0
      %p115 = por %p113, %p114
      %p116 = scmp.ne.s32.totalorder %s104, %s105
      %p117 = scmp.eq.s32.totalorder %s22, 2
      %p118 = por %p116, %p117
      %p120 = scmp.ne.s32.totalorder %s105, %s119
      %p121 = scmp.eq.s32.totalorder %s22, 0
      %p122 = por %p120, %p121
      %s124 = sadd.s32 %s123, 1
      %p127 = scmp.eq.s32.totalorder %s16, 2
      %p128 = scmp.ne.s32.totalorder %s123, %s125
      %p129 = scmp.eq.s32.totalorder %s16, 0
      %p130 = por %p128, %p129
      %p131 = scmp.ne.s32.totalorder %s123, %s125
      %p132 = scmp.eq.s32.totalorder %s21, 2
      %p133 = por %p131, %p132
      %p134 = scmp.ne.s32.totalorder %s125, %s126
      %p135 = scmp.eq.s32.totalorder %s21, 0
      %p136 = por %p134, %p135
      %p137 = scmp.ne.s32.totalorder %s125, %s126
      %p138 = scmp.eq.s32.totalorder %s22, 2
      %p139 = por %p137, %p138
      %p141 = scmp.ne.s32.totalorder %s126, %s140
      %p142 = scmp.eq.s32.totalorder %s22, 0
      %p143 = por %p141, %p142
      %s145 = sadd.s32 %s144, 1
      %p148 = scmp.eq.s32.totalorder %s16, 2
      %p149 = scmp.ne.s32.totalorder %s144, %s146
      %p150 = scmp.eq.s32.totalorder %s16, 0
      %p151 = por %p149, %p150
      %p152 = scmp.ne.s32.totalorder %s144, %s146
      %p153 = scmp.eq.s32.totalorder %s21, 2
      %p154 = por %p152, %p153
      %p155 = scmp.ne.s32.totalorder %s146, %s147
      %p156 = scmp.eq.s32.totalorder %s21, 0
      %p157 = por %p155, %p156
      %p158 = scmp.ne.s32.totalorder %s146, %s147
      %p159 = scmp.eq.s32.totalorder %s22, 2
      %p160 = por %p158, %p159
      %p162 = scmp.ne.s32.totalorder %s147, %s161
      %p163 = scmp.eq.s32.totalorder %s22, 0
      %p164 = por %p162, %p163
      %s166 = sadd.s32 %s165, 1
      %p169 = scmp.eq.s32.totalorder %s16, 2
      %p170 = scmp.ne.s32.totalorder %s165, %s167
      %p171 = scmp.eq.s32.totalorder %s16, 0
      %p172 = por %p170, %p171
      %p173 = scmp.ne.s32.totalorder %s165, %s167
      %p174 = scmp.eq.s32.totalorder %s21, 2
      %p175 = por %p173, %p174
      %p176 = scmp.ne.s32.totalorder %s167, %s168
      %p177 = scmp.eq.s32.totalorder %s21, 0
      %p178 = por %p176, %p177
      %p179 = scmp.ne.s32.totalorder %s167, %s168
      %p180 = scmp.eq.s32.totalorder %s22, 2
      %p181 = por %p179, %p180
      %p183 = scmp.ne.s32.totalorder %s168, %s182
      %p184 = scmp.eq.s32.totalorder %s22, 0
      %p185 = por %p183, %p184
      %s186 = ssub.s32 %s16, %s23
      %p187 = scmp.eq.s32.totalorder %s186, 0
      %s189 = sadd.s32 %s188, 1
      %s190 = scalar_select %p187, %s188, %s189
      %p193 = pneg %p187
      %p194 = scmp.eq.s32.totalorder %s16, 2
      %p195 = por %p193, %p194
      %p196 = scmp.ne.s32.totalorder %s188, %s191
      %p197 = scmp.eq.s32.totalorder %s16, 0
      %p198 = por %p196, %p197
      %p199 = scmp.ne.s32.totalorder %s188, %s191
      %p200 = scmp.eq.s32.totalorder %s21, 2
      %p201 = por %p199, %p200
      %p202 = scmp.ne.s32.totalorder %s191, %s192
      %p203 = scmp.eq.s32.totalorder %s21, 0
      %p204 = por %p202, %p203
      %p205 = scmp.ne.s32.totalorder %s191, %s192
      %p206 = scmp.eq.s32.totalorder %s22, 2
      %p207 = por %p205, %p206
      %p209 = scmp.ne.s32.totalorder %s192, %s208
      %p210 = scmp.eq.s32.totalorder %s22, 0
      %p211 = por %p209, %p210
      %p212 = scmp.le.s32.totalorder 1, %s16
      %p213 = scmp.lt.s32.totalorder %s16, 4
      %p214 = pnand %p212, %p213
      %p215 = pneg %p214
      // Predicated region
      $region9: #{tpu_custom_call.1} parent=5 // pred_check
        _
      $region10: #{tpu_custom_call.1} parent=5 // pred_check_branch
        %217 = sbr.rel (%p214) target = $region12
      $region11: #{tpu_custom_call.1} parent=5 // pred_region
        %s218 = ssub.s32 %s16, 1
        // Predicated region
        $region13: #{tpu_custom_call.1} parent=11 // pred_check
          %p219 = pneg %p115
        $region14: #{tpu_custom_call.1} parent=11 // pred_check_branch
          %221 = sbr.rel (%p219) target = $region16
        $region15: #{tpu_custom_call.1} parent=11 // pred_region
          _
        $region16: #{tpu_custom_call.1} parent=11 // pred_fallthru
          _
        // Predicated region
        $region17: #{tpu_custom_call.1} parent=11 // pred_check
          %p222 = pneg %p136
        $region18: #{tpu_custom_call.1} parent=11 // pred_check_branch
          %224 = sbr.rel (%p222) target = $region20
        $region19: #{tpu_custom_call.1} parent=11 // pred_region
          _
        $region20: #{tpu_custom_call.1} parent=11 // pred_fallthru
          _
        // Predicated region
        $region21: #{tpu_custom_call.1} parent=11 // pred_check
          %p225 = pneg %p157
        $region22: #{tpu_custom_call.1} parent=11 // pred_check_branch
          %227 = sbr.rel (%p225) target = $region24
        $region23: #{tpu_custom_call.1} parent=11 // pred_region
          _
        $region24: #{tpu_custom_call.1} parent=11 // pred_fallthru
          _
        // Predicated region
        $region25: #{tpu_custom_call.1} parent=11 // pred_check
          %p228 = pneg %p178
        $region26: #{tpu_custom_call.1} parent=11 // pred_check_branch
          %230 = sbr.rel (%p228) target = $region28
        $region27: #{tpu_custom_call.1} parent=11 // pred_region
          _
        $region28: #{tpu_custom_call.1} parent=11 // pred_fallthru
          _
      $region12: #{tpu_custom_call.1} parent=5 // pred_fallthru
        _
      %p231 = scmp.lt.s32.totalorder %s16, 3
      // Predicated region
      $region29: #{tpu_custom_call.1} parent=5 // pred_check
        %p232 = pneg %p231
      $region30: #{tpu_custom_call.1} parent=5 // pred_check_branch
        %234 = sbr.rel (%p232) target = $region32
      $region31: #{tpu_custom_call.1} parent=5 // pred_region
        // Predicated region
        $region33: #{tpu_custom_call.1} parent=31 // pred_check
          %p235 = pneg %p36
        $region34: #{tpu_custom_call.1} parent=31 // pred_check_branch
          %237 = sbr.rel (%p235) target = $region36
        $region35: #{tpu_custom_call.1} parent=31 // pred_region
          %s238 = smul.u32 128, %s16
          %p239 = scmp.lt.s32.totalorder %s238, 383
          %s240 = scalar_select %p239, %s238, 383
          %s241 = smul.addr %s240, 4
          %s242 = scalar_lea.vmem %s0, %s241
          %s243 = smul.u32 128, %s16
        $region36: #{tpu_custom_call.1} parent=31 // pred_fallthru
          _
        // Predicated region
        $region37: #{tpu_custom_call.1} parent=31 // pred_check
          %p244 = pneg %p62
        $region38: #{tpu_custom_call.1} parent=31 // pred_check_branch
          %246 = sbr.rel (%p244) target = $region40
        $region39: #{tpu_custom_call.1} parent=31 // pred_region
          %s247 = smul.u32 96, %s16
          %p248 = scmp.lt.s32.totalorder %s247, 287
          %s249 = scalar_select %p248, %s247, 287
          %s250 = smul.addr %s249, 4
          %s251 = scalar_lea.vmem %s1, %s250
          %s252 = smul.u32 96, %s16
        $region40: #{tpu_custom_call.1} parent=31 // pred_fallthru
          _
        // Predicated region
        $region41: #{tpu_custom_call.1} parent=31 // pred_check
          %p253 = pneg %p88
        $region42: #{tpu_custom_call.1} parent=31 // pred_check_branch
          %255 = sbr.rel (%p253) target = $region44
        $region43: #{tpu_custom_call.1} parent=31 // pred_region
          %s256 = smul.u32 4, %s16
          %p257 = scmp.lt.s32.totalorder %s256, 11
          %s258 = scalar_select %p257, %s256, 11
          %s259 = smul.addr %s258, 4
          %s260 = scalar_lea.vmem %s2, %s259
          %s261 = smul.u32 4, %s16
        $region44: #{tpu_custom_call.1} parent=31 // pred_fallthru
          _
      $region32: #{tpu_custom_call.1} parent=5 // pred_fallthru
        _
      %p262 = scmp.le.s32.totalorder 1, %s16
      %p263 = scmp.lt.s32.totalorder %s16, 4
      %p264 = pnand %p262, %p263
      %p265 = pneg %p264
      // Predicated region
      $region45: #{tpu_custom_call.1} parent=5 // pred_check
        _
      $region46: #{tpu_custom_call.1} parent=5 // pred_check_branch
        %267 = sbr.rel (%p264) target = $region48
      $region47: #{tpu_custom_call.1} parent=5 // pred_region
        %s268 = ssub.s32 %s16, 1
        %s269 = smul.u32 128, %s21
        %p270 = scmp.lt.s32.totalorder %s269, 383
        %s271 = scalar_select %p270, %s269, 383
        %s272 = smul.addr %s271, 4
        %s273 = scalar_lea.vmem %s0, %s272
        %p274 = pneg %p42
        %p275 = pneg %p39
        %s276 = smul.u32 96, %s21
        %p277 = scmp.lt.s32.totalorder %s276, 287
        %s278 = scalar_select %p277, %s276, 287
        %s279 = smul.addr %s278, 4
        %s280 = scalar_lea.vmem %s1, %s279
        %p281 = pneg %p68
        %p282 = pneg %p65
        %s283 = smul.u32 4, %s21
        %p284 = scmp.lt.s32.totalorder %s283, 11
        %s285 = scalar_select %p284, %s283, 11
        %s286 = smul.addr %s285, 4
        %s287 = scalar_lea.vmem %s2, %s286
        %p288 = pneg %p94
        %p289 = pneg %p91
        %p290 = pneg %p115
        %p291 = pneg %p112
        %p292 = pneg %p136
        %p293 = pneg %p133
        %p294 = pneg %p157
        %p295 = pneg %p154
        %p296 = pneg %p178
        %p297 = pneg %p175
        %p298 = pneg %p204
        %p299 = pneg %p201
        %s300 = sand.u32 %s191, 1
        %s301 = scalar_lea.sflag [#allocation3], %s300
        %s302 = sand.u32 %s191, 1
        %s303 = smul.addr %s302, 8
        %s304 = scalar_lea.vmem [#allocation2], %s303
        %s305 = smul.u32 128, %s21
        %p306 = scmp.lt.s32.totalorder %s305, 383
        %s307 = scalar_select %p306, %s305, 383
        %s308 = smul.addr %s307, 4
        %s309 = scalar_lea.vmem %s0, %s308
        %s310 = smul.u32 128, %s21
        %s311 = smul.u32 96, %s21
        %p312 = scmp.lt.s32.totalorder %s311, 287
        %s313 = scalar_select %p312, %s311, 287
        %s314 = smul.addr %s313, 4
        %s315 = scalar_lea.vmem %s1, %s314
        %s316 = smul.u32 96, %s21
        %s317 = smul.u32 4, %s21
        %p318 = scmp.lt.s32.totalorder %s317, 11
        %s319 = scalar_select %p318, %s317, 11
        %s320 = smul.addr %s319, 4
        %s321 = scalar_lea.vmem %s2, %s320
        %s322 = smul.u32 4, %s21
        %v324 = vld [vmem:[%s3] sm:$0xf]
        %v325 = vld [vmem:[%s3 + $0x4] sm:$0xf]
        %v326 = vld [vmem:[%s3 + $0x8] sm:$0xf]
        %v327 = vld [vmem:[%s3 + $0xc] sm:$0xf]
        %v328 = vld [vmem:[%s3 + $0x10] sm:$0xf]
        %v329 = vld [vmem:[%s3 + $0x14] sm:$0xf]
        %v330 = vld [vmem:[%s3 + $0x18] sm:$0xf]
        %v331 = vld [vmem:[%s3 + $0x1c] sm:$0xf]
        %v332 = vld [vmem:[%s3 + $0x20] sm:$0xf]
        %v333 = vld [vmem:[%s3 + $0x24] sm:$0xf]
        %v334 = vld [vmem:[%s3 + $0x28] sm:$0xf]
        %v335 = vld [vmem:[%s3 + $0x2c] sm:$0xf]
        %v336 = vld [vmem:[%s3 + $0x30] sm:$0xf]
        %v337 = vld [vmem:[%s3 + $0x34] sm:$0xf]
        %v338 = vld [vmem:[%s3 + $0x38] sm:$0xf]
        %v339 = vld [vmem:[%s3 + $0x3c] sm:$0xf]
        %v340 = vld [vmem:[%s3 + $0x40] sm:$0xf]
        %v341 = vld [vmem:[%s3 + $0x44] sm:$0xf]
        %v342 = vld [vmem:[%s3 + $0x48] sm:$0xf]
        %v343 = vld [vmem:[%s3 + $0x4c] sm:$0xf]
        %v344 = vld [vmem:[%s3 + $0x50] sm:$0xf]
        %v345 = vld [vmem:[%s3 + $0x54] sm:$0xf]
        %v346 = vld [vmem:[%s3 + $0x58] sm:$0xf]
        %v347 = vld [vmem:[%s3 + $0x5c] sm:$0xf]
        %v348 = vld [vmem:[%s3 + $0x60] sm:$0xf]
        %v349 = vld [vmem:[%s3 + $0x64] sm:$0xf]
        %v350 = vld [vmem:[%s3 + $0x68] sm:$0xf]
        %v351 = vld [vmem:[%s3 + $0x6c] sm:$0xf]
        %v352 = vld [vmem:[%s4] sm:$0xf]
        %v353 = vld [vmem:[%s4 + $0x4] sm:$0xf]
        %v354 = vld [vmem:[%s4 + $0x8] sm:$0xf]
        %v355 = vld [vmem:[%s4 + $0xc] sm:$0xf]
        %v356 = vld [vmem:[%s4 + $0x10] sm:$0xf]
        %v357 = vld [vmem:[%s4 + $0x14] sm:$0xf]
        %v358 = vld [vmem:[%s4 + $0x18] sm:$0xf]
        %v359 = vld [vmem:[%s4 + $0x1c] sm:$0xf]
        %v360 = vld [vmem:[%s4 + $0x20] sm:$0xf]
        %v361 = vld [vmem:[%s4 + $0x24] sm:$0xf]
        %v362 = vld [vmem:[%s4 + $0x28] sm:$0xf]
        %v363 = vld [vmem:[%s4 + $0x2c] sm:$0xf]
        %v364 = vld [vmem:[%s5] sm:$0x1]
        %v365 = vld [vmem:[%s5 + $0x1] sm:$0x1]
        %v366 = vld [vmem:[%s5 + $0x2] sm:$0x1]
        %v367 = vld [vmem:[%s5 + $0x3] sm:$0x1]
        %v368 = vld [vmem:[%s6] sm:$0x1]
        %v369 = vld [vmem:[%s6 + $0x1] sm:$0x1]
        %v370 = vld [vmem:[%s6 + $0x2] sm:$0x1]
        %v371 = vld [vmem:[%s6 + $0x3] sm:$0x1]
        %v372 = vld [vmem:[%s6 + $0x4] sm:$0x1]
        %v373 = vld [vmem:[%s6 + $0x5] sm:$0x1]
        %v374 = vld [vmem:[%s309] sm:$0xf]
        %v375 = vld [vmem:[%s309 + $0x4] sm:$0xf]
        %v376 = vld [vmem:[%s309 + $0x8] sm:$0xf]
        %v377 = vld [vmem:[%s309 + $0xc] sm:$0xf]
        %v378 = vld [vmem:[%s309 + $0x10] sm:$0xf]
        %v379 = vld [vmem:[%s309 + $0x14] sm:$0xf]
        %v380 = vld [vmem:[%s309 + $0x18] sm:$0xf]
        %v381 = vld [vmem:[%s309 + $0x1c] sm:$0xf]
        %v382 = vld [vmem:[%s309 + $0x20] sm:$0xf]
        %v383 = vld [vmem:[%s309 + $0x24] sm:$0xf]
        %v384 = vld [vmem:[%s309 + $0x28] sm:$0xf]
        %v385 = vld [vmem:[%s309 + $0x2c] sm:$0xf]
        %v386 = vld [vmem:[%s309 + $0x30] sm:$0xf]
        %v387 = vld [vmem:[%s309 + $0x34] sm:$0xf]
        %v388 = vld [vmem:[%s309 + $0x38] sm:$0xf]
        %v389 = vld [vmem:[%s309 + $0x3c] sm:$0xf]
        %v390 = vld [vmem:[%s309 + $0x40] sm:$0xf]
        %v391 = vld [vmem:[%s309 + $0x44] sm:$0xf]
        %v392 = vld [vmem:[%s309 + $0x48] sm:$0xf]
        %v393 = vld [vmem:[%s309 + $0x4c] sm:$0xf]
        %v394 = vld [vmem:[%s309 + $0x50] sm:$0xf]
        %v395 = vld [vmem:[%s309 + $0x54] sm:$0xf]
        %v396 = vld [vmem:[%s309 + $0x58] sm:$0xf]
        %v397 = vld [vmem:[%s309 + $0x5c] sm:$0xf]
        %v398 = vld [vmem:[%s309 + $0x60] sm:$0xf]
        %v399 = vld [vmem:[%s309 + $0x64] sm:$0xf]
        %v400 = vld [vmem:[%s309 + $0x68] sm:$0xf]
        %v401 = vld [vmem:[%s309 + $0x6c] sm:$0xf]
        %v402 = vld [vmem:[%s309 + $0x70] sm:$0xf]
        %v403 = vld [vmem:[%s309 + $0x74] sm:$0xf]
        %v404 = vld [vmem:[%s309 + $0x78] sm:$0xf]
        %v405 = vld [vmem:[%s309 + $0x7c] sm:$0xf]
        %v406 = vld [vmem:[%s309 + $0x80] sm:$0xf]
        %v407 = vld [vmem:[%s309 + $0x84] sm:$0xf]
        %v408 = vld [vmem:[%s309 + $0x88] sm:$0xf]
        %v409 = vld [vmem:[%s309 + $0x8c] sm:$0xf]
        %v410 = vld [vmem:[%s309 + $0x90] sm:$0xf]
        %v411 = vld [vmem:[%s309 + $0x94] sm:$0xf]
        %v412 = vld [vmem:[%s309 + $0x98] sm:$0xf]
        %v413 = vld [vmem:[%s309 + $0x9c] sm:$0xf]
        %v414 = vld [vmem:[%s309 + $0xa0] sm:$0xf]
        %v415 = vld [vmem:[%s309 + $0xa4] sm:$0xf]
        %v416 = vld [vmem:[%s309 + $0xa8] sm:$0xf]
        %v417 = vld [vmem:[%s309 + $0xac] sm:$0xf]
        %v418 = vld [vmem:[%s309 + $0xb0] sm:$0xf]
        %v419 = vld [vmem:[%s309 + $0xb4] sm:$0xf]
        %v420 = vld [vmem:[%s309 + $0xb8] sm:$0xf]
        %v421 = vld [vmem:[%s309 + $0xbc] sm:$0xf]
        %v422 = vld [vmem:[%s309 + $0xc0] sm:$0xf]
        %v423 = vld [vmem:[%s309 + $0xc4] sm:$0xf]
        %v424 = vld [vmem:[%s309 + $0xc8] sm:$0xf]
        %v425 = vld [vmem:[%s309 + $0xcc] sm:$0xf]
        %v426 = vld [vmem:[%s309 + $0xd0] sm:$0xf]
        %v427 = vld [vmem:[%s309 + $0xd4] sm:$0xf]
        %v428 = vld [vmem:[%s309 + $0xd8] sm:$0xf]
        %v429 = vld [vmem:[%s309 + $0xdc] sm:$0xf]
        %v430 = vld [vmem:[%s309 + $0xe0] sm:$0xf]
        %v431 = vld [vmem:[%s309 + $0xe4] sm:$0xf]
        %v432 = vld [vmem:[%s309 + $0xe8] sm:$0xf]
        %v433 = vld [vmem:[%s309 + $0xec] sm:$0xf]
        %v434 = vld [vmem:[%s309 + $0xf0] sm:$0xf]
        %v435 = vld [vmem:[%s309 + $0xf4] sm:$0xf]
        %v436 = vld [vmem:[%s309 + $0xf8] sm:$0xf]
        %v437 = vld [vmem:[%s309 + $0xfc] sm:$0xf]
        %v438 = vld [vmem:[%s309 + $0x100] sm:$0xf]
        %v439 = vld [vmem:[%s309 + $0x104] sm:$0xf]
        %v440 = vld [vmem:[%s309 + $0x108] sm:$0xf]
        %v441 = vld [vmem:[%s309 + $0x10c] sm:$0xf]
        %v442 = vld [vmem:[%s309 + $0x110] sm:$0xf]
        %v443 = vld [vmem:[%s309 + $0x114] sm:$0xf]
        %v444 = vld [vmem:[%s309 + $0x118] sm:$0xf]
        %v445 = vld [vmem:[%s309 + $0x11c] sm:$0xf]
        %v446 = vld [vmem:[%s309 + $0x120] sm:$0xf]
        %v447 = vld [vmem:[%s309 + $0x124] sm:$0xf]
        %v448 = vld [vmem:[%s309 + $0x128] sm:$0xf]
        %v449 = vld [vmem:[%s309 + $0x12c] sm:$0xf]
        %v450 = vld [vmem:[%s309 + $0x130] sm:$0xf]
        %v451 = vld [vmem:[%s309 + $0x134] sm:$0xf]
        %v452 = vld [vmem:[%s309 + $0x138] sm:$0xf]
        %v453 = vld [vmem:[%s309 + $0x13c] sm:$0xf]
        %v454 = vld [vmem:[%s309 + $0x140] sm:$0xf]
        %v455 = vld [vmem:[%s309 + $0x144] sm:$0xf]
        %v456 = vld [vmem:[%s309 + $0x148] sm:$0xf]
        %v457 = vld [vmem:[%s309 + $0x14c] sm:$0xf]
        %v458 = vld [vmem:[%s309 + $0x150] sm:$0xf]
        %v459 = vld [vmem:[%s309 + $0x154] sm:$0xf]
        %v460 = vld [vmem:[%s309 + $0x158] sm:$0xf]
        %v461 = vld [vmem:[%s309 + $0x15c] sm:$0xf]
        %v462 = vld [vmem:[%s309 + $0x160] sm:$0xf]
        %v463 = vld [vmem:[%s309 + $0x164] sm:$0xf]
        %v464 = vld [vmem:[%s309 + $0x168] sm:$0xf]
        %v465 = vld [vmem:[%s309 + $0x16c] sm:$0xf]
        %v466 = vld [vmem:[%s309 + $0x170] sm:$0xf]
        %v467 = vld [vmem:[%s309 + $0x174] sm:$0xf]
        %v468 = vld [vmem:[%s309 + $0x178] sm:$0xf]
        %v469 = vld [vmem:[%s309 + $0x17c] sm:$0xf]
        %v470 = vld [vmem:[%s309 + $0x180] sm:$0xf]
        %v471 = vld [vmem:[%s309 + $0x184] sm:$0xf]
        %v472 = vld [vmem:[%s309 + $0x188] sm:$0xf]
        %v473 = vld [vmem:[%s309 + $0x18c] sm:$0xf]
        %v474 = vld [vmem:[%s309 + $0x190] sm:$0xf]
        %v475 = vld [vmem:[%s309 + $0x194] sm:$0xf]
        %v476 = vld [vmem:[%s309 + $0x198] sm:$0xf]
        %v477 = vld [vmem:[%s309 + $0x19c] sm:$0xf]
        %v478 = vld [vmem:[%s309 + $0x1a0] sm:$0xf]
        %v479 = vld [vmem:[%s309 + $0x1a4] sm:$0xf]
        %v480 = vld [vmem:[%s309 + $0x1a8] sm:$0xf]
        %v481 = vld [vmem:[%s309 + $0x1ac] sm:$0xf]
        %v482 = vld [vmem:[%s309 + $0x1b0] sm:$0xf]
        %v483 = vld [vmem:[%s309 + $0x1b4] sm:$0xf]
        %v484 = vld [vmem:[%s309 + $0x1b8] sm:$0xf]
        %v485 = vld [vmem:[%s309 + $0x1bc] sm:$0xf]
        %v486 = vld [vmem:[%s309 + $0x1c0] sm:$0xf]
        %v487 = vld [vmem:[%s309 + $0x1c4] sm:$0xf]
        %v488 = vld [vmem:[%s309 + $0x1c8] sm:$0xf]
        %v489 = vld [vmem:[%s309 + $0x1cc] sm:$0xf]
        %v490 = vld [vmem:[%s309 + $0x1d0] sm:$0xf]
        %v491 = vld [vmem:[%s309 + $0x1d4] sm:$0xf]
        %v492 = vld [vmem:[%s309 + $0x1d8] sm:$0xf]
        %v493 = vld [vmem:[%s309 + $0x1dc] sm:$0xf]
        %v494 = vld [vmem:[%s309 + $0x1e0] sm:$0xf]
        %v495 = vld [vmem:[%s309 + $0x1e4] sm:$0xf]
        %v496 = vld [vmem:[%s309 + $0x1e8] sm:$0xf]
        %v497 = vld [vmem:[%s309 + $0x1ec] sm:$0xf]
        %v498 = vld [vmem:[%s309 + $0x1f0] sm:$0xf]
        %v499 = vld [vmem:[%s309 + $0x1f4] sm:$0xf]
        %v500 = vld [vmem:[%s309 + $0x1f8] sm:$0xf]
        %v501 = vld [vmem:[%s309 + $0x1fc] sm:$0xf]
        %v502 = vunpack.c.l.bf16 %v374
        %v503 = vunpack.c.l.bf16 %v375
        %v504 = vunpack.c.l.bf16 %v376
        %v505 = vunpack.c.l.bf16 %v377
        %v506 = vunpack.c.l.bf16 %v378
        %v507 = vunpack.c.l.bf16 %v379
        %v508 = vunpack.c.l.bf16 %v380
        %v509 = vunpack.c.l.bf16 %v381
        %v510 = vunpack.c.l.bf16 %v382
        %v511 = vunpack.c.l.bf16 %v383
        %v512 = vunpack.c.l.bf16 %v384
        %v513 = vunpack.c.l.bf16 %v385
        %v514 = vunpack.c.l.bf16 %v386
        %v515 = vunpack.c.l.bf16 %v387
        %v516 = vunpack.c.l.bf16 %v388
        %v517 = vunpack.c.l.bf16 %v389
        %v518 = vunpack.c.l.bf16 %v390
        %v519 = vunpack.c.l.bf16 %v391
        %v520 = vunpack.c.l.bf16 %v392
        %v521 = vunpack.c.l.bf16 %v393
        %v522 = vunpack.c.l.bf16 %v394
        %v523 = vunpack.c.l.bf16 %v395
        %v524 = vunpack.c.l.bf16 %v396
        %v525 = vunpack.c.l.bf16 %v397
        %v526 = vunpack.c.l.bf16 %v398
        %v527 = vunpack.c.l.bf16 %v399
        %v528 = vunpack.c.l.bf16 %v400
        %v529 = vunpack.c.l.bf16 %v401
        %v530 = vunpack.c.l.bf16 %v402
        %v531 = vunpack.c.l.bf16 %v403
        %v532 = vunpack.c.l.bf16 %v404
        %v533 = vunpack.c.l.bf16 %v405
        %v534 = vunpack.c.l.bf16 %v406
        %v535 = vunpack.c.l.bf16 %v407
        %v536 = vunpack.c.l.bf16 %v408
        %v537 = vunpack.c.l.bf16 %v409
        %v538 = vunpack.c.l.bf16 %v410
        %v539 = vunpack.c.l.bf16 %v411
        %v540 = vunpack.c.l.bf16 %v412
        %v541 = vunpack.c.l.bf16 %v413
        %v542 = vunpack.c.l.bf16 %v414
        %v543 = vunpack.c.l.bf16 %v415
        %v544 = vunpack.c.l.bf16 %v416
        %v545 = vunpack.c.l.bf16 %v417
        %v546 = vunpack.c.l.bf16 %v418
        %v547 = vunpack.c.l.bf16 %v419
        %v548 = vunpack.c.l.bf16 %v420
        %v549 = vunpack.c.l.bf16 %v421
        %v550 = vunpack.c.l.bf16 %v422
        %v551 = vunpack.c.l.bf16 %v423
        %v552 = vunpack.c.l.bf16 %v424
        %v553 = vunpack.c.l.bf16 %v425
        %v554 = vunpack.c.l.bf16 %v426
        %v555 = vunpack.c.l.bf16 %v427
        %v556 = vunpack.c.l.bf16 %v428
        %v557 = vunpack.c.l.bf16 %v429
        %v558 = vunpack.c.l.bf16 %v430
        %v559 = vunpack.c.l.bf16 %v431
        %v560 = vunpack.c.l.bf16 %v432
        %v561 = vunpack.c.l.bf16 %v433
        %v562 = vunpack.c.l.bf16 %v434
        %v563 = vunpack.c.l.bf16 %v435
        %v564 = vunpack.c.l.bf16 %v436
        %v565 = vunpack.c.l.bf16 %v437
        %v566 = vunpack.c.l.bf16 %v438
        %v567 = vunpack.c.l.bf16 %v439
        %v568 = vunpack.c.l.bf16 %v440
        %v569 = vunpack.c.l.bf16 %v441
        %v570 = vunpack.c.l.bf16 %v442
        %v571 = vunpack.c.l.bf16 %v443
        %v572 = vunpack.c.l.bf16 %v444
        %v573 = vunpack.c.l.bf16 %v445
        %v574 = vunpack.c.l.bf16 %v446
        %v575 = vunpack.c.l.bf16 %v447
        %v576 = vunpack.c.l.bf16 %v448
        %v577 = vunpack.c.l.bf16 %v449
        %v578 = vunpack.c.l.bf16 %v450
        %v579 = vunpack.c.l.bf16 %v451
        %v580 = vunpack.c.l.bf16 %v452
        %v581 = vunpack.c.l.bf16 %v453
        %v582 = vunpack.c.l.bf16 %v454
        %v583 = vunpack.c.l.bf16 %v455
        %v584 = vunpack.c.l.bf16 %v456
        %v585 = vunpack.c.l.bf16 %v457
        %v586 = vunpack.c.l.bf16 %v458
        %v587 = vunpack.c.l.bf16 %v459
        %v588 = vunpack.c.l.bf16 %v460
        %v589 = vunpack.c.l.bf16 %v461
        %v590 = vunpack.c.l.bf16 %v462
        %v591 = vunpack.c.l.bf16 %v463
        %v592 = vunpack.c.l.bf16 %v464
        %v593 = vunpack.c.l.bf16 %v465
        %v594 = vunpack.c.l.bf16 %v466
        %v595 = vunpack.c.l.bf16 %v467
        %v596 = vunpack.c.l.bf16 %v468
        %v597 = vunpack.c.l.bf16 %v469
        %v598 = vunpack.c.l.bf16 %v470
        %v599 = vunpack.c.l.bf16 %v471
        %v600 = vunpack.c.l.bf16 %v472
        %v601 = vunpack.c.l.bf16 %v473
        %v602 = vunpack.c.l.bf16 %v474
        %v603 = vunpack.c.l.bf16 %v475
        %v604 = vunpack.c.l.bf16 %v476
        %v605 = vunpack.c.l.bf16 %v477
        %v606 = vunpack.c.l.bf16 %v478
        %v607 = vunpack.c.l.bf16 %v479
        %v608 = vunpack.c.l.bf16 %v480
        %v609 = vunpack.c.l.bf16 %v481
        %v610 = vunpack.c.l.bf16 %v482
        %v611 = vunpack.c.l.bf16 %v483
        %v612 = vunpack.c.l.bf16 %v484
        %v613 = vunpack.c.l.bf16 %v485
        %v614 = vunpack.c.l.bf16 %v486
        %v615 = vunpack.c.l.bf16 %v487
        %v616 = vunpack.c.l.bf16 %v488
        %v617 = vunpack.c.l.bf16 %v489
        %v618 = vunpack.c.l.bf16 %v490
        %v619 = vunpack.c.l.bf16 %v491
        %v620 = vunpack.c.l.bf16 %v492
        %v621 = vunpack.c.l.bf16 %v493
        %v622 = vunpack.c.l.bf16 %v494
        %v623 = vunpack.c.l.bf16 %v495
        %v624 = vunpack.c.l.bf16 %v496
        %v625 = vunpack.c.l.bf16 %v497
        %v626 = vunpack.c.l.bf16 %v498
        %v627 = vunpack.c.l.bf16 %v499
        %v628 = vunpack.c.l.bf16 %v500
        %v629 = vunpack.c.l.bf16 %v501
        %v630 = vrot.slane %v502, 7
        %v631 = vrot.slane %v503, 7
        %v632 = vrot.slane %v504, 7
        %v633 = vrot.slane %v505, 7
        %v634 = vrot.slane %v506, 7
        %v635 = vrot.slane %v507, 7
        %v636 = vrot.slane %v508, 7
        %v637 = vrot.slane %v509, 7
        %v638 = vrot.slane %v510, 7
        %v639 = vrot.slane %v511, 7
        %v640 = vrot.slane %v512, 7
        %v641 = vrot.slane %v513, 7
        %v642 = vrot.slane %v514, 7
        %v643 = vrot.slane %v515, 7
        %v644 = vrot.slane %v516, 7
        %v645 = vrot.slane %v517, 7
        %v646 = vrot.slane %v518, 7
        %v647 = vrot.slane %v519, 7
        %v648 = vrot.slane %v520, 7
        %v649 = vrot.slane %v521, 7
        %v650 = vrot.slane %v522, 7
        %v651 = vrot.slane %v523, 7
        %v652 = vrot.slane %v524, 7
        %v653 = vrot.slane %v525, 7
        %v654 = vrot.slane %v526, 7
        %v655 = vrot.slane %v527, 7
        %v656 = vrot.slane %v528, 7
        %v657 = vrot.slane %v529, 7
        %v658 = vrot.slane %v530, 7
        %v659 = vrot.slane %v531, 7
        %v660 = vrot.slane %v532, 7
        %v661 = vrot.slane %v533, 7
        %v662 = vrot.slane %v534, 7
        %v663 = vrot.slane %v535, 7
        %v664 = vrot.slane %v536, 7
        %v665 = vrot.slane %v537, 7
        %v666 = vrot.slane %v538, 7
        %v667 = vrot.slane %v539, 7
        %v668 = vrot.slane %v540, 7
        %v669 = vrot.slane %v541, 7
        %v670 = vrot.slane %v542, 7
        %v671 = vrot.slane %v543, 7
        %v672 = vrot.slane %v544, 7
        %v673 = vrot.slane %v545, 7
        %v674 = vrot.slane %v546, 7
        %v675 = vrot.slane %v547, 7
        %v676 = vrot.slane %v548, 7
        %v677 = vrot.slane %v549, 7
        %v678 = vrot.slane %v550, 7
        %v679 = vrot.slane %v551, 7
        %v680 = vrot.slane %v552, 7
        %v681 = vrot.slane %v553, 7
        %v682 = vrot.slane %v554, 7
        %v683 = vrot.slane %v555, 7
        %v684 = vrot.slane %v556, 7
        %v685 = vrot.slane %v557, 7
        %v686 = vrot.slane %v558, 7
        %v687 = vrot.slane %v559, 7
        %v688 = vrot.slane %v560, 7
        %v689 = vrot.slane %v561, 7
        %v690 = vrot.slane %v562, 7
        %v691 = vrot.slane %v563, 7
        %v692 = vrot.slane %v564, 7
        %v693 = vrot.slane %v565, 7
        %v694 = vrot.slane %v566, 7
        %v695 = vrot.slane %v567, 7
        %v696 = vrot.slane %v568, 7
        %v697 = vrot.slane %v569, 7
        %v698 = vrot.slane %v570, 7
        %v699 = vrot.slane %v571, 7
        %v700 = vrot.slane %v572, 7
        %v701 = vrot.slane %v573, 7
        %v702 = vrot.slane %v574, 7
        %v703 = vrot.slane %v575, 7
        %v704 = vrot.slane %v576, 7
        %v705 = vrot.slane %v577, 7
        %v706 = vrot.slane %v578, 7
        %v707 = vrot.slane %v579, 7
        %v708 = vrot.slane %v580, 7
        %v709 = vrot.slane %v581, 7
        %v710 = vrot.slane %v582, 7
        %v711 = vrot.slane %v583, 7
        %v712 = vrot.slane %v584, 7
        %v713 = vrot.slane %v585, 7
        %v714 = vrot.slane %v586, 7
        %v715 = vrot.slane %v587, 7
        %v716 = vrot.slane %v588, 7
        %v717 = vrot.slane %v589, 7
        %v718 = vrot.slane %v590, 7
        %v719 = vrot.slane %v591, 7
        %v720 = vrot.slane %v592, 7
        %v721 = vrot.slane %v593, 7
        %v722 = vrot.slane %v594, 7
        %v723 = vrot.slane %v595, 7
        %v724 = vrot.slane %v596, 7
        %v725 = vrot.slane %v597, 7
        %v726 = vrot.slane %v598, 7
        %v727 = vrot.slane %v599, 7
        %v728 = vrot.slane %v600, 7
        %v729 = vrot.slane %v601, 7
        %v730 = vrot.slane %v602, 7
        %v731 = vrot.slane %v603, 7
        %v732 = vrot.slane %v604, 7
        %v733 = vrot.slane %v605, 7
        %v734 = vrot.slane %v606, 7
        %v735 = vrot.slane %v607, 7
        %v736 = vrot.slane %v608, 7
        %v737 = vrot.slane %v609, 7
        %v738 = vrot.slane %v610, 7
        %v739 = vrot.slane %v611, 7
        %v740 = vrot.slane %v612, 7
        %v741 = vrot.slane %v613, 7
        %v742 = vrot.slane %v614, 7
        %v743 = vrot.slane %v615, 7
        %v744 = vrot.slane %v616, 7
        %v745 = vrot.slane %v617, 7
        %v746 = vrot.slane %v618, 7
        %v747 = vrot.slane %v619, 7
        %v748 = vrot.slane %v620, 7
        %v749 = vrot.slane %v621, 7
        %v750 = vrot.slane %v622, 7
        %v751 = vrot.slane %v623, 7
        %v752 = vrot.slane %v624, 7
        %v753 = vrot.slane %v625, 7
        %v754 = vrot.slane %v626, 7
        %v755 = vrot.slane %v627, 7
        %v756 = vrot.slane %v628, 7
        %v757 = vrot.slane %v629, 7
        %v758 = vlaneseq
        %v759 = vshrl.u32 %v758, 7
        %vm760 = vcmp.lt.s32.totalorder %v759, 1
        %v761 = vsel %vm760, %v756, %v757
        %v762 = vsel %vm760, %v755, %v756
        %v763 = vsel %vm760, %v754, %v755
        %v764 = vsel %vm760, %v753, %v754
        %v765 = vsel %vm760, %v752, %v753
        %v766 = vsel %vm760, %v751, %v752
        %v767 = vsel %vm760, %v750, %v751
        %v768 = vsel %vm760, %v749, %v750
        %v769 = vsel %vm760, %v748, %v749
        %v770 = vsel %vm760, %v747, %v748
        %v771 = vsel %vm760, %v746, %v747
        %v772 = vsel %vm760, %v745, %v746
        %v773 = vsel %vm760, %v744, %v745
        %v774 = vsel %vm760, %v743, %v744
        %v775 = vsel %vm760, %v742, %v743
        %v776 = vsel %vm760, %v741, %v742
        %v777 = vsel %vm760, %v740, %v741
        %v778 = vsel %vm760, %v739, %v740
        %v779 = vsel %vm760, %v738, %v739
        %v780 = vsel %vm760, %v737, %v738
        %v781 = vsel %vm760, %v736, %v737
        %v782 = vsel %vm760, %v735, %v736
        %v783 = vsel %vm760, %v734, %v735
        %v784 = vsel %vm760, %v733, %v734
        %v785 = vsel %vm760, %v732, %v733
        %v786 = vsel %vm760, %v731, %v732
        %v787 = vsel %vm760, %v730, %v731
        %v788 = vsel %vm760, %v729, %v730
        %v789 = vsel %vm760, %v728, %v729
        %v790 = vsel %vm760, %v727, %v728
        %v791 = vsel %vm760, %v726, %v727
        %v792 = vsel %vm760, %v725, %v726
        %v793 = vsel %vm760, %v724, %v725
        %v794 = vsel %vm760, %v723, %v724
        %v795 = vsel %vm760, %v722, %v723
        %v796 = vsel %vm760, %v721, %v722
        %v797 = vsel %vm760, %v720, %v721
        %v798 = vsel %vm760, %v719, %v720
        %v799 = vsel %vm760, %v718, %v719
        %v800 = vsel %vm760, %v717, %v718
        %v801 = vsel %vm760, %v716, %v717
        %v802 = vsel %vm760, %v715, %v716
        %v803 = vsel %vm760, %v714, %v715
        %v804 = vsel %vm760, %v713, %v714
        %v805 = vsel %vm760, %v712, %v713
        %v806 = vsel %vm760, %v711, %v712
        %v807 = vsel %vm760, %v710, %v711
        %v808 = vsel %vm760, %v709, %v710
        %v809 = vsel %vm760, %v708, %v709
        %v810 = vsel %vm760, %v707, %v708
        %v811 = vsel %vm760, %v706, %v707
        %v812 = vsel %vm760, %v705, %v706
        %v813 = vsel %vm760, %v704, %v705
        %v814 = vsel %vm760, %v703, %v704
        %v815 = vsel %vm760, %v702, %v703
        %v816 = vsel %vm760, %v701, %v702
        %v817 = vsel %vm760, %v700, %v701
        %v818 = vsel %vm760, %v699, %v700
        %v819 = vsel %vm760, %v698, %v699
        %v820 = vsel %vm760, %v697, %v698
        %v821 = vsel %vm760, %v696, %v697
        %v822 = vsel %vm760, %v695, %v696
        %v823 = vsel %vm760, %v694, %v695
        %v824 = vsel %vm760, %v693, %v694
        %v825 = vsel %vm760, %v692, %v693
        %v826 = vsel %vm760, %v691, %v692
        %v827 = vsel %vm760, %v690, %v691
        %v828 = vsel %vm760, %v689, %v690
        %v829 = vsel %vm760, %v688, %v689
        %v830 = vsel %vm760, %v687, %v688
        %v831 = vsel %vm760, %v686, %v687
        %v832 = vsel %vm760, %v685, %v686
        %v833 = vsel %vm760, %v684, %v685
        %v834 = vsel %vm760, %v683, %v684
        %v835 = vsel %vm760, %v682, %v683
        %v836 = vsel %vm760, %v681, %v682
        %v837 = vsel %vm760, %v680, %v681
        %v838 = vsel %vm760, %v679, %v680
        %v839 = vsel %vm760, %v678, %v679
        %v840 = vsel %vm760, %v677, %v678
        %v841 = vsel %vm760, %v676, %v677
        %v842 = vsel %vm760, %v675, %v676
        %v843 = vsel %vm760, %v674, %v675
        %v844 = vsel %vm760, %v673, %v674
        %v845 = vsel %vm760, %v672, %v673
        %v846 = vsel %vm760, %v671, %v672
        %v847 = vsel %vm760, %v670, %v671
        %v848 = vsel %vm760, %v669, %v670
        %v849 = vsel %vm760, %v668, %v669
        %v850 = vsel %vm760, %v667, %v668
        %v851 = vsel %vm760, %v666, %v667
        %v852 = vsel %vm760, %v665, %v666
        %v853 = vsel %vm760, %v664, %v665
        %v854 = vsel %vm760, %v663, %v664
        %v855 = vsel %vm760, %v662, %v663
        %v856 = vsel %vm760, %v661, %v662
        %v857 = vsel %vm760, %v660, %v661
        %v858 = vsel %vm760, %v659, %v660
        %v859 = vsel %vm760, %v658, %v659
        %v860 = vsel %vm760, %v657, %v658
        %v861 = vsel %vm760, %v656, %v657
        %v862 = vsel %vm760, %v655, %v656
        %v863 = vsel %vm760, %v654, %v655
        %v864 = vsel %vm760, %v653, %v654
        %v865 = vsel %vm760, %v652, %v653
        %v866 = vsel %vm760, %v651, %v652
        %v867 = vsel %vm760, %v650, %v651
        %v868 = vsel %vm760, %v649, %v650
        %v869 = vsel %vm760, %v648, %v649
        %v870 = vsel %vm760, %v647, %v648
        %v871 = vsel %vm760, %v646, %v647
        %v872 = vsel %vm760, %v645, %v646
        %v873 = vsel %vm760, %v644, %v645
        %v874 = vsel %vm760, %v643, %v644
        %v875 = vsel %vm760, %v642, %v643
        %v876 = vsel %vm760, %v641, %v642
        %v877 = vsel %vm760, %v640, %v641
        %v878 = vsel %vm760, %v639, %v640
        %v879 = vsel %vm760, %v638, %v639
        %v880 = vsel %vm760, %v637, %v638
        %v881 = vsel %vm760, %v636, %v637
        %v882 = vsel %vm760, %v635, %v636
        %v883 = vsel %vm760, %v634, %v635
        %v884 = vsel %vm760, %v633, %v634
        %v885 = vsel %vm760, %v632, %v633
        %v886 = vsel %vm760, %v631, %v632
        %v887 = vsel %vm760, %v630, %v631
        %v888 = vsel %vm760, %v757, %v630
        %v889 = vrot.slane %v502, 1
        %v890 = vrot.slane %v503, 1
        %v891 = vrot.slane %v504, 1
        %v892 = vrot.slane %v505, 1
        %v893 = vrot.slane %v506, 1
        %v894 = vrot.slane %v507, 1
        %v895 = vrot.slane %v508, 1
        %v896 = vrot.slane %v509, 1
        %v897 = vrot.slane %v510, 1
        %v898 = vrot.slane %v511, 1
        %v899 = vrot.slane %v512, 1
        %v900 = vrot.slane %v513, 1
        %v901 = vrot.slane %v514, 1
        %v902 = vrot.slane %v515, 1
        %v903 = vrot.slane %v516, 1
        %v904 = vrot.slane %v517, 1
        %v905 = vrot.slane %v518, 1
        %v906 = vrot.slane %v519, 1
        %v907 = vrot.slane %v520, 1
        %v908 = vrot.slane %v521, 1
        %v909 = vrot.slane %v522, 1
        %v910 = vrot.slane %v523, 1
        %v911 = vrot.slane %v524, 1
        %v912 = vrot.slane %v525, 1
        %v913 = vrot.slane %v526, 1
        %v914 = vrot.slane %v527, 1
        %v915 = vrot.slane %v528, 1
        %v916 = vrot.slane %v529, 1
        %v917 = vrot.slane %v530, 1
        %v918 = vrot.slane %v531, 1
        %v919 = vrot.slane %v532, 1
        %v920 = vrot.slane %v533, 1
        %v921 = vrot.slane %v534, 1
        %v922 = vrot.slane %v535, 1
        %v923 = vrot.slane %v536, 1
        %v924 = vrot.slane %v537, 1
        %v925 = vrot.slane %v538, 1
        %v926 = vrot.slane %v539, 1
        %v927 = vrot.slane %v540, 1
        %v928 = vrot.slane %v541, 1
        %v929 = vrot.slane %v542, 1
        %v930 = vrot.slane %v543, 1
        %v931 = vrot.slane %v544, 1
        %v932 = vrot.slane %v545, 1
        %v933 = vrot.slane %v546, 1
        %v934 = vrot.slane %v547, 1
        %v935 = vrot.slane %v548, 1
        %v936 = vrot.slane %v549, 1
        %v937 = vrot.slane %v550, 1
        %v938 = vrot.slane %v551, 1
        %v939 = vrot.slane %v552, 1
        %v940 = vrot.slane %v553, 1
        %v941 = vrot.slane %v554, 1
        %v942 = vrot.slane %v555, 1
        %v943 = vrot.slane %v556, 1
        %v944 = vrot.slane %v557, 1
        %v945 = vrot.slane %v558, 1
        %v946 = vrot.slane %v559, 1
        %v947 = vrot.slane %v560, 1
        %v948 = vrot.slane %v561, 1
        %v949 = vrot.slane %v562, 1
        %v950 = vrot.slane %v563, 1
        %v951 = vrot.slane %v564, 1
        %v952 = vrot.slane %v565, 1
        %v953 = vrot.slane %v566, 1
        %v954 = vrot.slane %v567, 1
        %v955 = vrot.slane %v568, 1
        %v956 = vrot.slane %v569, 1
        %v957 = vrot.slane %v570, 1
        %v958 = vrot.slane %v571, 1
        %v959 = vrot.slane %v572, 1
        %v960 = vrot.slane %v573, 1
        %v961 = vrot.slane %v574, 1
        %v962 = vrot.slane %v575, 1
        %v963 = vrot.slane %v576, 1
        %v964 = vrot.slane %v577, 1
        %v965 = vrot.slane %v578, 1
        %v966 = vrot.slane %v579, 1
        %v967 = vrot.slane %v580, 1
        %v968 = vrot.slane %v581, 1
        %v969 = vrot.slane %v582, 1
        %v970 = vrot.slane %v583, 1
        %v971 = vrot.slane %v584, 1
        %v972 = vrot.slane %v585, 1
        %v973 = vrot.slane %v586, 1
        %v974 = vrot.slane %v587, 1
        %v975 = vrot.slane %v588, 1
        %v976 = vrot.slane %v589, 1
        %v977 = vrot.slane %v590, 1
        %v978 = vrot.slane %v591, 1
        %v979 = vrot.slane %v592, 1
        %v980 = vrot.slane %v593, 1
        %v981 = vrot.slane %v594, 1
        %v982 = vrot.slane %v595, 1
        %v983 = vrot.slane %v596, 1
        %v984 = vrot.slane %v597, 1
        %v985 = vrot.slane %v598, 1
        %v986 = vrot.slane %v599, 1
        %v987 = vrot.slane %v600, 1
        %v988 = vrot.slane %v601, 1
        %v989 = vrot.slane %v602, 1
        %v990 = vrot.slane %v603, 1
        %v991 = vrot.slane %v604, 1
        %v992 = vrot.slane %v605, 1
        %v993 = vrot.slane %v606, 1
        %v994 = vrot.slane %v607, 1
        %v995 = vrot.slane %v608, 1
        %v996 = vrot.slane %v609, 1
        %v997 = vrot.slane %v610, 1
        %v998 = vrot.slane %v611, 1
        %v999 = vrot.slane %v612, 1
        %v1000 = vrot.slane %v613, 1
        %v1001 = vrot.slane %v614, 1
        %v1002 = vrot.slane %v615, 1
        %v1003 = vrot.slane %v616, 1
        %v1004 = vrot.slane %v617, 1
        %v1005 = vrot.slane %v618, 1
        %v1006 = vrot.slane %v619, 1
        %v1007 = vrot.slane %v620, 1
        %v1008 = vrot.slane %v621, 1
        %v1009 = vrot.slane %v622, 1
        %v1010 = vrot.slane %v623, 1
        %v1011 = vrot.slane %v624, 1
        %v1012 = vrot.slane %v625, 1
        %v1013 = vrot.slane %v626, 1
        %v1014 = vrot.slane %v627, 1
        %v1015 = vrot.slane %v628, 1
        %v1016 = vrot.slane %v629, 1
        %vm1017 = vcmp.lt.s32.totalorder %v759, 7
        %v1018 = vsel %vm1017, %v1015, %v1016
        %v1019 = vsel %vm1017, %v1014, %v1015
        %v1020 = vsel %vm1017, %v1013, %v1014
        %v1021 = vsel %vm1017, %v1012, %v1013
        %v1022 = vsel %vm1017, %v1011, %v1012
        %v1023 = vsel %vm1017, %v1010, %v1011
        %v1024 = vsel %vm1017, %v1009, %v1010
        %v1025 = vsel %vm1017, %v1008, %v1009
        %v1026 = vsel %vm1017, %v1007, %v1008
        %v1027 = vsel %vm1017, %v1006, %v1007
        %v1028 = vsel %vm1017, %v1005, %v1006
        %v1029 = vsel %vm1017, %v1004, %v1005
        %v1030 = vsel %vm1017, %v1003, %v1004
        %v1031 = vsel %vm1017, %v1002, %v1003
        %v1032 = vsel %vm1017, %v1001, %v1002
        %v1033 = vsel %vm1017, %v1000, %v1001
        %v1034 = vsel %vm1017, %v999, %v1000
        %v1035 = vsel %vm1017, %v998, %v999
        %v1036 = vsel %vm1017, %v997, %v998
        %v1037 = vsel %vm1017, %v996, %v997
        %v1038 = vsel %vm1017, %v995, %v996
        %v1039 = vsel %vm1017, %v994, %v995
        %v1040 = vsel %vm1017, %v993, %v994
        %v1041 = vsel %vm1017, %v992, %v993
        %v1042 = vsel %vm1017, %v991, %v992
        %v1043 = vsel %vm1017, %v990, %v991
        %v1044 = vsel %vm1017, %v989, %v990
        %v1045 = vsel %vm1017, %v988, %v989
        %v1046 = vsel %vm1017, %v987, %v988
        %v1047 = vsel %vm1017, %v986, %v987
        %v1048 = vsel %vm1017, %v985, %v986
        %v1049 = vsel %vm1017, %v984, %v985
        %v1050 = vsel %vm1017, %v983, %v984
        %v1051 = vsel %vm1017, %v982, %v983
        %v1052 = vsel %vm1017, %v981, %v982
        %v1053 = vsel %vm1017, %v980, %v981
        %v1054 = vsel %vm1017, %v979, %v980
        %v1055 = vsel %vm1017, %v978, %v979
        %v1056 = vsel %vm1017, %v977, %v978
        %v1057 = vsel %vm1017, %v976, %v977
        %v1058 = vsel %vm1017, %v975, %v976
        %v1059 = vsel %vm1017, %v974, %v975
        %v1060 = vsel %vm1017, %v973, %v974
        %v1061 = vsel %vm1017, %v972, %v973
        %v1062 = vsel %vm1017, %v971, %v972
        %v1063 = vsel %vm1017, %v970, %v971
        %v1064 = vsel %vm1017, %v969, %v970
        %v1065 = vsel %vm1017, %v968, %v969
        %v1066 = vsel %vm1017, %v967, %v968
        %v1067 = vsel %vm1017, %v966, %v967
        %v1068 = vsel %vm1017, %v965, %v966
        %v1069 = vsel %vm1017, %v964, %v965
        %v1070 = vsel %vm1017, %v963, %v964
        %v1071 = vsel %vm1017, %v962, %v963
        %v1072 = vsel %vm1017, %v961, %v962
        %v1073 = vsel %vm1017, %v960, %v961
        %v1074 = vsel %vm1017, %v959, %v960
        %v1075 = vsel %vm1017, %v958, %v959
        %v1076 = vsel %vm1017, %v957, %v958
        %v1077 = vsel %vm1017, %v956, %v957
        %v1078 = vsel %vm1017, %v955, %v956
        %v1079 = vsel %vm1017, %v954, %v955
        %v1080 = vsel %vm1017, %v953, %v954
        %v1081 = vsel %vm1017, %v952, %v953
        %v1082 = vsel %vm1017, %v951, %v952
        %v1083 = vsel %vm1017, %v950, %v951
        %v1084 = vsel %vm1017, %v949, %v950
        %v1085 = vsel %vm1017, %v948, %v949
        %v1086 = vsel %vm1017, %v947, %v948
        %v1087 = vsel %vm1017, %v946, %v947
        %v1088 = vsel %vm1017, %v945, %v946
        %v1089 = vsel %vm1017, %v944, %v945
        %v1090 = vsel %vm1017, %v943, %v944
        %v1091 = vsel %vm1017, %v942, %v943
        %v1092 = vsel %vm1017, %v941, %v942
        %v1093 = vsel %vm1017, %v940, %v941
        %v1094 = vsel %vm1017, %v939, %v940
        %v1095 = vsel %vm1017, %v938, %v939
        %v1096 = vsel %vm1017, %v937, %v938
        %v1097 = vsel %vm1017, %v936, %v937
        %v1098 = vsel %vm1017, %v935, %v936
        %v1099 = vsel %vm1017, %v934, %v935
        %v1100 = vsel %vm1017, %v933, %v934
        %v1101 = vsel %vm1017, %v932, %v933
        %v1102 = vsel %vm1017, %v931, %v932
        %v1103 = vsel %vm1017, %v930, %v931
        %v1104 = vsel %vm1017, %v929, %v930
        %v1105 = vsel %vm1017, %v928, %v929
        %v1106 = vsel %vm1017, %v927, %v928
        %v1107 = vsel %vm1017, %v926, %v927
        %v1108 = vsel %vm1017, %v925, %v926
        %v1109 = vsel %vm1017, %v924, %v925
        %v1110 = vsel %vm1017, %v923, %v924
        %v1111 = vsel %vm1017, %v922, %v923
        %v1112 = vsel %vm1017, %v921, %v922
        %v1113 = vsel %vm1017, %v920, %v921
        %v1114 = vsel %vm1017, %v919, %v920
        %v1115 = vsel %vm1017, %v918, %v919
        %v1116 = vsel %vm1017, %v917, %v918
        %v1117 = vsel %vm1017, %v916, %v917
        %v1118 = vsel %vm1017, %v915, %v916
        %v1119 = vsel %vm1017, %v914, %v915
        %v1120 = vsel %vm1017, %v913, %v914
        %v1121 = vsel %vm1017, %v912, %v913
        %v1122 = vsel %vm1017, %v911, %v912
        %v1123 = vsel %vm1017, %v910, %v911
        %v1124 = vsel %vm1017, %v909, %v910
        %v1125 = vsel %vm1017, %v908, %v909
        %v1126 = vsel %vm1017, %v907, %v908
        %v1127 = vsel %vm1017, %v906, %v907
        %v1128 = vsel %vm1017, %v905, %v906
        %v1129 = vsel %vm1017, %v904, %v905
        %v1130 = vsel %vm1017, %v903, %v904
        %v1131 = vsel %vm1017, %v902, %v903
        %v1132 = vsel %vm1017, %v901, %v902
        %v1133 = vsel %vm1017, %v900, %v901
        %v1134 = vsel %vm1017, %v899, %v900
        %v1135 = vsel %vm1017, %v898, %v899
        %v1136 = vsel %vm1017, %v897, %v898
        %v1137 = vsel %vm1017, %v896, %v897
        %v1138 = vsel %vm1017, %v895, %v896
        %v1139 = vsel %vm1017, %v894, %v895
        %v1140 = vsel %vm1017, %v893, %v894
        %v1141 = vsel %vm1017, %v892, %v893
        %v1142 = vsel %vm1017, %v891, %v892
        %v1143 = vsel %vm1017, %v890, %v891
        %v1144 = vsel %vm1017, %v889, %v890
        %v1145 = vsel %vm1017, %v1016, %v889
        %1274 = vrot.lane.b32.xlu0 %v502, 32
        %v1275 = vpop.permute.xlu0 %1274
        %1276 = vrot.lane.b32.xlu0 %v503, 32
        %v1277 = vpop.permute.xlu0 %1276
        %1278 = vrot.lane.b32.xlu0 %v504, 32
        %v1279 = vpop.permute.xlu0 %1278
        %1280 = vrot.lane.b32.xlu0 %v505, 32
        %v1281 = vpop.permute.xlu0 %1280
        %1282 = vrot.lane.b32.xlu0 %v506, 32
        %v1283 = vpop.permute.xlu0 %1282
        %1284 = vrot.lane.b32.xlu0 %v507, 32
        %v1285 = vpop.permute.xlu0 %1284
        %1286 = vrot.lane.b32.xlu0 %v508, 32
        %v1287 = vpop.permute.xlu0 %1286
        %1288 = vrot.lane.b32.xlu0 %v509, 32
        %v1289 = vpop.permute.xlu0 %1288
        %1290 = vrot.lane.b32.xlu0 %v510, 32
        %v1291 = vpop.permute.xlu0 %1290
        %1292 = vrot.lane.b32.xlu0 %v511, 32
        %v1293 = vpop.permute.xlu0 %1292
        %1294 = vrot.lane.b32.xlu0 %v512, 32
        %v1295 = vpop.permute.xlu0 %1294
        %1296 = vrot.lane.b32.xlu0 %v513, 32
        %v1297 = vpop.permute.xlu0 %1296
        %1298 = vrot.lane.b32.xlu0 %v514, 32
        %v1299 = vpop.permute.xlu0 %1298
        %1300 = vrot.lane.b32.xlu0 %v515, 32
        %v1301 = vpop.permute.xlu0 %1300
        %1302 = vrot.lane.b32.xlu0 %v516, 32
        %v1303 = vpop.permute.xlu0 %1302
        %1304 = vrot.lane.b32.xlu0 %v517, 32
        %v1305 = vpop.permute.xlu0 %1304
        %1306 = vrot.lane.b32.xlu0 %v518, 32
        %v1307 = vpop.permute.xlu0 %1306
        %1308 = vrot.lane.b32.xlu0 %v519, 32
        %v1309 = vpop.permute.xlu0 %1308
        %1310 = vrot.lane.b32.xlu0 %v520, 32
        %v1311 = vpop.permute.xlu0 %1310
        %1312 = vrot.lane.b32.xlu0 %v521, 32
        %v1313 = vpop.permute.xlu0 %1312
        %1314 = vrot.lane.b32.xlu0 %v522, 32
        %v1315 = vpop.permute.xlu0 %1314
        %1316 = vrot.lane.b32.xlu0 %v523, 32
        %v1317 = vpop.permute.xlu0 %1316
        %1318 = vrot.lane.b32.xlu0 %v524, 32
        %v1319 = vpop.permute.xlu0 %1318
        %1320 = vrot.lane.b32.xlu0 %v525, 32
        %v1321 = vpop.permute.xlu0 %1320
        %1322 = vrot.lane.b32.xlu0 %v526, 32
        %v1323 = vpop.permute.xlu0 %1322
        %1324 = vrot.lane.b32.xlu0 %v527, 32
        %v1325 = vpop.permute.xlu0 %1324
        %1326 = vrot.lane.b32.xlu0 %v528, 32
        %v1327 = vpop.permute.xlu0 %1326
        %1328 = vrot.lane.b32.xlu0 %v529, 32
        %v1329 = vpop.permute.xlu0 %1328
        %1330 = vrot.lane.b32.xlu0 %v530, 32
        %v1331 = vpop.permute.xlu0 %1330
        %1332 = vrot.lane.b32.xlu0 %v531, 32
        %v1333 = vpop.permute.xlu0 %1332
        %1334 = vrot.lane.b32.xlu0 %v532, 32
        %v1335 = vpop.permute.xlu0 %1334
        %1336 = vrot.lane.b32.xlu0 %v533, 32
        %v1337 = vpop.permute.xlu0 %1336
        %1338 = vrot.lane.b32.xlu0 %v534, 32
        %v1339 = vpop.permute.xlu0 %1338
        %1340 = vrot.lane.b32.xlu0 %v535, 32
        %v1341 = vpop.permute.xlu0 %1340
        %1342 = vrot.lane.b32.xlu0 %v536, 32
        %v1343 = vpop.permute.xlu0 %1342
        %1344 = vrot.lane.b32.xlu0 %v537, 32
        %v1345 = vpop.permute.xlu0 %1344
        %1346 = vrot.lane.b32.xlu0 %v538, 32
        %v1347 = vpop.permute.xlu0 %1346
        %1348 = vrot.lane.b32.xlu0 %v539, 32
        %v1349 = vpop.permute.xlu0 %1348
        %1350 = vrot.lane.b32.xlu0 %v540, 32
        %v1351 = vpop.permute.xlu0 %1350
        %1352 = vrot.lane.b32.xlu0 %v541, 32
        %v1353 = vpop.permute.xlu0 %1352
        %1354 = vrot.lane.b32.xlu0 %v542, 32
        %v1355 = vpop.permute.xlu0 %1354
        %1356 = vrot.lane.b32.xlu0 %v543, 32
        %v1357 = vpop.permute.xlu0 %1356
        %1358 = vrot.lane.b32.xlu0 %v544, 32
        %v1359 = vpop.permute.xlu0 %1358
        %1360 = vrot.lane.b32.xlu0 %v545, 32
        %v1361 = vpop.permute.xlu0 %1360
        %1362 = vrot.lane.b32.xlu0 %v546, 32
        %v1363 = vpop.permute.xlu0 %1362
        %1364 = vrot.lane.b32.xlu0 %v547, 32
        %v1365 = vpop.permute.xlu0 %1364
        %1366 = vrot.lane.b32.xlu0 %v548, 32
        %v1367 = vpop.permute.xlu0 %1366
        %1368 = vrot.lane.b32.xlu0 %v549, 32
        %v1369 = vpop.permute.xlu0 %1368
        %1370 = vrot.lane.b32.xlu0 %v550, 32
        %v1371 = vpop.permute.xlu0 %1370
        %1372 = vrot.lane.b32.xlu0 %v551, 32
        %v1373 = vpop.permute.xlu0 %1372
        %1374 = vrot.lane.b32.xlu0 %v552, 32
        %v1375 = vpop.permute.xlu0 %1374
        %1376 = vrot.lane.b32.xlu0 %v553, 32
        %v1377 = vpop.permute.xlu0 %1376
        %1378 = vrot.lane.b32.xlu0 %v554, 32
        %v1379 = vpop.permute.xlu0 %1378
        %1380 = vrot.lane.b32.xlu0 %v555, 32
        %v1381 = vpop.permute.xlu0 %1380
        %1382 = vrot.lane.b32.xlu0 %v556, 32
        %v1383 = vpop.permute.xlu0 %1382
        %1384 = vrot.lane.b32.xlu0 %v557, 32
        %v1385 = vpop.permute.xlu0 %1384
        %1386 = vrot.lane.b32.xlu0 %v558, 32
        %v1387 = vpop.permute.xlu0 %1386
        %1388 = vrot.lane.b32.xlu0 %v559, 32
        %v1389 = vpop.permute.xlu0 %1388
        %1390 = vrot.lane.b32.xlu0 %v560, 32
        %v1391 = vpop.permute.xlu0 %1390
        %1392 = vrot.lane.b32.xlu0 %v561, 32
        %v1393 = vpop.permute.xlu0 %1392
        %1394 = vrot.lane.b32.xlu0 %v562, 32
        %v1395 = vpop.permute.xlu0 %1394
        %1396 = vrot.lane.b32.xlu0 %v563, 32
        %v1397 = vpop.permute.xlu0 %1396
        %1398 = vrot.lane.b32.xlu0 %v564, 32
        %v1399 = vpop.permute.xlu0 %1398
        %1400 = vrot.lane.b32.xlu0 %v565, 32
        %v1401 = vpop.permute.xlu0 %1400
        %1402 = vrot.lane.b32.xlu0 %v566, 32
        %v1403 = vpop.permute.xlu0 %1402
        %1404 = vrot.lane.b32.xlu0 %v567, 32
        %v1405 = vpop.permute.xlu0 %1404
        %1406 = vrot.lane.b32.xlu0 %v568, 32
        %v1407 = vpop.permute.xlu0 %1406
        %1408 = vrot.lane.b32.xlu0 %v569, 32
        %v1409 = vpop.permute.xlu0 %1408
        %1410 = vrot.lane.b32.xlu0 %v570, 32
        %v1411 = vpop.permute.xlu0 %1410
        %1412 = vrot.lane.b32.xlu0 %v571, 32
        %v1413 = vpop.permute.xlu0 %1412
        %1414 = vrot.lane.b32.xlu0 %v572, 32
        %v1415 = vpop.permute.xlu0 %1414
        %1416 = vrot.lane.b32.xlu0 %v573, 32
        %v1417 = vpop.permute.xlu0 %1416
        %1418 = vrot.lane.b32.xlu0 %v574, 32
        %v1419 = vpop.permute.xlu0 %1418
        %1420 = vrot.lane.b32.xlu0 %v575, 32
        %v1421 = vpop.permute.xlu0 %1420
        %1422 = vrot.lane.b32.xlu0 %v576, 32
        %v1423 = vpop.permute.xlu0 %1422
        %1424 = vrot.lane.b32.xlu0 %v577, 32
        %v1425 = vpop.permute.xlu0 %1424
        %1426 = vrot.lane.b32.xlu0 %v578, 32
        %v1427 = vpop.permute.xlu0 %1426
        %1428 = vrot.lane.b32.xlu0 %v579, 32
        %v1429 = vpop.permute.xlu0 %1428
        %1430 = vrot.lane.b32.xlu0 %v580, 32
        %v1431 = vpop.permute.xlu0 %1430
        %1432 = vrot.lane.b32.xlu0 %v581, 32
        %v1433 = vpop.permute.xlu0 %1432
        %1434 = vrot.lane.b32.xlu0 %v582, 32
        %v1435 = vpop.permute.xlu0 %1434
        %1436 = vrot.lane.b32.xlu0 %v583, 32
        %v1437 = vpop.permute.xlu0 %1436
        %1438 = vrot.lane.b32.xlu0 %v584, 32
        %v1439 = vpop.permute.xlu0 %1438
        %1440 = vrot.lane.b32.xlu0 %v585, 32
        %v1441 = vpop.permute.xlu0 %1440
        %1442 = vrot.lane.b32.xlu0 %v586, 32
        %v1443 = vpop.permute.xlu0 %1442
        %1444 = vrot.lane.b32.xlu0 %v587, 32
        %v1445 = vpop.permute.xlu0 %1444
        %1446 = vrot.lane.b32.xlu0 %v588, 32
        %v1447 = vpop.permute.xlu0 %1446
        %1448 = vrot.lane.b32.xlu0 %v589, 32
        %v1449 = vpop.permute.xlu0 %1448
        %1450 = vrot.lane.b32.xlu0 %v590, 32
        %v1451 = vpop.permute.xlu0 %1450
        %1452 = vrot.lane.b32.xlu0 %v591, 32
        %v1453 = vpop.permute.xlu0 %1452
        %1454 = vrot.lane.b32.xlu0 %v592, 32
        %v1455 = vpop.permute.xlu0 %1454
        %1456 = vrot.lane.b32.xlu0 %v593, 32
        %v1457 = vpop.permute.xlu0 %1456
        %1458 = vrot.lane.b32.xlu0 %v594, 32
        %v1459 = vpop.permute.xlu0 %1458
        %1460 = vrot.lane.b32.xlu0 %v595, 32
        %v1461 = vpop.permute.xlu0 %1460
        %1462 = vrot.lane.b32.xlu0 %v596, 32
        %v1463 = vpop.permute.xlu0 %1462
        %1464 = vrot.lane.b32.xlu0 %v597, 32
        %v1465 = vpop.permute.xlu0 %1464
        %1466 = vrot.lane.b32.xlu0 %v598, 32
        %v1467 = vpop.permute.xlu0 %1466
        %1468 = vrot.lane.b32.xlu0 %v599, 32
        %v1469 = vpop.permute.xlu0 %1468
        %1470 = vrot.lane.b32.xlu0 %v600, 32
        %v1471 = vpop.permute.xlu0 %1470
        %1472 = vrot.lane.b32.xlu0 %v601, 32
        %v1473 = vpop.permute.xlu0 %1472
        %1474 = vrot.lane.b32.xlu0 %v602, 32
        %v1475 = vpop.permute.xlu0 %1474
        %1476 = vrot.lane.b32.xlu0 %v603, 32
        %v1477 = vpop.permute.xlu0 %1476
        %1478 = vrot.lane.b32.xlu0 %v604, 32
        %v1479 = vpop.permute.xlu0 %1478
        %1480 = vrot.lane.b32.xlu0 %v605, 32
        %v1481 = vpop.permute.xlu0 %1480
        %1482 = vrot.lane.b32.xlu0 %v606, 32
        %v1483 = vpop.permute.xlu0 %1482
        %1484 = vrot.lane.b32.xlu0 %v607, 32
        %v1485 = vpop.permute.xlu0 %1484
        %1486 = vrot.lane.b32.xlu0 %v608, 32
        %v1487 = vpop.permute.xlu0 %1486
        %1488 = vrot.lane.b32.xlu0 %v609, 32
        %v1489 = vpop.permute.xlu0 %1488
        %1490 = vrot.lane.b32.xlu0 %v610, 32
        %v1491 = vpop.permute.xlu0 %1490
        %1492 = vrot.lane.b32.xlu0 %v611, 32
        %v1493 = vpop.permute.xlu0 %1492
        %1494 = vrot.lane.b32.xlu0 %v612, 32
        %v1495 = vpop.permute.xlu0 %1494
        %1496 = vrot.lane.b32.xlu0 %v613, 32
        %v1497 = vpop.permute.xlu0 %1496
        %1498 = vrot.lane.b32.xlu0 %v614, 32
        %v1499 = vpop.permute.xlu0 %1498
        %1500 = vrot.lane.b32.xlu0 %v615, 32
        %v1501 = vpop.permute.xlu0 %1500
        %1502 = vrot.lane.b32.xlu0 %v616, 32
        %v1503 = vpop.permute.xlu0 %1502
        %1504 = vrot.lane.b32.xlu0 %v617, 32
        %v1505 = vpop.permute.xlu0 %1504
        %1506 = vrot.lane.b32.xlu0 %v618, 32
        %v1507 = vpop.permute.xlu0 %1506
        %1508 = vrot.lane.b32.xlu0 %v619, 32
        %v1509 = vpop.permute.xlu0 %1508
        %1510 = vrot.lane.b32.xlu0 %v620, 32
        %v1511 = vpop.permute.xlu0 %1510
        %1512 = vrot.lane.b32.xlu0 %v621, 32
        %v1513 = vpop.permute.xlu0 %1512
        %1514 = vrot.lane.b32.xlu0 %v622, 32
        %v1515 = vpop.permute.xlu0 %1514
        %1516 = vrot.lane.b32.xlu0 %v623, 32
        %v1517 = vpop.permute.xlu0 %1516
        %1518 = vrot.lane.b32.xlu0 %v624, 32
        %v1519 = vpop.permute.xlu0 %1518
        %1520 = vrot.lane.b32.xlu0 %v625, 32
        %v1521 = vpop.permute.xlu0 %1520
        %1522 = vrot.lane.b32.xlu0 %v626, 32
        %v1523 = vpop.permute.xlu0 %1522
        %1524 = vrot.lane.b32.xlu0 %v627, 32
        %v1525 = vpop.permute.xlu0 %1524
        %1526 = vrot.lane.b32.xlu0 %v628, 32
        %v1527 = vpop.permute.xlu0 %1526
        %1528 = vrot.lane.b32.xlu0 %v629, 32
        %v1529 = vpop.permute.xlu0 %1528
        %1786 = vrot.lane.b32.xlu0 %v1144, 64
        %v1787 = vpop.permute.xlu0 %1786
        %1788 = vrot.lane.b32.xlu0 %v1143, 64
        %v1789 = vpop.permute.xlu0 %1788
        %1790 = vrot.lane.b32.xlu0 %v1142, 64
        %v1791 = vpop.permute.xlu0 %1790
        %1792 = vrot.lane.b32.xlu0 %v1141, 64
        %v1793 = vpop.permute.xlu0 %1792
        %1794 = vrot.lane.b32.xlu0 %v1140, 64
        %v1795 = vpop.permute.xlu0 %1794
        %1796 = vrot.lane.b32.xlu0 %v1139, 64
        %v1797 = vpop.permute.xlu0 %1796
        %1798 = vrot.lane.b32.xlu0 %v1138, 64
        %v1799 = vpop.permute.xlu0 %1798
        %1800 = vrot.lane.b32.xlu0 %v1137, 64
        %v1801 = vpop.permute.xlu0 %1800
        %1802 = vrot.lane.b32.xlu0 %v1136, 64
        %v1803 = vpop.permute.xlu0 %1802
        %1804 = vrot.lane.b32.xlu0 %v1135, 64
        %v1805 = vpop.permute.xlu0 %1804
        %1806 = vrot.lane.b32.xlu0 %v1134, 64
        %v1807 = vpop.permute.xlu0 %1806
        %1808 = vrot.lane.b32.xlu0 %v1133, 64
        %v1809 = vpop.permute.xlu0 %1808
        %1810 = vrot.lane.b32.xlu0 %v1132, 64
        %v1811 = vpop.permute.xlu0 %1810
        %1812 = vrot.lane.b32.xlu0 %v1131, 64
        %v1813 = vpop.permute.xlu0 %1812
        %1814 = vrot.lane.b32.xlu0 %v1130, 64
        %v1815 = vpop.permute.xlu0 %1814
        %1816 = vrot.lane.b32.xlu0 %v1129, 64
        %v1817 = vpop.permute.xlu0 %1816
        %1818 = vrot.lane.b32.xlu0 %v1128, 64
        %v1819 = vpop.permute.xlu0 %1818
        %1820 = vrot.lane.b32.xlu0 %v1127, 64
        %v1821 = vpop.permute.xlu0 %1820
        %1822 = vrot.lane.b32.xlu0 %v1126, 64
        %v1823 = vpop.permute.xlu0 %1822
        %1824 = vrot.lane.b32.xlu0 %v1125, 64
        %v1825 = vpop.permute.xlu0 %1824
        %1826 = vrot.lane.b32.xlu0 %v1124, 64
        %v1827 = vpop.permute.xlu0 %1826
        %1828 = vrot.lane.b32.xlu0 %v1123, 64
        %v1829 = vpop.permute.xlu0 %1828
        %1830 = vrot.lane.b32.xlu0 %v1122, 64
        %v1831 = vpop.permute.xlu0 %1830
        %1832 = vrot.lane.b32.xlu0 %v1121, 64
        %v1833 = vpop.permute.xlu0 %1832
        %1834 = vrot.lane.b32.xlu0 %v1120, 64
        %v1835 = vpop.permute.xlu0 %1834
        %1836 = vrot.lane.b32.xlu0 %v1119, 64
        %v1837 = vpop.permute.xlu0 %1836
        %1838 = vrot.lane.b32.xlu0 %v1118, 64
        %v1839 = vpop.permute.xlu0 %1838
        %1840 = vrot.lane.b32.xlu0 %v1117, 64
        %v1841 = vpop.permute.xlu0 %1840
        %1842 = vrot.lane.b32.xlu0 %v1116, 64
        %v1843 = vpop.permute.xlu0 %1842
        %1844 = vrot.lane.b32.xlu0 %v1115, 64
        %v1845 = vpop.permute.xlu0 %1844
        %1846 = vrot.lane.b32.xlu0 %v1114, 64
        %v1847 = vpop.permute.xlu0 %1846
        %1848 = vrot.lane.b32.xlu0 %v1113, 64
        %v1849 = vpop.permute.xlu0 %1848
        %1850 = vrot.lane.b32.xlu0 %v1112, 64
        %v1851 = vpop.permute.xlu0 %1850
        %1852 = vrot.lane.b32.xlu0 %v1111, 64
        %v1853 = vpop.permute.xlu0 %1852
        %1854 = vrot.lane.b32.xlu0 %v1110, 64
        %v1855 = vpop.permute.xlu0 %1854
        %1856 = vrot.lane.b32.xlu0 %v1109, 64
        %v1857 = vpop.permute.xlu0 %1856
        %1858 = vrot.lane.b32.xlu0 %v1108, 64
        %v1859 = vpop.permute.xlu0 %1858
        %1860 = vrot.lane.b32.xlu0 %v1107, 64
        %v1861 = vpop.permute.xlu0 %1860
        %1862 = vrot.lane.b32.xlu0 %v1106, 64
        %v1863 = vpop.permute.xlu0 %1862
        %1864 = vrot.lane.b32.xlu0 %v1105, 64
        %v1865 = vpop.permute.xlu0 %1864
        %1866 = vrot.lane.b32.xlu0 %v1104, 64
        %v1867 = vpop.permute.xlu0 %1866
        %1868 = vrot.lane.b32.xlu0 %v1103, 64
        %v1869 = vpop.permute.xlu0 %1868
        %1870 = vrot.lane.b32.xlu0 %v1102, 64
        %v1871 = vpop.permute.xlu0 %1870
        %1872 = vrot.lane.b32.xlu0 %v1101, 64
        %v1873 = vpop.permute.xlu0 %1872
        %1874 = vrot.lane.b32.xlu0 %v1100, 64
        %v1875 = vpop.permute.xlu0 %1874
        %1876 = vrot.lane.b32.xlu0 %v1099, 64
        %v1877 = vpop.permute.xlu0 %1876
        %1878 = vrot.lane.b32.xlu0 %v1098, 64
        %v1879 = vpop.permute.xlu0 %1878
        %1880 = vrot.lane.b32.xlu0 %v1097, 64
        %v1881 = vpop.permute.xlu0 %1880
        %1882 = vrot.lane.b32.xlu0 %v1096, 64
        %v1883 = vpop.permute.xlu0 %1882
        %1884 = vrot.lane.b32.xlu0 %v1095, 64
        %v1885 = vpop.permute.xlu0 %1884
        %1886 = vrot.lane.b32.xlu0 %v1094, 64
        %v1887 = vpop.permute.xlu0 %1886
        %1888 = vrot.lane.b32.xlu0 %v1093, 64
        %v1889 = vpop.permute.xlu0 %1888
        %1890 = vrot.lane.b32.xlu0 %v1092, 64
        %v1891 = vpop.permute.xlu0 %1890
        %1892 = vrot.lane.b32.xlu0 %v1091, 64
        %v1893 = vpop.permute.xlu0 %1892
        %1894 = vrot.lane.b32.xlu0 %v1090, 64
        %v1895 = vpop.permute.xlu0 %1894
        %1896 = vrot.lane.b32.xlu0 %v1089, 64
        %v1897 = vpop.permute.xlu0 %1896
        %1898 = vrot.lane.b32.xlu0 %v1088, 64
        %v1899 = vpop.permute.xlu0 %1898
        %1900 = vrot.lane.b32.xlu0 %v1087, 64
        %v1901 = vpop.permute.xlu0 %1900
        %1902 = vrot.lane.b32.xlu0 %v1086, 64
        %v1903 = vpop.permute.xlu0 %1902
        %1904 = vrot.lane.b32.xlu0 %v1085, 64
        %v1905 = vpop.permute.xlu0 %1904
        %1906 = vrot.lane.b32.xlu0 %v1084, 64
        %v1907 = vpop.permute.xlu0 %1906
        %1908 = vrot.lane.b32.xlu0 %v1083, 64
        %v1909 = vpop.permute.xlu0 %1908
        %1910 = vrot.lane.b32.xlu0 %v1082, 64
        %v1911 = vpop.permute.xlu0 %1910
        %1912 = vrot.lane.b32.xlu0 %v1081, 64
        %v1913 = vpop.permute.xlu0 %1912
        %1914 = vrot.lane.b32.xlu0 %v1080, 64
        %v1915 = vpop.permute.xlu0 %1914
        %1916 = vrot.lane.b32.xlu0 %v1079, 64
        %v1917 = vpop.permute.xlu0 %1916
        %1918 = vrot.lane.b32.xlu0 %v1078, 64
        %v1919 = vpop.permute.xlu0 %1918
        %1920 = vrot.lane.b32.xlu0 %v1077, 64
        %v1921 = vpop.permute.xlu0 %1920
        %1922 = vrot.lane.b32.xlu0 %v1076, 64
        %v1923 = vpop.permute.xlu0 %1922
        %1924 = vrot.lane.b32.xlu0 %v1075, 64
        %v1925 = vpop.permute.xlu0 %1924
        %1926 = vrot.lane.b32.xlu0 %v1074, 64
        %v1927 = vpop.permute.xlu0 %1926
        %1928 = vrot.lane.b32.xlu0 %v1073, 64
        %v1929 = vpop.permute.xlu0 %1928
        %1930 = vrot.lane.b32.xlu0 %v1072, 64
        %v1931 = vpop.permute.xlu0 %1930
        %1932 = vrot.lane.b32.xlu0 %v1071, 64
        %v1933 = vpop.permute.xlu0 %1932
        %1934 = vrot.lane.b32.xlu0 %v1070, 64
        %v1935 = vpop.permute.xlu0 %1934
        %1936 = vrot.lane.b32.xlu0 %v1069, 64
        %v1937 = vpop.permute.xlu0 %1936
        %1938 = vrot.lane.b32.xlu0 %v1068, 64
        %v1939 = vpop.permute.xlu0 %1938
        %1940 = vrot.lane.b32.xlu0 %v1067, 64
        %v1941 = vpop.permute.xlu0 %1940
        %1942 = vrot.lane.b32.xlu0 %v1066, 64
        %v1943 = vpop.permute.xlu0 %1942
        %1944 = vrot.lane.b32.xlu0 %v1065, 64
        %v1945 = vpop.permute.xlu0 %1944
        %1946 = vrot.lane.b32.xlu0 %v1064, 64
        %v1947 = vpop.permute.xlu0 %1946
        %1948 = vrot.lane.b32.xlu0 %v1063, 64
        %v1949 = vpop.permute.xlu0 %1948
        %1950 = vrot.lane.b32.xlu0 %v1062, 64
        %v1951 = vpop.permute.xlu0 %1950
        %1952 = vrot.lane.b32.xlu0 %v1061, 64
        %v1953 = vpop.permute.xlu0 %1952
        %1954 = vrot.lane.b32.xlu0 %v1060, 64
        %v1955 = vpop.permute.xlu0 %1954
        %1956 = vrot.lane.b32.xlu0 %v1059, 64
        %v1957 = vpop.permute.xlu0 %1956
        %1958 = vrot.lane.b32.xlu0 %v1058, 64
        %v1959 = vpop.permute.xlu0 %1958
        %1960 = vrot.lane.b32.xlu0 %v1057, 64
        %v1961 = vpop.permute.xlu0 %1960
        %1962 = vrot.lane.b32.xlu0 %v1056, 64
        %v1963 = vpop.permute.xlu0 %1962
        %1964 = vrot.lane.b32.xlu0 %v1055, 64
        %v1965 = vpop.permute.xlu0 %1964
        %1966 = vrot.lane.b32.xlu0 %v1054, 64
        %v1967 = vpop.permute.xlu0 %1966
        %1968 = vrot.lane.b32.xlu0 %v1053, 64
        %v1969 = vpop.permute.xlu0 %1968
        %1970 = vrot.lane.b32.xlu0 %v1052, 64
        %v1971 = vpop.permute.xlu0 %1970
        %1972 = vrot.lane.b32.xlu0 %v1051, 64
        %v1973 = vpop.permute.xlu0 %1972
        %1974 = vrot.lane.b32.xlu0 %v1050, 64
        %v1975 = vpop.permute.xlu0 %1974
        %1976 = vrot.lane.b32.xlu0 %v1049, 64
        %v1977 = vpop.permute.xlu0 %1976
        %1978 = vrot.lane.b32.xlu0 %v1048, 64
        %v1979 = vpop.permute.xlu0 %1978
        %1980 = vrot.lane.b32.xlu0 %v1047, 64
        %v1981 = vpop.permute.xlu0 %1980
        %1982 = vrot.lane.b32.xlu0 %v1046, 64
        %v1983 = vpop.permute.xlu0 %1982
        %1984 = vrot.lane.b32.xlu0 %v1045, 64
        %v1985 = vpop.permute.xlu0 %1984
        %1986 = vrot.lane.b32.xlu0 %v1044, 64
        %v1987 = vpop.permute.xlu0 %1986
        %1988 = vrot.lane.b32.xlu0 %v1043, 64
        %v1989 = vpop.permute.xlu0 %1988
        %1990 = vrot.lane.b32.xlu0 %v1042, 64
        %v1991 = vpop.permute.xlu0 %1990
        %1992 = vrot.lane.b32.xlu0 %v1041, 64
        %v1993 = vpop.permute.xlu0 %1992
        %1994 = vrot.lane.b32.xlu0 %v1040, 64
        %v1995 = vpop.permute.xlu0 %1994
        %1996 = vrot.lane.b32.xlu0 %v1039, 64
        %v1997 = vpop.permute.xlu0 %1996
        %1998 = vrot.lane.b32.xlu0 %v1038, 64
        %v1999 = vpop.permute.xlu0 %1998
        %2000 = vrot.lane.b32.xlu0 %v1037, 64
        %v2001 = vpop.permute.xlu0 %2000
        %2002 = vrot.lane.b32.xlu0 %v1036, 64
        %v2003 = vpop.permute.xlu0 %2002
        %2004 = vrot.lane.b32.xlu0 %v1035, 64
        %v2005 = vpop.permute.xlu0 %2004
        %2006 = vrot.lane.b32.xlu0 %v1034, 64
        %v2007 = vpop.permute.xlu0 %2006
        %2008 = vrot.lane.b32.xlu0 %v1033, 64
        %v2009 = vpop.permute.xlu0 %2008
        %2010 = vrot.lane.b32.xlu0 %v1032, 64
        %v2011 = vpop.permute.xlu0 %2010
        %2012 = vrot.lane.b32.xlu0 %v1031, 64
        %v2013 = vpop.permute.xlu0 %2012
        %2014 = vrot.lane.b32.xlu0 %v1030, 64
        %v2015 = vpop.permute.xlu0 %2014
        %2016 = vrot.lane.b32.xlu0 %v1029, 64
        %v2017 = vpop.permute.xlu0 %2016
        %2018 = vrot.lane.b32.xlu0 %v1028, 64
        %v2019 = vpop.permute.xlu0 %2018
        %2020 = vrot.lane.b32.xlu0 %v1027, 64
        %v2021 = vpop.permute.xlu0 %2020
        %2022 = vrot.lane.b32.xlu0 %v1026, 64
        %v2023 = vpop.permute.xlu0 %2022
        %2024 = vrot.lane.b32.xlu0 %v1025, 64
        %v2025 = vpop.permute.xlu0 %2024
        %2026 = vrot.lane.b32.xlu0 %v1024, 64
        %v2027 = vpop.permute.xlu0 %2026
        %2028 = vrot.lane.b32.xlu0 %v1023, 64
        %v2029 = vpop.permute.xlu0 %2028
        %2030 = vrot.lane.b32.xlu0 %v1022, 64
        %v2031 = vpop.permute.xlu0 %2030
        %2032 = vrot.lane.b32.xlu0 %v1021, 64
        %v2033 = vpop.permute.xlu0 %2032
        %2034 = vrot.lane.b32.xlu0 %v1020, 64
        %v2035 = vpop.permute.xlu0 %2034
        %2036 = vrot.lane.b32.xlu0 %v1019, 64
        %v2037 = vpop.permute.xlu0 %2036
        %2038 = vrot.lane.b32.xlu0 %v1018, 64
        %v2039 = vpop.permute.xlu0 %2038
        %2040 = vrot.lane.b32.xlu0 %v1145, 64
        %v2041 = vpop.permute.xlu0 %2040
        %vm2170 = vcmask 261120
        %v2171 = vsel %vm2170, %v888, %v1275
        %v2172 = vsel %vm2170, %v887, %v1277
        %v2173 = vsel %vm2170, %v886, %v1279
        %v2174 = vsel %vm2170, %v885, %v1281
        %v2175 = vsel %vm2170, %v884, %v1283
        %v2176 = vsel %vm2170, %v883, %v1285
        %v2177 = vsel %vm2170, %v882, %v1287
        %v2178 = vsel %vm2170, %v881, %v1289
        %v2179 = vsel %vm2170, %v880, %v1291
        %v2180 = vsel %vm2170, %v879, %v1293
        %v2181 = vsel %vm2170, %v878, %v1295
        %v2182 = vsel %vm2170, %v877, %v1297
        %v2183 = vsel %vm2170, %v876, %v1299
        %v2184 = vsel %vm2170, %v875, %v1301
        %v2185 = vsel %vm2170, %v874, %v1303
        %v2186 = vsel %vm2170, %v873, %v1305
        %v2187 = vsel %vm2170, %v872, %v1307
        %v2188 = vsel %vm2170, %v871, %v1309
        %v2189 = vsel %vm2170, %v870, %v1311
        %v2190 = vsel %vm2170, %v869, %v1313
        %v2191 = vsel %vm2170, %v868, %v1315
        %v2192 = vsel %vm2170, %v867, %v1317
        %v2193 = vsel %vm2170, %v866, %v1319
        %v2194 = vsel %vm2170, %v865, %v1321
        %v2195 = vsel %vm2170, %v864, %v1323
        %v2196 = vsel %vm2170, %v863, %v1325
        %v2197 = vsel %vm2170, %v862, %v1327
        %v2198 = vsel %vm2170, %v861, %v1329
        %v2199 = vsel %vm2170, %v860, %v1331
        %v2200 = vsel %vm2170, %v859, %v1333
        %v2201 = vsel %vm2170, %v858, %v1335
        %v2202 = vsel %vm2170, %v857, %v1337
        %v2203 = vsel %vm2170, %v856, %v1339
        %v2204 = vsel %vm2170, %v855, %v1341
        %v2205 = vsel %vm2170, %v854, %v1343
        %v2206 = vsel %vm2170, %v853, %v1345
        %v2207 = vsel %vm2170, %v852, %v1347
        %v2208 = vsel %vm2170, %v851, %v1349
        %v2209 = vsel %vm2170, %v850, %v1351
        %v2210 = vsel %vm2170, %v849, %v1353
        %v2211 = vsel %vm2170, %v848, %v1355
        %v2212 = vsel %vm2170, %v847, %v1357
        %v2213 = vsel %vm2170, %v846, %v1359
        %v2214 = vsel %vm2170, %v845, %v1361
        %v2215 = vsel %vm2170, %v844, %v1363
        %v2216 = vsel %vm2170, %v843, %v1365
        %v2217 = vsel %vm2170, %v842, %v1367
        %v2218 = vsel %vm2170, %v841, %v1369
        %v2219 = vsel %vm2170, %v840, %v1371
        %v2220 = vsel %vm2170, %v839, %v1373
        %v2221 = vsel %vm2170, %v838, %v1375
        %v2222 = vsel %vm2170, %v837, %v1377
        %v2223 = vsel %vm2170, %v836, %v1379
        %v2224 = vsel %vm2170, %v835, %v1381
        %v2225 = vsel %vm2170, %v834, %v1383
        %v2226 = vsel %vm2170, %v833, %v1385
        %v2227 = vsel %vm2170, %v832, %v1387
        %v2228 = vsel %vm2170, %v831, %v1389
        %v2229 = vsel %vm2170, %v830, %v1391
        %v2230 = vsel %vm2170, %v829, %v1393
        %v2231 = vsel %vm2170, %v828, %v1395
        %v2232 = vsel %vm2170, %v827, %v1397
        %v2233 = vsel %vm2170, %v826, %v1399
        %v2234 = vsel %vm2170, %v825, %v1401
        %v2235 = vsel %vm2170, %v824, %v1403
        %v2236 = vsel %vm2170, %v823, %v1405
        %v2237 = vsel %vm2170, %v822, %v1407
        %v2238 = vsel %vm2170, %v821, %v1409
        %v2239 = vsel %vm2170, %v820, %v1411
        %v2240 = vsel %vm2170, %v819, %v1413
        %v2241 = vsel %vm2170, %v818, %v1415
        %v2242 = vsel %vm2170, %v817, %v1417
        %v2243 = vsel %vm2170, %v816, %v1419
        %v2244 = vsel %vm2170, %v815, %v1421
        %v2245 = vsel %vm2170, %v814, %v1423
        %v2246 = vsel %vm2170, %v813, %v1425
        %v2247 = vsel %vm2170, %v812, %v1427
        %v2248 = vsel %vm2170, %v811, %v1429
        %v2249 = vsel %vm2170, %v810, %v1431
        %v2250 = vsel %vm2170, %v809, %v1433
        %v2251 = vsel %vm2170, %v808, %v1435
        %v2252 = vsel %vm2170, %v807, %v1437
        %v2253 = vsel %vm2170, %v806, %v1439
        %v2254 = vsel %vm2170, %v805, %v1441
        %v2255 = vsel %vm2170, %v804, %v1443
        %v2256 = vsel %vm2170, %v803, %v1445
        %v2257 = vsel %vm2170, %v802, %v1447
        %v2258 = vsel %vm2170, %v801, %v1449
        %v2259 = vsel %vm2170, %v800, %v1451
        %v2260 = vsel %vm2170, %v799, %v1453
        %v2261 = vsel %vm2170, %v798, %v1455
        %v2262 = vsel %vm2170, %v797, %v1457
        %v2263 = vsel %vm2170, %v796, %v1459
        %v2264 = vsel %vm2170, %v795, %v1461
        %v2265 = vsel %vm2170, %v794, %v1463
        %v2266 = vsel %vm2170, %v793, %v1465
        %v2267 = vsel %vm2170, %v792, %v1467
        %v2268 = vsel %vm2170, %v791, %v1469
        %v2269 = vsel %vm2170, %v790, %v1471
        %v2270 = vsel %vm2170, %v789, %v1473
        %v2271 = vsel %vm2170, %v788, %v1475
        %v2272 = vsel %vm2170, %v787, %v1477
        %v2273 = vsel %vm2170, %v786, %v1479
        %v2274 = vsel %vm2170, %v785, %v1481
        %v2275 = vsel %vm2170, %v784, %v1483
        %v2276 = vsel %vm2170, %v783, %v1485
        %v2277 = vsel %vm2170, %v782, %v1487
        %v2278 = vsel %vm2170, %v781, %v1489
        %v2279 = vsel %vm2170, %v780, %v1491
        %v2280 = vsel %vm2170, %v779, %v1493
        %v2281 = vsel %vm2170, %v778, %v1495
        %v2282 = vsel %vm2170, %v777, %v1497
        %v2283 = vsel %vm2170, %v776, %v1499
        %v2284 = vsel %vm2170, %v775, %v1501
        %v2285 = vsel %vm2170, %v774, %v1503
        %v2286 = vsel %vm2170, %v773, %v1505
        %v2287 = vsel %vm2170, %v772, %v1507
        %v2288 = vsel %vm2170, %v771, %v1509
        %v2289 = vsel %vm2170, %v770, %v1511
        %v2290 = vsel %vm2170, %v769, %v1513
        %v2291 = vsel %vm2170, %v768, %v1515
        %v2292 = vsel %vm2170, %v767, %v1517
        %v2293 = vsel %vm2170, %v766, %v1519
        %v2294 = vsel %vm2170, %v765, %v1521
        %v2295 = vsel %vm2170, %v764, %v1523
        %v2296 = vsel %vm2170, %v763, %v1525
        %v2297 = vsel %vm2170, %v762, %v1527
        %v2298 = vsel %vm2170, %v761, %v1529
        %vm2299 = vcmask 523264
        %v2300 = vsel %vm2299, %v2171, %v1787
        %v2301 = vsel %vm2299, %v2172, %v1789
        %v2302 = vsel %vm2299, %v2173, %v1791
        %v2303 = vsel %vm2299, %v2174, %v1793
        %v2304 = vsel %vm2299, %v2175, %v1795
        %v2305 = vsel %vm2299, %v2176, %v1797
        %v2306 = vsel %vm2299, %v2177, %v1799
        %v2307 = vsel %vm2299, %v2178, %v1801
        %v2308 = vsel %vm2299, %v2179, %v1803
        %v2309 = vsel %vm2299, %v2180, %v1805
        %v2310 = vsel %vm2299, %v2181, %v1807
        %v2311 = vsel %vm2299, %v2182, %v1809
        %v2312 = vsel %vm2299, %v2183, %v1811
        %v2313 = vsel %vm2299, %v2184, %v1813
        %v2314 = vsel %vm2299, %v2185, %v1815
        %v2315 = vsel %vm2299, %v2186, %v1817
        %v2316 = vsel %vm2299, %v2187, %v1819
        %v2317 = vsel %vm2299, %v2188, %v1821
        %v2318 = vsel %vm2299, %v2189, %v1823
        %v2319 = vsel %vm2299, %v2190, %v1825
        %v2320 = vsel %vm2299, %v2191, %v1827
        %v2321 = vsel %vm2299, %v2192, %v1829
        %v2322 = vsel %vm2299, %v2193, %v1831
        %v2323 = vsel %vm2299, %v2194, %v1833
        %v2324 = vsel %vm2299, %v2195, %v1835
        %v2325 = vsel %vm2299, %v2196, %v1837
        %v2326 = vsel %vm2299, %v2197, %v1839
        %v2327 = vsel %vm2299, %v2198, %v1841
        %v2328 = vsel %vm2299, %v2199, %v1843
        %v2329 = vsel %vm2299, %v2200, %v1845
        %v2330 = vsel %vm2299, %v2201, %v1847
        %v2331 = vsel %vm2299, %v2202, %v1849
        %v2332 = vsel %vm2299, %v2203, %v1851
        %v2333 = vsel %vm2299, %v2204, %v1853
        %v2334 = vsel %vm2299, %v2205, %v1855
        %v2335 = vsel %vm2299, %v2206, %v1857
        %v2336 = vsel %vm2299, %v2207, %v1859
        %v2337 = vsel %vm2299, %v2208, %v1861
        %v2338 = vsel %vm2299, %v2209, %v1863
        %v2339 = vsel %vm2299, %v2210, %v1865
        %v2340 = vsel %vm2299, %v2211, %v1867
        %v2341 = vsel %vm2299, %v2212, %v1869
        %v2342 = vsel %vm2299, %v2213, %v1871
        %v2343 = vsel %vm2299, %v2214, %v1873
        %v2344 = vsel %vm2299, %v2215, %v1875
        %v2345 = vsel %vm2299, %v2216, %v1877
        %v2346 = vsel %vm2299, %v2217, %v1879
        %v2347 = vsel %vm2299, %v2218, %v1881
        %v2348 = vsel %vm2299, %v2219, %v1883
        %v2349 = vsel %vm2299, %v2220, %v1885
        %v2350 = vsel %vm2299, %v2221, %v1887
        %v2351 = vsel %vm2299, %v2222, %v1889
        %v2352 = vsel %vm2299, %v2223, %v1891
        %v2353 = vsel %vm2299, %v2224, %v1893
        %v2354 = vsel %vm2299, %v2225, %v1895
        %v2355 = vsel %vm2299, %v2226, %v1897
        %v2356 = vsel %vm2299, %v2227, %v1899
        %v2357 = vsel %vm2299, %v2228, %v1901
        %v2358 = vsel %vm2299, %v2229, %v1903
        %v2359 = vsel %vm2299, %v2230, %v1905
        %v2360 = vsel %vm2299, %v2231, %v1907
        %v2361 = vsel %vm2299, %v2232, %v1909
        %v2362 = vsel %vm2299, %v2233, %v1911
        %v2363 = vsel %vm2299, %v2234, %v1913
        %v2364 = vsel %vm2299, %v2235, %v1915
        %v2365 = vsel %vm2299, %v2236, %v1917
        %v2366 = vsel %vm2299, %v2237, %v1919
        %v2367 = vsel %vm2299, %v2238, %v1921
        %v2368 = vsel %vm2299, %v2239, %v1923
        %v2369 = vsel %vm2299, %v2240, %v1925
        %v2370 = vsel %vm2299, %v2241, %v1927
        %v2371 = vsel %vm2299, %v2242, %v1929
        %v2372 = vsel %vm2299, %v2243, %v1931
        %v2373 = vsel %vm2299, %v2244, %v1933
        %v2374 = vsel %vm2299, %v2245, %v1935
        %v2375 = vsel %vm2299, %v2246, %v1937
        %v2376 = vsel %vm2299, %v2247, %v1939
        %v2377 = vsel %vm2299, %v2248, %v1941
        %v2378 = vsel %vm2299, %v2249, %v1943
        %v2379 = vsel %vm2299, %v2250, %v1945
        %v2380 = vsel %vm2299, %v2251, %v1947
        %v2381 = vsel %vm2299, %v2252, %v1949
        %v2382 = vsel %vm2299, %v2253, %v1951
        %v2383 = vsel %vm2299, %v2254, %v1953
        %v2384 = vsel %vm2299, %v2255, %v1955
        %v2385 = vsel %vm2299, %v2256, %v1957
        %v2386 = vsel %vm2299, %v2257, %v1959
        %v2387 = vsel %vm2299, %v2258, %v1961
        %v2388 = vsel %vm2299, %v2259, %v1963
        %v2389 = vsel %vm2299, %v2260, %v1965
        %v2390 = vsel %vm2299, %v2261, %v1967
        %v2391 = vsel %vm2299, %v2262, %v1969
        %v2392 = vsel %vm2299, %v2263, %v1971
        %v2393 = vsel %vm2299, %v2264, %v1973
        %v2394 = vsel %vm2299, %v2265, %v1975
        %v2395 = vsel %vm2299, %v2266, %v1977
        %v2396 = vsel %vm2299, %v2267, %v1979
        %v2397 = vsel %vm2299, %v2268, %v1981
        %v2398 = vsel %vm2299, %v2269, %v1983
        %v2399 = vsel %vm2299, %v2270, %v1985
        %v2400 = vsel %vm2299, %v2271, %v1987
        %v2401 = vsel %vm2299, %v2272, %v1989
        %v2402 = vsel %vm2299, %v2273, %v1991
        %v2403 = vsel %vm2299, %v2274, %v1993
        %v2404 = vsel %vm2299, %v2275, %v1995
        %v2405 = vsel %vm2299, %v2276, %v1997
        %v2406 = vsel %vm2299, %v2277, %v1999
        %v2407 = vsel %vm2299, %v2278, %v2001
        %v2408 = vsel %vm2299, %v2279, %v2003
        %v2409 = vsel %vm2299, %v2280, %v2005
        %v2410 = vsel %vm2299, %v2281, %v2007
        %v2411 = vsel %vm2299, %v2282, %v2009
        %v2412 = vsel %vm2299, %v2283, %v2011
        %v2413 = vsel %vm2299, %v2284, %v2013
        %v2414 = vsel %vm2299, %v2285, %v2015
        %v2415 = vsel %vm2299, %v2286, %v2017
        %v2416 = vsel %vm2299, %v2287, %v2019
        %v2417 = vsel %vm2299, %v2288, %v2021
        %v2418 = vsel %vm2299, %v2289, %v2023
        %v2419 = vsel %vm2299, %v2290, %v2025
        %v2420 = vsel %vm2299, %v2291, %v2027
        %v2421 = vsel %vm2299, %v2292, %v2029
        %v2422 = vsel %vm2299, %v2293, %v2031
        %v2423 = vsel %vm2299, %v2294, %v2033
        %v2424 = vsel %vm2299, %v2295, %v2035
        %v2425 = vsel %vm2299, %v2296, %v2037
        %v2426 = vsel %vm2299, %v2297, %v2039
        %v2427 = vsel %vm2299, %v2298, %v2041
        %v2428 = vpack.c.bf16 %v2301, %v2300
        %v2429 = vpack.c.bf16 %v2303, %v2302
        %v2430 = vpack.c.bf16 %v2305, %v2304
        %v2431 = vpack.c.bf16 %v2307, %v2306
        %v2432 = vpack.c.bf16 %v2309, %v2308
        %v2433 = vpack.c.bf16 %v2311, %v2310
        %v2434 = vpack.c.bf16 %v2313, %v2312
        %v2435 = vpack.c.bf16 %v2315, %v2314
        %v2436 = vpack.c.bf16 %v2317, %v2316
        %v2437 = vpack.c.bf16 %v2319, %v2318
        %v2438 = vpack.c.bf16 %v2321, %v2320
        %v2439 = vpack.c.bf16 %v2323, %v2322
        %v2440 = vpack.c.bf16 %v2325, %v2324
        %v2441 = vpack.c.bf16 %v2327, %v2326
        %v2442 = vpack.c.bf16 %v2329, %v2328
        %v2443 = vpack.c.bf16 %v2331, %v2330
        %v2444 = vpack.c.bf16 %v2333, %v2332
        %v2445 = vpack.c.bf16 %v2335, %v2334
        %v2446 = vpack.c.bf16 %v2337, %v2336
        %v2447 = vpack.c.bf16 %v2339, %v2338
        %v2448 = vpack.c.bf16 %v2341, %v2340
        %v2449 = vpack.c.bf16 %v2343, %v2342
        %v2450 = vpack.c.bf16 %v2345, %v2344
        %v2451 = vpack.c.bf16 %v2347, %v2346
        %v2452 = vpack.c.bf16 %v2349, %v2348
        %v2453 = vpack.c.bf16 %v2351, %v2350
        %v2454 = vpack.c.bf16 %v2353, %v2352
        %v2455 = vpack.c.bf16 %v2355, %v2354
        %v2456 = vpack.c.bf16 %v2357, %v2356
        %v2457 = vpack.c.bf16 %v2359, %v2358
        %v2458 = vpack.c.bf16 %v2361, %v2360
        %v2459 = vpack.c.bf16 %v2363, %v2362
        %v2460 = vpack.c.bf16 %v2365, %v2364
        %v2461 = vpack.c.bf16 %v2367, %v2366
        %v2462 = vpack.c.bf16 %v2369, %v2368
        %v2463 = vpack.c.bf16 %v2371, %v2370
        %v2464 = vpack.c.bf16 %v2373, %v2372
        %v2465 = vpack.c.bf16 %v2375, %v2374
        %v2466 = vpack.c.bf16 %v2377, %v2376
        %v2467 = vpack.c.bf16 %v2379, %v2378
        %v2468 = vpack.c.bf16 %v2381, %v2380
        %v2469 = vpack.c.bf16 %v2383, %v2382
        %v2470 = vpack.c.bf16 %v2385, %v2384
        %v2471 = vpack.c.bf16 %v2387, %v2386
        %v2472 = vpack.c.bf16 %v2389, %v2388
        %v2473 = vpack.c.bf16 %v2391, %v2390
        %v2474 = vpack.c.bf16 %v2393, %v2392
        %v2475 = vpack.c.bf16 %v2395, %v2394
        %v2476 = vpack.c.bf16 %v2397, %v2396
        %v2477 = vpack.c.bf16 %v2399, %v2398
        %v2478 = vpack.c.bf16 %v2401, %v2400
        %v2479 = vpack.c.bf16 %v2403, %v2402
        %v2480 = vpack.c.bf16 %v2405, %v2404
        %v2481 = vpack.c.bf16 %v2407, %v2406
        %v2482 = vpack.c.bf16 %v2409, %v2408
        %v2483 = vpack.c.bf16 %v2411, %v2410
        %v2484 = vpack.c.bf16 %v2413, %v2412
        %v2485 = vpack.c.bf16 %v2415, %v2414
        %v2486 = vpack.c.bf16 %v2417, %v2416
        %v2487 = vpack.c.bf16 %v2419, %v2418
        %v2488 = vpack.c.bf16 %v2421, %v2420
        %v2489 = vpack.c.bf16 %v2423, %v2422
        %v2490 = vpack.c.bf16 %v2425, %v2424
        %v2491 = vpack.c.bf16 %v2427, %v2426
        %v2492 = vlaneseq
        %v2493 = vshrl.u32 %v2492, 7
        %v2494 = vsub.s32 0, %v2493
        %v2495 = vrot.slane %v364, %v2494
        %v2508 = vunpack.c.l.b16 %v324
        %v2509 = vunpack.c.l.b16 %v325
        %v2510 = vunpack.c.l.b16 %v326
        %v2511 = vunpack.c.l.b16 %v327
        %v2512 = vunpack.c.l.b16 %v328
        %v2513 = vunpack.c.l.b16 %v329
        %v2514 = vunpack.c.l.b16 %v330
        %v2515 = vunpack.c.l.b16 %v331
        %v2516 = vunpack.c.l.b16 %v332
        %v2517 = vunpack.c.l.b16 %v333
        %v2518 = vunpack.c.l.b16 %v334
        %v2519 = vunpack.c.l.b16 %v335
        %v2520 = vpack.c.b16 %v2509, %v2508
        %v2521 = vpack.c.b16 %v2511, %v2510
        %v2522 = vpack.c.b16 %v2513, %v2512
        %v2523 = vpack.c.b16 %v2515, %v2514
        %v2524 = vpack.c.b16 %v2517, %v2516
        %v2525 = vpack.c.b16 %v2519, %v2518
        %vm2532 = vcmask 785408
        %v2534 = vsel %vm2532, %v2428, 0
        %v2537 = vsel %vm2532, %v2429, 0
        %v2540 = vsel %vm2532, %v2430, 0
        %v2543 = vsel %vm2532, %v2431, 0
        %v2546 = vsel %vm2532, %v2432, 0
        %v2549 = vsel %vm2532, %v2433, 0
        %v2552 = vsel %vm2532, %v2434, 0
        %v2555 = vsel %vm2532, %v2435, 0
        %v2558 = vsel %vm2532, %v2436, 0
        %v2561 = vsel %vm2532, %v2437, 0
        %v2564 = vsel %vm2532, %v2438, 0
        %v2567 = vsel %vm2532, %v2439, 0
        %v2570 = vsel %vm2532, %v2440, 0
        %v2573 = vsel %vm2532, %v2441, 0
        %v2576 = vsel %vm2532, %v2442, 0
        %v2579 = vsel %vm2532, %v2443, 0
        %v2582 = vsel %vm2532, %v2444, 0
        %v2585 = vsel %vm2532, %v2445, 0
        %v2588 = vsel %vm2532, %v2446, 0
        %v2591 = vsel %vm2532, %v2447, 0
        %v2594 = vsel %vm2532, %v2448, 0
        %v2597 = vsel %vm2532, %v2449, 0
        %v2600 = vsel %vm2532, %v2450, 0
        %v2603 = vsel %vm2532, %v2451, 0
        %v2606 = vsel %vm2532, %v2452, 0
        %v2609 = vsel %vm2532, %v2453, 0
        %v2612 = vsel %vm2532, %v2454, 0
        %v2615 = vsel %vm2532, %v2455, 0
        %v2618 = vsel %vm2532, %v2456, 0
        %v2621 = vsel %vm2532, %v2457, 0
        %v2624 = vsel %vm2532, %v2458, 0
        %v2627 = vsel %vm2532, %v2459, 0
        %v2630 = vsel %vm2532, %v2460, 0
        %v2633 = vsel %vm2532, %v2461, 0
        %v2636 = vsel %vm2532, %v2462, 0
        %v2639 = vsel %vm2532, %v2463, 0
        %v2642 = vsel %vm2532, %v2464, 0
        %v2645 = vsel %vm2532, %v2465, 0
        %v2648 = vsel %vm2532, %v2466, 0
        %v2651 = vsel %vm2532, %v2467, 0
        %v2654 = vsel %vm2532, %v2468, 0
        %v2657 = vsel %vm2532, %v2469, 0
        %v2660 = vsel %vm2532, %v2470, 0
        %v2663 = vsel %vm2532, %v2471, 0
        %v2666 = vsel %vm2532, %v2472, 0
        %v2669 = vsel %vm2532, %v2473, 0
        %v2672 = vsel %vm2532, %v2474, 0
        %v2675 = vsel %vm2532, %v2475, 0
        %v2678 = vsel %vm2532, %v2476, 0
        %v2681 = vsel %vm2532, %v2477, 0
        %v2684 = vsel %vm2532, %v2478, 0
        %v2687 = vsel %vm2532, %v2479, 0
        %v2690 = vsel %vm2532, %v2480, 0
        %v2693 = vsel %vm2532, %v2481, 0
        %v2696 = vsel %vm2532, %v2482, 0
        %v2699 = vsel %vm2532, %v2483, 0
        %v2702 = vsel %vm2532, %v2484, 0
        %v2705 = vsel %vm2532, %v2485, 0
        %v2708 = vsel %vm2532, %v2486, 0
        %v2711 = vsel %vm2532, %v2487, 0
        %v2714 = vsel %vm2532, %v2488, 0
        %v2717 = vsel %vm2532, %v2489, 0
        %v2720 = vsel %vm2532, %v2490, 0
        %v2723 = vsel %vm2532, %v2491, 0
        %2725 = vmatprep.subr.bf16.mxu0 0
        %2726 = vmatpush1.bf16.msra.mxu0 0
        %2727 = vmatprep.subr.bf16.mxu0 0
        %2728 = vmatpush1.bf16.msra.mxu0 0
        %2729 = vmatprep.subr.bf16.mxu0 0
        %2730 = vmatpush1.bf16.msra.mxu0 %v2525
        %2731 = vmatprep.subr.bf16.mxu0 0
        %2732 = vmatpush1.bf16.msra.mxu0 %v2524
        %2733 = vmatprep.subr.bf16.mxu0 0
        %2734 = vmatpush1.bf16.msra.mxu0 %v2523
        %2735 = vmatprep.subr.bf16.mxu0 0
        %2736 = vmatpush1.bf16.msra.mxu0 %v2522
        %2737 = vmatprep.subr.bf16.mxu0 0
        %2738 = vmatpush1.bf16.msra.mxu0 %v2521
        %2739 = vmatprep.subr.bf16.mxu0 0
        %2740 = vmatpush1.bf16.msra.mxu0 %v2520
        %2741 = vmatprep.subr.bf16.mxu0 0
        %2742 = vmatpush2.bf16.msra.mxu0 0
        %2743 = vmatprep.subr.bf16.mxu0 0
        %2744 = vmatpush2.bf16.msra.mxu0 0
        %2745 = vmatprep.subr.bf16.mxu0 0
        %2746 = vmatpush2.bf16.msra.mxu0 0
        %2747 = vmatprep.subr.bf16.mxu0 0
        %2748 = vmatpush2.bf16.msra.mxu0 0
        %2749 = vmatprep.subr.bf16.mxu0 0
        %2750 = vmatpush2.bf16.msra.mxu0 0
        %2751 = vmatprep.subr.bf16.mxu0 0
        %2752 = vmatpush2.bf16.msra.mxu0 0
        %2753 = vmatprep.subr.bf16.mxu0 0
        %2754 = vmatpush2.bf16.msra.mxu0 0
        %2755 = vmatprep.subr.bf16.mxu0 0
        %2756 = vmatpush2.bf16.msra.mxu0 0
        %2757 = vmatprep.mubr.bf16.mxu0 0
        %2758 = vmatmul.mubr.bf16.gmra.mxu0 %v2534
        %v2759 = vpop.f32.mrf.mxu0
        %v2760 = vadd.f32 %v2495, %v2759
        %v2761 = vpop.f32.mrf.mxu0
        %v2762 = vpop.f32.mrf.mxu0
        %v2763 = vadd.f32 %v2495, %v2762
        %v2764 = vpop.f32.mrf.mxu0
        %2765 = vmatprep.mubr.bf16.mxu0 0
        %2766 = vmatmul.mubr.bf16.gmra.mxu0 %v2537
        %v2767 = vpop.f32.mrf.mxu0
        %v2768 = vadd.f32 %v2495, %v2767
        %v2769 = vpop.f32.mrf.mxu0
        %v2770 = vpop.f32.mrf.mxu0
        %v2771 = vadd.f32 %v2495, %v2770
        %v2772 = vpop.f32.mrf.mxu0
        %2773 = vmatprep.mubr.bf16.mxu0 0
        %2774 = vmatmul.mubr.bf16.gmra.mxu0 %v2540
        %v2775 = vpop.f32.mrf.mxu0
        %v2776 = vadd.f32 %v2495, %v2775
        %v2777 = vpop.f32.mrf.mxu0
        %v2778 = vpop.f32.mrf.mxu0
        %v2779 = vadd.f32 %v2495, %v2778
        %v2780 = vpop.f32.mrf.mxu0
        %2781 = vmatprep.mubr.bf16.mxu0 0
        %2782 = vmatmul.mubr.bf16.gmra.mxu0 %v2543
        %v2783 = vpop.f32.mrf.mxu0
        %v2784 = vadd.f32 %v2495, %v2783
        %v2785 = vpop.f32.mrf.mxu0
        %v2786 = vpop.f32.mrf.mxu0
        %v2787 = vadd.f32 %v2495, %v2786
        %v2788 = vpop.f32.mrf.mxu0
        %2789 = vmatprep.mubr.bf16.mxu0 0
        %2790 = vmatmul.mubr.bf16.gmra.mxu0 %v2546
        %v2791 = vpop.f32.mrf.mxu0
        %v2792 = vadd.f32 %v2495, %v2791
        %v2793 = vpop.f32.mrf.mxu0
        %v2794 = vpop.f32.mrf.mxu0
        %v2795 = vadd.f32 %v2495, %v2794
        %v2796 = vpop.f32.mrf.mxu0
        %2797 = vmatprep.mubr.bf16.mxu0 0
        %2798 = vmatmul.mubr.bf16.gmra.mxu0 %v2549
        %v2799 = vpop.f32.mrf.mxu0
        %v2800 = vadd.f32 %v2495, %v2799
        %v2801 = vpop.f32.mrf.mxu0
        %v2802 = vpop.f32.mrf.mxu0
        %v2803 = vadd.f32 %v2495, %v2802
        %v2804 = vpop.f32.mrf.mxu0
        %2805 = vmatprep.mubr.bf16.mxu0 0
        %2806 = vmatmul.mubr.bf16.gmra.mxu0 %v2552
        %v2807 = vpop.f32.mrf.mxu0
        %v2808 = vadd.f32 %v2495, %v2807
        %v2809 = vpop.f32.mrf.mxu0
        %v2810 = vpop.f32.mrf.mxu0
        %v2811 = vadd.f32 %v2495, %v2810
        %v2812 = vpop.f32.mrf.mxu0
        %2813 = vmatprep.mubr.bf16.mxu0 0
        %2814 = vmatmul.mubr.bf16.gmra.mxu0 %v2555
        %v2815 = vpop.f32.mrf.mxu0
        %v2816 = vadd.f32 %v2495, %v2815
        %v2817 = vpop.f32.mrf.mxu0
        %v2818 = vpop.f32.mrf.mxu0
        %v2819 = vadd.f32 %v2495, %v2818
        %v2820 = vpop.f32.mrf.mxu0
        %2821 = vmatprep.mubr.bf16.mxu0 0
        %2822 = vmatmul.mubr.bf16.gmra.mxu0 %v2558
        %v2823 = vpop.f32.mrf.mxu0
        %v2824 = vadd.f32 %v2495, %v2823
        %v2825 = vpop.f32.mrf.mxu0
        %v2826 = vpop.f32.mrf.mxu0
        %v2827 = vadd.f32 %v2495, %v2826
        %v2828 = vpop.f32.mrf.mxu0
        %2829 = vmatprep.mubr.bf16.mxu0 0
        %2830 = vmatmul.mubr.bf16.gmra.mxu0 %v2561
        %v2831 = vpop.f32.mrf.mxu0
        %v2832 = vadd.f32 %v2495, %v2831
        %v2833 = vpop.f32.mrf.mxu0
        %v2834 = vpop.f32.mrf.mxu0
        %v2835 = vadd.f32 %v2495, %v2834
        %v2836 = vpop.f32.mrf.mxu0
        %2837 = vmatprep.mubr.bf16.mxu0 0
        %2838 = vmatmul.mubr.bf16.gmra.mxu0 %v2564
        %v2839 = vpop.f32.mrf.mxu0
        %v2840 = vadd.f32 %v2495, %v2839
        %v2841 = vpop.f32.mrf.mxu0
        %v2842 = vpop.f32.mrf.mxu0
        %v2843 = vadd.f32 %v2495, %v2842
        %v2844 = vpop.f32.mrf.mxu0
        %2845 = vmatprep.mubr.bf16.mxu0 0
        %2846 = vmatmul.mubr.bf16.gmra.mxu0 %v2567
        %v2847 = vpop.f32.mrf.mxu0
        %v2848 = vadd.f32 %v2495, %v2847
        %v2849 = vpop.f32.mrf.mxu0
        %v2850 = vpop.f32.mrf.mxu0
        %v2851 = vadd.f32 %v2495, %v2850
        %v2852 = vpop.f32.mrf.mxu0
        %2853 = vmatprep.mubr.bf16.mxu0 0
        %2854 = vmatmul.mubr.bf16.gmra.mxu0 %v2570
        %v2855 = vpop.f32.mrf.mxu0
        %v2856 = vadd.f32 %v2495, %v2855
        %v2857 = vpop.f32.mrf.mxu0
        %v2858 = vpop.f32.mrf.mxu0
        %v2859 = vadd.f32 %v2495, %v2858
        %v2860 = vpop.f32.mrf.mxu0
        %2861 = vmatprep.mubr.bf16.mxu0 0
        %2862 = vmatmul.mubr.bf16.gmra.mxu0 %v2573
        %v2863 = vpop.f32.mrf.mxu0
        %v2864 = vadd.f32 %v2495, %v2863
        %v2865 = vpop.f32.mrf.mxu0
        %v2866 = vpop.f32.mrf.mxu0
        %v2867 = vadd.f32 %v2495, %v2866
        %v2868 = vpop.f32.mrf.mxu0
        %2869 = vmatprep.mubr.bf16.mxu0 0
        %2870 = vmatmul.mubr.bf16.gmra.mxu0 %v2576
        %v2871 = vpop.f32.mrf.mxu0
        %v2872 = vadd.f32 %v2495, %v2871
        %v2873 = vpop.f32.mrf.mxu0
        %v2874 = vpop.f32.mrf.mxu0
        %v2875 = vadd.f32 %v2495, %v2874
        %v2876 = vpop.f32.mrf.mxu0
        %2877 = vmatprep.mubr.bf16.mxu0 0
        %2878 = vmatmul.mubr.bf16.gmra.mxu0 %v2579
        %v2879 = vpop.f32.mrf.mxu0
        %v2880 = vadd.f32 %v2495, %v2879
        %v2881 = vpop.f32.mrf.mxu0
        %v2882 = vpop.f32.mrf.mxu0
        %v2883 = vadd.f32 %v2495, %v2882
        %v2884 = vpop.f32.mrf.mxu0
        %2885 = vmatprep.mubr.bf16.mxu0 0
        %2886 = vmatmul.mubr.bf16.gmra.mxu0 %v2582
        %v2887 = vpop.f32.mrf.mxu0
        %v2888 = vadd.f32 %v2495, %v2887
        %v2889 = vpop.f32.mrf.mxu0
        %v2890 = vpop.f32.mrf.mxu0
        %v2891 = vadd.f32 %v2495, %v2890
        %v2892 = vpop.f32.mrf.mxu0
        %2893 = vmatprep.mubr.bf16.mxu0 0
        %2894 = vmatmul.mubr.bf16.gmra.mxu0 %v2585
        %v2895 = vpop.f32.mrf.mxu0
        %v2896 = vadd.f32 %v2495, %v2895
        %v2897 = vpop.f32.mrf.mxu0
        %v2898 = vpop.f32.mrf.mxu0
        %v2899 = vadd.f32 %v2495, %v2898
        %v2900 = vpop.f32.mrf.mxu0
        %2901 = vmatprep.mubr.bf16.mxu0 0
        %2902 = vmatmul.mubr.bf16.gmra.mxu0 %v2588
        %v2903 = vpop.f32.mrf.mxu0
        %v2904 = vadd.f32 %v2495, %v2903
        %v2905 = vpop.f32.mrf.mxu0
        %v2906 = vpop.f32.mrf.mxu0
        %v2907 = vadd.f32 %v2495, %v2906
        %v2908 = vpop.f32.mrf.mxu0
        %2909 = vmatprep.mubr.bf16.mxu0 0
        %2910 = vmatmul.mubr.bf16.gmra.mxu0 %v2591
        %v2911 = vpop.f32.mrf.mxu0
        %v2912 = vadd.f32 %v2495, %v2911
        %v2913 = vpop.f32.mrf.mxu0
        %v2914 = vpop.f32.mrf.mxu0
        %v2915 = vadd.f32 %v2495, %v2914
        %v2916 = vpop.f32.mrf.mxu0
        %2917 = vmatprep.mubr.bf16.mxu0 0
        %2918 = vmatmul.mubr.bf16.gmra.mxu0 %v2594
        %v2919 = vpop.f32.mrf.mxu0
        %v2920 = vadd.f32 %v2495, %v2919
        %v2921 = vpop.f32.mrf.mxu0
        %v2922 = vpop.f32.mrf.mxu0
        %v2923 = vadd.f32 %v2495, %v2922
        %v2924 = vpop.f32.mrf.mxu0
        %2925 = vmatprep.mubr.bf16.mxu0 0
        %2926 = vmatmul.mubr.bf16.gmra.mxu0 %v2597
        %v2927 = vpop.f32.mrf.mxu0
        %v2928 = vadd.f32 %v2495, %v2927
        %v2929 = vpop.f32.mrf.mxu0
        %v2930 = vpop.f32.mrf.mxu0
        %v2931 = vadd.f32 %v2495, %v2930
        %v2932 = vpop.f32.mrf.mxu0
        %2933 = vmatprep.mubr.bf16.mxu0 0
        %2934 = vmatmul.mubr.bf16.gmra.mxu0 %v2600
        %v2935 = vpop.f32.mrf.mxu0
        %v2936 = vadd.f32 %v2495, %v2935
        %v2937 = vpop.f32.mrf.mxu0
        %v2938 = vpop.f32.mrf.mxu0
        %v2939 = vadd.f32 %v2495, %v2938
        %v2940 = vpop.f32.mrf.mxu0
        %2941 = vmatprep.mubr.bf16.mxu0 0
        %2942 = vmatmul.mubr.bf16.gmra.mxu0 %v2603
        %v2943 = vpop.f32.mrf.mxu0
        %v2944 = vadd.f32 %v2495, %v2943
        %v2945 = vpop.f32.mrf.mxu0
        %v2946 = vpop.f32.mrf.mxu0
        %v2947 = vadd.f32 %v2495, %v2946
        %v2948 = vpop.f32.mrf.mxu0
        %2949 = vmatprep.mubr.bf16.mxu0 0
        %2950 = vmatmul.mubr.bf16.gmra.mxu0 %v2606
        %v2951 = vpop.f32.mrf.mxu0
        %v2952 = vadd.f32 %v2495, %v2951
        %v2953 = vpop.f32.mrf.mxu0
        %v2954 = vpop.f32.mrf.mxu0
        %v2955 = vadd.f32 %v2495, %v2954
        %v2956 = vpop.f32.mrf.mxu0
        %2957 = vmatprep.mubr.bf16.mxu0 0
        %2958 = vmatmul.mubr.bf16.gmra.mxu0 %v2609
        %v2959 = vpop.f32.mrf.mxu0
        %v2960 = vadd.f32 %v2495, %v2959
        %v2961 = vpop.f32.mrf.mxu0
        %v2962 = vpop.f32.mrf.mxu0
        %v2963 = vadd.f32 %v2495, %v2962
        %v2964 = vpop.f32.mrf.mxu0
        %2965 = vmatprep.mubr.bf16.mxu0 0
        %2966 = vmatmul.mubr.bf16.gmra.mxu0 %v2612
        %v2967 = vpop.f32.mrf.mxu0
        %v2968 = vadd.f32 %v2495, %v2967
        %v2969 = vpop.f32.mrf.mxu0
        %v2970 = vpop.f32.mrf.mxu0
        %v2971 = vadd.f32 %v2495, %v2970
        %v2972 = vpop.f32.mrf.mxu0
        %2973 = vmatprep.mubr.bf16.mxu0 0
        %2974 = vmatmul.mubr.bf16.gmra.mxu0 %v2615
        %v2975 = vpop.f32.mrf.mxu0
        %v2976 = vadd.f32 %v2495, %v2975
        %v2977 = vpop.f32.mrf.mxu0
        %v2978 = vpop.f32.mrf.mxu0
        %v2979 = vadd.f32 %v2495, %v2978
        %v2980 = vpop.f32.mrf.mxu0
        %2981 = vmatprep.mubr.bf16.mxu0 0
        %2982 = vmatmul.mubr.bf16.gmra.mxu0 %v2618
        %v2983 = vpop.f32.mrf.mxu0
        %v2984 = vadd.f32 %v2495, %v2983
        %v2985 = vpop.f32.mrf.mxu0
        %v2986 = vpop.f32.mrf.mxu0
        %v2987 = vadd.f32 %v2495, %v2986
        %v2988 = vpop.f32.mrf.mxu0
        %2989 = vmatprep.mubr.bf16.mxu0 0
        %2990 = vmatmul.mubr.bf16.gmra.mxu0 %v2621
        %v2991 = vpop.f32.mrf.mxu0
        %v2992 = vadd.f32 %v2495, %v2991
        %v2993 = vpop.f32.mrf.mxu0
        %v2994 = vpop.f32.mrf.mxu0
        %v2995 = vadd.f32 %v2495, %v2994
        %v2996 = vpop.f32.mrf.mxu0
        %2997 = vmatprep.mubr.bf16.mxu0 0
        %2998 = vmatmul.mubr.bf16.gmra.mxu0 %v2624
        %v2999 = vpop.f32.mrf.mxu0
        %v3000 = vadd.f32 %v2495, %v2999
        %v3001 = vpop.f32.mrf.mxu0
        %v3002 = vpop.f32.mrf.mxu0
        %v3003 = vadd.f32 %v2495, %v3002
        %v3004 = vpop.f32.mrf.mxu0
        %3005 = vmatprep.mubr.bf16.mxu0 0
        %3006 = vmatmul.mubr.bf16.gmra.mxu0 %v2627
        %v3007 = vpop.f32.mrf.mxu0
        %v3008 = vadd.f32 %v2495, %v3007
        %v3009 = vpop.f32.mrf.mxu0
        %v3010 = vpop.f32.mrf.mxu0
        %v3011 = vadd.f32 %v2495, %v3010
        %v3012 = vpop.f32.mrf.mxu0
        %3013 = vmatprep.mubr.bf16.mxu0 0
        %3014 = vmatmul.mubr.bf16.gmra.mxu0 %v2630
        %v3015 = vpop.f32.mrf.mxu0
        %v3016 = vadd.f32 %v2495, %v3015
        %v3017 = vpop.f32.mrf.mxu0
        %v3018 = vpop.f32.mrf.mxu0
        %v3019 = vadd.f32 %v2495, %v3018
        %v3020 = vpop.f32.mrf.mxu0
        %3021 = vmatprep.mubr.bf16.mxu0 0
        %3022 = vmatmul.mubr.bf16.gmra.mxu0 %v2633
        %v3023 = vpop.f32.mrf.mxu0
        %v3024 = vadd.f32 %v2495, %v3023
        %v3025 = vpop.f32.mrf.mxu0
        %v3026 = vpop.f32.mrf.mxu0
        %v3027 = vadd.f32 %v2495, %v3026
        %v3028 = vpop.f32.mrf.mxu0
        %3029 = vmatprep.mubr.bf16.mxu0 0
        %3030 = vmatmul.mubr.bf16.gmra.mxu0 %v2636
        %v3031 = vpop.f32.mrf.mxu0
        %v3032 = vadd.f32 %v2495, %v3031
        %v3033 = vpop.f32.mrf.mxu0
        %v3034 = vpop.f32.mrf.mxu0
        %v3035 = vadd.f32 %v2495, %v3034
        %v3036 = vpop.f32.mrf.mxu0
        %3037 = vmatprep.mubr.bf16.mxu0 0
        %3038 = vmatmul.mubr.bf16.gmra.mxu0 %v2639
        %v3039 = vpop.f32.mrf.mxu0
        %v3040 = vadd.f32 %v2495, %v3039
        %v3041 = vpop.f32.mrf.mxu0
        %v3042 = vpop.f32.mrf.mxu0
        %v3043 = vadd.f32 %v2495, %v3042
        %v3044 = vpop.f32.mrf.mxu0
        %3045 = vmatprep.mubr.bf16.mxu0 0
        %3046 = vmatmul.mubr.bf16.gmra.mxu0 %v2642
        %v3047 = vpop.f32.mrf.mxu0
        %v3048 = vadd.f32 %v2495, %v3047
        %v3049 = vpop.f32.mrf.mxu0
        %v3050 = vpop.f32.mrf.mxu0
        %v3051 = vadd.f32 %v2495, %v3050
        %v3052 = vpop.f32.mrf.mxu0
        %3053 = vmatprep.mubr.bf16.mxu0 0
        %3054 = vmatmul.mubr.bf16.gmra.mxu0 %v2645
        %v3055 = vpop.f32.mrf.mxu0
        %v3056 = vadd.f32 %v2495, %v3055
        %v3057 = vpop.f32.mrf.mxu0
        %v3058 = vpop.f32.mrf.mxu0
        %v3059 = vadd.f32 %v2495, %v3058
        %v3060 = vpop.f32.mrf.mxu0
        %3061 = vmatprep.mubr.bf16.mxu0 0
        %3062 = vmatmul.mubr.bf16.gmra.mxu0 %v2648
        %v3063 = vpop.f32.mrf.mxu0
        %v3064 = vadd.f32 %v2495, %v3063
        %v3065 = vpop.f32.mrf.mxu0
        %v3066 = vpop.f32.mrf.mxu0
        %v3067 = vadd.f32 %v2495, %v3066
        %v3068 = vpop.f32.mrf.mxu0
        %3069 = vmatprep.mubr.bf16.mxu0 0
        %3070 = vmatmul.mubr.bf16.gmra.mxu0 %v2651
        %v3071 = vpop.f32.mrf.mxu0
        %v3072 = vadd.f32 %v2495, %v3071
        %v3073 = vpop.f32.mrf.mxu0
        %v3074 = vpop.f32.mrf.mxu0
        %v3075 = vadd.f32 %v2495, %v3074
        %v3076 = vpop.f32.mrf.mxu0
        %3077 = vmatprep.mubr.bf16.mxu0 0
        %3078 = vmatmul.mubr.bf16.gmra.mxu0 %v2654
        %v3079 = vpop.f32.mrf.mxu0
        %v3080 = vadd.f32 %v2495, %v3079
        %v3081 = vpop.f32.mrf.mxu0
        %v3082 = vpop.f32.mrf.mxu0
        %v3083 = vadd.f32 %v2495, %v3082
        %v3084 = vpop.f32.mrf.mxu0
        %3085 = vmatprep.mubr.bf16.mxu0 0
        %3086 = vmatmul.mubr.bf16.gmra.mxu0 %v2657
        %v3087 = vpop.f32.mrf.mxu0
        %v3088 = vadd.f32 %v2495, %v3087
        %v3089 = vpop.f32.mrf.mxu0
        %v3090 = vpop.f32.mrf.mxu0
        %v3091 = vadd.f32 %v2495, %v3090
        %v3092 = vpop.f32.mrf.mxu0
        %3093 = vmatprep.mubr.bf16.mxu0 0
        %3094 = vmatmul.mubr.bf16.gmra.mxu0 %v2660
        %v3095 = vpop.f32.mrf.mxu0
        %v3096 = vadd.f32 %v2495, %v3095
        %v3097 = vpop.f32.mrf.mxu0
        %v3098 = vpop.f32.mrf.mxu0
        %v3099 = vadd.f32 %v2495, %v3098
        %v3100 = vpop.f32.mrf.mxu0
        %3101 = vmatprep.mubr.bf16.mxu0 0
        %3102 = vmatmul.mubr.bf16.gmra.mxu0 %v2663
        %v3103 = vpop.f32.mrf.mxu0
        %v3104 = vadd.f32 %v2495, %v3103
        %v3105 = vpop.f32.mrf.mxu0
        %v3106 = vpop.f32.mrf.mxu0
        %v3107 = vadd.f32 %v2495, %v3106
        %v3108 = vpop.f32.mrf.mxu0
        %3109 = vmatprep.mubr.bf16.mxu0 0
        %3110 = vmatmul.mubr.bf16.gmra.mxu0 %v2666
        %v3111 = vpop.f32.mrf.mxu0
        %v3112 = vadd.f32 %v2495, %v3111
        %v3113 = vpop.f32.mrf.mxu0
        %v3114 = vpop.f32.mrf.mxu0
        %v3115 = vadd.f32 %v2495, %v3114
        %v3116 = vpop.f32.mrf.mxu0
        %3117 = vmatprep.mubr.bf16.mxu0 0
        %3118 = vmatmul.mubr.bf16.gmra.mxu0 %v2669
        %v3119 = vpop.f32.mrf.mxu0
        %v3120 = vadd.f32 %v2495, %v3119
        %v3121 = vpop.f32.mrf.mxu0
        %v3122 = vpop.f32.mrf.mxu0
        %v3123 = vadd.f32 %v2495, %v3122
        %v3124 = vpop.f32.mrf.mxu0
        %3125 = vmatprep.mubr.bf16.mxu0 0
        %3126 = vmatmul.mubr.bf16.gmra.mxu0 %v2672
        %v3127 = vpop.f32.mrf.mxu0
        %v3128 = vadd.f32 %v2495, %v3127
        %v3129 = vpop.f32.mrf.mxu0
        %v3130 = vpop.f32.mrf.mxu0
        %v3131 = vadd.f32 %v2495, %v3130
        %v3132 = vpop.f32.mrf.mxu0
        %3133 = vmatprep.mubr.bf16.mxu0 0
        %3134 = vmatmul.mubr.bf16.gmra.mxu0 %v2675
        %v3135 = vpop.f32.mrf.mxu0
        %v3136 = vadd.f32 %v2495, %v3135
        %v3137 = vpop.f32.mrf.mxu0
        %v3138 = vpop.f32.mrf.mxu0
        %v3139 = vadd.f32 %v2495, %v3138
        %v3140 = vpop.f32.mrf.mxu0
        %3141 = vmatprep.mubr.bf16.mxu0 0
        %3142 = vmatmul.mubr.bf16.gmra.mxu0 %v2678
        %v3143 = vpop.f32.mrf.mxu0
        %v3144 = vadd.f32 %v2495, %v3143
        %v3145 = vpop.f32.mrf.mxu0
        %v3146 = vpop.f32.mrf.mxu0
        %v3147 = vadd.f32 %v2495, %v3146
        %v3148 = vpop.f32.mrf.mxu0
        %3149 = vmatprep.mubr.bf16.mxu0 0
        %3150 = vmatmul.mubr.bf16.gmra.mxu0 %v2681
        %v3151 = vpop.f32.mrf.mxu0
        %v3152 = vadd.f32 %v2495, %v3151
        %v3153 = vpop.f32.mrf.mxu0
        %v3154 = vpop.f32.mrf.mxu0
        %v3155 = vadd.f32 %v2495, %v3154
        %v3156 = vpop.f32.mrf.mxu0
        %3157 = vmatprep.mubr.bf16.mxu0 0
        %3158 = vmatmul.mubr.bf16.gmra.mxu0 %v2684
        %v3159 = vpop.f32.mrf.mxu0
        %v3160 = vadd.f32 %v2495, %v3159
        %v3161 = vpop.f32.mrf.mxu0
        %v3162 = vpop.f32.mrf.mxu0
        %v3163 = vadd.f32 %v2495, %v3162
        %v3164 = vpop.f32.mrf.mxu0
        %3165 = vmatprep.mubr.bf16.mxu0 0
        %3166 = vmatmul.mubr.bf16.gmra.mxu0 %v2687
        %v3167 = vpop.f32.mrf.mxu0
        %v3168 = vadd.f32 %v2495, %v3167
        %v3169 = vpop.f32.mrf.mxu0
        %v3170 = vpop.f32.mrf.mxu0
        %v3171 = vadd.f32 %v2495, %v3170
        %v3172 = vpop.f32.mrf.mxu0
        %3173 = vmatprep.mubr.bf16.mxu0 0
        %3174 = vmatmul.mubr.bf16.gmra.mxu0 %v2690
        %v3175 = vpop.f32.mrf.mxu0
        %v3176 = vadd.f32 %v2495, %v3175
        %v3177 = vpop.f32.mrf.mxu0
        %v3178 = vpop.f32.mrf.mxu0
        %v3179 = vadd.f32 %v2495, %v3178
        %v3180 = vpop.f32.mrf.mxu0
        %3181 = vmatprep.mubr.bf16.mxu0 0
        %3182 = vmatmul.mubr.bf16.gmra.mxu0 %v2693
        %v3183 = vpop.f32.mrf.mxu0
        %v3184 = vadd.f32 %v2495, %v3183
        %v3185 = vpop.f32.mrf.mxu0
        %v3186 = vpop.f32.mrf.mxu0
        %v3187 = vadd.f32 %v2495, %v3186
        %v3188 = vpop.f32.mrf.mxu0
        %3189 = vmatprep.mubr.bf16.mxu0 0
        %3190 = vmatmul.mubr.bf16.gmra.mxu0 %v2696
        %v3191 = vpop.f32.mrf.mxu0
        %v3192 = vadd.f32 %v2495, %v3191
        %v3193 = vpop.f32.mrf.mxu0
        %v3194 = vpop.f32.mrf.mxu0
        %v3195 = vadd.f32 %v2495, %v3194
        %v3196 = vpop.f32.mrf.mxu0
        %3197 = vmatprep.mubr.bf16.mxu0 0
        %3198 = vmatmul.mubr.bf16.gmra.mxu0 %v2699
        %v3199 = vpop.f32.mrf.mxu0
        %v3200 = vadd.f32 %v2495, %v3199
        %v3201 = vpop.f32.mrf.mxu0
        %v3202 = vpop.f32.mrf.mxu0
        %v3203 = vadd.f32 %v2495, %v3202
        %v3204 = vpop.f32.mrf.mxu0
        %3205 = vmatprep.mubr.bf16.mxu0 0
        %3206 = vmatmul.mubr.bf16.gmra.mxu0 %v2702
        %v3207 = vpop.f32.mrf.mxu0
        %v3208 = vadd.f32 %v2495, %v3207
        %v3209 = vpop.f32.mrf.mxu0
        %v3210 = vpop.f32.mrf.mxu0
        %v3211 = vadd.f32 %v2495, %v3210
        %v3212 = vpop.f32.mrf.mxu0
        %3213 = vmatprep.mubr.bf16.mxu0 0
        %3214 = vmatmul.mubr.bf16.gmra.mxu0 %v2705
        %v3215 = vpop.f32.mrf.mxu0
        %v3216 = vadd.f32 %v2495, %v3215
        %v3217 = vpop.f32.mrf.mxu0
        %v3218 = vpop.f32.mrf.mxu0
        %v3219 = vadd.f32 %v2495, %v3218
        %v3220 = vpop.f32.mrf.mxu0
        %3221 = vmatprep.mubr.bf16.mxu0 0
        %3222 = vmatmul.mubr.bf16.gmra.mxu0 %v2708
        %v3223 = vpop.f32.mrf.mxu0
        %v3224 = vadd.f32 %v2495, %v3223
        %v3225 = vpop.f32.mrf.mxu0
        %v3226 = vpop.f32.mrf.mxu0
        %v3227 = vadd.f32 %v2495, %v3226
        %v3228 = vpop.f32.mrf.mxu0
        %3229 = vmatprep.mubr.bf16.mxu0 0
        %3230 = vmatmul.mubr.bf16.gmra.mxu0 %v2711
        %v3231 = vpop.f32.mrf.mxu0
        %v3232 = vadd.f32 %v2495, %v3231
        %v3233 = vpop.f32.mrf.mxu0
        %v3234 = vpop.f32.mrf.mxu0
        %v3235 = vadd.f32 %v2495, %v3234
        %v3236 = vpop.f32.mrf.mxu0
        %3237 = vmatprep.mubr.bf16.mxu0 0
        %3238 = vmatmul.mubr.bf16.gmra.mxu0 %v2714
        %v3239 = vpop.f32.mrf.mxu0
        %v3240 = vadd.f32 %v2495, %v3239
        %v3241 = vpop.f32.mrf.mxu0
        %v3242 = vpop.f32.mrf.mxu0
        %v3243 = vadd.f32 %v2495, %v3242
        %v3244 = vpop.f32.mrf.mxu0
        %3245 = vmatprep.mubr.bf16.mxu0 0
        %3246 = vmatmul.mubr.bf16.gmra.mxu0 %v2717
        %v3247 = vpop.f32.mrf.mxu0
        %v3248 = vadd.f32 %v2495, %v3247
        %v3249 = vpop.f32.mrf.mxu0
        %v3250 = vpop.f32.mrf.mxu0
        %v3251 = vadd.f32 %v2495, %v3250
        %v3252 = vpop.f32.mrf.mxu0
        %3253 = vmatprep.mubr.bf16.mxu0 0
        %3254 = vmatmul.mubr.bf16.gmra.mxu0 %v2720
        %v3255 = vpop.f32.mrf.mxu0
        %v3256 = vadd.f32 %v2495, %v3255
        %v3257 = vpop.f32.mrf.mxu0
        %v3258 = vpop.f32.mrf.mxu0
        %v3259 = vadd.f32 %v2495, %v3258
        %v3260 = vpop.f32.mrf.mxu0
        %3261 = vmatprep.mubr.bf16.mxu0 0
        %3262 = vmatmul.mubr.bf16.gmra.mxu0 %v2723
        %v3263 = vpop.f32.mrf.mxu0
        %v3264 = vadd.f32 %v2495, %v3263
        %v3265 = vpop.f32.mrf.mxu0
        %v3266 = vpop.f32.mrf.mxu0
        %v3267 = vadd.f32 %v2495, %v3266
        %v3268 = vpop.f32.mrf.mxu0
        %3269 = vdwg.mxu0
        %v3270 = vpack.c.bf16 %v2763, %v2760
        %v3271 = vpack.c.bf16 %v2771, %v2768
        %v3272 = vpack.c.bf16 %v2779, %v2776
        %v3273 = vpack.c.bf16 %v2787, %v2784
        %v3274 = vpack.c.bf16 %v2795, %v2792
        %v3275 = vpack.c.bf16 %v2803, %v2800
        %v3276 = vpack.c.bf16 %v2811, %v2808
        %v3277 = vpack.c.bf16 %v2819, %v2816
        %v3278 = vpack.c.bf16 %v2827, %v2824
        %v3279 = vpack.c.bf16 %v2835, %v2832
        %v3280 = vpack.c.bf16 %v2843, %v2840
        %v3281 = vpack.c.bf16 %v2851, %v2848
        %v3282 = vpack.c.bf16 %v2859, %v2856
        %v3283 = vpack.c.bf16 %v2867, %v2864
        %v3284 = vpack.c.bf16 %v2875, %v2872
        %v3285 = vpack.c.bf16 %v2883, %v2880
        %v3286 = vpack.c.bf16 %v2891, %v2888
        %v3287 = vpack.c.bf16 %v2899, %v2896
        %v3288 = vpack.c.bf16 %v2907, %v2904
        %v3289 = vpack.c.bf16 %v2915, %v2912
        %v3290 = vpack.c.bf16 %v2923, %v2920
        %v3291 = vpack.c.bf16 %v2931, %v2928
        %v3292 = vpack.c.bf16 %v2939, %v2936
        %v3293 = vpack.c.bf16 %v2947, %v2944
        %v3294 = vpack.c.bf16 %v2955, %v2952
        %v3295 = vpack.c.bf16 %v2963, %v2960
        %v3296 = vpack.c.bf16 %v2971, %v2968
        %v3297 = vpack.c.bf16 %v2979, %v2976
        %v3298 = vpack.c.bf16 %v2987, %v2984
        %v3299 = vpack.c.bf16 %v2995, %v2992
        %v3300 = vpack.c.bf16 %v3003, %v3000
        %v3301 = vpack.c.bf16 %v3011, %v3008
        %v3302 = vpack.c.bf16 %v3019, %v3016
        %v3303 = vpack.c.bf16 %v3027, %v3024
        %v3304 = vpack.c.bf16 %v3035, %v3032
        %v3305 = vpack.c.bf16 %v3043, %v3040
        %v3306 = vpack.c.bf16 %v3051, %v3048
        %v3307 = vpack.c.bf16 %v3059, %v3056
        %v3308 = vpack.c.bf16 %v3067, %v3064
        %v3309 = vpack.c.bf16 %v3075, %v3072
        %v3310 = vpack.c.bf16 %v3083, %v3080
        %v3311 = vpack.c.bf16 %v3091, %v3088
        %v3312 = vpack.c.bf16 %v3099, %v3096
        %v3313 = vpack.c.bf16 %v3107, %v3104
        %v3314 = vpack.c.bf16 %v3115, %v3112
        %v3315 = vpack.c.bf16 %v3123, %v3120
        %v3316 = vpack.c.bf16 %v3131, %v3128
        %v3317 = vpack.c.bf16 %v3139, %v3136
        %v3318 = vpack.c.bf16 %v3147, %v3144
        %v3319 = vpack.c.bf16 %v3155, %v3152
        %v3320 = vpack.c.bf16 %v3163, %v3160
        %v3321 = vpack.c.bf16 %v3171, %v3168
        %v3322 = vpack.c.bf16 %v3179, %v3176
        %v3323 = vpack.c.bf16 %v3187, %v3184
        %v3324 = vpack.c.bf16 %v3195, %v3192
        %v3325 = vpack.c.bf16 %v3203, %v3200
        %v3326 = vpack.c.bf16 %v3211, %v3208
        %v3327 = vpack.c.bf16 %v3219, %v3216
        %v3328 = vpack.c.bf16 %v3227, %v3224
        %v3329 = vpack.c.bf16 %v3235, %v3232
        %v3330 = vpack.c.bf16 %v3243, %v3240
        %v3331 = vpack.c.bf16 %v3251, %v3248
        %v3332 = vpack.c.bf16 %v3259, %v3256
        %v3333 = vpack.c.bf16 %v3267, %v3264
        %v3334 = vlaneseq
        %v3335 = vshrl.u32 %v3334, 7
        %v3336 = vsub.s32 0, %v3335
        %v3337 = vrot.slane %v368, %v3336
        %v3342 = vunpack.c.l.b16 %v352
        %v3343 = vunpack.c.l.b16 %v353
        %v3344 = vunpack.c.l.b16 %v354
        %v3345 = vunpack.c.l.b16 %v355
        %v3346 = vpack.c.b16 %v3343, %v3342
        %v3347 = vpack.c.b16 %v3345, %v3344
        %v3351 = vsel %vm2170, %v3270, 0
        %v3354 = vsel %vm2170, %v3271, 0
        %v3357 = vsel %vm2170, %v3272, 0
        %v3360 = vsel %vm2170, %v3273, 0
        %v3363 = vsel %vm2170, %v3274, 0
        %v3366 = vsel %vm2170, %v3275, 0
        %v3369 = vsel %vm2170, %v3276, 0
        %v3372 = vsel %vm2170, %v3277, 0
        %v3375 = vsel %vm2170, %v3278, 0
        %v3378 = vsel %vm2170, %v3279, 0
        %v3381 = vsel %vm2170, %v3280, 0
        %v3384 = vsel %vm2170, %v3281, 0
        %v3387 = vsel %vm2170, %v3282, 0
        %v3390 = vsel %vm2170, %v3283, 0
        %v3393 = vsel %vm2170, %v3284, 0
        %v3396 = vsel %vm2170, %v3285, 0
        %v3399 = vsel %vm2170, %v3286, 0
        %v3402 = vsel %vm2170, %v3287, 0
        %v3405 = vsel %vm2170, %v3288, 0
        %v3408 = vsel %vm2170, %v3289, 0
        %v3411 = vsel %vm2170, %v3290, 0
        %v3414 = vsel %vm2170, %v3291, 0
        %v3417 = vsel %vm2170, %v3292, 0
        %v3420 = vsel %vm2170, %v3293, 0
        %v3423 = vsel %vm2170, %v3294, 0
        %v3426 = vsel %vm2170, %v3295, 0
        %v3429 = vsel %vm2170, %v3296, 0
        %v3432 = vsel %vm2170, %v3297, 0
        %v3435 = vsel %vm2170, %v3298, 0
        %v3438 = vsel %vm2170, %v3299, 0
        %v3441 = vsel %vm2170, %v3300, 0
        %v3444 = vsel %vm2170, %v3301, 0
        %v3447 = vsel %vm2170, %v3302, 0
        %v3450 = vsel %vm2170, %v3303, 0
        %v3453 = vsel %vm2170, %v3304, 0
        %v3456 = vsel %vm2170, %v3305, 0
        %v3459 = vsel %vm2170, %v3306, 0
        %v3462 = vsel %vm2170, %v3307, 0
        %v3465 = vsel %vm2170, %v3308, 0
        %v3468 = vsel %vm2170, %v3309, 0
        %v3471 = vsel %vm2170, %v3310, 0
        %v3474 = vsel %vm2170, %v3311, 0
        %v3477 = vsel %vm2170, %v3312, 0
        %v3480 = vsel %vm2170, %v3313, 0
        %v3483 = vsel %vm2170, %v3314, 0
        %v3486 = vsel %vm2170, %v3315, 0
        %v3489 = vsel %vm2170, %v3316, 0
        %v3492 = vsel %vm2170, %v3317, 0
        %v3495 = vsel %vm2170, %v3318, 0
        %v3498 = vsel %vm2170, %v3319, 0
        %v3501 = vsel %vm2170, %v3320, 0
        %v3504 = vsel %vm2170, %v3321, 0
        %v3507 = vsel %vm2170, %v3322, 0
        %v3510 = vsel %vm2170, %v3323, 0
        %v3513 = vsel %vm2170, %v3324, 0
        %v3516 = vsel %vm2170, %v3325, 0
        %v3519 = vsel %vm2170, %v3326, 0
        %v3522 = vsel %vm2170, %v3327, 0
        %v3525 = vsel %vm2170, %v3328, 0
        %v3528 = vsel %vm2170, %v3329, 0
        %v3531 = vsel %vm2170, %v3330, 0
        %v3534 = vsel %vm2170, %v3331, 0
        %v3537 = vsel %vm2170, %v3332, 0
        %v3540 = vsel %vm2170, %v3333, 0
        %3542 = vmatprep.subr.bf16.mxu0 0
        %3543 = vmatpush1.bf16.msra.mxu0 0
        %3544 = vmatprep.subr.bf16.mxu0 0
        %3545 = vmatpush1.bf16.msra.mxu0 0
        %3546 = vmatprep.subr.bf16.mxu0 0
        %3547 = vmatpush1.bf16.msra.mxu0 0
        %3548 = vmatprep.subr.bf16.mxu0 0
        %3549 = vmatpush1.bf16.msra.mxu0 0
        %3550 = vmatprep.subr.bf16.mxu0 0
        %3551 = vmatpush1.bf16.msra.mxu0 0
        %3552 = vmatprep.subr.bf16.mxu0 0
        %3553 = vmatpush1.bf16.msra.mxu0 0
        %3554 = vmatprep.subr.bf16.mxu0 0
        %3555 = vmatpush1.bf16.msra.mxu0 %v3347
        %3556 = vmatprep.subr.bf16.mxu0 0
        %3557 = vmatpush1.bf16.msra.mxu0 %v3346
        %3558 = vmatprep.subr.bf16.mxu0 0
        %3559 = vmatpush2.bf16.msra.mxu0 0
        %3560 = vmatprep.subr.bf16.mxu0 0
        %3561 = vmatpush2.bf16.msra.mxu0 0
        %3562 = vmatprep.subr.bf16.mxu0 0
        %3563 = vmatpush2.bf16.msra.mxu0 0
        %3564 = vmatprep.subr.bf16.mxu0 0
        %3565 = vmatpush2.bf16.msra.mxu0 0
        %3566 = vmatprep.subr.bf16.mxu0 0
        %3567 = vmatpush2.bf16.msra.mxu0 0
        %3568 = vmatprep.subr.bf16.mxu0 0
        %3569 = vmatpush2.bf16.msra.mxu0 0
        %3570 = vmatprep.subr.bf16.mxu0 0
        %3571 = vmatpush2.bf16.msra.mxu0 0
        %3572 = vmatprep.subr.bf16.mxu0 0
        %3573 = vmatpush2.bf16.msra.mxu0 0
        %3574 = vmatprep.mubr.bf16.mxu0 0
        %3575 = vmatmul.mubr.bf16.gmra.mxu0 %v3351
        %v3576 = vpop.f32.mrf.mxu0
        %v3577 = vadd.f32 %v3337, %v3576
        %v3578 = vpop.f32.mrf.mxu0
        %v3579 = vpop.f32.mrf.mxu0
        %v3580 = vadd.f32 %v3337, %v3579
        %v3581 = vpop.f32.mrf.mxu0
        %3582 = vmatprep.mubr.bf16.mxu0 0
        %3583 = vmatmul.mubr.bf16.gmra.mxu0 %v3354
        %v3584 = vpop.f32.mrf.mxu0
        %v3585 = vadd.f32 %v3337, %v3584
        %v3586 = vpop.f32.mrf.mxu0
        %v3587 = vpop.f32.mrf.mxu0
        %v3588 = vadd.f32 %v3337, %v3587
        %v3589 = vpop.f32.mrf.mxu0
        %3590 = vmatprep.mubr.bf16.mxu0 0
        %3591 = vmatmul.mubr.bf16.gmra.mxu0 %v3357
        %v3592 = vpop.f32.mrf.mxu0
        %v3593 = vadd.f32 %v3337, %v3592
        %v3594 = vpop.f32.mrf.mxu0
        %v3595 = vpop.f32.mrf.mxu0
        %v3596 = vadd.f32 %v3337, %v3595
        %v3597 = vpop.f32.mrf.mxu0
        %3598 = vmatprep.mubr.bf16.mxu0 0
        %3599 = vmatmul.mubr.bf16.gmra.mxu0 %v3360
        %v3600 = vpop.f32.mrf.mxu0
        %v3601 = vadd.f32 %v3337, %v3600
        %v3602 = vpop.f32.mrf.mxu0
        %v3603 = vpop.f32.mrf.mxu0
        %v3604 = vadd.f32 %v3337, %v3603
        %v3605 = vpop.f32.mrf.mxu0
        %3606 = vmatprep.mubr.bf16.mxu0 0
        %3607 = vmatmul.mubr.bf16.gmra.mxu0 %v3363
        %v3608 = vpop.f32.mrf.mxu0
        %v3609 = vadd.f32 %v3337, %v3608
        %v3610 = vpop.f32.mrf.mxu0
        %v3611 = vpop.f32.mrf.mxu0
        %v3612 = vadd.f32 %v3337, %v3611
        %v3613 = vpop.f32.mrf.mxu0
        %3614 = vmatprep.mubr.bf16.mxu0 0
        %3615 = vmatmul.mubr.bf16.gmra.mxu0 %v3366
        %v3616 = vpop.f32.mrf.mxu0
        %v3617 = vadd.f32 %v3337, %v3616
        %v3618 = vpop.f32.mrf.mxu0
        %v3619 = vpop.f32.mrf.mxu0
        %v3620 = vadd.f32 %v3337, %v3619
        %v3621 = vpop.f32.mrf.mxu0
        %3622 = vmatprep.mubr.bf16.mxu0 0
        %3623 = vmatmul.mubr.bf16.gmra.mxu0 %v3369
        %v3624 = vpop.f32.mrf.mxu0
        %v3625 = vadd.f32 %v3337, %v3624
        %v3626 = vpop.f32.mrf.mxu0
        %v3627 = vpop.f32.mrf.mxu0
        %v3628 = vadd.f32 %v3337, %v3627
        %v3629 = vpop.f32.mrf.mxu0
        %3630 = vmatprep.mubr.bf16.mxu0 0
        %3631 = vmatmul.mubr.bf16.gmra.mxu0 %v3372
        %v3632 = vpop.f32.mrf.mxu0
        %v3633 = vadd.f32 %v3337, %v3632
        %v3634 = vpop.f32.mrf.mxu0
        %v3635 = vpop.f32.mrf.mxu0
        %v3636 = vadd.f32 %v3337, %v3635
        %v3637 = vpop.f32.mrf.mxu0
        %3638 = vmatprep.mubr.bf16.mxu0 0
        %3639 = vmatmul.mubr.bf16.gmra.mxu0 %v3375
        %v3640 = vpop.f32.mrf.mxu0
        %v3641 = vadd.f32 %v3337, %v3640
        %v3642 = vpop.f32.mrf.mxu0
        %v3643 = vpop.f32.mrf.mxu0
        %v3644 = vadd.f32 %v3337, %v3643
        %v3645 = vpop.f32.mrf.mxu0
        %3646 = vmatprep.mubr.bf16.mxu0 0
        %3647 = vmatmul.mubr.bf16.gmra.mxu0 %v3378
        %v3648 = vpop.f32.mrf.mxu0
        %v3649 = vadd.f32 %v3337, %v3648
        %v3650 = vpop.f32.mrf.mxu0
        %v3651 = vpop.f32.mrf.mxu0
        %v3652 = vadd.f32 %v3337, %v3651
        %v3653 = vpop.f32.mrf.mxu0
        %3654 = vmatprep.mubr.bf16.mxu0 0
        %3655 = vmatmul.mubr.bf16.gmra.mxu0 %v3381
        %v3656 = vpop.f32.mrf.mxu0
        %v3657 = vadd.f32 %v3337, %v3656
        %v3658 = vpop.f32.mrf.mxu0
        %v3659 = vpop.f32.mrf.mxu0
        %v3660 = vadd.f32 %v3337, %v3659
        %v3661 = vpop.f32.mrf.mxu0
        %3662 = vmatprep.mubr.bf16.mxu0 0
        %3663 = vmatmul.mubr.bf16.gmra.mxu0 %v3384
        %v3664 = vpop.f32.mrf.mxu0
        %v3665 = vadd.f32 %v3337, %v3664
        %v3666 = vpop.f32.mrf.mxu0
        %v3667 = vpop.f32.mrf.mxu0
        %v3668 = vadd.f32 %v3337, %v3667
        %v3669 = vpop.f32.mrf.mxu0
        %3670 = vmatprep.mubr.bf16.mxu0 0
        %3671 = vmatmul.mubr.bf16.gmra.mxu0 %v3387
        %v3672 = vpop.f32.mrf.mxu0
        %v3673 = vadd.f32 %v3337, %v3672
        %v3674 = vpop.f32.mrf.mxu0
        %v3675 = vpop.f32.mrf.mxu0
        %v3676 = vadd.f32 %v3337, %v3675
        %v3677 = vpop.f32.mrf.mxu0
        %3678 = vmatprep.mubr.bf16.mxu0 0
        %3679 = vmatmul.mubr.bf16.gmra.mxu0 %v3390
        %v3680 = vpop.f32.mrf.mxu0
        %v3681 = vadd.f32 %v3337, %v3680
        %v3682 = vpop.f32.mrf.mxu0
        %v3683 = vpop.f32.mrf.mxu0
        %v3684 = vadd.f32 %v3337, %v3683
        %v3685 = vpop.f32.mrf.mxu0
        %3686 = vmatprep.mubr.bf16.mxu0 0
        %3687 = vmatmul.mubr.bf16.gmra.mxu0 %v3393
        %v3688 = vpop.f32.mrf.mxu0
        %v3689 = vadd.f32 %v3337, %v3688
        %v3690 = vpop.f32.mrf.mxu0
        %v3691 = vpop.f32.mrf.mxu0
        %v3692 = vadd.f32 %v3337, %v3691
        %v3693 = vpop.f32.mrf.mxu0
        %3694 = vmatprep.mubr.bf16.mxu0 0
        %3695 = vmatmul.mubr.bf16.gmra.mxu0 %v3396
        %v3696 = vpop.f32.mrf.mxu0
        %v3697 = vadd.f32 %v3337, %v3696
        %v3698 = vpop.f32.mrf.mxu0
        %v3699 = vpop.f32.mrf.mxu0
        %v3700 = vadd.f32 %v3337, %v3699
        %v3701 = vpop.f32.mrf.mxu0
        %3702 = vmatprep.mubr.bf16.mxu0 0
        %3703 = vmatmul.mubr.bf16.gmra.mxu0 %v3399
        %v3704 = vpop.f32.mrf.mxu0
        %v3705 = vadd.f32 %v3337, %v3704
        %v3706 = vpop.f32.mrf.mxu0
        %v3707 = vpop.f32.mrf.mxu0
        %v3708 = vadd.f32 %v3337, %v3707
        %v3709 = vpop.f32.mrf.mxu0
        %3710 = vmatprep.mubr.bf16.mxu0 0
        %3711 = vmatmul.mubr.bf16.gmra.mxu0 %v3402
        %v3712 = vpop.f32.mrf.mxu0
        %v3713 = vadd.f32 %v3337, %v3712
        %v3714 = vpop.f32.mrf.mxu0
        %v3715 = vpop.f32.mrf.mxu0
        %v3716 = vadd.f32 %v3337, %v3715
        %v3717 = vpop.f32.mrf.mxu0
        %3718 = vmatprep.mubr.bf16.mxu0 0
        %3719 = vmatmul.mubr.bf16.gmra.mxu0 %v3405
        %v3720 = vpop.f32.mrf.mxu0
        %v3721 = vadd.f32 %v3337, %v3720
        %v3722 = vpop.f32.mrf.mxu0
        %v3723 = vpop.f32.mrf.mxu0
        %v3724 = vadd.f32 %v3337, %v3723
        %v3725 = vpop.f32.mrf.mxu0
        %3726 = vmatprep.mubr.bf16.mxu0 0
        %3727 = vmatmul.mubr.bf16.gmra.mxu0 %v3408
        %v3728 = vpop.f32.mrf.mxu0
        %v3729 = vadd.f32 %v3337, %v3728
        %v3730 = vpop.f32.mrf.mxu0
        %v3731 = vpop.f32.mrf.mxu0
        %v3732 = vadd.f32 %v3337, %v3731
        %v3733 = vpop.f32.mrf.mxu0
        %3734 = vmatprep.mubr.bf16.mxu0 0
        %3735 = vmatmul.mubr.bf16.gmra.mxu0 %v3411
        %v3736 = vpop.f32.mrf.mxu0
        %v3737 = vadd.f32 %v3337, %v3736
        %v3738 = vpop.f32.mrf.mxu0
        %v3739 = vpop.f32.mrf.mxu0
        %v3740 = vadd.f32 %v3337, %v3739
        %v3741 = vpop.f32.mrf.mxu0
        %3742 = vmatprep.mubr.bf16.mxu0 0
        %3743 = vmatmul.mubr.bf16.gmra.mxu0 %v3414
        %v3744 = vpop.f32.mrf.mxu0
        %v3745 = vadd.f32 %v3337, %v3744
        %v3746 = vpop.f32.mrf.mxu0
        %v3747 = vpop.f32.mrf.mxu0
        %v3748 = vadd.f32 %v3337, %v3747
        %v3749 = vpop.f32.mrf.mxu0
        %3750 = vmatprep.mubr.bf16.mxu0 0
        %3751 = vmatmul.mubr.bf16.gmra.mxu0 %v3417
        %v3752 = vpop.f32.mrf.mxu0
        %v3753 = vadd.f32 %v3337, %v3752
        %v3754 = vpop.f32.mrf.mxu0
        %v3755 = vpop.f32.mrf.mxu0
        %v3756 = vadd.f32 %v3337, %v3755
        %v3757 = vpop.f32.mrf.mxu0
        %3758 = vmatprep.mubr.bf16.mxu0 0
        %3759 = vmatmul.mubr.bf16.gmra.mxu0 %v3420
        %v3760 = vpop.f32.mrf.mxu0
        %v3761 = vadd.f32 %v3337, %v3760
        %v3762 = vpop.f32.mrf.mxu0
        %v3763 = vpop.f32.mrf.mxu0
        %v3764 = vadd.f32 %v3337, %v3763
        %v3765 = vpop.f32.mrf.mxu0
        %3766 = vmatprep.mubr.bf16.mxu0 0
        %3767 = vmatmul.mubr.bf16.gmra.mxu0 %v3423
        %v3768 = vpop.f32.mrf.mxu0
        %v3769 = vadd.f32 %v3337, %v3768
        %v3770 = vpop.f32.mrf.mxu0
        %v3771 = vpop.f32.mrf.mxu0
        %v3772 = vadd.f32 %v3337, %v3771
        %v3773 = vpop.f32.mrf.mxu0
        %3774 = vmatprep.mubr.bf16.mxu0 0
        %3775 = vmatmul.mubr.bf16.gmra.mxu0 %v3426
        %v3776 = vpop.f32.mrf.mxu0
        %v3777 = vadd.f32 %v3337, %v3776
        %v3778 = vpop.f32.mrf.mxu0
        %v3779 = vpop.f32.mrf.mxu0
        %v3780 = vadd.f32 %v3337, %v3779
        %v3781 = vpop.f32.mrf.mxu0
        %3782 = vmatprep.mubr.bf16.mxu0 0
        %3783 = vmatmul.mubr.bf16.gmra.mxu0 %v3429
        %v3784 = vpop.f32.mrf.mxu0
        %v3785 = vadd.f32 %v3337, %v3784
        %v3786 = vpop.f32.mrf.mxu0
        %v3787 = vpop.f32.mrf.mxu0
        %v3788 = vadd.f32 %v3337, %v3787
        %v3789 = vpop.f32.mrf.mxu0
        %3790 = vmatprep.mubr.bf16.mxu0 0
        %3791 = vmatmul.mubr.bf16.gmra.mxu0 %v3432
        %v3792 = vpop.f32.mrf.mxu0
        %v3793 = vadd.f32 %v3337, %v3792
        %v3794 = vpop.f32.mrf.mxu0
        %v3795 = vpop.f32.mrf.mxu0
        %v3796 = vadd.f32 %v3337, %v3795
        %v3797 = vpop.f32.mrf.mxu0
        %3798 = vmatprep.mubr.bf16.mxu0 0
        %3799 = vmatmul.mubr.bf16.gmra.mxu0 %v3435
        %v3800 = vpop.f32.mrf.mxu0
        %v3801 = vadd.f32 %v3337, %v3800
        %v3802 = vpop.f32.mrf.mxu0
        %v3803 = vpop.f32.mrf.mxu0
        %v3804 = vadd.f32 %v3337, %v3803
        %v3805 = vpop.f32.mrf.mxu0
        %3806 = vmatprep.mubr.bf16.mxu0 0
        %3807 = vmatmul.mubr.bf16.gmra.mxu0 %v3438
        %v3808 = vpop.f32.mrf.mxu0
        %v3809 = vadd.f32 %v3337, %v3808
        %v3810 = vpop.f32.mrf.mxu0
        %v3811 = vpop.f32.mrf.mxu0
        %v3812 = vadd.f32 %v3337, %v3811
        %v3813 = vpop.f32.mrf.mxu0
        %3814 = vmatprep.mubr.bf16.mxu0 0
        %3815 = vmatmul.mubr.bf16.gmra.mxu0 %v3441
        %v3816 = vpop.f32.mrf.mxu0
        %v3817 = vadd.f32 %v3337, %v3816
        %v3818 = vpop.f32.mrf.mxu0
        %v3819 = vpop.f32.mrf.mxu0
        %v3820 = vadd.f32 %v3337, %v3819
        %v3821 = vpop.f32.mrf.mxu0
        %3822 = vmatprep.mubr.bf16.mxu0 0
        %3823 = vmatmul.mubr.bf16.gmra.mxu0 %v3444
        %v3824 = vpop.f32.mrf.mxu0
        %v3825 = vadd.f32 %v3337, %v3824
        %v3826 = vpop.f32.mrf.mxu0
        %v3827 = vpop.f32.mrf.mxu0
        %v3828 = vadd.f32 %v3337, %v3827
        %v3829 = vpop.f32.mrf.mxu0
        %3830 = vmatprep.mubr.bf16.mxu0 0
        %3831 = vmatmul.mubr.bf16.gmra.mxu0 %v3447
        %v3832 = vpop.f32.mrf.mxu0
        %v3833 = vadd.f32 %v3337, %v3832
        %v3834 = vpop.f32.mrf.mxu0
        %v3835 = vpop.f32.mrf.mxu0
        %v3836 = vadd.f32 %v3337, %v3835
        %v3837 = vpop.f32.mrf.mxu0
        %3838 = vmatprep.mubr.bf16.mxu0 0
        %3839 = vmatmul.mubr.bf16.gmra.mxu0 %v3450
        %v3840 = vpop.f32.mrf.mxu0
        %v3841 = vadd.f32 %v3337, %v3840
        %v3842 = vpop.f32.mrf.mxu0
        %v3843 = vpop.f32.mrf.mxu0
        %v3844 = vadd.f32 %v3337, %v3843
        %v3845 = vpop.f32.mrf.mxu0
        %3846 = vmatprep.mubr.bf16.mxu0 0
        %3847 = vmatmul.mubr.bf16.gmra.mxu0 %v3453
        %v3848 = vpop.f32.mrf.mxu0
        %v3849 = vadd.f32 %v3337, %v3848
        %v3850 = vpop.f32.mrf.mxu0
        %v3851 = vpop.f32.mrf.mxu0
        %v3852 = vadd.f32 %v3337, %v3851
        %v3853 = vpop.f32.mrf.mxu0
        %3854 = vmatprep.mubr.bf16.mxu0 0
        %3855 = vmatmul.mubr.bf16.gmra.mxu0 %v3456
        %v3856 = vpop.f32.mrf.mxu0
        %v3857 = vadd.f32 %v3337, %v3856
        %v3858 = vpop.f32.mrf.mxu0
        %v3859 = vpop.f32.mrf.mxu0
        %v3860 = vadd.f32 %v3337, %v3859
        %v3861 = vpop.f32.mrf.mxu0
        %3862 = vmatprep.mubr.bf16.mxu0 0
        %3863 = vmatmul.mubr.bf16.gmra.mxu0 %v3459
        %v3864 = vpop.f32.mrf.mxu0
        %v3865 = vadd.f32 %v3337, %v3864
        %v3866 = vpop.f32.mrf.mxu0
        %v3867 = vpop.f32.mrf.mxu0
        %v3868 = vadd.f32 %v3337, %v3867
        %v3869 = vpop.f32.mrf.mxu0
        %3870 = vmatprep.mubr.bf16.mxu0 0
        %3871 = vmatmul.mubr.bf16.gmra.mxu0 %v3462
        %v3872 = vpop.f32.mrf.mxu0
        %v3873 = vadd.f32 %v3337, %v3872
        %v3874 = vpop.f32.mrf.mxu0
        %v3875 = vpop.f32.mrf.mxu0
        %v3876 = vadd.f32 %v3337, %v3875
        %v3877 = vpop.f32.mrf.mxu0
        %3878 = vmatprep.mubr.bf16.mxu0 0
        %3879 = vmatmul.mubr.bf16.gmra.mxu0 %v3465
        %v3880 = vpop.f32.mrf.mxu0
        %v3881 = vadd.f32 %v3337, %v3880
        %v3882 = vpop.f32.mrf.mxu0
        %v3883 = vpop.f32.mrf.mxu0
        %v3884 = vadd.f32 %v3337, %v3883
        %v3885 = vpop.f32.mrf.mxu0
        %3886 = vmatprep.mubr.bf16.mxu0 0
        %3887 = vmatmul.mubr.bf16.gmra.mxu0 %v3468
        %v3888 = vpop.f32.mrf.mxu0
        %v3889 = vadd.f32 %v3337, %v3888
        %v3890 = vpop.f32.mrf.mxu0
        %v3891 = vpop.f32.mrf.mxu0
        %v3892 = vadd.f32 %v3337, %v3891
        %v3893 = vpop.f32.mrf.mxu0
        %3894 = vmatprep.mubr.bf16.mxu0 0
        %3895 = vmatmul.mubr.bf16.gmra.mxu0 %v3471
        %v3896 = vpop.f32.mrf.mxu0
        %v3897 = vadd.f32 %v3337, %v3896
        %v3898 = vpop.f32.mrf.mxu0
        %v3899 = vpop.f32.mrf.mxu0
        %v3900 = vadd.f32 %v3337, %v3899
        %v3901 = vpop.f32.mrf.mxu0
        %3902 = vmatprep.mubr.bf16.mxu0 0
        %3903 = vmatmul.mubr.bf16.gmra.mxu0 %v3474
        %v3904 = vpop.f32.mrf.mxu0
        %v3905 = vadd.f32 %v3337, %v3904
        %v3906 = vpop.f32.mrf.mxu0
        %v3907 = vpop.f32.mrf.mxu0
        %v3908 = vadd.f32 %v3337, %v3907
        %v3909 = vpop.f32.mrf.mxu0
        %3910 = vmatprep.mubr.bf16.mxu0 0
        %3911 = vmatmul.mubr.bf16.gmra.mxu0 %v3477
        %v3912 = vpop.f32.mrf.mxu0
        %v3913 = vadd.f32 %v3337, %v3912
        %v3914 = vpop.f32.mrf.mxu0
        %v3915 = vpop.f32.mrf.mxu0
        %v3916 = vadd.f32 %v3337, %v3915
        %v3917 = vpop.f32.mrf.mxu0
        %3918 = vmatprep.mubr.bf16.mxu0 0
        %3919 = vmatmul.mubr.bf16.gmra.mxu0 %v3480
        %v3920 = vpop.f32.mrf.mxu0
        %v3921 = vadd.f32 %v3337, %v3920
        %v3922 = vpop.f32.mrf.mxu0
        %v3923 = vpop.f32.mrf.mxu0
        %v3924 = vadd.f32 %v3337, %v3923
        %v3925 = vpop.f32.mrf.mxu0
        %3926 = vmatprep.mubr.bf16.mxu0 0
        %3927 = vmatmul.mubr.bf16.gmra.mxu0 %v3483
        %v3928 = vpop.f32.mrf.mxu0
        %v3929 = vadd.f32 %v3337, %v3928
        %v3930 = vpop.f32.mrf.mxu0
        %v3931 = vpop.f32.mrf.mxu0
        %v3932 = vadd.f32 %v3337, %v3931
        %v3933 = vpop.f32.mrf.mxu0
        %3934 = vmatprep.mubr.bf16.mxu0 0
        %3935 = vmatmul.mubr.bf16.gmra.mxu0 %v3486
        %v3936 = vpop.f32.mrf.mxu0
        %v3937 = vadd.f32 %v3337, %v3936
        %v3938 = vpop.f32.mrf.mxu0
        %v3939 = vpop.f32.mrf.mxu0
        %v3940 = vadd.f32 %v3337, %v3939
        %v3941 = vpop.f32.mrf.mxu0
        %3942 = vmatprep.mubr.bf16.mxu0 0
        %3943 = vmatmul.mubr.bf16.gmra.mxu0 %v3489
        %v3944 = vpop.f32.mrf.mxu0
        %v3945 = vadd.f32 %v3337, %v3944
        %v3946 = vpop.f32.mrf.mxu0
        %v3947 = vpop.f32.mrf.mxu0
        %v3948 = vadd.f32 %v3337, %v3947
        %v3949 = vpop.f32.mrf.mxu0
        %3950 = vmatprep.mubr.bf16.mxu0 0
        %3951 = vmatmul.mubr.bf16.gmra.mxu0 %v3492
        %v3952 = vpop.f32.mrf.mxu0
        %v3953 = vadd.f32 %v3337, %v3952
        %v3954 = vpop.f32.mrf.mxu0
        %v3955 = vpop.f32.mrf.mxu0
        %v3956 = vadd.f32 %v3337, %v3955
        %v3957 = vpop.f32.mrf.mxu0
        %3958 = vmatprep.mubr.bf16.mxu0 0
        %3959 = vmatmul.mubr.bf16.gmra.mxu0 %v3495
        %v3960 = vpop.f32.mrf.mxu0
        %v3961 = vadd.f32 %v3337, %v3960
        %v3962 = vpop.f32.mrf.mxu0
        %v3963 = vpop.f32.mrf.mxu0
        %v3964 = vadd.f32 %v3337, %v3963
        %v3965 = vpop.f32.mrf.mxu0
        %3966 = vmatprep.mubr.bf16.mxu0 0
        %3967 = vmatmul.mubr.bf16.gmra.mxu0 %v3498
        %v3968 = vpop.f32.mrf.mxu0
        %v3969 = vadd.f32 %v3337, %v3968
        %v3970 = vpop.f32.mrf.mxu0
        %v3971 = vpop.f32.mrf.mxu0
        %v3972 = vadd.f32 %v3337, %v3971
        %v3973 = vpop.f32.mrf.mxu0
        %3974 = vmatprep.mubr.bf16.mxu0 0
        %3975 = vmatmul.mubr.bf16.gmra.mxu0 %v3501
        %v3976 = vpop.f32.mrf.mxu0
        %v3977 = vadd.f32 %v3337, %v3976
        %v3978 = vpop.f32.mrf.mxu0
        %v3979 = vpop.f32.mrf.mxu0
        %v3980 = vadd.f32 %v3337, %v3979
        %v3981 = vpop.f32.mrf.mxu0
        %3982 = vmatprep.mubr.bf16.mxu0 0
        %3983 = vmatmul.mubr.bf16.gmra.mxu0 %v3504
        %v3984 = vpop.f32.mrf.mxu0
        %v3985 = vadd.f32 %v3337, %v3984
        %v3986 = vpop.f32.mrf.mxu0
        %v3987 = vpop.f32.mrf.mxu0
        %v3988 = vadd.f32 %v3337, %v3987
        %v3989 = vpop.f32.mrf.mxu0
        %3990 = vmatprep.mubr.bf16.mxu0 0
        %3991 = vmatmul.mubr.bf16.gmra.mxu0 %v3507
        %v3992 = vpop.f32.mrf.mxu0
        %v3993 = vadd.f32 %v3337, %v3992
        %v3994 = vpop.f32.mrf.mxu0
        %v3995 = vpop.f32.mrf.mxu0
        %v3996 = vadd.f32 %v3337, %v3995
        %v3997 = vpop.f32.mrf.mxu0
        %3998 = vmatprep.mubr.bf16.mxu0 0
        %3999 = vmatmul.mubr.bf16.gmra.mxu0 %v3510
        %v4000 = vpop.f32.mrf.mxu0
        %v4001 = vadd.f32 %v3337, %v4000
        %v4002 = vpop.f32.mrf.mxu0
        %v4003 = vpop.f32.mrf.mxu0
        %v4004 = vadd.f32 %v3337, %v4003
        %v4005 = vpop.f32.mrf.mxu0
        %4006 = vmatprep.mubr.bf16.mxu0 0
        %4007 = vmatmul.mubr.bf16.gmra.mxu0 %v3513
        %v4008 = vpop.f32.mrf.mxu0
        %v4009 = vadd.f32 %v3337, %v4008
        %v4010 = vpop.f32.mrf.mxu0
        %v4011 = vpop.f32.mrf.mxu0
        %v4012 = vadd.f32 %v3337, %v4011
        %v4013 = vpop.f32.mrf.mxu0
        %4014 = vmatprep.mubr.bf16.mxu0 0
        %4015 = vmatmul.mubr.bf16.gmra.mxu0 %v3516
        %v4016 = vpop.f32.mrf.mxu0
        %v4017 = vadd.f32 %v3337, %v4016
        %v4018 = vpop.f32.mrf.mxu0
        %v4019 = vpop.f32.mrf.mxu0
        %v4020 = vadd.f32 %v3337, %v4019
        %v4021 = vpop.f32.mrf.mxu0
        %4022 = vmatprep.mubr.bf16.mxu0 0
        %4023 = vmatmul.mubr.bf16.gmra.mxu0 %v3519
        %v4024 = vpop.f32.mrf.mxu0
        %v4025 = vadd.f32 %v3337, %v4024
        %v4026 = vpop.f32.mrf.mxu0
        %v4027 = vpop.f32.mrf.mxu0
        %v4028 = vadd.f32 %v3337, %v4027
        %v4029 = vpop.f32.mrf.mxu0
        %4030 = vmatprep.mubr.bf16.mxu0 0
        %4031 = vmatmul.mubr.bf16.gmra.mxu0 %v3522
        %v4032 = vpop.f32.mrf.mxu0
        %v4033 = vadd.f32 %v3337, %v4032
        %v4034 = vpop.f32.mrf.mxu0
        %v4035 = vpop.f32.mrf.mxu0
        %v4036 = vadd.f32 %v3337, %v4035
        %v4037 = vpop.f32.mrf.mxu0
        %4038 = vmatprep.mubr.bf16.mxu0 0
        %4039 = vmatmul.mubr.bf16.gmra.mxu0 %v3525
        %v4040 = vpop.f32.mrf.mxu0
        %v4041 = vadd.f32 %v3337, %v4040
        %v4042 = vpop.f32.mrf.mxu0
        %v4043 = vpop.f32.mrf.mxu0
        %v4044 = vadd.f32 %v3337, %v4043
        %v4045 = vpop.f32.mrf.mxu0
        %4046 = vmatprep.mubr.bf16.mxu0 0
        %4047 = vmatmul.mubr.bf16.gmra.mxu0 %v3528
        %v4048 = vpop.f32.mrf.mxu0
        %v4049 = vadd.f32 %v3337, %v4048
        %v4050 = vpop.f32.mrf.mxu0
        %v4051 = vpop.f32.mrf.mxu0
        %v4052 = vadd.f32 %v3337, %v4051
        %v4053 = vpop.f32.mrf.mxu0
        %4054 = vmatprep.mubr.bf16.mxu0 0
        %4055 = vmatmul.mubr.bf16.gmra.mxu0 %v3531
        %v4056 = vpop.f32.mrf.mxu0
        %v4057 = vadd.f32 %v3337, %v4056
        %v4058 = vpop.f32.mrf.mxu0
        %v4059 = vpop.f32.mrf.mxu0
        %v4060 = vadd.f32 %v3337, %v4059
        %v4061 = vpop.f32.mrf.mxu0
        %4062 = vmatprep.mubr.bf16.mxu0 0
        %4063 = vmatmul.mubr.bf16.gmra.mxu0 %v3534
        %v4064 = vpop.f32.mrf.mxu0
        %v4065 = vadd.f32 %v3337, %v4064
        %v4066 = vpop.f32.mrf.mxu0
        %v4067 = vpop.f32.mrf.mxu0
        %v4068 = vadd.f32 %v3337, %v4067
        %v4069 = vpop.f32.mrf.mxu0
        %4070 = vmatprep.mubr.bf16.mxu0 0
        %4071 = vmatmul.mubr.bf16.gmra.mxu0 %v3537
        %v4072 = vpop.f32.mrf.mxu0
        %v4073 = vadd.f32 %v3337, %v4072
        %v4074 = vpop.f32.mrf.mxu0
        %v4075 = vpop.f32.mrf.mxu0
        %v4076 = vadd.f32 %v3337, %v4075
        %v4077 = vpop.f32.mrf.mxu0
        %4078 = vmatprep.mubr.bf16.mxu0 0
        %4079 = vmatmul.mubr.bf16.gmra.mxu0 %v3540
        %v4080 = vpop.f32.mrf.mxu0
        %v4081 = vadd.f32 %v3337, %v4080
        %v4082 = vpop.f32.mrf.mxu0
        %v4083 = vpop.f32.mrf.mxu0
        %v4084 = vadd.f32 %v3337, %v4083
        %v4085 = vpop.f32.mrf.mxu0
        %4086 = vdwg.mxu0
        %v4087 = vtanh.pop %v3577
        %v4088 = vtanh.pop %v3580
        %v4089 = vtanh.pop %v3585
        %v4090 = vtanh.pop %v3588
        %v4091 = vtanh.pop %v3593
        %v4092 = vtanh.pop %v3596
        %v4093 = vtanh.pop %v3601
        %v4094 = vtanh.pop %v3604
        %v4095 = vtanh.pop %v3609
        %v4096 = vtanh.pop %v3612
        %v4097 = vtanh.pop %v3617
        %v4098 = vtanh.pop %v3620
        %v4099 = vtanh.pop %v3625
        %v4100 = vtanh.pop %v3628
        %v4101 = vtanh.pop %v3633
        %v4102 = vtanh.pop %v3636
        %v4103 = vtanh.pop %v3641
        %v4104 = vtanh.pop %v3644
        %v4105 = vtanh.pop %v3649
        %v4106 = vtanh.pop %v3652
        %v4107 = vtanh.pop %v3657
        %v4108 = vtanh.pop %v3660
        %v4109 = vtanh.pop %v3665
        %v4110 = vtanh.pop %v3668
        %v4111 = vtanh.pop %v3673
        %v4112 = vtanh.pop %v3676
        %v4113 = vtanh.pop %v3681
        %v4114 = vtanh.pop %v3684
        %v4115 = vtanh.pop %v3689
        %v4116 = vtanh.pop %v3692
        %v4117 = vtanh.pop %v3697
        %v4118 = vtanh.pop %v3700
        %v4119 = vtanh.pop %v3705
        %v4120 = vtanh.pop %v3708
        %v4121 = vtanh.pop %v3713
        %v4122 = vtanh.pop %v3716
        %v4123 = vtanh.pop %v3721
        %v4124 = vtanh.pop %v3724
        %v4125 = vtanh.pop %v3729
        %v4126 = vtanh.pop %v3732
        %v4127 = vtanh.pop %v3737
        %v4128 = vtanh.pop %v3740
        %v4129 = vtanh.pop %v3745
        %v4130 = vtanh.pop %v3748
        %v4131 = vtanh.pop %v3753
        %v4132 = vtanh.pop %v3756
        %v4133 = vtanh.pop %v3761
        %v4134 = vtanh.pop %v3764
        %v4135 = vtanh.pop %v3769
        %v4136 = vtanh.pop %v3772
        %v4137 = vtanh.pop %v3777
        %v4138 = vtanh.pop %v3780
        %v4139 = vtanh.pop %v3785
        %v4140 = vtanh.pop %v3788
        %v4141 = vtanh.pop %v3793
        %v4142 = vtanh.pop %v3796
        %v4143 = vtanh.pop %v3801
        %v4144 = vtanh.pop %v3804
        %v4145 = vtanh.pop %v3809
        %v4146 = vtanh.pop %v3812
        %v4147 = vtanh.pop %v3817
        %v4148 = vtanh.pop %v3820
        %v4149 = vtanh.pop %v3825
        %v4150 = vtanh.pop %v3828
        %v4151 = vtanh.pop %v3833
        %v4152 = vtanh.pop %v3836
        %v4153 = vtanh.pop %v3841
        %v4154 = vtanh.pop %v3844
        %v4155 = vtanh.pop %v3849
        %v4156 = vtanh.pop %v3852
        %v4157 = vtanh.pop %v3857
        %v4158 = vtanh.pop %v3860
        %v4159 = vtanh.pop %v3865
        %v4160 = vtanh.pop %v3868
        %v4161 = vtanh.pop %v3873
        %v4162 = vtanh.pop %v3876
        %v4163 = vtanh.pop %v3881
        %v4164 = vtanh.pop %v3884
        %v4165 = vtanh.pop %v3889
        %v4166 = vtanh.pop %v3892
        %v4167 = vtanh.pop %v3897
        %v4168 = vtanh.pop %v3900
        %v4169 = vtanh.pop %v3905
        %v4170 = vtanh.pop %v3908
        %v4171 = vtanh.pop %v3913
        %v4172 = vtanh.pop %v3916
        %v4173 = vtanh.pop %v3921
        %v4174 = vtanh.pop %v3924
        %v4175 = vtanh.pop %v3929
        %v4176 = vtanh.pop %v3932
        %v4177 = vtanh.pop %v3937
        %v4178 = vtanh.pop %v3940
        %v4179 = vtanh.pop %v3945
        %v4180 = vtanh.pop %v3948
        %v4181 = vtanh.pop %v3953
        %v4182 = vtanh.pop %v3956
        %v4183 = vtanh.pop %v3961
        %v4184 = vtanh.pop %v3964
        %v4185 = vtanh.pop %v3969
        %v4186 = vtanh.pop %v3972
        %v4187 = vtanh.pop %v3977
        %v4188 = vtanh.pop %v3980
        %v4189 = vtanh.pop %v3985
        %v4190 = vtanh.pop %v3988
        %v4191 = vtanh.pop %v3993
        %v4192 = vtanh.pop %v3996
        %v4193 = vtanh.pop %v4001
        %v4194 = vtanh.pop %v4004
        %v4195 = vtanh.pop %v4009
        %v4196 = vtanh.pop %v4012
        %v4197 = vtanh.pop %v4017
        %v4198 = vtanh.pop %v4020
        %v4199 = vtanh.pop %v4025
        %v4200 = vtanh.pop %v4028
        %v4201 = vtanh.pop %v4033
        %v4202 = vtanh.pop %v4036
        %v4203 = vtanh.pop %v4041
        %v4204 = vtanh.pop %v4044
        %v4205 = vtanh.pop %v4049
        %v4206 = vtanh.pop %v4052
        %v4207 = vtanh.pop %v4057
        %v4208 = vtanh.pop %v4060
        %v4209 = vtanh.pop %v4065
        %v4210 = vtanh.pop %v4068
        %v4211 = vtanh.pop %v4073
        %v4212 = vtanh.pop %v4076
        %v4213 = vtanh.pop %v4081
        %v4214 = vtanh.pop %v4084
        %v4215 = vlaneseq
        %v4216 = vshrl.u32 %v4215, 7
        %v4217 = vsub.s32 0, %v4216
        %v4218 = vrot.slane %v369, %v4217
        %v4219 = vmul.f32 %v4087, %v4218
        %v4220 = vmul.f32 %v4088, %v4218
        %v4221 = vmul.f32 %v4089, %v4218
        %v4222 = vmul.f32 %v4090, %v4218
        %v4223 = vmul.f32 %v4091, %v4218
        %v4224 = vmul.f32 %v4092, %v4218
        %v4225 = vmul.f32 %v4093, %v4218
        %v4226 = vmul.f32 %v4094, %v4218
        %v4227 = vmul.f32 %v4095, %v4218
        %v4228 = vmul.f32 %v4096, %v4218
        %v4229 = vmul.f32 %v4097, %v4218
        %v4230 = vmul.f32 %v4098, %v4218
        %v4231 = vmul.f32 %v4099, %v4218
        %v4232 = vmul.f32 %v4100, %v4218
        %v4233 = vmul.f32 %v4101, %v4218
        %v4234 = vmul.f32 %v4102, %v4218
        %v4235 = vmul.f32 %v4103, %v4218
        %v4236 = vmul.f32 %v4104, %v4218
        %v4237 = vmul.f32 %v4105, %v4218
        %v4238 = vmul.f32 %v4106, %v4218
        %v4239 = vmul.f32 %v4107, %v4218
        %v4240 = vmul.f32 %v4108, %v4218
        %v4241 = vmul.f32 %v4109, %v4218
        %v4242 = vmul.f32 %v4110, %v4218
        %v4243 = vmul.f32 %v4111, %v4218
        %v4244 = vmul.f32 %v4112, %v4218
        %v4245 = vmul.f32 %v4113, %v4218
        %v4246 = vmul.f32 %v4114, %v4218
        %v4247 = vmul.f32 %v4115, %v4218
        %v4248 = vmul.f32 %v4116, %v4218
        %v4249 = vmul.f32 %v4117, %v4218
        %v4250 = vmul.f32 %v4118, %v4218
        %v4251 = vmul.f32 %v4119, %v4218
        %v4252 = vmul.f32 %v4120, %v4218
        %v4253 = vmul.f32 %v4121, %v4218
        %v4254 = vmul.f32 %v4122, %v4218
        %v4255 = vmul.f32 %v4123, %v4218
        %v4256 = vmul.f32 %v4124, %v4218
        %v4257 = vmul.f32 %v4125, %v4218
        %v4258 = vmul.f32 %v4126, %v4218
        %v4259 = vmul.f32 %v4127, %v4218
        %v4260 = vmul.f32 %v4128, %v4218
        %v4261 = vmul.f32 %v4129, %v4218
        %v4262 = vmul.f32 %v4130, %v4218
        %v4263 = vmul.f32 %v4131, %v4218
        %v4264 = vmul.f32 %v4132, %v4218
        %v4265 = vmul.f32 %v4133, %v4218
        %v4266 = vmul.f32 %v4134, %v4218
        %v4267 = vmul.f32 %v4135, %v4218
        %v4268 = vmul.f32 %v4136, %v4218
        %v4269 = vmul.f32 %v4137, %v4218
        %v4270 = vmul.f32 %v4138, %v4218
        %v4271 = vmul.f32 %v4139, %v4218
        %v4272 = vmul.f32 %v4140, %v4218
        %v4273 = vmul.f32 %v4141, %v4218
        %v4274 = vmul.f32 %v4142, %v4218
        %v4275 = vmul.f32 %v4143, %v4218
        %v4276 = vmul.f32 %v4144, %v4218
        %v4277 = vmul.f32 %v4145, %v4218
        %v4278 = vmul.f32 %v4146, %v4218
        %v4279 = vmul.f32 %v4147, %v4218
        %v4280 = vmul.f32 %v4148, %v4218
        %v4281 = vmul.f32 %v4149, %v4218
        %v4282 = vmul.f32 %v4150, %v4218
        %v4283 = vmul.f32 %v4151, %v4218
        %v4284 = vmul.f32 %v4152, %v4218
        %v4285 = vmul.f32 %v4153, %v4218
        %v4286 = vmul.f32 %v4154, %v4218
        %v4287 = vmul.f32 %v4155, %v4218
        %v4288 = vmul.f32 %v4156, %v4218
        %v4289 = vmul.f32 %v4157, %v4218
        %v4290 = vmul.f32 %v4158, %v4218
        %v4291 = vmul.f32 %v4159, %v4218
        %v4292 = vmul.f32 %v4160, %v4218
        %v4293 = vmul.f32 %v4161, %v4218
        %v4294 = vmul.f32 %v4162, %v4218
        %v4295 = vmul.f32 %v4163, %v4218
        %v4296 = vmul.f32 %v4164, %v4218
        %v4297 = vmul.f32 %v4165, %v4218
        %v4298 = vmul.f32 %v4166, %v4218
        %v4299 = vmul.f32 %v4167, %v4218
        %v4300 = vmul.f32 %v4168, %v4218
        %v4301 = vmul.f32 %v4169, %v4218
        %v4302 = vmul.f32 %v4170, %v4218
        %v4303 = vmul.f32 %v4171, %v4218
        %v4304 = vmul.f32 %v4172, %v4218
        %v4305 = vmul.f32 %v4173, %v4218
        %v4306 = vmul.f32 %v4174, %v4218
        %v4307 = vmul.f32 %v4175, %v4218
        %v4308 = vmul.f32 %v4176, %v4218
        %v4309 = vmul.f32 %v4177, %v4218
        %v4310 = vmul.f32 %v4178, %v4218
        %v4311 = vmul.f32 %v4179, %v4218
        %v4312 = vmul.f32 %v4180, %v4218
        %v4313 = vmul.f32 %v4181, %v4218
        %v4314 = vmul.f32 %v4182, %v4218
        %v4315 = vmul.f32 %v4183, %v4218
        %v4316 = vmul.f32 %v4184, %v4218
        %v4317 = vmul.f32 %v4185, %v4218
        %v4318 = vmul.f32 %v4186, %v4218
        %v4319 = vmul.f32 %v4187, %v4218
        %v4320 = vmul.f32 %v4188, %v4218
        %v4321 = vmul.f32 %v4189, %v4218
        %v4322 = vmul.f32 %v4190, %v4218
        %v4323 = vmul.f32 %v4191, %v4218
        %v4324 = vmul.f32 %v4192, %v4218
        %v4325 = vmul.f32 %v4193, %v4218
        %v4326 = vmul.f32 %v4194, %v4218
        %v4327 = vmul.f32 %v4195, %v4218
        %v4328 = vmul.f32 %v4196, %v4218
        %v4329 = vmul.f32 %v4197, %v4218
        %v4330 = vmul.f32 %v4198, %v4218
        %v4331 = vmul.f32 %v4199, %v4218
        %v4332 = vmul.f32 %v4200, %v4218
        %v4333 = vmul.f32 %v4201, %v4218
        %v4334 = vmul.f32 %v4202, %v4218
        %v4335 = vmul.f32 %v4203, %v4218
        %v4336 = vmul.f32 %v4204, %v4218
        %v4337 = vmul.f32 %v4205, %v4218
        %v4338 = vmul.f32 %v4206, %v4218
        %v4339 = vmul.f32 %v4207, %v4218
        %v4340 = vmul.f32 %v4208, %v4218
        %v4341 = vmul.f32 %v4209, %v4218
        %v4342 = vmul.f32 %v4210, %v4218
        %v4343 = vmul.f32 %v4211, %v4218
        %v4344 = vmul.f32 %v4212, %v4218
        %v4345 = vmul.f32 %v4213, %v4218
        %v4346 = vmul.f32 %v4214, %v4218
        %v4347 = vsel %vm2170, %v4219, 0.0
        %4348 = vadd.xlane.f32.xlu0 %v4347
        %v4349 = vpop.xlane.xlu0 %4348
        %v4350 = vsel %vm2170, %v4220, 0.0
        %4351 = vadd.xlane.f32.xlu0 %v4350
        %v4352 = vpop.xlane.xlu0 %4351
        %v4353 = vsel %vm2170, %v4221, 0.0
        %4354 = vadd.xlane.f32.xlu0 %v4353
        %v4355 = vpop.xlane.xlu0 %4354
        %v4356 = vsel %vm2170, %v4222, 0.0
        %4357 = vadd.xlane.f32.xlu0 %v4356
        %v4358 = vpop.xlane.xlu0 %4357
        %v4359 = vsel %vm2170, %v4223, 0.0
        %4360 = vadd.xlane.f32.xlu0 %v4359
        %v4361 = vpop.xlane.xlu0 %4360
        %v4362 = vsel %vm2170, %v4224, 0.0
        %4363 = vadd.xlane.f32.xlu0 %v4362
        %v4364 = vpop.xlane.xlu0 %4363
        %v4365 = vsel %vm2170, %v4225, 0.0
        %4366 = vadd.xlane.f32.xlu0 %v4365
        %v4367 = vpop.xlane.xlu0 %4366
        %v4368 = vsel %vm2170, %v4226, 0.0
        %4369 = vadd.xlane.f32.xlu0 %v4368
        %v4370 = vpop.xlane.xlu0 %4369
        %v4371 = vsel %vm2170, %v4227, 0.0
        %4372 = vadd.xlane.f32.xlu0 %v4371
        %v4373 = vpop.xlane.xlu0 %4372
        %v4374 = vsel %vm2170, %v4228, 0.0
        %4375 = vadd.xlane.f32.xlu0 %v4374
        %v4376 = vpop.xlane.xlu0 %4375
        %v4377 = vsel %vm2170, %v4229, 0.0
        %4378 = vadd.xlane.f32.xlu0 %v4377
        %v4379 = vpop.xlane.xlu0 %4378
        %v4380 = vsel %vm2170, %v4230, 0.0
        %4381 = vadd.xlane.f32.xlu0 %v4380
        %v4382 = vpop.xlane.xlu0 %4381
        %v4383 = vsel %vm2170, %v4231, 0.0
        %4384 = vadd.xlane.f32.xlu0 %v4383
        %v4385 = vpop.xlane.xlu0 %4384
        %v4386 = vsel %vm2170, %v4232, 0.0
        %4387 = vadd.xlane.f32.xlu0 %v4386
        %v4388 = vpop.xlane.xlu0 %4387
        %v4389 = vsel %vm2170, %v4233, 0.0
        %4390 = vadd.xlane.f32.xlu0 %v4389
        %v4391 = vpop.xlane.xlu0 %4390
        %v4392 = vsel %vm2170, %v4234, 0.0
        %4393 = vadd.xlane.f32.xlu0 %v4392
        %v4394 = vpop.xlane.xlu0 %4393
        %v4395 = vsel %vm2170, %v4235, 0.0
        %4396 = vadd.xlane.f32.xlu0 %v4395
        %v4397 = vpop.xlane.xlu0 %4396
        %v4398 = vsel %vm2170, %v4236, 0.0
        %4399 = vadd.xlane.f32.xlu0 %v4398
        %v4400 = vpop.xlane.xlu0 %4399
        %v4401 = vsel %vm2170, %v4237, 0.0
        %4402 = vadd.xlane.f32.xlu0 %v4401
        %v4403 = vpop.xlane.xlu0 %4402
        %v4404 = vsel %vm2170, %v4238, 0.0
        %4405 = vadd.xlane.f32.xlu0 %v4404
        %v4406 = vpop.xlane.xlu0 %4405
        %v4407 = vsel %vm2170, %v4239, 0.0
        %4408 = vadd.xlane.f32.xlu0 %v4407
        %v4409 = vpop.xlane.xlu0 %4408
        %v4410 = vsel %vm2170, %v4240, 0.0
        %4411 = vadd.xlane.f32.xlu0 %v4410
        %v4412 = vpop.xlane.xlu0 %4411
        %v4413 = vsel %vm2170, %v4241, 0.0
        %4414 = vadd.xlane.f32.xlu0 %v4413
        %v4415 = vpop.xlane.xlu0 %4414
        %v4416 = vsel %vm2170, %v4242, 0.0
        %4417 = vadd.xlane.f32.xlu0 %v4416
        %v4418 = vpop.xlane.xlu0 %4417
        %v4419 = vsel %vm2170, %v4243, 0.0
        %4420 = vadd.xlane.f32.xlu0 %v4419
        %v4421 = vpop.xlane.xlu0 %4420
        %v4422 = vsel %vm2170, %v4244, 0.0
        %4423 = vadd.xlane.f32.xlu0 %v4422
        %v4424 = vpop.xlane.xlu0 %4423
        %v4425 = vsel %vm2170, %v4245, 0.0
        %4426 = vadd.xlane.f32.xlu0 %v4425
        %v4427 = vpop.xlane.xlu0 %4426
        %v4428 = vsel %vm2170, %v4246, 0.0
        %4429 = vadd.xlane.f32.xlu0 %v4428
        %v4430 = vpop.xlane.xlu0 %4429
        %v4431 = vsel %vm2170, %v4247, 0.0
        %4432 = vadd.xlane.f32.xlu0 %v4431
        %v4433 = vpop.xlane.xlu0 %4432
        %v4434 = vsel %vm2170, %v4248, 0.0
        %4435 = vadd.xlane.f32.xlu0 %v4434
        %v4436 = vpop.xlane.xlu0 %4435
        %v4437 = vsel %vm2170, %v4249, 0.0
        %4438 = vadd.xlane.f32.xlu0 %v4437
        %v4439 = vpop.xlane.xlu0 %4438
        %v4440 = vsel %vm2170, %v4250, 0.0
        %4441 = vadd.xlane.f32.xlu0 %v4440
        %v4442 = vpop.xlane.xlu0 %4441
        %v4443 = vsel %vm2170, %v4251, 0.0
        %4444 = vadd.xlane.f32.xlu0 %v4443
        %v4445 = vpop.xlane.xlu0 %4444
        %v4446 = vsel %vm2170, %v4252, 0.0
        %4447 = vadd.xlane.f32.xlu0 %v4446
        %v4448 = vpop.xlane.xlu0 %4447
        %v4449 = vsel %vm2170, %v4253, 0.0
        %4450 = vadd.xlane.f32.xlu0 %v4449
        %v4451 = vpop.xlane.xlu0 %4450
        %v4452 = vsel %vm2170, %v4254, 0.0
        %4453 = vadd.xlane.f32.xlu0 %v4452
        %v4454 = vpop.xlane.xlu0 %4453
        %v4455 = vsel %vm2170, %v4255, 0.0
        %4456 = vadd.xlane.f32.xlu0 %v4455
        %v4457 = vpop.xlane.xlu0 %4456
        %v4458 = vsel %vm2170, %v4256, 0.0
        %4459 = vadd.xlane.f32.xlu0 %v4458
        %v4460 = vpop.xlane.xlu0 %4459
        %v4461 = vsel %vm2170, %v4257, 0.0
        %4462 = vadd.xlane.f32.xlu0 %v4461
        %v4463 = vpop.xlane.xlu0 %4462
        %v4464 = vsel %vm2170, %v4258, 0.0
        %4465 = vadd.xlane.f32.xlu0 %v4464
        %v4466 = vpop.xlane.xlu0 %4465
        %v4467 = vsel %vm2170, %v4259, 0.0
        %4468 = vadd.xlane.f32.xlu0 %v4467
        %v4469 = vpop.xlane.xlu0 %4468
        %v4470 = vsel %vm2170, %v4260, 0.0
        %4471 = vadd.xlane.f32.xlu0 %v4470
        %v4472 = vpop.xlane.xlu0 %4471
        %v4473 = vsel %vm2170, %v4261, 0.0
        %4474 = vadd.xlane.f32.xlu0 %v4473
        %v4475 = vpop.xlane.xlu0 %4474
        %v4476 = vsel %vm2170, %v4262, 0.0
        %4477 = vadd.xlane.f32.xlu0 %v4476
        %v4478 = vpop.xlane.xlu0 %4477
        %v4479 = vsel %vm2170, %v4263, 0.0
        %4480 = vadd.xlane.f32.xlu0 %v4479
        %v4481 = vpop.xlane.xlu0 %4480
        %v4482 = vsel %vm2170, %v4264, 0.0
        %4483 = vadd.xlane.f32.xlu0 %v4482
        %v4484 = vpop.xlane.xlu0 %4483
        %v4485 = vsel %vm2170, %v4265, 0.0
        %4486 = vadd.xlane.f32.xlu0 %v4485
        %v4487 = vpop.xlane.xlu0 %4486
        %v4488 = vsel %vm2170, %v4266, 0.0
        %4489 = vadd.xlane.f32.xlu0 %v4488
        %v4490 = vpop.xlane.xlu0 %4489
        %v4491 = vsel %vm2170, %v4267, 0.0
        %4492 = vadd.xlane.f32.xlu0 %v4491
        %v4493 = vpop.xlane.xlu0 %4492
        %v4494 = vsel %vm2170, %v4268, 0.0
        %4495 = vadd.xlane.f32.xlu0 %v4494
        %v4496 = vpop.xlane.xlu0 %4495
        %v4497 = vsel %vm2170, %v4269, 0.0
        %4498 = vadd.xlane.f32.xlu0 %v4497
        %v4499 = vpop.xlane.xlu0 %4498
        %v4500 = vsel %vm2170, %v4270, 0.0
        %4501 = vadd.xlane.f32.xlu0 %v4500
        %v4502 = vpop.xlane.xlu0 %4501
        %v4503 = vsel %vm2170, %v4271, 0.0
        %4504 = vadd.xlane.f32.xlu0 %v4503
        %v4505 = vpop.xlane.xlu0 %4504
        %v4506 = vsel %vm2170, %v4272, 0.0
        %4507 = vadd.xlane.f32.xlu0 %v4506
        %v4508 = vpop.xlane.xlu0 %4507
        %v4509 = vsel %vm2170, %v4273, 0.0
        %4510 = vadd.xlane.f32.xlu0 %v4509
        %v4511 = vpop.xlane.xlu0 %4510
        %v4512 = vsel %vm2170, %v4274, 0.0
        %4513 = vadd.xlane.f32.xlu0 %v4512
        %v4514 = vpop.xlane.xlu0 %4513
        %v4515 = vsel %vm2170, %v4275, 0.0
        %4516 = vadd.xlane.f32.xlu0 %v4515
        %v4517 = vpop.xlane.xlu0 %4516
        %v4518 = vsel %vm2170, %v4276, 0.0
        %4519 = vadd.xlane.f32.xlu0 %v4518
        %v4520 = vpop.xlane.xlu0 %4519
        %v4521 = vsel %vm2170, %v4277, 0.0
        %4522 = vadd.xlane.f32.xlu0 %v4521
        %v4523 = vpop.xlane.xlu0 %4522
        %v4524 = vsel %vm2170, %v4278, 0.0
        %4525 = vadd.xlane.f32.xlu0 %v4524
        %v4526 = vpop.xlane.xlu0 %4525
        %v4527 = vsel %vm2170, %v4279, 0.0
        %4528 = vadd.xlane.f32.xlu0 %v4527
        %v4529 = vpop.xlane.xlu0 %4528
        %v4530 = vsel %vm2170, %v4280, 0.0
        %4531 = vadd.xlane.f32.xlu0 %v4530
        %v4532 = vpop.xlane.xlu0 %4531
        %v4533 = vsel %vm2170, %v4281, 0.0
        %4534 = vadd.xlane.f32.xlu0 %v4533
        %v4535 = vpop.xlane.xlu0 %4534
        %v4536 = vsel %vm2170, %v4282, 0.0
        %4537 = vadd.xlane.f32.xlu0 %v4536
        %v4538 = vpop.xlane.xlu0 %4537
        %v4539 = vsel %vm2170, %v4283, 0.0
        %4540 = vadd.xlane.f32.xlu0 %v4539
        %v4541 = vpop.xlane.xlu0 %4540
        %v4542 = vsel %vm2170, %v4284, 0.0
        %4543 = vadd.xlane.f32.xlu0 %v4542
        %v4544 = vpop.xlane.xlu0 %4543
        %v4545 = vsel %vm2170, %v4285, 0.0
        %4546 = vadd.xlane.f32.xlu0 %v4545
        %v4547 = vpop.xlane.xlu0 %4546
        %v4548 = vsel %vm2170, %v4286, 0.0
        %4549 = vadd.xlane.f32.xlu0 %v4548
        %v4550 = vpop.xlane.xlu0 %4549
        %v4551 = vsel %vm2170, %v4287, 0.0
        %4552 = vadd.xlane.f32.xlu0 %v4551
        %v4553 = vpop.xlane.xlu0 %4552
        %v4554 = vsel %vm2170, %v4288, 0.0
        %4555 = vadd.xlane.f32.xlu0 %v4554
        %v4556 = vpop.xlane.xlu0 %4555
        %v4557 = vsel %vm2170, %v4289, 0.0
        %4558 = vadd.xlane.f32.xlu0 %v4557
        %v4559 = vpop.xlane.xlu0 %4558
        %v4560 = vsel %vm2170, %v4290, 0.0
        %4561 = vadd.xlane.f32.xlu0 %v4560
        %v4562 = vpop.xlane.xlu0 %4561
        %v4563 = vsel %vm2170, %v4291, 0.0
        %4564 = vadd.xlane.f32.xlu0 %v4563
        %v4565 = vpop.xlane.xlu0 %4564
        %v4566 = vsel %vm2170, %v4292, 0.0
        %4567 = vadd.xlane.f32.xlu0 %v4566
        %v4568 = vpop.xlane.xlu0 %4567
        %v4569 = vsel %vm2170, %v4293, 0.0
        %4570 = vadd.xlane.f32.xlu0 %v4569
        %v4571 = vpop.xlane.xlu0 %4570
        %v4572 = vsel %vm2170, %v4294, 0.0
        %4573 = vadd.xlane.f32.xlu0 %v4572
        %v4574 = vpop.xlane.xlu0 %4573
        %v4575 = vsel %vm2170, %v4295, 0.0
        %4576 = vadd.xlane.f32.xlu0 %v4575
        %v4577 = vpop.xlane.xlu0 %4576
        %v4578 = vsel %vm2170, %v4296, 0.0
        %4579 = vadd.xlane.f32.xlu0 %v4578
        %v4580 = vpop.xlane.xlu0 %4579
        %v4581 = vsel %vm2170, %v4297, 0.0
        %4582 = vadd.xlane.f32.xlu0 %v4581
        %v4583 = vpop.xlane.xlu0 %4582
        %v4584 = vsel %vm2170, %v4298, 0.0
        %4585 = vadd.xlane.f32.xlu0 %v4584
        %v4586 = vpop.xlane.xlu0 %4585
        %v4587 = vsel %vm2170, %v4299, 0.0
        %4588 = vadd.xlane.f32.xlu0 %v4587
        %v4589 = vpop.xlane.xlu0 %4588
        %v4590 = vsel %vm2170, %v4300, 0.0
        %4591 = vadd.xlane.f32.xlu0 %v4590
        %v4592 = vpop.xlane.xlu0 %4591
        %v4593 = vsel %vm2170, %v4301, 0.0
        %4594 = vadd.xlane.f32.xlu0 %v4593
        %v4595 = vpop.xlane.xlu0 %4594
        %v4596 = vsel %vm2170, %v4302, 0.0
        %4597 = vadd.xlane.f32.xlu0 %v4596
        %v4598 = vpop.xlane.xlu0 %4597
        %v4599 = vsel %vm2170, %v4303, 0.0
        %4600 = vadd.xlane.f32.xlu0 %v4599
        %v4601 = vpop.xlane.xlu0 %4600
        %v4602 = vsel %vm2170, %v4304, 0.0
        %4603 = vadd.xlane.f32.xlu0 %v4602
        %v4604 = vpop.xlane.xlu0 %4603
        %v4605 = vsel %vm2170, %v4305, 0.0
        %4606 = vadd.xlane.f32.xlu0 %v4605
        %v4607 = vpop.xlane.xlu0 %4606
        %v4608 = vsel %vm2170, %v4306, 0.0
        %4609 = vadd.xlane.f32.xlu0 %v4608
        %v4610 = vpop.xlane.xlu0 %4609
        %v4611 = vsel %vm2170, %v4307, 0.0
        %4612 = vadd.xlane.f32.xlu0 %v4611
        %v4613 = vpop.xlane.xlu0 %4612
        %v4614 = vsel %vm2170, %v4308, 0.0
        %4615 = vadd.xlane.f32.xlu0 %v4614
        %v4616 = vpop.xlane.xlu0 %4615
        %v4617 = vsel %vm2170, %v4309, 0.0
        %4618 = vadd.xlane.f32.xlu0 %v4617
        %v4619 = vpop.xlane.xlu0 %4618
        %v4620 = vsel %vm2170, %v4310, 0.0
        %4621 = vadd.xlane.f32.xlu0 %v4620
        %v4622 = vpop.xlane.xlu0 %4621
        %v4623 = vsel %vm2170, %v4311, 0.0
        %4624 = vadd.xlane.f32.xlu0 %v4623
        %v4625 = vpop.xlane.xlu0 %4624
        %v4626 = vsel %vm2170, %v4312, 0.0
        %4627 = vadd.xlane.f32.xlu0 %v4626
        %v4628 = vpop.xlane.xlu0 %4627
        %v4629 = vsel %vm2170, %v4313, 0.0
        %4630 = vadd.xlane.f32.xlu0 %v4629
        %v4631 = vpop.xlane.xlu0 %4630
        %v4632 = vsel %vm2170, %v4314, 0.0
        %4633 = vadd.xlane.f32.xlu0 %v4632
        %v4634 = vpop.xlane.xlu0 %4633
        %v4635 = vsel %vm2170, %v4315, 0.0
        %4636 = vadd.xlane.f32.xlu0 %v4635
        %v4637 = vpop.xlane.xlu0 %4636
        %v4638 = vsel %vm2170, %v4316, 0.0
        %4639 = vadd.xlane.f32.xlu0 %v4638
        %v4640 = vpop.xlane.xlu0 %4639
        %v4641 = vsel %vm2170, %v4317, 0.0
        %4642 = vadd.xlane.f32.xlu0 %v4641
        %v4643 = vpop.xlane.xlu0 %4642
        %v4644 = vsel %vm2170, %v4318, 0.0
        %4645 = vadd.xlane.f32.xlu0 %v4644
        %v4646 = vpop.xlane.xlu0 %4645
        %v4647 = vsel %vm2170, %v4319, 0.0
        %4648 = vadd.xlane.f32.xlu0 %v4647
        %v4649 = vpop.xlane.xlu0 %4648
        %v4650 = vsel %vm2170, %v4320, 0.0
        %4651 = vadd.xlane.f32.xlu0 %v4650
        %v4652 = vpop.xlane.xlu0 %4651
        %v4653 = vsel %vm2170, %v4321, 0.0
        %4654 = vadd.xlane.f32.xlu0 %v4653
        %v4655 = vpop.xlane.xlu0 %4654
        %v4656 = vsel %vm2170, %v4322, 0.0
        %4657 = vadd.xlane.f32.xlu0 %v4656
        %v4658 = vpop.xlane.xlu0 %4657
        %v4659 = vsel %vm2170, %v4323, 0.0
        %4660 = vadd.xlane.f32.xlu0 %v4659
        %v4661 = vpop.xlane.xlu0 %4660
        %v4662 = vsel %vm2170, %v4324, 0.0
        %4663 = vadd.xlane.f32.xlu0 %v4662
        %v4664 = vpop.xlane.xlu0 %4663
        %v4665 = vsel %vm2170, %v4325, 0.0
        %4666 = vadd.xlane.f32.xlu0 %v4665
        %v4667 = vpop.xlane.xlu0 %4666
        %v4668 = vsel %vm2170, %v4326, 0.0
        %4669 = vadd.xlane.f32.xlu0 %v4668
        %v4670 = vpop.xlane.xlu0 %4669
        %v4671 = vsel %vm2170, %v4327, 0.0
        %4672 = vadd.xlane.f32.xlu0 %v4671
        %v4673 = vpop.xlane.xlu0 %4672
        %v4674 = vsel %vm2170, %v4328, 0.0
        %4675 = vadd.xlane.f32.xlu0 %v4674
        %v4676 = vpop.xlane.xlu0 %4675
        %v4677 = vsel %vm2170, %v4329, 0.0
        %4678 = vadd.xlane.f32.xlu0 %v4677
        %v4679 = vpop.xlane.xlu0 %4678
        %v4680 = vsel %vm2170, %v4330, 0.0
        %4681 = vadd.xlane.f32.xlu0 %v4680
        %v4682 = vpop.xlane.xlu0 %4681
        %v4683 = vsel %vm2170, %v4331, 0.0
        %4684 = vadd.xlane.f32.xlu0 %v4683
        %v4685 = vpop.xlane.xlu0 %4684
        %v4686 = vsel %vm2170, %v4332, 0.0
        %4687 = vadd.xlane.f32.xlu0 %v4686
        %v4688 = vpop.xlane.xlu0 %4687
        %v4689 = vsel %vm2170, %v4333, 0.0
        %4690 = vadd.xlane.f32.xlu0 %v4689
        %v4691 = vpop.xlane.xlu0 %4690
        %v4692 = vsel %vm2170, %v4334, 0.0
        %4693 = vadd.xlane.f32.xlu0 %v4692
        %v4694 = vpop.xlane.xlu0 %4693
        %v4695 = vsel %vm2170, %v4335, 0.0
        %4696 = vadd.xlane.f32.xlu0 %v4695
        %v4697 = vpop.xlane.xlu0 %4696
        %v4698 = vsel %vm2170, %v4336, 0.0
        %4699 = vadd.xlane.f32.xlu0 %v4698
        %v4700 = vpop.xlane.xlu0 %4699
        %v4701 = vsel %vm2170, %v4337, 0.0
        %4702 = vadd.xlane.f32.xlu0 %v4701
        %v4703 = vpop.xlane.xlu0 %4702
        %v4704 = vsel %vm2170, %v4338, 0.0
        %4705 = vadd.xlane.f32.xlu0 %v4704
        %v4706 = vpop.xlane.xlu0 %4705
        %v4707 = vsel %vm2170, %v4339, 0.0
        %4708 = vadd.xlane.f32.xlu0 %v4707
        %v4709 = vpop.xlane.xlu0 %4708
        %v4710 = vsel %vm2170, %v4340, 0.0
        %4711 = vadd.xlane.f32.xlu0 %v4710
        %v4712 = vpop.xlane.xlu0 %4711
        %v4713 = vsel %vm2170, %v4341, 0.0
        %4714 = vadd.xlane.f32.xlu0 %v4713
        %v4715 = vpop.xlane.xlu0 %4714
        %v4716 = vsel %vm2170, %v4342, 0.0
        %4717 = vadd.xlane.f32.xlu0 %v4716
        %v4718 = vpop.xlane.xlu0 %4717
        %v4719 = vsel %vm2170, %v4343, 0.0
        %4720 = vadd.xlane.f32.xlu0 %v4719
        %v4721 = vpop.xlane.xlu0 %4720
        %v4722 = vsel %vm2170, %v4344, 0.0
        %4723 = vadd.xlane.f32.xlu0 %v4722
        %v4724 = vpop.xlane.xlu0 %4723
        %v4725 = vsel %vm2170, %v4345, 0.0
        %4726 = vadd.xlane.f32.xlu0 %v4725
        %v4727 = vpop.xlane.xlu0 %4726
        %v4728 = vsel %vm2170, %v4346, 0.0
        %4729 = vadd.xlane.f32.xlu0 %v4728
        %v4730 = vpop.xlane.xlu0 %4729
        %v4731 = vadd.s32 %v759, 8
        %v4732 = vadd.s32 %v759, 16
        %v4733 = vadd.s32 %v759, 24
        %vm4734 = vcmp.lt.s32.totalorder %v759, 30
        %vm4735 = vcmp.lt.s32.totalorder %v4731, 30
        %vm4736 = vcmp.lt.s32.totalorder %v4732, 30
        %vm4737 = vcmp.lt.s32.totalorder %v4733, 30
        %v4738 = vsel %vm4734, %v4349, -1e+09
        %v4739 = vsel %vm4735, %v4352, -1e+09
        %v4740 = vsel %vm4736, %v4355, -1e+09
        %v4741 = vsel %vm4737, %v4358, -1e+09
        %v4742 = vsel %vm4734, %v4361, -1e+09
        %v4743 = vsel %vm4735, %v4364, -1e+09
        %v4744 = vsel %vm4736, %v4367, -1e+09
        %v4745 = vsel %vm4737, %v4370, -1e+09
        %v4746 = vsel %vm4734, %v4373, -1e+09
        %v4747 = vsel %vm4735, %v4376, -1e+09
        %v4748 = vsel %vm4736, %v4379, -1e+09
        %v4749 = vsel %vm4737, %v4382, -1e+09
        %v4750 = vsel %vm4734, %v4385, -1e+09
        %v4751 = vsel %vm4735, %v4388, -1e+09
        %v4752 = vsel %vm4736, %v4391, -1e+09
        %v4753 = vsel %vm4737, %v4394, -1e+09
        %v4754 = vsel %vm4734, %v4397, -1e+09
        %v4755 = vsel %vm4735, %v4400, -1e+09
        %v4756 = vsel %vm4736, %v4403, -1e+09
        %v4757 = vsel %vm4737, %v4406, -1e+09
        %v4758 = vsel %vm4734, %v4409, -1e+09
        %v4759 = vsel %vm4735, %v4412, -1e+09
        %v4760 = vsel %vm4736, %v4415, -1e+09
        %v4761 = vsel %vm4737, %v4418, -1e+09
        %v4762 = vsel %vm4734, %v4421, -1e+09
        %v4763 = vsel %vm4735, %v4424, -1e+09
        %v4764 = vsel %vm4736, %v4427, -1e+09
        %v4765 = vsel %vm4737, %v4430, -1e+09
        %v4766 = vsel %vm4734, %v4433, -1e+09
        %v4767 = vsel %vm4735, %v4436, -1e+09
        %v4768 = vsel %vm4736, %v4439, -1e+09
        %v4769 = vsel %vm4737, %v4442, -1e+09
        %v4770 = vsel %vm4734, %v4445, -1e+09
        %v4771 = vsel %vm4735, %v4448, -1e+09
        %v4772 = vsel %vm4736, %v4451, -1e+09
        %v4773 = vsel %vm4737, %v4454, -1e+09
        %v4774 = vsel %vm4734, %v4457, -1e+09
        %v4775 = vsel %vm4735, %v4460, -1e+09
        %v4776 = vsel %vm4736, %v4463, -1e+09
        %v4777 = vsel %vm4737, %v4466, -1e+09
        %v4778 = vsel %vm4734, %v4469, -1e+09
        %v4779 = vsel %vm4735, %v4472, -1e+09
        %v4780 = vsel %vm4736, %v4475, -1e+09
        %v4781 = vsel %vm4737, %v4478, -1e+09
        %v4782 = vsel %vm4734, %v4481, -1e+09
        %v4783 = vsel %vm4735, %v4484, -1e+09
        %v4784 = vsel %vm4736, %v4487, -1e+09
        %v4785 = vsel %vm4737, %v4490, -1e+09
        %v4786 = vsel %vm4734, %v4493, -1e+09
        %v4787 = vsel %vm4735, %v4496, -1e+09
        %v4788 = vsel %vm4736, %v4499, -1e+09
        %v4789 = vsel %vm4737, %v4502, -1e+09
        %v4790 = vsel %vm4734, %v4505, -1e+09
        %v4791 = vsel %vm4735, %v4508, -1e+09
        %v4792 = vsel %vm4736, %v4511, -1e+09
        %v4793 = vsel %vm4737, %v4514, -1e+09
        %v4794 = vsel %vm4734, %v4517, -1e+09
        %v4795 = vsel %vm4735, %v4520, -1e+09
        %v4796 = vsel %vm4736, %v4523, -1e+09
        %v4797 = vsel %vm4737, %v4526, -1e+09
        %v4798 = vsel %vm4734, %v4529, -1e+09
        %v4799 = vsel %vm4735, %v4532, -1e+09
        %v4800 = vsel %vm4736, %v4535, -1e+09
        %v4801 = vsel %vm4737, %v4538, -1e+09
        %v4802 = vsel %vm4734, %v4541, -1e+09
        %v4803 = vsel %vm4735, %v4544, -1e+09
        %v4804 = vsel %vm4736, %v4547, -1e+09
        %v4805 = vsel %vm4737, %v4550, -1e+09
        %v4806 = vsel %vm4734, %v4553, -1e+09
        %v4807 = vsel %vm4735, %v4556, -1e+09
        %v4808 = vsel %vm4736, %v4559, -1e+09
        %v4809 = vsel %vm4737, %v4562, -1e+09
        %v4810 = vsel %vm4734, %v4565, -1e+09
        %v4811 = vsel %vm4735, %v4568, -1e+09
        %v4812 = vsel %vm4736, %v4571, -1e+09
        %v4813 = vsel %vm4737, %v4574, -1e+09
        %v4814 = vsel %vm4734, %v4577, -1e+09
        %v4815 = vsel %vm4735, %v4580, -1e+09
        %v4816 = vsel %vm4736, %v4583, -1e+09
        %v4817 = vsel %vm4737, %v4586, -1e+09
        %v4818 = vsel %vm4734, %v4589, -1e+09
        %v4819 = vsel %vm4735, %v4592, -1e+09
        %v4820 = vsel %vm4736, %v4595, -1e+09
        %v4821 = vsel %vm4737, %v4598, -1e+09
        %v4822 = vsel %vm4734, %v4601, -1e+09
        %v4823 = vsel %vm4735, %v4604, -1e+09
        %v4824 = vsel %vm4736, %v4607, -1e+09
        %v4825 = vsel %vm4737, %v4610, -1e+09
        %v4826 = vsel %vm4734, %v4613, -1e+09
        %v4827 = vsel %vm4735, %v4616, -1e+09
        %v4828 = vsel %vm4736, %v4619, -1e+09
        %v4829 = vsel %vm4737, %v4622, -1e+09
        %v4830 = vsel %vm4734, %v4625, -1e+09
        %v4831 = vsel %vm4735, %v4628, -1e+09
        %v4832 = vsel %vm4736, %v4631, -1e+09
        %v4833 = vsel %vm4737, %v4634, -1e+09
        %v4834 = vsel %vm4734, %v4637, -1e+09
        %v4835 = vsel %vm4735, %v4640, -1e+09
        %v4836 = vsel %vm4736, %v4643, -1e+09
        %v4837 = vsel %vm4737, %v4646, -1e+09
        %v4838 = vsel %vm4734, %v4649, -1e+09
        %v4839 = vsel %vm4735, %v4652, -1e+09
        %v4840 = vsel %vm4736, %v4655, -1e+09
        %v4841 = vsel %vm4737, %v4658, -1e+09
        %v4842 = vsel %vm4734, %v4661, -1e+09
        %v4843 = vsel %vm4735, %v4664, -1e+09
        %v4844 = vsel %vm4736, %v4667, -1e+09
        %v4845 = vsel %vm4737, %v4670, -1e+09
        %v4846 = vsel %vm4734, %v4673, -1e+09
        %v4847 = vsel %vm4735, %v4676, -1e+09
        %v4848 = vsel %vm4736, %v4679, -1e+09
        %v4849 = vsel %vm4737, %v4682, -1e+09
        %v4850 = vsel %vm4734, %v4685, -1e+09
        %v4851 = vsel %vm4735, %v4688, -1e+09
        %v4852 = vsel %vm4736, %v4691, -1e+09
        %v4853 = vsel %vm4737, %v4694, -1e+09
        %v4854 = vsel %vm4734, %v4697, -1e+09
        %v4855 = vsel %vm4735, %v4700, -1e+09
        %v4856 = vsel %vm4736, %v4703, -1e+09
        %v4857 = vsel %vm4737, %v4706, -1e+09
        %v4858 = vsel %vm4734, %v4709, -1e+09
        %v4859 = vsel %vm4735, %v4712, -1e+09
        %v4860 = vsel %vm4736, %v4715, -1e+09
        %v4861 = vsel %vm4737, %v4718, -1e+09
        %v4862 = vsel %vm4734, %v4721, -1e+09
        %v4863 = vsel %vm4735, %v4724, -1e+09
        %v4864 = vsel %vm4736, %v4727, -1e+09
        %v4865 = vsel %vm4737, %v4730, -1e+09
        %v4866 = vmax.f32 %v4738, %v4739
        %v4867 = vmax.f32 %v4866, %v4740
        %v4868 = vmax.f32 %v4867, %v4741
        %v4869 = vrot.slane %v4868, 4
        %v4870 = vmax.f32 %v4868, %v4869
        %v4871 = vrot.slane %v4870, 2
        %v4872 = vmax.f32 %v4870, %v4871
        %v4873 = vrot.slane %v4872, 1
        %v4874 = vmax.f32 %v4872, %v4873
        %v4875 = vmax.f32 %v4742, %v4743
        %v4876 = vmax.f32 %v4875, %v4744
        %v4877 = vmax.f32 %v4876, %v4745
        %v4878 = vrot.slane %v4877, 4
        %v4879 = vmax.f32 %v4877, %v4878
        %v4880 = vrot.slane %v4879, 2
        %v4881 = vmax.f32 %v4879, %v4880
        %v4882 = vrot.slane %v4881, 1
        %v4883 = vmax.f32 %v4881, %v4882
        %v4884 = vmax.f32 %v4746, %v4747
        %v4885 = vmax.f32 %v4884, %v4748
        %v4886 = vmax.f32 %v4885, %v4749
        %v4887 = vrot.slane %v4886, 4
        %v4888 = vmax.f32 %v4886, %v4887
        %v4889 = vrot.slane %v4888, 2
        %v4890 = vmax.f32 %v4888, %v4889
        %v4891 = vrot.slane %v4890, 1
        %v4892 = vmax.f32 %v4890, %v4891
        %v4893 = vmax.f32 %v4750, %v4751
        %v4894 = vmax.f32 %v4893, %v4752
        %v4895 = vmax.f32 %v4894, %v4753
        %v4896 = vrot.slane %v4895, 4
        %v4897 = vmax.f32 %v4895, %v4896
        %v4898 = vrot.slane %v4897, 2
        %v4899 = vmax.f32 %v4897, %v4898
        %v4900 = vrot.slane %v4899, 1
        %v4901 = vmax.f32 %v4899, %v4900
        %v4902 = vmax.f32 %v4754, %v4755
        %v4903 = vmax.f32 %v4902, %v4756
        %v4904 = vmax.f32 %v4903, %v4757
        %v4905 = vrot.slane %v4904, 4
        %v4906 = vmax.f32 %v4904, %v4905
        %v4907 = vrot.slane %v4906, 2
        %v4908 = vmax.f32 %v4906, %v4907
        %v4909 = vrot.slane %v4908, 1
        %v4910 = vmax.f32 %v4908, %v4909
        %v4911 = vmax.f32 %v4758, %v4759
        %v4912 = vmax.f32 %v4911, %v4760
        %v4913 = vmax.f32 %v4912, %v4761
        %v4914 = vrot.slane %v4913, 4
        %v4915 = vmax.f32 %v4913, %v4914
        %v4916 = vrot.slane %v4915, 2
        %v4917 = vmax.f32 %v4915, %v4916
        %v4918 = vrot.slane %v4917, 1
        %v4919 = vmax.f32 %v4917, %v4918
        %v4920 = vmax.f32 %v4762, %v4763
        %v4921 = vmax.f32 %v4920, %v4764
        %v4922 = vmax.f32 %v4921, %v4765
        %v4923 = vrot.slane %v4922, 4
        %v4924 = vmax.f32 %v4922, %v4923
        %v4925 = vrot.slane %v4924, 2
        %v4926 = vmax.f32 %v4924, %v4925
        %v4927 = vrot.slane %v4926, 1
        %v4928 = vmax.f32 %v4926, %v4927
        %v4929 = vmax.f32 %v4766, %v4767
        %v4930 = vmax.f32 %v4929, %v4768
        %v4931 = vmax.f32 %v4930, %v4769
        %v4932 = vrot.slane %v4931, 4
        %v4933 = vmax.f32 %v4931, %v4932
        %v4934 = vrot.slane %v4933, 2
        %v4935 = vmax.f32 %v4933, %v4934
        %v4936 = vrot.slane %v4935, 1
        %v4937 = vmax.f32 %v4935, %v4936
        %v4938 = vmax.f32 %v4770, %v4771
        %v4939 = vmax.f32 %v4938, %v4772
        %v4940 = vmax.f32 %v4939, %v4773
        %v4941 = vrot.slane %v4940, 4
        %v4942 = vmax.f32 %v4940, %v4941
        %v4943 = vrot.slane %v4942, 2
        %v4944 = vmax.f32 %v4942, %v4943
        %v4945 = vrot.slane %v4944, 1
        %v4946 = vmax.f32 %v4944, %v4945
        %v4947 = vmax.f32 %v4774, %v4775
        %v4948 = vmax.f32 %v4947, %v4776
        %v4949 = vmax.f32 %v4948, %v4777
        %v4950 = vrot.slane %v4949, 4
        %v4951 = vmax.f32 %v4949, %v4950
        %v4952 = vrot.slane %v4951, 2
        %v4953 = vmax.f32 %v4951, %v4952
        %v4954 = vrot.slane %v4953, 1
        %v4955 = vmax.f32 %v4953, %v4954
        %v4956 = vmax.f32 %v4778, %v4779
        %v4957 = vmax.f32 %v4956, %v4780
        %v4958 = vmax.f32 %v4957, %v4781
        %v4959 = vrot.slane %v4958, 4
        %v4960 = vmax.f32 %v4958, %v4959
        %v4961 = vrot.slane %v4960, 2
        %v4962 = vmax.f32 %v4960, %v4961
        %v4963 = vrot.slane %v4962, 1
        %v4964 = vmax.f32 %v4962, %v4963
        %v4965 = vmax.f32 %v4782, %v4783
        %v4966 = vmax.f32 %v4965, %v4784
        %v4967 = vmax.f32 %v4966, %v4785
        %v4968 = vrot.slane %v4967, 4
        %v4969 = vmax.f32 %v4967, %v4968
        %v4970 = vrot.slane %v4969, 2
        %v4971 = vmax.f32 %v4969, %v4970
        %v4972 = vrot.slane %v4971, 1
        %v4973 = vmax.f32 %v4971, %v4972
        %v4974 = vmax.f32 %v4786, %v4787
        %v4975 = vmax.f32 %v4974, %v4788
        %v4976 = vmax.f32 %v4975, %v4789
        %v4977 = vrot.slane %v4976, 4
        %v4978 = vmax.f32 %v4976, %v4977
        %v4979 = vrot.slane %v4978, 2
        %v4980 = vmax.f32 %v4978, %v4979
        %v4981 = vrot.slane %v4980, 1
        %v4982 = vmax.f32 %v4980, %v4981
        %v4983 = vmax.f32 %v4790, %v4791
        %v4984 = vmax.f32 %v4983, %v4792
        %v4985 = vmax.f32 %v4984, %v4793
        %v4986 = vrot.slane %v4985, 4
        %v4987 = vmax.f32 %v4985, %v4986
        %v4988 = vrot.slane %v4987, 2
        %v4989 = vmax.f32 %v4987, %v4988
        %v4990 = vrot.slane %v4989, 1
        %v4991 = vmax.f32 %v4989, %v4990
        %v4992 = vmax.f32 %v4794, %v4795
        %v4993 = vmax.f32 %v4992, %v4796
        %v4994 = vmax.f32 %v4993, %v4797
        %v4995 = vrot.slane %v4994, 4
        %v4996 = vmax.f32 %v4994, %v4995
        %v4997 = vrot.slane %v4996, 2
        %v4998 = vmax.f32 %v4996, %v4997
        %v4999 = vrot.slane %v4998, 1
        %v5000 = vmax.f32 %v4998, %v4999
        %v5001 = vmax.f32 %v4798, %v4799
        %v5002 = vmax.f32 %v5001, %v4800
        %v5003 = vmax.f32 %v5002, %v4801
        %v5004 = vrot.slane %v5003, 4
        %v5005 = vmax.f32 %v5003, %v5004
        %v5006 = vrot.slane %v5005, 2
        %v5007 = vmax.f32 %v5005, %v5006
        %v5008 = vrot.slane %v5007, 1
        %v5009 = vmax.f32 %v5007, %v5008
        %v5010 = vmax.f32 %v4802, %v4803
        %v5011 = vmax.f32 %v5010, %v4804
        %v5012 = vmax.f32 %v5011, %v4805
        %v5013 = vrot.slane %v5012, 4
        %v5014 = vmax.f32 %v5012, %v5013
        %v5015 = vrot.slane %v5014, 2
        %v5016 = vmax.f32 %v5014, %v5015
        %v5017 = vrot.slane %v5016, 1
        %v5018 = vmax.f32 %v5016, %v5017
        %v5019 = vmax.f32 %v4806, %v4807
        %v5020 = vmax.f32 %v5019, %v4808
        %v5021 = vmax.f32 %v5020, %v4809
        %v5022 = vrot.slane %v5021, 4
        %v5023 = vmax.f32 %v5021, %v5022
        %v5024 = vrot.slane %v5023, 2
        %v5025 = vmax.f32 %v5023, %v5024
        %v5026 = vrot.slane %v5025, 1
        %v5027 = vmax.f32 %v5025, %v5026
        %v5028 = vmax.f32 %v4810, %v4811
        %v5029 = vmax.f32 %v5028, %v4812
        %v5030 = vmax.f32 %v5029, %v4813
        %v5031 = vrot.slane %v5030, 4
        %v5032 = vmax.f32 %v5030, %v5031
        %v5033 = vrot.slane %v5032, 2
        %v5034 = vmax.f32 %v5032, %v5033
        %v5035 = vrot.slane %v5034, 1
        %v5036 = vmax.f32 %v5034, %v5035
        %v5037 = vmax.f32 %v4814, %v4815
        %v5038 = vmax.f32 %v5037, %v4816
        %v5039 = vmax.f32 %v5038, %v4817
        %v5040 = vrot.slane %v5039, 4
        %v5041 = vmax.f32 %v5039, %v5040
        %v5042 = vrot.slane %v5041, 2
        %v5043 = vmax.f32 %v5041, %v5042
        %v5044 = vrot.slane %v5043, 1
        %v5045 = vmax.f32 %v5043, %v5044
        %v5046 = vmax.f32 %v4818, %v4819
        %v5047 = vmax.f32 %v5046, %v4820
        %v5048 = vmax.f32 %v5047, %v4821
        %v5049 = vrot.slane %v5048, 4
        %v5050 = vmax.f32 %v5048, %v5049
        %v5051 = vrot.slane %v5050, 2
        %v5052 = vmax.f32 %v5050, %v5051
        %v5053 = vrot.slane %v5052, 1
        %v5054 = vmax.f32 %v5052, %v5053
        %v5055 = vmax.f32 %v4822, %v4823
        %v5056 = vmax.f32 %v5055, %v4824
        %v5057 = vmax.f32 %v5056, %v4825
        %v5058 = vrot.slane %v5057, 4
        %v5059 = vmax.f32 %v5057, %v5058
        %v5060 = vrot.slane %v5059, 2
        %v5061 = vmax.f32 %v5059, %v5060
        %v5062 = vrot.slane %v5061, 1
        %v5063 = vmax.f32 %v5061, %v5062
        %v5064 = vmax.f32 %v4826, %v4827
        %v5065 = vmax.f32 %v5064, %v4828
        %v5066 = vmax.f32 %v5065, %v4829
        %v5067 = vrot.slane %v5066, 4
        %v5068 = vmax.f32 %v5066, %v5067
        %v5069 = vrot.slane %v5068, 2
        %v5070 = vmax.f32 %v5068, %v5069
        %v5071 = vrot.slane %v5070, 1
        %v5072 = vmax.f32 %v5070, %v5071
        %v5073 = vmax.f32 %v4830, %v4831
        %v5074 = vmax.f32 %v5073, %v4832
        %v5075 = vmax.f32 %v5074, %v4833
        %v5076 = vrot.slane %v5075, 4
        %v5077 = vmax.f32 %v5075, %v5076
        %v5078 = vrot.slane %v5077, 2
        %v5079 = vmax.f32 %v5077, %v5078
        %v5080 = vrot.slane %v5079, 1
        %v5081 = vmax.f32 %v5079, %v5080
        %v5082 = vmax.f32 %v4834, %v4835
        %v5083 = vmax.f32 %v5082, %v4836
        %v5084 = vmax.f32 %v5083, %v4837
        %v5085 = vrot.slane %v5084, 4
        %v5086 = vmax.f32 %v5084, %v5085
        %v5087 = vrot.slane %v5086, 2
        %v5088 = vmax.f32 %v5086, %v5087
        %v5089 = vrot.slane %v5088, 1
        %v5090 = vmax.f32 %v5088, %v5089
        %v5091 = vmax.f32 %v4838, %v4839
        %v5092 = vmax.f32 %v5091, %v4840
        %v5093 = vmax.f32 %v5092, %v4841
        %v5094 = vrot.slane %v5093, 4
        %v5095 = vmax.f32 %v5093, %v5094
        %v5096 = vrot.slane %v5095, 2
        %v5097 = vmax.f32 %v5095, %v5096
        %v5098 = vrot.slane %v5097, 1
        %v5099 = vmax.f32 %v5097, %v5098
        %v5100 = vmax.f32 %v4842, %v4843
        %v5101 = vmax.f32 %v5100, %v4844
        %v5102 = vmax.f32 %v5101, %v4845
        %v5103 = vrot.slane %v5102, 4
        %v5104 = vmax.f32 %v5102, %v5103
        %v5105 = vrot.slane %v5104, 2
        %v5106 = vmax.f32 %v5104, %v5105
        %v5107 = vrot.slane %v5106, 1
        %v5108 = vmax.f32 %v5106, %v5107
        %v5109 = vmax.f32 %v4846, %v4847
        %v5110 = vmax.f32 %v5109, %v4848
        %v5111 = vmax.f32 %v5110, %v4849
        %v5112 = vrot.slane %v5111, 4
        %v5113 = vmax.f32 %v5111, %v5112
        %v5114 = vrot.slane %v5113, 2
        %v5115 = vmax.f32 %v5113, %v5114
        %v5116 = vrot.slane %v5115, 1
        %v5117 = vmax.f32 %v5115, %v5116
        %v5118 = vmax.f32 %v4850, %v4851
        %v5119 = vmax.f32 %v5118, %v4852
        %v5120 = vmax.f32 %v5119, %v4853
        %v5121 = vrot.slane %v5120, 4
        %v5122 = vmax.f32 %v5120, %v5121
        %v5123 = vrot.slane %v5122, 2
        %v5124 = vmax.f32 %v5122, %v5123
        %v5125 = vrot.slane %v5124, 1
        %v5126 = vmax.f32 %v5124, %v5125
        %v5127 = vmax.f32 %v4854, %v4855
        %v5128 = vmax.f32 %v5127, %v4856
        %v5129 = vmax.f32 %v5128, %v4857
        %v5130 = vrot.slane %v5129, 4
        %v5131 = vmax.f32 %v5129, %v5130
        %v5132 = vrot.slane %v5131, 2
        %v5133 = vmax.f32 %v5131, %v5132
        %v5134 = vrot.slane %v5133, 1
        %v5135 = vmax.f32 %v5133, %v5134
        %v5136 = vmax.f32 %v4858, %v4859
        %v5137 = vmax.f32 %v5136, %v4860
        %v5138 = vmax.f32 %v5137, %v4861
        %v5139 = vrot.slane %v5138, 4
        %v5140 = vmax.f32 %v5138, %v5139
        %v5141 = vrot.slane %v5140, 2
        %v5142 = vmax.f32 %v5140, %v5141
        %v5143 = vrot.slane %v5142, 1
        %v5144 = vmax.f32 %v5142, %v5143
        %v5145 = vmax.f32 %v4862, %v4863
        %v5146 = vmax.f32 %v5145, %v4864
        %v5147 = vmax.f32 %v5146, %v4865
        %v5148 = vrot.slane %v5147, 4
        %v5149 = vmax.f32 %v5147, %v5148
        %v5150 = vrot.slane %v5149, 2
        %v5151 = vmax.f32 %v5149, %v5150
        %v5152 = vrot.slane %v5151, 1
        %v5153 = vmax.f32 %v5151, %v5152
        %v5154 = vsub.f32 %v4738, %v4874
        %v5155 = vsub.f32 %v4739, %v4874
        %v5156 = vsub.f32 %v4740, %v4874
        %v5157 = vsub.f32 %v4741, %v4874
        %v5158 = vsub.f32 %v4742, %v4883
        %v5159 = vsub.f32 %v4743, %v4883
        %v5160 = vsub.f32 %v4744, %v4883
        %v5161 = vsub.f32 %v4745, %v4883
        %v5162 = vsub.f32 %v4746, %v4892
        %v5163 = vsub.f32 %v4747, %v4892
        %v5164 = vsub.f32 %v4748, %v4892
        %v5165 = vsub.f32 %v4749, %v4892
        %v5166 = vsub.f32 %v4750, %v4901
        %v5167 = vsub.f32 %v4751, %v4901
        %v5168 = vsub.f32 %v4752, %v4901
        %v5169 = vsub.f32 %v4753, %v4901
        %v5170 = vsub.f32 %v4754, %v4910
        %v5171 = vsub.f32 %v4755, %v4910
        %v5172 = vsub.f32 %v4756, %v4910
        %v5173 = vsub.f32 %v4757, %v4910
        %v5174 = vsub.f32 %v4758, %v4919
        %v5175 = vsub.f32 %v4759, %v4919
        %v5176 = vsub.f32 %v4760, %v4919
        %v5177 = vsub.f32 %v4761, %v4919
        %v5178 = vsub.f32 %v4762, %v4928
        %v5179 = vsub.f32 %v4763, %v4928
        %v5180 = vsub.f32 %v4764, %v4928
        %v5181 = vsub.f32 %v4765, %v4928
        %v5182 = vsub.f32 %v4766, %v4937
        %v5183 = vsub.f32 %v4767, %v4937
        %v5184 = vsub.f32 %v4768, %v4937
        %v5185 = vsub.f32 %v4769, %v4937
        %v5186 = vsub.f32 %v4770, %v4946
        %v5187 = vsub.f32 %v4771, %v4946
        %v5188 = vsub.f32 %v4772, %v4946
        %v5189 = vsub.f32 %v4773, %v4946
        %v5190 = vsub.f32 %v4774, %v4955
        %v5191 = vsub.f32 %v4775, %v4955
        %v5192 = vsub.f32 %v4776, %v4955
        %v5193 = vsub.f32 %v4777, %v4955
        %v5194 = vsub.f32 %v4778, %v4964
        %v5195 = vsub.f32 %v4779, %v4964
        %v5196 = vsub.f32 %v4780, %v4964
        %v5197 = vsub.f32 %v4781, %v4964
        %v5198 = vsub.f32 %v4782, %v4973
        %v5199 = vsub.f32 %v4783, %v4973
        %v5200 = vsub.f32 %v4784, %v4973
        %v5201 = vsub.f32 %v4785, %v4973
        %v5202 = vsub.f32 %v4786, %v4982
        %v5203 = vsub.f32 %v4787, %v4982
        %v5204 = vsub.f32 %v4788, %v4982
        %v5205 = vsub.f32 %v4789, %v4982
        %v5206 = vsub.f32 %v4790, %v4991
        %v5207 = vsub.f32 %v4791, %v4991
        %v5208 = vsub.f32 %v4792, %v4991
        %v5209 = vsub.f32 %v4793, %v4991
        %v5210 = vsub.f32 %v4794, %v5000
        %v5211 = vsub.f32 %v4795, %v5000
        %v5212 = vsub.f32 %v4796, %v5000
        %v5213 = vsub.f32 %v4797, %v5000
        %v5214 = vsub.f32 %v4798, %v5009
        %v5215 = vsub.f32 %v4799, %v5009
        %v5216 = vsub.f32 %v4800, %v5009
        %v5217 = vsub.f32 %v4801, %v5009
        %v5218 = vsub.f32 %v4802, %v5018
        %v5219 = vsub.f32 %v4803, %v5018
        %v5220 = vsub.f32 %v4804, %v5018
        %v5221 = vsub.f32 %v4805, %v5018
        %v5222 = vsub.f32 %v4806, %v5027
        %v5223 = vsub.f32 %v4807, %v5027
        %v5224 = vsub.f32 %v4808, %v5027
        %v5225 = vsub.f32 %v4809, %v5027
        %v5226 = vsub.f32 %v4810, %v5036
        %v5227 = vsub.f32 %v4811, %v5036
        %v5228 = vsub.f32 %v4812, %v5036
        %v5229 = vsub.f32 %v4813, %v5036
        %v5230 = vsub.f32 %v4814, %v5045
        %v5231 = vsub.f32 %v4815, %v5045
        %v5232 = vsub.f32 %v4816, %v5045
        %v5233 = vsub.f32 %v4817, %v5045
        %v5234 = vsub.f32 %v4818, %v5054
        %v5235 = vsub.f32 %v4819, %v5054
        %v5236 = vsub.f32 %v4820, %v5054
        %v5237 = vsub.f32 %v4821, %v5054
        %v5238 = vsub.f32 %v4822, %v5063
        %v5239 = vsub.f32 %v4823, %v5063
        %v5240 = vsub.f32 %v4824, %v5063
        %v5241 = vsub.f32 %v4825, %v5063
        %v5242 = vsub.f32 %v4826, %v5072
        %v5243 = vsub.f32 %v4827, %v5072
        %v5244 = vsub.f32 %v4828, %v5072
        %v5245 = vsub.f32 %v4829, %v5072
        %v5246 = vsub.f32 %v4830, %v5081
        %v5247 = vsub.f32 %v4831, %v5081
        %v5248 = vsub.f32 %v4832, %v5081
        %v5249 = vsub.f32 %v4833, %v5081
        %v5250 = vsub.f32 %v4834, %v5090
        %v5251 = vsub.f32 %v4835, %v5090
        %v5252 = vsub.f32 %v4836, %v5090
        %v5253 = vsub.f32 %v4837, %v5090
        %v5254 = vsub.f32 %v4838, %v5099
        %v5255 = vsub.f32 %v4839, %v5099
        %v5256 = vsub.f32 %v4840, %v5099
        %v5257 = vsub.f32 %v4841, %v5099
        %v5258 = vsub.f32 %v4842, %v5108
        %v5259 = vsub.f32 %v4843, %v5108
        %v5260 = vsub.f32 %v4844, %v5108
        %v5261 = vsub.f32 %v4845, %v5108
        %v5262 = vsub.f32 %v4846, %v5117
        %v5263 = vsub.f32 %v4847, %v5117
        %v5264 = vsub.f32 %v4848, %v5117
        %v5265 = vsub.f32 %v4849, %v5117
        %v5266 = vsub.f32 %v4850, %v5126
        %v5267 = vsub.f32 %v4851, %v5126
        %v5268 = vsub.f32 %v4852, %v5126
        %v5269 = vsub.f32 %v4853, %v5126
        %v5270 = vsub.f32 %v4854, %v5135
        %v5271 = vsub.f32 %v4855, %v5135
        %v5272 = vsub.f32 %v4856, %v5135
        %v5273 = vsub.f32 %v4857, %v5135
        %v5274 = vsub.f32 %v4858, %v5144
        %v5275 = vsub.f32 %v4859, %v5144
        %v5276 = vsub.f32 %v4860, %v5144
        %v5277 = vsub.f32 %v4861, %v5144
        %v5278 = vsub.f32 %v4862, %v5153
        %v5279 = vsub.f32 %v4863, %v5153
        %v5280 = vsub.f32 %v4864, %v5153
        %v5281 = vsub.f32 %v4865, %v5153
        %v5282 = vmul.f32 %v5154, 1.442695
        %v5283 = vpow.pop %v5282
        %v5284 = vmul.f32 %v5155, 1.442695
        %v5285 = vpow.pop %v5284
        %v5286 = vmul.f32 %v5156, 1.442695
        %v5287 = vpow.pop %v5286
        %v5288 = vmul.f32 %v5157, 1.442695
        %v5289 = vpow.pop %v5288
        %v5290 = vmul.f32 %v5158, 1.442695
        %v5291 = vpow.pop %v5290
        %v5292 = vmul.f32 %v5159, 1.442695
        %v5293 = vpow.pop %v5292
        %v5294 = vmul.f32 %v5160, 1.442695
        %v5295 = vpow.pop %v5294
        %v5296 = vmul.f32 %v5161, 1.442695
        %v5297 = vpow.pop %v5296
        %v5298 = vmul.f32 %v5162, 1.442695
        %v5299 = vpow.pop %v5298
        %v5300 = vmul.f32 %v5163, 1.442695
        %v5301 = vpow.pop %v5300
        %v5302 = vmul.f32 %v5164, 1.442695
        %v5303 = vpow.pop %v5302
        %v5304 = vmul.f32 %v5165, 1.442695
        %v5305 = vpow.pop %v5304
        %v5306 = vmul.f32 %v5166, 1.442695
        %v5307 = vpow.pop %v5306
        %v5308 = vmul.f32 %v5167, 1.442695
        %v5309 = vpow.pop %v5308
        %v5310 = vmul.f32 %v5168, 1.442695
        %v5311 = vpow.pop %v5310
        %v5312 = vmul.f32 %v5169, 1.442695
        %v5313 = vpow.pop %v5312
        %v5314 = vmul.f32 %v5170, 1.442695
        %v5315 = vpow.pop %v5314
        %v5316 = vmul.f32 %v5171, 1.442695
        %v5317 = vpow.pop %v5316
        %v5318 = vmul.f32 %v5172, 1.442695
        %v5319 = vpow.pop %v5318
        %v5320 = vmul.f32 %v5173, 1.442695
        %v5321 = vpow.pop %v5320
        %v5322 = vmul.f32 %v5174, 1.442695
        %v5323 = vpow.pop %v5322
        %v5324 = vmul.f32 %v5175, 1.442695
        %v5325 = vpow.pop %v5324
        %v5326 = vmul.f32 %v5176, 1.442695
        %v5327 = vpow.pop %v5326
        %v5328 = vmul.f32 %v5177, 1.442695
        %v5329 = vpow.pop %v5328
        %v5330 = vmul.f32 %v5178, 1.442695
        %v5331 = vpow.pop %v5330
        %v5332 = vmul.f32 %v5179, 1.442695
        %v5333 = vpow.pop %v5332
        %v5334 = vmul.f32 %v5180, 1.442695
        %v5335 = vpow.pop %v5334
        %v5336 = vmul.f32 %v5181, 1.442695
        %v5337 = vpow.pop %v5336
        %v5338 = vmul.f32 %v5182, 1.442695
        %v5339 = vpow.pop %v5338
        %v5340 = vmul.f32 %v5183, 1.442695
        %v5341 = vpow.pop %v5340
        %v5342 = vmul.f32 %v5184, 1.442695
        %v5343 = vpow.pop %v5342
        %v5344 = vmul.f32 %v5185, 1.442695
        %v5345 = vpow.pop %v5344
        %v5346 = vmul.f32 %v5186, 1.442695
        %v5347 = vpow.pop %v5346
        %v5348 = vmul.f32 %v5187, 1.442695
        %v5349 = vpow.pop %v5348
        %v5350 = vmul.f32 %v5188, 1.442695
        %v5351 = vpow.pop %v5350
        %v5352 = vmul.f32 %v5189, 1.442695
        %v5353 = vpow.pop %v5352
        %v5354 = vmul.f32 %v5190, 1.442695
        %v5355 = vpow.pop %v5354
        %v5356 = vmul.f32 %v5191, 1.442695
        %v5357 = vpow.pop %v5356
        %v5358 = vmul.f32 %v5192, 1.442695
        %v5359 = vpow.pop %v5358
        %v5360 = vmul.f32 %v5193, 1.442695
        %v5361 = vpow.pop %v5360
        %v5362 = vmul.f32 %v5194, 1.442695
        %v5363 = vpow.pop %v5362
        %v5364 = vmul.f32 %v5195, 1.442695
        %v5365 = vpow.pop %v5364
        %v5366 = vmul.f32 %v5196, 1.442695
        %v5367 = vpow.pop %v5366
        %v5368 = vmul.f32 %v5197, 1.442695
        %v5369 = vpow.pop %v5368
        %v5370 = vmul.f32 %v5198, 1.442695
        %v5371 = vpow.pop %v5370
        %v5372 = vmul.f32 %v5199, 1.442695
        %v5373 = vpow.pop %v5372
        %v5374 = vmul.f32 %v5200, 1.442695
        %v5375 = vpow.pop %v5374
        %v5376 = vmul.f32 %v5201, 1.442695
        %v5377 = vpow.pop %v5376
        %v5378 = vmul.f32 %v5202, 1.442695
        %v5379 = vpow.pop %v5378
        %v5380 = vmul.f32 %v5203, 1.442695
        %v5381 = vpow.pop %v5380
        %v5382 = vmul.f32 %v5204, 1.442695
        %v5383 = vpow.pop %v5382
        %v5384 = vmul.f32 %v5205, 1.442695
        %v5385 = vpow.pop %v5384
        %v5386 = vmul.f32 %v5206, 1.442695
        %v5387 = vpow.pop %v5386
        %v5388 = vmul.f32 %v5207, 1.442695
        %v5389 = vpow.pop %v5388
        %v5390 = vmul.f32 %v5208, 1.442695
        %v5391 = vpow.pop %v5390
        %v5392 = vmul.f32 %v5209, 1.442695
        %v5393 = vpow.pop %v5392
        %v5394 = vmul.f32 %v5210, 1.442695
        %v5395 = vpow.pop %v5394
        %v5396 = vmul.f32 %v5211, 1.442695
        %v5397 = vpow.pop %v5396
        %v5398 = vmul.f32 %v5212, 1.442695
        %v5399 = vpow.pop %v5398
        %v5400 = vmul.f32 %v5213, 1.442695
        %v5401 = vpow.pop %v5400
        %v5402 = vmul.f32 %v5214, 1.442695
        %v5403 = vpow.pop %v5402
        %v5404 = vmul.f32 %v5215, 1.442695
        %v5405 = vpow.pop %v5404
        %v5406 = vmul.f32 %v5216, 1.442695
        %v5407 = vpow.pop %v5406
        %v5408 = vmul.f32 %v5217, 1.442695
        %v5409 = vpow.pop %v5408
        %v5410 = vmul.f32 %v5218, 1.442695
        %v5411 = vpow.pop %v5410
        %v5412 = vmul.f32 %v5219, 1.442695
        %v5413 = vpow.pop %v5412
        %v5414 = vmul.f32 %v5220, 1.442695
        %v5415 = vpow.pop %v5414
        %v5416 = vmul.f32 %v5221, 1.442695
        %v5417 = vpow.pop %v5416
        %v5418 = vmul.f32 %v5222, 1.442695
        %v5419 = vpow.pop %v5418
        %v5420 = vmul.f32 %v5223, 1.442695
        %v5421 = vpow.pop %v5420
        %v5422 = vmul.f32 %v5224, 1.442695
        %v5423 = vpow.pop %v5422
        %v5424 = vmul.f32 %v5225, 1.442695
        %v5425 = vpow.pop %v5424
        %v5426 = vmul.f32 %v5226, 1.442695
        %v5427 = vpow.pop %v5426
        %v5428 = vmul.f32 %v5227, 1.442695
        %v5429 = vpow.pop %v5428
        %v5430 = vmul.f32 %v5228, 1.442695
        %v5431 = vpow.pop %v5430
        %v5432 = vmul.f32 %v5229, 1.442695
        %v5433 = vpow.pop %v5432
        %v5434 = vmul.f32 %v5230, 1.442695
        %v5435 = vpow.pop %v5434
        %v5436 = vmul.f32 %v5231, 1.442695
        %v5437 = vpow.pop %v5436
        %v5438 = vmul.f32 %v5232, 1.442695
        %v5439 = vpow.pop %v5438
        %v5440 = vmul.f32 %v5233, 1.442695
        %v5441 = vpow.pop %v5440
        %v5442 = vmul.f32 %v5234, 1.442695
        %v5443 = vpow.pop %v5442
        %v5444 = vmul.f32 %v5235, 1.442695
        %v5445 = vpow.pop %v5444
        %v5446 = vmul.f32 %v5236, 1.442695
        %v5447 = vpow.pop %v5446
        %v5448 = vmul.f32 %v5237, 1.442695
        %v5449 = vpow.pop %v5448
        %v5450 = vmul.f32 %v5238, 1.442695
        %v5451 = vpow.pop %v5450
        %v5452 = vmul.f32 %v5239, 1.442695
        %v5453 = vpow.pop %v5452
        %v5454 = vmul.f32 %v5240, 1.442695
        %v5455 = vpow.pop %v5454
        %v5456 = vmul.f32 %v5241, 1.442695
        %v5457 = vpow.pop %v5456
        %v5458 = vmul.f32 %v5242, 1.442695
        %v5459 = vpow.pop %v5458
        %v5460 = vmul.f32 %v5243, 1.442695
        %v5461 = vpow.pop %v5460
        %v5462 = vmul.f32 %v5244, 1.442695
        %v5463 = vpow.pop %v5462
        %v5464 = vmul.f32 %v5245, 1.442695
        %v5465 = vpow.pop %v5464
        %v5466 = vmul.f32 %v5246, 1.442695
        %v5467 = vpow.pop %v5466
        %v5468 = vmul.f32 %v5247, 1.442695
        %v5469 = vpow.pop %v5468
        %v5470 = vmul.f32 %v5248, 1.442695
        %v5471 = vpow.pop %v5470
        %v5472 = vmul.f32 %v5249, 1.442695
        %v5473 = vpow.pop %v5472
        %v5474 = vmul.f32 %v5250, 1.442695
        %v5475 = vpow.pop %v5474
        %v5476 = vmul.f32 %v5251, 1.442695
        %v5477 = vpow.pop %v5476
        %v5478 = vmul.f32 %v5252, 1.442695
        %v5479 = vpow.pop %v5478
        %v5480 = vmul.f32 %v5253, 1.442695
        %v5481 = vpow.pop %v5480
        %v5482 = vmul.f32 %v5254, 1.442695
        %v5483 = vpow.pop %v5482
        %v5484 = vmul.f32 %v5255, 1.442695
        %v5485 = vpow.pop %v5484
        %v5486 = vmul.f32 %v5256, 1.442695
        %v5487 = vpow.pop %v5486
        %v5488 = vmul.f32 %v5257, 1.442695
        %v5489 = vpow.pop %v5488
        %v5490 = vmul.f32 %v5258, 1.442695
        %v5491 = vpow.pop %v5490
        %v5492 = vmul.f32 %v5259, 1.442695
        %v5493 = vpow.pop %v5492
        %v5494 = vmul.f32 %v5260, 1.442695
        %v5495 = vpow.pop %v5494
        %v5496 = vmul.f32 %v5261, 1.442695
        %v5497 = vpow.pop %v5496
        %v5498 = vmul.f32 %v5262, 1.442695
        %v5499 = vpow.pop %v5498
        %v5500 = vmul.f32 %v5263, 1.442695
        %v5501 = vpow.pop %v5500
        %v5502 = vmul.f32 %v5264, 1.442695
        %v5503 = vpow.pop %v5502
        %v5504 = vmul.f32 %v5265, 1.442695
        %v5505 = vpow.pop %v5504
        %v5506 = vmul.f32 %v5266, 1.442695
        %v5507 = vpow.pop %v5506
        %v5508 = vmul.f32 %v5267, 1.442695
        %v5509 = vpow.pop %v5508
        %v5510 = vmul.f32 %v5268, 1.442695
        %v5511 = vpow.pop %v5510
        %v5512 = vmul.f32 %v5269, 1.442695
        %v5513 = vpow.pop %v5512
        %v5514 = vmul.f32 %v5270, 1.442695
        %v5515 = vpow.pop %v5514
        %v5516 = vmul.f32 %v5271, 1.442695
        %v5517 = vpow.pop %v5516
        %v5518 = vmul.f32 %v5272, 1.442695
        %v5519 = vpow.pop %v5518
        %v5520 = vmul.f32 %v5273, 1.442695
        %v5521 = vpow.pop %v5520
        %v5522 = vmul.f32 %v5274, 1.442695
        %v5523 = vpow.pop %v5522
        %v5524 = vmul.f32 %v5275, 1.442695
        %v5525 = vpow.pop %v5524
        %v5526 = vmul.f32 %v5276, 1.442695
        %v5527 = vpow.pop %v5526
        %v5528 = vmul.f32 %v5277, 1.442695
        %v5529 = vpow.pop %v5528
        %v5530 = vmul.f32 %v5278, 1.442695
        %v5531 = vpow.pop %v5530
        %v5532 = vmul.f32 %v5279, 1.442695
        %v5533 = vpow.pop %v5532
        %v5534 = vmul.f32 %v5280, 1.442695
        %v5535 = vpow.pop %v5534
        %v5536 = vmul.f32 %v5281, 1.442695
        %v5537 = vpow.pop %v5536
        %v5538 = vadd.f32 %v5283, %v5285
        %v5539 = vadd.f32 %v5538, %v5287
        %v5540 = vadd.f32 %v5539, %v5289
        %v5541 = vrot.slane %v5540, 4
        %v5542 = vadd.f32 %v5540, %v5541
        %v5543 = vrot.slane %v5542, 2
        %v5544 = vadd.f32 %v5542, %v5543
        %v5545 = vrot.slane %v5544, 1
        %v5546 = vadd.f32 %v5544, %v5545
        %v5547 = vadd.f32 %v5291, %v5293
        %v5548 = vadd.f32 %v5547, %v5295
        %v5549 = vadd.f32 %v5548, %v5297
        %v5550 = vrot.slane %v5549, 4
        %v5551 = vadd.f32 %v5549, %v5550
        %v5552 = vrot.slane %v5551, 2
        %v5553 = vadd.f32 %v5551, %v5552
        %v5554 = vrot.slane %v5553, 1
        %v5555 = vadd.f32 %v5553, %v5554
        %v5556 = vadd.f32 %v5299, %v5301
        %v5557 = vadd.f32 %v5556, %v5303
        %v5558 = vadd.f32 %v5557, %v5305
        %v5559 = vrot.slane %v5558, 4
        %v5560 = vadd.f32 %v5558, %v5559
        %v5561 = vrot.slane %v5560, 2
        %v5562 = vadd.f32 %v5560, %v5561
        %v5563 = vrot.slane %v5562, 1
        %v5564 = vadd.f32 %v5562, %v5563
        %v5565 = vadd.f32 %v5307, %v5309
        %v5566 = vadd.f32 %v5565, %v5311
        %v5567 = vadd.f32 %v5566, %v5313
        %v5568 = vrot.slane %v5567, 4
        %v5569 = vadd.f32 %v5567, %v5568
        %v5570 = vrot.slane %v5569, 2
        %v5571 = vadd.f32 %v5569, %v5570
        %v5572 = vrot.slane %v5571, 1
        %v5573 = vadd.f32 %v5571, %v5572
        %v5574 = vadd.f32 %v5315, %v5317
        %v5575 = vadd.f32 %v5574, %v5319
        %v5576 = vadd.f32 %v5575, %v5321
        %v5577 = vrot.slane %v5576, 4
        %v5578 = vadd.f32 %v5576, %v5577
        %v5579 = vrot.slane %v5578, 2
        %v5580 = vadd.f32 %v5578, %v5579
        %v5581 = vrot.slane %v5580, 1
        %v5582 = vadd.f32 %v5580, %v5581
        %v5583 = vadd.f32 %v5323, %v5325
        %v5584 = vadd.f32 %v5583, %v5327
        %v5585 = vadd.f32 %v5584, %v5329
        %v5586 = vrot.slane %v5585, 4
        %v5587 = vadd.f32 %v5585, %v5586
        %v5588 = vrot.slane %v5587, 2
        %v5589 = vadd.f32 %v5587, %v5588
        %v5590 = vrot.slane %v5589, 1
        %v5591 = vadd.f32 %v5589, %v5590
        %v5592 = vadd.f32 %v5331, %v5333
        %v5593 = vadd.f32 %v5592, %v5335
        %v5594 = vadd.f32 %v5593, %v5337
        %v5595 = vrot.slane %v5594, 4
        %v5596 = vadd.f32 %v5594, %v5595
        %v5597 = vrot.slane %v5596, 2
        %v5598 = vadd.f32 %v5596, %v5597
        %v5599 = vrot.slane %v5598, 1
        %v5600 = vadd.f32 %v5598, %v5599
        %v5601 = vadd.f32 %v5339, %v5341
        %v5602 = vadd.f32 %v5601, %v5343
        %v5603 = vadd.f32 %v5602, %v5345
        %v5604 = vrot.slane %v5603, 4
        %v5605 = vadd.f32 %v5603, %v5604
        %v5606 = vrot.slane %v5605, 2
        %v5607 = vadd.f32 %v5605, %v5606
        %v5608 = vrot.slane %v5607, 1
        %v5609 = vadd.f32 %v5607, %v5608
        %v5610 = vadd.f32 %v5347, %v5349
        %v5611 = vadd.f32 %v5610, %v5351
        %v5612 = vadd.f32 %v5611, %v5353
        %v5613 = vrot.slane %v5612, 4
        %v5614 = vadd.f32 %v5612, %v5613
        %v5615 = vrot.slane %v5614, 2
        %v5616 = vadd.f32 %v5614, %v5615
        %v5617 = vrot.slane %v5616, 1
        %v5618 = vadd.f32 %v5616, %v5617
        %v5619 = vadd.f32 %v5355, %v5357
        %v5620 = vadd.f32 %v5619, %v5359
        %v5621 = vadd.f32 %v5620, %v5361
        %v5622 = vrot.slane %v5621, 4
        %v5623 = vadd.f32 %v5621, %v5622
        %v5624 = vrot.slane %v5623, 2
        %v5625 = vadd.f32 %v5623, %v5624
        %v5626 = vrot.slane %v5625, 1
        %v5627 = vadd.f32 %v5625, %v5626
        %v5628 = vadd.f32 %v5363, %v5365
        %v5629 = vadd.f32 %v5628, %v5367
        %v5630 = vadd.f32 %v5629, %v5369
        %v5631 = vrot.slane %v5630, 4
        %v5632 = vadd.f32 %v5630, %v5631
        %v5633 = vrot.slane %v5632, 2
        %v5634 = vadd.f32 %v5632, %v5633
        %v5635 = vrot.slane %v5634, 1
        %v5636 = vadd.f32 %v5634, %v5635
        %v5637 = vadd.f32 %v5371, %v5373
        %v5638 = vadd.f32 %v5637, %v5375
        %v5639 = vadd.f32 %v5638, %v5377
        %v5640 = vrot.slane %v5639, 4
        %v5641 = vadd.f32 %v5639, %v5640
        %v5642 = vrot.slane %v5641, 2
        %v5643 = vadd.f32 %v5641, %v5642
        %v5644 = vrot.slane %v5643, 1
        %v5645 = vadd.f32 %v5643, %v5644
        %v5646 = vadd.f32 %v5379, %v5381
        %v5647 = vadd.f32 %v5646, %v5383
        %v5648 = vadd.f32 %v5647, %v5385
        %v5649 = vrot.slane %v5648, 4
        %v5650 = vadd.f32 %v5648, %v5649
        %v5651 = vrot.slane %v5650, 2
        %v5652 = vadd.f32 %v5650, %v5651
        %v5653 = vrot.slane %v5652, 1
        %v5654 = vadd.f32 %v5652, %v5653
        %v5655 = vadd.f32 %v5387, %v5389
        %v5656 = vadd.f32 %v5655, %v5391
        %v5657 = vadd.f32 %v5656, %v5393
        %v5658 = vrot.slane %v5657, 4
        %v5659 = vadd.f32 %v5657, %v5658
        %v5660 = vrot.slane %v5659, 2
        %v5661 = vadd.f32 %v5659, %v5660
        %v5662 = vrot.slane %v5661, 1
        %v5663 = vadd.f32 %v5661, %v5662
        %v5664 = vadd.f32 %v5395, %v5397
        %v5665 = vadd.f32 %v5664, %v5399
        %v5666 = vadd.f32 %v5665, %v5401
        %v5667 = vrot.slane %v5666, 4
        %v5668 = vadd.f32 %v5666, %v5667
        %v5669 = vrot.slane %v5668, 2
        %v5670 = vadd.f32 %v5668, %v5669
        %v5671 = vrot.slane %v5670, 1
        %v5672 = vadd.f32 %v5670, %v5671
        %v5673 = vadd.f32 %v5403, %v5405
        %v5674 = vadd.f32 %v5673, %v5407
        %v5675 = vadd.f32 %v5674, %v5409
        %v5676 = vrot.slane %v5675, 4
        %v5677 = vadd.f32 %v5675, %v5676
        %v5678 = vrot.slane %v5677, 2
        %v5679 = vadd.f32 %v5677, %v5678
        %v5680 = vrot.slane %v5679, 1
        %v5681 = vadd.f32 %v5679, %v5680
        %v5682 = vadd.f32 %v5411, %v5413
        %v5683 = vadd.f32 %v5682, %v5415
        %v5684 = vadd.f32 %v5683, %v5417
        %v5685 = vrot.slane %v5684, 4
        %v5686 = vadd.f32 %v5684, %v5685
        %v5687 = vrot.slane %v5686, 2
        %v5688 = vadd.f32 %v5686, %v5687
        %v5689 = vrot.slane %v5688, 1
        %v5690 = vadd.f32 %v5688, %v5689
        %v5691 = vadd.f32 %v5419, %v5421
        %v5692 = vadd.f32 %v5691, %v5423
        %v5693 = vadd.f32 %v5692, %v5425
        %v5694 = vrot.slane %v5693, 4
        %v5695 = vadd.f32 %v5693, %v5694
        %v5696 = vrot.slane %v5695, 2
        %v5697 = vadd.f32 %v5695, %v5696
        %v5698 = vrot.slane %v5697, 1
        %v5699 = vadd.f32 %v5697, %v5698
        %v5700 = vadd.f32 %v5427, %v5429
        %v5701 = vadd.f32 %v5700, %v5431
        %v5702 = vadd.f32 %v5701, %v5433
        %v5703 = vrot.slane %v5702, 4
        %v5704 = vadd.f32 %v5702, %v5703
        %v5705 = vrot.slane %v5704, 2
        %v5706 = vadd.f32 %v5704, %v5705
        %v5707 = vrot.slane %v5706, 1
        %v5708 = vadd.f32 %v5706, %v5707
        %v5709 = vadd.f32 %v5435, %v5437
        %v5710 = vadd.f32 %v5709, %v5439
        %v5711 = vadd.f32 %v5710, %v5441
        %v5712 = vrot.slane %v5711, 4
        %v5713 = vadd.f32 %v5711, %v5712
        %v5714 = vrot.slane %v5713, 2
        %v5715 = vadd.f32 %v5713, %v5714
        %v5716 = vrot.slane %v5715, 1
        %v5717 = vadd.f32 %v5715, %v5716
        %v5718 = vadd.f32 %v5443, %v5445
        %v5719 = vadd.f32 %v5718, %v5447
        %v5720 = vadd.f32 %v5719, %v5449
        %v5721 = vrot.slane %v5720, 4
        %v5722 = vadd.f32 %v5720, %v5721
        %v5723 = vrot.slane %v5722, 2
        %v5724 = vadd.f32 %v5722, %v5723
        %v5725 = vrot.slane %v5724, 1
        %v5726 = vadd.f32 %v5724, %v5725
        %v5727 = vadd.f32 %v5451, %v5453
        %v5728 = vadd.f32 %v5727, %v5455
        %v5729 = vadd.f32 %v5728, %v5457
        %v5730 = vrot.slane %v5729, 4
        %v5731 = vadd.f32 %v5729, %v5730
        %v5732 = vrot.slane %v5731, 2
        %v5733 = vadd.f32 %v5731, %v5732
        %v5734 = vrot.slane %v5733, 1
        %v5735 = vadd.f32 %v5733, %v5734
        %v5736 = vadd.f32 %v5459, %v5461
        %v5737 = vadd.f32 %v5736, %v5463
        %v5738 = vadd.f32 %v5737, %v5465
        %v5739 = vrot.slane %v5738, 4
        %v5740 = vadd.f32 %v5738, %v5739
        %v5741 = vrot.slane %v5740, 2
        %v5742 = vadd.f32 %v5740, %v5741
        %v5743 = vrot.slane %v5742, 1
        %v5744 = vadd.f32 %v5742, %v5743
        %v5745 = vadd.f32 %v5467, %v5469
        %v5746 = vadd.f32 %v5745, %v5471
        %v5747 = vadd.f32 %v5746, %v5473
        %v5748 = vrot.slane %v5747, 4
        %v5749 = vadd.f32 %v5747, %v5748
        %v5750 = vrot.slane %v5749, 2
        %v5751 = vadd.f32 %v5749, %v5750
        %v5752 = vrot.slane %v5751, 1
        %v5753 = vadd.f32 %v5751, %v5752
        %v5754 = vadd.f32 %v5475, %v5477
        %v5755 = vadd.f32 %v5754, %v5479
        %v5756 = vadd.f32 %v5755, %v5481
        %v5757 = vrot.slane %v5756, 4
        %v5758 = vadd.f32 %v5756, %v5757
        %v5759 = vrot.slane %v5758, 2
        %v5760 = vadd.f32 %v5758, %v5759
        %v5761 = vrot.slane %v5760, 1
        %v5762 = vadd.f32 %v5760, %v5761
        %v5763 = vadd.f32 %v5483, %v5485
        %v5764 = vadd.f32 %v5763, %v5487
        %v5765 = vadd.f32 %v5764, %v5489
        %v5766 = vrot.slane %v5765, 4
        %v5767 = vadd.f32 %v5765, %v5766
        %v5768 = vrot.slane %v5767, 2
        %v5769 = vadd.f32 %v5767, %v5768
        %v5770 = vrot.slane %v5769, 1
        %v5771 = vadd.f32 %v5769, %v5770
        %v5772 = vadd.f32 %v5491, %v5493
        %v5773 = vadd.f32 %v5772, %v5495
        %v5774 = vadd.f32 %v5773, %v5497
        %v5775 = vrot.slane %v5774, 4
        %v5776 = vadd.f32 %v5774, %v5775
        %v5777 = vrot.slane %v5776, 2
        %v5778 = vadd.f32 %v5776, %v5777
        %v5779 = vrot.slane %v5778, 1
        %v5780 = vadd.f32 %v5778, %v5779
        %v5781 = vadd.f32 %v5499, %v5501
        %v5782 = vadd.f32 %v5781, %v5503
        %v5783 = vadd.f32 %v5782, %v5505
        %v5784 = vrot.slane %v5783, 4
        %v5785 = vadd.f32 %v5783, %v5784
        %v5786 = vrot.slane %v5785, 2
        %v5787 = vadd.f32 %v5785, %v5786
        %v5788 = vrot.slane %v5787, 1
        %v5789 = vadd.f32 %v5787, %v5788
        %v5790 = vadd.f32 %v5507, %v5509
        %v5791 = vadd.f32 %v5790, %v5511
        %v5792 = vadd.f32 %v5791, %v5513
        %v5793 = vrot.slane %v5792, 4
        %v5794 = vadd.f32 %v5792, %v5793
        %v5795 = vrot.slane %v5794, 2
        %v5796 = vadd.f32 %v5794, %v5795
        %v5797 = vrot.slane %v5796, 1
        %v5798 = vadd.f32 %v5796, %v5797
        %v5799 = vadd.f32 %v5515, %v5517
        %v5800 = vadd.f32 %v5799, %v5519
        %v5801 = vadd.f32 %v5800, %v5521
        %v5802 = vrot.slane %v5801, 4
        %v5803 = vadd.f32 %v5801, %v5802
        %v5804 = vrot.slane %v5803, 2
        %v5805 = vadd.f32 %v5803, %v5804
        %v5806 = vrot.slane %v5805, 1
        %v5807 = vadd.f32 %v5805, %v5806
        %v5808 = vadd.f32 %v5523, %v5525
        %v5809 = vadd.f32 %v5808, %v5527
        %v5810 = vadd.f32 %v5809, %v5529
        %v5811 = vrot.slane %v5810, 4
        %v5812 = vadd.f32 %v5810, %v5811
        %v5813 = vrot.slane %v5812, 2
        %v5814 = vadd.f32 %v5812, %v5813
        %v5815 = vrot.slane %v5814, 1
        %v5816 = vadd.f32 %v5814, %v5815
        %v5817 = vadd.f32 %v5531, %v5533
        %v5818 = vadd.f32 %v5817, %v5535
        %v5819 = vadd.f32 %v5818, %v5537
        %v5820 = vrot.slane %v5819, 4
        %v5821 = vadd.f32 %v5819, %v5820
        %v5822 = vrot.slane %v5821, 2
        %v5823 = vadd.f32 %v5821, %v5822
        %v5824 = vrot.slane %v5823, 1
        %v5825 = vadd.f32 %v5823, %v5824
        %v5826 = vrcp.pop %v5546
        %v5827 = vrcp.pop %v5555
        %v5828 = vrcp.pop %v5564
        %v5829 = vrcp.pop %v5573
        %v5830 = vrcp.pop %v5582
        %v5831 = vrcp.pop %v5591
        %v5832 = vrcp.pop %v5600
        %v5833 = vrcp.pop %v5609
        %v5834 = vrcp.pop %v5618
        %v5835 = vrcp.pop %v5627
        %v5836 = vrcp.pop %v5636
        %v5837 = vrcp.pop %v5645
        %v5838 = vrcp.pop %v5654
        %v5839 = vrcp.pop %v5663
        %v5840 = vrcp.pop %v5672
        %v5841 = vrcp.pop %v5681
        %v5842 = vrcp.pop %v5690
        %v5843 = vrcp.pop %v5699
        %v5844 = vrcp.pop %v5708
        %v5845 = vrcp.pop %v5717
        %v5846 = vrcp.pop %v5726
        %v5847 = vrcp.pop %v5735
        %v5848 = vrcp.pop %v5744
        %v5849 = vrcp.pop %v5753
        %v5850 = vrcp.pop %v5762
        %v5851 = vrcp.pop %v5771
        %v5852 = vrcp.pop %v5780
        %v5853 = vrcp.pop %v5789
        %v5854 = vrcp.pop %v5798
        %v5855 = vrcp.pop %v5807
        %v5856 = vrcp.pop %v5816
        %v5857 = vrcp.pop %v5825
        %v5858 = vmul.f32 %v5283, %v5826
        %v5859 = vmul.f32 %v5285, %v5826
        %v5860 = vmul.f32 %v5287, %v5826
        %v5861 = vmul.f32 %v5289, %v5826
        %v5862 = vmul.f32 %v5291, %v5827
        %v5863 = vmul.f32 %v5293, %v5827
        %v5864 = vmul.f32 %v5295, %v5827
        %v5865 = vmul.f32 %v5297, %v5827
        %v5866 = vmul.f32 %v5299, %v5828
        %v5867 = vmul.f32 %v5301, %v5828
        %v5868 = vmul.f32 %v5303, %v5828
        %v5869 = vmul.f32 %v5305, %v5828
        %v5870 = vmul.f32 %v5307, %v5829
        %v5871 = vmul.f32 %v5309, %v5829
        %v5872 = vmul.f32 %v5311, %v5829
        %v5873 = vmul.f32 %v5313, %v5829
        %v5874 = vmul.f32 %v5315, %v5830
        %v5875 = vmul.f32 %v5317, %v5830
        %v5876 = vmul.f32 %v5319, %v5830
        %v5877 = vmul.f32 %v5321, %v5830
        %v5878 = vmul.f32 %v5323, %v5831
        %v5879 = vmul.f32 %v5325, %v5831
        %v5880 = vmul.f32 %v5327, %v5831
        %v5881 = vmul.f32 %v5329, %v5831
        %v5882 = vmul.f32 %v5331, %v5832
        %v5883 = vmul.f32 %v5333, %v5832
        %v5884 = vmul.f32 %v5335, %v5832
        %v5885 = vmul.f32 %v5337, %v5832
        %v5886 = vmul.f32 %v5339, %v5833
        %v5887 = vmul.f32 %v5341, %v5833
        %v5888 = vmul.f32 %v5343, %v5833
        %v5889 = vmul.f32 %v5345, %v5833
        %v5890 = vmul.f32 %v5347, %v5834
        %v5891 = vmul.f32 %v5349, %v5834
        %v5892 = vmul.f32 %v5351, %v5834
        %v5893 = vmul.f32 %v5353, %v5834
        %v5894 = vmul.f32 %v5355, %v5835
        %v5895 = vmul.f32 %v5357, %v5835
        %v5896 = vmul.f32 %v5359, %v5835
        %v5897 = vmul.f32 %v5361, %v5835
        %v5898 = vmul.f32 %v5363, %v5836
        %v5899 = vmul.f32 %v5365, %v5836
        %v5900 = vmul.f32 %v5367, %v5836
        %v5901 = vmul.f32 %v5369, %v5836
        %v5902 = vmul.f32 %v5371, %v5837
        %v5903 = vmul.f32 %v5373, %v5837
        %v5904 = vmul.f32 %v5375, %v5837
        %v5905 = vmul.f32 %v5377, %v5837
        %v5906 = vmul.f32 %v5379, %v5838
        %v5907 = vmul.f32 %v5381, %v5838
        %v5908 = vmul.f32 %v5383, %v5838
        %v5909 = vmul.f32 %v5385, %v5838
        %v5910 = vmul.f32 %v5387, %v5839
        %v5911 = vmul.f32 %v5389, %v5839
        %v5912 = vmul.f32 %v5391, %v5839
        %v5913 = vmul.f32 %v5393, %v5839
        %v5914 = vmul.f32 %v5395, %v5840
        %v5915 = vmul.f32 %v5397, %v5840
        %v5916 = vmul.f32 %v5399, %v5840
        %v5917 = vmul.f32 %v5401, %v5840
        %v5918 = vmul.f32 %v5403, %v5841
        %v5919 = vmul.f32 %v5405, %v5841
        %v5920 = vmul.f32 %v5407, %v5841
        %v5921 = vmul.f32 %v5409, %v5841
        %v5922 = vmul.f32 %v5411, %v5842
        %v5923 = vmul.f32 %v5413, %v5842
        %v5924 = vmul.f32 %v5415, %v5842
        %v5925 = vmul.f32 %v5417, %v5842
        %v5926 = vmul.f32 %v5419, %v5843
        %v5927 = vmul.f32 %v5421, %v5843
        %v5928 = vmul.f32 %v5423, %v5843
        %v5929 = vmul.f32 %v5425, %v5843
        %v5930 = vmul.f32 %v5427, %v5844
        %v5931 = vmul.f32 %v5429, %v5844
        %v5932 = vmul.f32 %v5431, %v5844
        %v5933 = vmul.f32 %v5433, %v5844
        %v5934 = vmul.f32 %v5435, %v5845
        %v5935 = vmul.f32 %v5437, %v5845
        %v5936 = vmul.f32 %v5439, %v5845
        %v5937 = vmul.f32 %v5441, %v5845
        %v5938 = vmul.f32 %v5443, %v5846
        %v5939 = vmul.f32 %v5445, %v5846
        %v5940 = vmul.f32 %v5447, %v5846
        %v5941 = vmul.f32 %v5449, %v5846
        %v5942 = vmul.f32 %v5451, %v5847
        %v5943 = vmul.f32 %v5453, %v5847
        %v5944 = vmul.f32 %v5455, %v5847
        %v5945 = vmul.f32 %v5457, %v5847
        %v5946 = vmul.f32 %v5459, %v5848
        %v5947 = vmul.f32 %v5461, %v5848
        %v5948 = vmul.f32 %v5463, %v5848
        %v5949 = vmul.f32 %v5465, %v5848
        %v5950 = vmul.f32 %v5467, %v5849
        %v5951 = vmul.f32 %v5469, %v5849
        %v5952 = vmul.f32 %v5471, %v5849
        %v5953 = vmul.f32 %v5473, %v5849
        %v5954 = vmul.f32 %v5475, %v5850
        %v5955 = vmul.f32 %v5477, %v5850
        %v5956 = vmul.f32 %v5479, %v5850
        %v5957 = vmul.f32 %v5481, %v5850
        %v5958 = vmul.f32 %v5483, %v5851
        %v5959 = vmul.f32 %v5485, %v5851
        %v5960 = vmul.f32 %v5487, %v5851
        %v5961 = vmul.f32 %v5489, %v5851
        %v5962 = vmul.f32 %v5491, %v5852
        %v5963 = vmul.f32 %v5493, %v5852
        %v5964 = vmul.f32 %v5495, %v5852
        %v5965 = vmul.f32 %v5497, %v5852
        %v5966 = vmul.f32 %v5499, %v5853
        %v5967 = vmul.f32 %v5501, %v5853
        %v5968 = vmul.f32 %v5503, %v5853
        %v5969 = vmul.f32 %v5505, %v5853
        %v5970 = vmul.f32 %v5507, %v5854
        %v5971 = vmul.f32 %v5509, %v5854
        %v5972 = vmul.f32 %v5511, %v5854
        %v5973 = vmul.f32 %v5513, %v5854
        %v5974 = vmul.f32 %v5515, %v5855
        %v5975 = vmul.f32 %v5517, %v5855
        %v5976 = vmul.f32 %v5519, %v5855
        %v5977 = vmul.f32 %v5521, %v5855
        %v5978 = vmul.f32 %v5523, %v5856
        %v5979 = vmul.f32 %v5525, %v5856
        %v5980 = vmul.f32 %v5527, %v5856
        %v5981 = vmul.f32 %v5529, %v5856
        %v5982 = vmul.f32 %v5531, %v5857
        %v5983 = vmul.f32 %v5533, %v5857
        %v5984 = vmul.f32 %v5535, %v5857
        %v5985 = vmul.f32 %v5537, %v5857
        %v5986 = vmul.f32 %v5858, %v2760
        %v5987 = vmul.f32 %v5859, %v2763
        %v5988 = vmul.f32 %v5860, %v2768
        %v5989 = vmul.f32 %v5861, %v2771
        %v5990 = vmul.f32 %v5862, %v2776
        %v5991 = vmul.f32 %v5863, %v2779
        %v5992 = vmul.f32 %v5864, %v2784
        %v5993 = vmul.f32 %v5865, %v2787
        %v5994 = vmul.f32 %v5866, %v2792
        %v5995 = vmul.f32 %v5867, %v2795
        %v5996 = vmul.f32 %v5868, %v2800
        %v5997 = vmul.f32 %v5869, %v2803
        %v5998 = vmul.f32 %v5870, %v2808
        %v5999 = vmul.f32 %v5871, %v2811
        %v6000 = vmul.f32 %v5872, %v2816
        %v6001 = vmul.f32 %v5873, %v2819
        %v6002 = vmul.f32 %v5874, %v2824
        %v6003 = vmul.f32 %v5875, %v2827
        %v6004 = vmul.f32 %v5876, %v2832
        %v6005 = vmul.f32 %v5877, %v2835
        %v6006 = vmul.f32 %v5878, %v2840
        %v6007 = vmul.f32 %v5879, %v2843
        %v6008 = vmul.f32 %v5880, %v2848
        %v6009 = vmul.f32 %v5881, %v2851
        %v6010 = vmul.f32 %v5882, %v2856
        %v6011 = vmul.f32 %v5883, %v2859
        %v6012 = vmul.f32 %v5884, %v2864
        %v6013 = vmul.f32 %v5885, %v2867
        %v6014 = vmul.f32 %v5886, %v2872
        %v6015 = vmul.f32 %v5887, %v2875
        %v6016 = vmul.f32 %v5888, %v2880
        %v6017 = vmul.f32 %v5889, %v2883
        %v6018 = vmul.f32 %v5890, %v2888
        %v6019 = vmul.f32 %v5891, %v2891
        %v6020 = vmul.f32 %v5892, %v2896
        %v6021 = vmul.f32 %v5893, %v2899
        %v6022 = vmul.f32 %v5894, %v2904
        %v6023 = vmul.f32 %v5895, %v2907
        %v6024 = vmul.f32 %v5896, %v2912
        %v6025 = vmul.f32 %v5897, %v2915
        %v6026 = vmul.f32 %v5898, %v2920
        %v6027 = vmul.f32 %v5899, %v2923
        %v6028 = vmul.f32 %v5900, %v2928
        %v6029 = vmul.f32 %v5901, %v2931
        %v6030 = vmul.f32 %v5902, %v2936
        %v6031 = vmul.f32 %v5903, %v2939
        %v6032 = vmul.f32 %v5904, %v2944
        %v6033 = vmul.f32 %v5905, %v2947
        %v6034 = vmul.f32 %v5906, %v2952
        %v6035 = vmul.f32 %v5907, %v2955
        %v6036 = vmul.f32 %v5908, %v2960
        %v6037 = vmul.f32 %v5909, %v2963
        %v6038 = vmul.f32 %v5910, %v2968
        %v6039 = vmul.f32 %v5911, %v2971
        %v6040 = vmul.f32 %v5912, %v2976
        %v6041 = vmul.f32 %v5913, %v2979
        %v6042 = vmul.f32 %v5914, %v2984
        %v6043 = vmul.f32 %v5915, %v2987
        %v6044 = vmul.f32 %v5916, %v2992
        %v6045 = vmul.f32 %v5917, %v2995
        %v6046 = vmul.f32 %v5918, %v3000
        %v6047 = vmul.f32 %v5919, %v3003
        %v6048 = vmul.f32 %v5920, %v3008
        %v6049 = vmul.f32 %v5921, %v3011
        %v6050 = vmul.f32 %v5922, %v3016
        %v6051 = vmul.f32 %v5923, %v3019
        %v6052 = vmul.f32 %v5924, %v3024
        %v6053 = vmul.f32 %v5925, %v3027
        %v6054 = vmul.f32 %v5926, %v3032
        %v6055 = vmul.f32 %v5927, %v3035
        %v6056 = vmul.f32 %v5928, %v3040
        %v6057 = vmul.f32 %v5929, %v3043
        %v6058 = vmul.f32 %v5930, %v3048
        %v6059 = vmul.f32 %v5931, %v3051
        %v6060 = vmul.f32 %v5932, %v3056
        %v6061 = vmul.f32 %v5933, %v3059
        %v6062 = vmul.f32 %v5934, %v3064
        %v6063 = vmul.f32 %v5935, %v3067
        %v6064 = vmul.f32 %v5936, %v3072
        %v6065 = vmul.f32 %v5937, %v3075
        %v6066 = vmul.f32 %v5938, %v3080
        %v6067 = vmul.f32 %v5939, %v3083
        %v6068 = vmul.f32 %v5940, %v3088
        %v6069 = vmul.f32 %v5941, %v3091
        %v6070 = vmul.f32 %v5942, %v3096
        %v6071 = vmul.f32 %v5943, %v3099
        %v6072 = vmul.f32 %v5944, %v3104
        %v6073 = vmul.f32 %v5945, %v3107
        %v6074 = vmul.f32 %v5946, %v3112
        %v6075 = vmul.f32 %v5947, %v3115
        %v6076 = vmul.f32 %v5948, %v3120
        %v6077 = vmul.f32 %v5949, %v3123
        %v6078 = vmul.f32 %v5950, %v3128
        %v6079 = vmul.f32 %v5951, %v3131
        %v6080 = vmul.f32 %v5952, %v3136
        %v6081 = vmul.f32 %v5953, %v3139
        %v6082 = vmul.f32 %v5954, %v3144
        %v6083 = vmul.f32 %v5955, %v3147
        %v6084 = vmul.f32 %v5956, %v3152
        %v6085 = vmul.f32 %v5957, %v3155
        %v6086 = vmul.f32 %v5958, %v3160
        %v6087 = vmul.f32 %v5959, %v3163
        %v6088 = vmul.f32 %v5960, %v3168
        %v6089 = vmul.f32 %v5961, %v3171
        %v6090 = vmul.f32 %v5962, %v3176
        %v6091 = vmul.f32 %v5963, %v3179
        %v6092 = vmul.f32 %v5964, %v3184
        %v6093 = vmul.f32 %v5965, %v3187
        %v6094 = vmul.f32 %v5966, %v3192
        %v6095 = vmul.f32 %v5967, %v3195
        %v6096 = vmul.f32 %v5968, %v3200
        %v6097 = vmul.f32 %v5969, %v3203
        %v6098 = vmul.f32 %v5970, %v3208
        %v6099 = vmul.f32 %v5971, %v3211
        %v6100 = vmul.f32 %v5972, %v3216
        %v6101 = vmul.f32 %v5973, %v3219
        %v6102 = vmul.f32 %v5974, %v3224
        %v6103 = vmul.f32 %v5975, %v3227
        %v6104 = vmul.f32 %v5976, %v3232
        %v6105 = vmul.f32 %v5977, %v3235
        %v6106 = vmul.f32 %v5978, %v3240
        %v6107 = vmul.f32 %v5979, %v3243
        %v6108 = vmul.f32 %v5980, %v3248
        %v6109 = vmul.f32 %v5981, %v3251
        %v6110 = vmul.f32 %v5982, %v3256
        %v6111 = vmul.f32 %v5983, %v3259
        %v6112 = vmul.f32 %v5984, %v3264
        %v6113 = vmul.f32 %v5985, %v3267
        %v6114 = vsel %vm2170, %v5986, 0.0
        %v6115 = vsel %vm2170, %v5987, 0.0
        %v6116 = vadd.f32 %v6114, %v6115
        %v6117 = vsel %vm2170, %v5988, 0.0
        %v6118 = vadd.f32 %v6116, %v6117
        %v6119 = vsel %vm2170, %v5989, 0.0
        %v6120 = vadd.f32 %v6118, %v6119
        %v6121 = vrot.slane %v6120, 4
        %v6122 = vadd.f32 %v6120, %v6121
        %v6123 = vrot.slane %v6122, 2
        %v6124 = vadd.f32 %v6122, %v6123
        %v6125 = vrot.slane %v6124, 1
        %v6126 = vadd.f32 %v6124, %v6125
        %v6127 = vsel %vm2170, %v5990, 0.0
        %v6128 = vsel %vm2170, %v5991, 0.0
        %v6129 = vadd.f32 %v6127, %v6128
        %v6130 = vsel %vm2170, %v5992, 0.0
        %v6131 = vadd.f32 %v6129, %v6130
        %v6132 = vsel %vm2170, %v5993, 0.0
        %v6133 = vadd.f32 %v6131, %v6132
        %v6134 = vrot.slane %v6133, 4
        %v6135 = vadd.f32 %v6133, %v6134
        %v6136 = vrot.slane %v6135, 2
        %v6137 = vadd.f32 %v6135, %v6136
        %v6138 = vrot.slane %v6137, 1
        %v6139 = vadd.f32 %v6137, %v6138
        %v6140 = vsel %vm2170, %v5994, 0.0
        %v6141 = vsel %vm2170, %v5995, 0.0
        %v6142 = vadd.f32 %v6140, %v6141
        %v6143 = vsel %vm2170, %v5996, 0.0
        %v6144 = vadd.f32 %v6142, %v6143
        %v6145 = vsel %vm2170, %v5997, 0.0
        %v6146 = vadd.f32 %v6144, %v6145
        %v6147 = vrot.slane %v6146, 4
        %v6148 = vadd.f32 %v6146, %v6147
        %v6149 = vrot.slane %v6148, 2
        %v6150 = vadd.f32 %v6148, %v6149
        %v6151 = vrot.slane %v6150, 1
        %v6152 = vadd.f32 %v6150, %v6151
        %v6153 = vsel %vm2170, %v5998, 0.0
        %v6154 = vsel %vm2170, %v5999, 0.0
        %v6155 = vadd.f32 %v6153, %v6154
        %v6156 = vsel %vm2170, %v6000, 0.0
        %v6157 = vadd.f32 %v6155, %v6156
        %v6158 = vsel %vm2170, %v6001, 0.0
        %v6159 = vadd.f32 %v6157, %v6158
        %v6160 = vrot.slane %v6159, 4
        %v6161 = vadd.f32 %v6159, %v6160
        %v6162 = vrot.slane %v6161, 2
        %v6163 = vadd.f32 %v6161, %v6162
        %v6164 = vrot.slane %v6163, 1
        %v6165 = vadd.f32 %v6163, %v6164
        %v6166 = vsel %vm2170, %v6002, 0.0
        %v6167 = vsel %vm2170, %v6003, 0.0
        %v6168 = vadd.f32 %v6166, %v6167
        %v6169 = vsel %vm2170, %v6004, 0.0
        %v6170 = vadd.f32 %v6168, %v6169
        %v6171 = vsel %vm2170, %v6005, 0.0
        %v6172 = vadd.f32 %v6170, %v6171
        %v6173 = vrot.slane %v6172, 4
        %v6174 = vadd.f32 %v6172, %v6173
        %v6175 = vrot.slane %v6174, 2
        %v6176 = vadd.f32 %v6174, %v6175
        %v6177 = vrot.slane %v6176, 1
        %v6178 = vadd.f32 %v6176, %v6177
        %v6179 = vsel %vm2170, %v6006, 0.0
        %v6180 = vsel %vm2170, %v6007, 0.0
        %v6181 = vadd.f32 %v6179, %v6180
        %v6182 = vsel %vm2170, %v6008, 0.0
        %v6183 = vadd.f32 %v6181, %v6182
        %v6184 = vsel %vm2170, %v6009, 0.0
        %v6185 = vadd.f32 %v6183, %v6184
        %v6186 = vrot.slane %v6185, 4
        %v6187 = vadd.f32 %v6185, %v6186
        %v6188 = vrot.slane %v6187, 2
        %v6189 = vadd.f32 %v6187, %v6188
        %v6190 = vrot.slane %v6189, 1
        %v6191 = vadd.f32 %v6189, %v6190
        %v6192 = vsel %vm2170, %v6010, 0.0
        %v6193 = vsel %vm2170, %v6011, 0.0
        %v6194 = vadd.f32 %v6192, %v6193
        %v6195 = vsel %vm2170, %v6012, 0.0
        %v6196 = vadd.f32 %v6194, %v6195
        %v6197 = vsel %vm2170, %v6013, 0.0
        %v6198 = vadd.f32 %v6196, %v6197
        %v6199 = vrot.slane %v6198, 4
        %v6200 = vadd.f32 %v6198, %v6199
        %v6201 = vrot.slane %v6200, 2
        %v6202 = vadd.f32 %v6200, %v6201
        %v6203 = vrot.slane %v6202, 1
        %v6204 = vadd.f32 %v6202, %v6203
        %v6205 = vsel %vm2170, %v6014, 0.0
        %v6206 = vsel %vm2170, %v6015, 0.0
        %v6207 = vadd.f32 %v6205, %v6206
        %v6208 = vsel %vm2170, %v6016, 0.0
        %v6209 = vadd.f32 %v6207, %v6208
        %v6210 = vsel %vm2170, %v6017, 0.0
        %v6211 = vadd.f32 %v6209, %v6210
        %v6212 = vrot.slane %v6211, 4
        %v6213 = vadd.f32 %v6211, %v6212
        %v6214 = vrot.slane %v6213, 2
        %v6215 = vadd.f32 %v6213, %v6214
        %v6216 = vrot.slane %v6215, 1
        %v6217 = vadd.f32 %v6215, %v6216
        %v6218 = vsel %vm2170, %v6018, 0.0
        %v6219 = vsel %vm2170, %v6019, 0.0
        %v6220 = vadd.f32 %v6218, %v6219
        %v6221 = vsel %vm2170, %v6020, 0.0
        %v6222 = vadd.f32 %v6220, %v6221
        %v6223 = vsel %vm2170, %v6021, 0.0
        %v6224 = vadd.f32 %v6222, %v6223
        %v6225 = vrot.slane %v6224, 4
        %v6226 = vadd.f32 %v6224, %v6225
        %v6227 = vrot.slane %v6226, 2
        %v6228 = vadd.f32 %v6226, %v6227
        %v6229 = vrot.slane %v6228, 1
        %v6230 = vadd.f32 %v6228, %v6229
        %v6231 = vsel %vm2170, %v6022, 0.0
        %v6232 = vsel %vm2170, %v6023, 0.0
        %v6233 = vadd.f32 %v6231, %v6232
        %v6234 = vsel %vm2170, %v6024, 0.0
        %v6235 = vadd.f32 %v6233, %v6234
        %v6236 = vsel %vm2170, %v6025, 0.0
        %v6237 = vadd.f32 %v6235, %v6236
        %v6238 = vrot.slane %v6237, 4
        %v6239 = vadd.f32 %v6237, %v6238
        %v6240 = vrot.slane %v6239, 2
        %v6241 = vadd.f32 %v6239, %v6240
        %v6242 = vrot.slane %v6241, 1
        %v6243 = vadd.f32 %v6241, %v6242
        %v6244 = vsel %vm2170, %v6026, 0.0
        %v6245 = vsel %vm2170, %v6027, 0.0
        %v6246 = vadd.f32 %v6244, %v6245
        %v6247 = vsel %vm2170, %v6028, 0.0
        %v6248 = vadd.f32 %v6246, %v6247
        %v6249 = vsel %vm2170, %v6029, 0.0
        %v6250 = vadd.f32 %v6248, %v6249
        %v6251 = vrot.slane %v6250, 4
        %v6252 = vadd.f32 %v6250, %v6251
        %v6253 = vrot.slane %v6252, 2
        %v6254 = vadd.f32 %v6252, %v6253
        %v6255 = vrot.slane %v6254, 1
        %v6256 = vadd.f32 %v6254, %v6255
        %v6257 = vsel %vm2170, %v6030, 0.0
        %v6258 = vsel %vm2170, %v6031, 0.0
        %v6259 = vadd.f32 %v6257, %v6258
        %v6260 = vsel %vm2170, %v6032, 0.0
        %v6261 = vadd.f32 %v6259, %v6260
        %v6262 = vsel %vm2170, %v6033, 0.0
        %v6263 = vadd.f32 %v6261, %v6262
        %v6264 = vrot.slane %v6263, 4
        %v6265 = vadd.f32 %v6263, %v6264
        %v6266 = vrot.slane %v6265, 2
        %v6267 = vadd.f32 %v6265, %v6266
        %v6268 = vrot.slane %v6267, 1
        %v6269 = vadd.f32 %v6267, %v6268
        %v6270 = vsel %vm2170, %v6034, 0.0
        %v6271 = vsel %vm2170, %v6035, 0.0
        %v6272 = vadd.f32 %v6270, %v6271
        %v6273 = vsel %vm2170, %v6036, 0.0
        %v6274 = vadd.f32 %v6272, %v6273
        %v6275 = vsel %vm2170, %v6037, 0.0
        %v6276 = vadd.f32 %v6274, %v6275
        %v6277 = vrot.slane %v6276, 4
        %v6278 = vadd.f32 %v6276, %v6277
        %v6279 = vrot.slane %v6278, 2
        %v6280 = vadd.f32 %v6278, %v6279
        %v6281 = vrot.slane %v6280, 1
        %v6282 = vadd.f32 %v6280, %v6281
        %v6283 = vsel %vm2170, %v6038, 0.0
        %v6284 = vsel %vm2170, %v6039, 0.0
        %v6285 = vadd.f32 %v6283, %v6284
        %v6286 = vsel %vm2170, %v6040, 0.0
        %v6287 = vadd.f32 %v6285, %v6286
        %v6288 = vsel %vm2170, %v6041, 0.0
        %v6289 = vadd.f32 %v6287, %v6288
        %v6290 = vrot.slane %v6289, 4
        %v6291 = vadd.f32 %v6289, %v6290
        %v6292 = vrot.slane %v6291, 2
        %v6293 = vadd.f32 %v6291, %v6292
        %v6294 = vrot.slane %v6293, 1
        %v6295 = vadd.f32 %v6293, %v6294
        %v6296 = vsel %vm2170, %v6042, 0.0
        %v6297 = vsel %vm2170, %v6043, 0.0
        %v6298 = vadd.f32 %v6296, %v6297
        %v6299 = vsel %vm2170, %v6044, 0.0
        %v6300 = vadd.f32 %v6298, %v6299
        %v6301 = vsel %vm2170, %v6045, 0.0
        %v6302 = vadd.f32 %v6300, %v6301
        %v6303 = vrot.slane %v6302, 4
        %v6304 = vadd.f32 %v6302, %v6303
        %v6305 = vrot.slane %v6304, 2
        %v6306 = vadd.f32 %v6304, %v6305
        %v6307 = vrot.slane %v6306, 1
        %v6308 = vadd.f32 %v6306, %v6307
        %v6309 = vsel %vm2170, %v6046, 0.0
        %v6310 = vsel %vm2170, %v6047, 0.0
        %v6311 = vadd.f32 %v6309, %v6310
        %v6312 = vsel %vm2170, %v6048, 0.0
        %v6313 = vadd.f32 %v6311, %v6312
        %v6314 = vsel %vm2170, %v6049, 0.0
        %v6315 = vadd.f32 %v6313, %v6314
        %v6316 = vrot.slane %v6315, 4
        %v6317 = vadd.f32 %v6315, %v6316
        %v6318 = vrot.slane %v6317, 2
        %v6319 = vadd.f32 %v6317, %v6318
        %v6320 = vrot.slane %v6319, 1
        %v6321 = vadd.f32 %v6319, %v6320
        %v6322 = vsel %vm2170, %v6050, 0.0
        %v6323 = vsel %vm2170, %v6051, 0.0
        %v6324 = vadd.f32 %v6322, %v6323
        %v6325 = vsel %vm2170, %v6052, 0.0
        %v6326 = vadd.f32 %v6324, %v6325
        %v6327 = vsel %vm2170, %v6053, 0.0
        %v6328 = vadd.f32 %v6326, %v6327
        %v6329 = vrot.slane %v6328, 4
        %v6330 = vadd.f32 %v6328, %v6329
        %v6331 = vrot.slane %v6330, 2
        %v6332 = vadd.f32 %v6330, %v6331
        %v6333 = vrot.slane %v6332, 1
        %v6334 = vadd.f32 %v6332, %v6333
        %v6335 = vsel %vm2170, %v6054, 0.0
        %v6336 = vsel %vm2170, %v6055, 0.0
        %v6337 = vadd.f32 %v6335, %v6336
        %v6338 = vsel %vm2170, %v6056, 0.0
        %v6339 = vadd.f32 %v6337, %v6338
        %v6340 = vsel %vm2170, %v6057, 0.0
        %v6341 = vadd.f32 %v6339, %v6340
        %v6342 = vrot.slane %v6341, 4
        %v6343 = vadd.f32 %v6341, %v6342
        %v6344 = vrot.slane %v6343, 2
        %v6345 = vadd.f32 %v6343, %v6344
        %v6346 = vrot.slane %v6345, 1
        %v6347 = vadd.f32 %v6345, %v6346
        %v6348 = vsel %vm2170, %v6058, 0.0
        %v6349 = vsel %vm2170, %v6059, 0.0
        %v6350 = vadd.f32 %v6348, %v6349
        %v6351 = vsel %vm2170, %v6060, 0.0
        %v6352 = vadd.f32 %v6350, %v6351
        %v6353 = vsel %vm2170, %v6061, 0.0
        %v6354 = vadd.f32 %v6352, %v6353
        %v6355 = vrot.slane %v6354, 4
        %v6356 = vadd.f32 %v6354, %v6355
        %v6357 = vrot.slane %v6356, 2
        %v6358 = vadd.f32 %v6356, %v6357
        %v6359 = vrot.slane %v6358, 1
        %v6360 = vadd.f32 %v6358, %v6359
        %v6361 = vsel %vm2170, %v6062, 0.0
        %v6362 = vsel %vm2170, %v6063, 0.0
        %v6363 = vadd.f32 %v6361, %v6362
        %v6364 = vsel %vm2170, %v6064, 0.0
        %v6365 = vadd.f32 %v6363, %v6364
        %v6366 = vsel %vm2170, %v6065, 0.0
        %v6367 = vadd.f32 %v6365, %v6366
        %v6368 = vrot.slane %v6367, 4
        %v6369 = vadd.f32 %v6367, %v6368
        %v6370 = vrot.slane %v6369, 2
        %v6371 = vadd.f32 %v6369, %v6370
        %v6372 = vrot.slane %v6371, 1
        %v6373 = vadd.f32 %v6371, %v6372
        %v6374 = vsel %vm2170, %v6066, 0.0
        %v6375 = vsel %vm2170, %v6067, 0.0
        %v6376 = vadd.f32 %v6374, %v6375
        %v6377 = vsel %vm2170, %v6068, 0.0
        %v6378 = vadd.f32 %v6376, %v6377
        %v6379 = vsel %vm2170, %v6069, 0.0
        %v6380 = vadd.f32 %v6378, %v6379
        %v6381 = vrot.slane %v6380, 4
        %v6382 = vadd.f32 %v6380, %v6381
        %v6383 = vrot.slane %v6382, 2
        %v6384 = vadd.f32 %v6382, %v6383
        %v6385 = vrot.slane %v6384, 1
        %v6386 = vadd.f32 %v6384, %v6385
        %v6387 = vsel %vm2170, %v6070, 0.0
        %v6388 = vsel %vm2170, %v6071, 0.0
        %v6389 = vadd.f32 %v6387, %v6388
        %v6390 = vsel %vm2170, %v6072, 0.0
        %v6391 = vadd.f32 %v6389, %v6390
        %v6392 = vsel %vm2170, %v6073, 0.0
        %v6393 = vadd.f32 %v6391, %v6392
        %v6394 = vrot.slane %v6393, 4
        %v6395 = vadd.f32 %v6393, %v6394
        %v6396 = vrot.slane %v6395, 2
        %v6397 = vadd.f32 %v6395, %v6396
        %v6398 = vrot.slane %v6397, 1
        %v6399 = vadd.f32 %v6397, %v6398
        %v6400 = vsel %vm2170, %v6074, 0.0
        %v6401 = vsel %vm2170, %v6075, 0.0
        %v6402 = vadd.f32 %v6400, %v6401
        %v6403 = vsel %vm2170, %v6076, 0.0
        %v6404 = vadd.f32 %v6402, %v6403
        %v6405 = vsel %vm2170, %v6077, 0.0
        %v6406 = vadd.f32 %v6404, %v6405
        %v6407 = vrot.slane %v6406, 4
        %v6408 = vadd.f32 %v6406, %v6407
        %v6409 = vrot.slane %v6408, 2
        %v6410 = vadd.f32 %v6408, %v6409
        %v6411 = vrot.slane %v6410, 1
        %v6412 = vadd.f32 %v6410, %v6411
        %v6413 = vsel %vm2170, %v6078, 0.0
        %v6414 = vsel %vm2170, %v6079, 0.0
        %v6415 = vadd.f32 %v6413, %v6414
        %v6416 = vsel %vm2170, %v6080, 0.0
        %v6417 = vadd.f32 %v6415, %v6416
        %v6418 = vsel %vm2170, %v6081, 0.0
        %v6419 = vadd.f32 %v6417, %v6418
        %v6420 = vrot.slane %v6419, 4
        %v6421 = vadd.f32 %v6419, %v6420
        %v6422 = vrot.slane %v6421, 2
        %v6423 = vadd.f32 %v6421, %v6422
        %v6424 = vrot.slane %v6423, 1
        %v6425 = vadd.f32 %v6423, %v6424
        %v6426 = vsel %vm2170, %v6082, 0.0
        %v6427 = vsel %vm2170, %v6083, 0.0
        %v6428 = vadd.f32 %v6426, %v6427
        %v6429 = vsel %vm2170, %v6084, 0.0
        %v6430 = vadd.f32 %v6428, %v6429
        %v6431 = vsel %vm2170, %v6085, 0.0
        %v6432 = vadd.f32 %v6430, %v6431
        %v6433 = vrot.slane %v6432, 4
        %v6434 = vadd.f32 %v6432, %v6433
        %v6435 = vrot.slane %v6434, 2
        %v6436 = vadd.f32 %v6434, %v6435
        %v6437 = vrot.slane %v6436, 1
        %v6438 = vadd.f32 %v6436, %v6437
        %v6439 = vsel %vm2170, %v6086, 0.0
        %v6440 = vsel %vm2170, %v6087, 0.0
        %v6441 = vadd.f32 %v6439, %v6440
        %v6442 = vsel %vm2170, %v6088, 0.0
        %v6443 = vadd.f32 %v6441, %v6442
        %v6444 = vsel %vm2170, %v6089, 0.0
        %v6445 = vadd.f32 %v6443, %v6444
        %v6446 = vrot.slane %v6445, 4
        %v6447 = vadd.f32 %v6445, %v6446
        %v6448 = vrot.slane %v6447, 2
        %v6449 = vadd.f32 %v6447, %v6448
        %v6450 = vrot.slane %v6449, 1
        %v6451 = vadd.f32 %v6449, %v6450
        %v6452 = vsel %vm2170, %v6090, 0.0
        %v6453 = vsel %vm2170, %v6091, 0.0
        %v6454 = vadd.f32 %v6452, %v6453
        %v6455 = vsel %vm2170, %v6092, 0.0
        %v6456 = vadd.f32 %v6454, %v6455
        %v6457 = vsel %vm2170, %v6093, 0.0
        %v6458 = vadd.f32 %v6456, %v6457
        %v6459 = vrot.slane %v6458, 4
        %v6460 = vadd.f32 %v6458, %v6459
        %v6461 = vrot.slane %v6460, 2
        %v6462 = vadd.f32 %v6460, %v6461
        %v6463 = vrot.slane %v6462, 1
        %v6464 = vadd.f32 %v6462, %v6463
        %v6465 = vsel %vm2170, %v6094, 0.0
        %v6466 = vsel %vm2170, %v6095, 0.0
        %v6467 = vadd.f32 %v6465, %v6466
        %v6468 = vsel %vm2170, %v6096, 0.0
        %v6469 = vadd.f32 %v6467, %v6468
        %v6470 = vsel %vm2170, %v6097, 0.0
        %v6471 = vadd.f32 %v6469, %v6470
        %v6472 = vrot.slane %v6471, 4
        %v6473 = vadd.f32 %v6471, %v6472
        %v6474 = vrot.slane %v6473, 2
        %v6475 = vadd.f32 %v6473, %v6474
        %v6476 = vrot.slane %v6475, 1
        %v6477 = vadd.f32 %v6475, %v6476
        %v6478 = vsel %vm2170, %v6098, 0.0
        %v6479 = vsel %vm2170, %v6099, 0.0
        %v6480 = vadd.f32 %v6478, %v6479
        %v6481 = vsel %vm2170, %v6100, 0.0
        %v6482 = vadd.f32 %v6480, %v6481
        %v6483 = vsel %vm2170, %v6101, 0.0
        %v6484 = vadd.f32 %v6482, %v6483
        %v6485 = vrot.slane %v6484, 4
        %v6486 = vadd.f32 %v6484, %v6485
        %v6487 = vrot.slane %v6486, 2
        %v6488 = vadd.f32 %v6486, %v6487
        %v6489 = vrot.slane %v6488, 1
        %v6490 = vadd.f32 %v6488, %v6489
        %v6491 = vsel %vm2170, %v6102, 0.0
        %v6492 = vsel %vm2170, %v6103, 0.0
        %v6493 = vadd.f32 %v6491, %v6492
        %v6494 = vsel %vm2170, %v6104, 0.0
        %v6495 = vadd.f32 %v6493, %v6494
        %v6496 = vsel %vm2170, %v6105, 0.0
        %v6497 = vadd.f32 %v6495, %v6496
        %v6498 = vrot.slane %v6497, 4
        %v6499 = vadd.f32 %v6497, %v6498
        %v6500 = vrot.slane %v6499, 2
        %v6501 = vadd.f32 %v6499, %v6500
        %v6502 = vrot.slane %v6501, 1
        %v6503 = vadd.f32 %v6501, %v6502
        %v6504 = vsel %vm2170, %v6106, 0.0
        %v6505 = vsel %vm2170, %v6107, 0.0
        %v6506 = vadd.f32 %v6504, %v6505
        %v6507 = vsel %vm2170, %v6108, 0.0
        %v6508 = vadd.f32 %v6506, %v6507
        %v6509 = vsel %vm2170, %v6109, 0.0
        %v6510 = vadd.f32 %v6508, %v6509
        %v6511 = vrot.slane %v6510, 4
        %v6512 = vadd.f32 %v6510, %v6511
        %v6513 = vrot.slane %v6512, 2
        %v6514 = vadd.f32 %v6512, %v6513
        %v6515 = vrot.slane %v6514, 1
        %v6516 = vadd.f32 %v6514, %v6515
        %v6517 = vsel %vm2170, %v6110, 0.0
        %v6518 = vsel %vm2170, %v6111, 0.0
        %v6519 = vadd.f32 %v6517, %v6518
        %v6520 = vsel %vm2170, %v6112, 0.0
        %v6521 = vadd.f32 %v6519, %v6520
        %v6522 = vsel %vm2170, %v6113, 0.0
        %v6523 = vadd.f32 %v6521, %v6522
        %v6524 = vrot.slane %v6523, 4
        %v6525 = vadd.f32 %v6523, %v6524
        %v6526 = vrot.slane %v6525, 2
        %v6527 = vadd.f32 %v6525, %v6526
        %v6528 = vrot.slane %v6527, 1
        %v6529 = vadd.f32 %v6527, %v6528
        %v6530 = vld [vmem:[%s315] sm:$0xf]
        %v6531 = vld [vmem:[%s315 + $0x4] sm:$0xf]
        %v6532 = vld [vmem:[%s315 + $0x8] sm:$0xf]
        %v6533 = vld [vmem:[%s315 + $0xc] sm:$0xf]
        %v6534 = vld [vmem:[%s315 + $0x10] sm:$0xf]
        %v6535 = vld [vmem:[%s315 + $0x14] sm:$0xf]
        %v6536 = vld [vmem:[%s315 + $0x18] sm:$0xf]
        %v6537 = vld [vmem:[%s315 + $0x1c] sm:$0xf]
        %v6538 = vld [vmem:[%s315 + $0x20] sm:$0xf]
        %v6539 = vld [vmem:[%s315 + $0x24] sm:$0xf]
        %v6540 = vld [vmem:[%s315 + $0x28] sm:$0xf]
        %v6541 = vld [vmem:[%s315 + $0x2c] sm:$0xf]
        %v6542 = vld [vmem:[%s315 + $0x30] sm:$0xf]
        %v6543 = vld [vmem:[%s315 + $0x34] sm:$0xf]
        %v6544 = vld [vmem:[%s315 + $0x38] sm:$0xf]
        %v6545 = vld [vmem:[%s315 + $0x3c] sm:$0xf]
        %v6546 = vld [vmem:[%s315 + $0x40] sm:$0xf]
        %v6547 = vld [vmem:[%s315 + $0x44] sm:$0xf]
        %v6548 = vld [vmem:[%s315 + $0x48] sm:$0xf]
        %v6549 = vld [vmem:[%s315 + $0x4c] sm:$0xf]
        %v6550 = vld [vmem:[%s315 + $0x50] sm:$0xf]
        %v6551 = vld [vmem:[%s315 + $0x54] sm:$0xf]
        %v6552 = vld [vmem:[%s315 + $0x58] sm:$0xf]
        %v6553 = vld [vmem:[%s315 + $0x5c] sm:$0xf]
        %v6554 = vld [vmem:[%s315 + $0x60] sm:$0xf]
        %v6555 = vld [vmem:[%s315 + $0x64] sm:$0xf]
        %v6556 = vld [vmem:[%s315 + $0x68] sm:$0xf]
        %v6557 = vld [vmem:[%s315 + $0x6c] sm:$0xf]
        %v6558 = vld [vmem:[%s315 + $0x70] sm:$0xf]
        %v6559 = vld [vmem:[%s315 + $0x74] sm:$0xf]
        %v6560 = vld [vmem:[%s315 + $0x78] sm:$0xf]
        %v6561 = vld [vmem:[%s315 + $0x7c] sm:$0xf]
        %v6562 = vld [vmem:[%s315 + $0x80] sm:$0xf]
        %v6563 = vld [vmem:[%s315 + $0x84] sm:$0xf]
        %v6564 = vld [vmem:[%s315 + $0x88] sm:$0xf]
        %v6565 = vld [vmem:[%s315 + $0x8c] sm:$0xf]
        %v6566 = vld [vmem:[%s315 + $0x90] sm:$0xf]
        %v6567 = vld [vmem:[%s315 + $0x94] sm:$0xf]
        %v6568 = vld [vmem:[%s315 + $0x98] sm:$0xf]
        %v6569 = vld [vmem:[%s315 + $0x9c] sm:$0xf]
        %v6570 = vld [vmem:[%s315 + $0xa0] sm:$0xf]
        %v6571 = vld [vmem:[%s315 + $0xa4] sm:$0xf]
        %v6572 = vld [vmem:[%s315 + $0xa8] sm:$0xf]
        %v6573 = vld [vmem:[%s315 + $0xac] sm:$0xf]
        %v6574 = vld [vmem:[%s315 + $0xb0] sm:$0xf]
        %v6575 = vld [vmem:[%s315 + $0xb4] sm:$0xf]
        %v6576 = vld [vmem:[%s315 + $0xb8] sm:$0xf]
        %v6577 = vld [vmem:[%s315 + $0xbc] sm:$0xf]
        %v6578 = vld [vmem:[%s315 + $0xc0] sm:$0xf]
        %v6579 = vld [vmem:[%s315 + $0xc4] sm:$0xf]
        %v6580 = vld [vmem:[%s315 + $0xc8] sm:$0xf]
        %v6581 = vld [vmem:[%s315 + $0xcc] sm:$0xf]
        %v6582 = vld [vmem:[%s315 + $0xd0] sm:$0xf]
        %v6583 = vld [vmem:[%s315 + $0xd4] sm:$0xf]
        %v6584 = vld [vmem:[%s315 + $0xd8] sm:$0xf]
        %v6585 = vld [vmem:[%s315 + $0xdc] sm:$0xf]
        %v6586 = vld [vmem:[%s315 + $0xe0] sm:$0xf]
        %v6587 = vld [vmem:[%s315 + $0xe4] sm:$0xf]
        %v6588 = vld [vmem:[%s315 + $0xe8] sm:$0xf]
        %v6589 = vld [vmem:[%s315 + $0xec] sm:$0xf]
        %v6590 = vld [vmem:[%s315 + $0xf0] sm:$0xf]
        %v6591 = vld [vmem:[%s315 + $0xf4] sm:$0xf]
        %v6592 = vld [vmem:[%s315 + $0xf8] sm:$0xf]
        %v6593 = vld [vmem:[%s315 + $0xfc] sm:$0xf]
        %v6594 = vld [vmem:[%s315 + $0x100] sm:$0xf]
        %v6595 = vld [vmem:[%s315 + $0x104] sm:$0xf]
        %v6596 = vld [vmem:[%s315 + $0x108] sm:$0xf]
        %v6597 = vld [vmem:[%s315 + $0x10c] sm:$0xf]
        %v6598 = vld [vmem:[%s315 + $0x110] sm:$0xf]
        %v6599 = vld [vmem:[%s315 + $0x114] sm:$0xf]
        %v6600 = vld [vmem:[%s315 + $0x118] sm:$0xf]
        %v6601 = vld [vmem:[%s315 + $0x11c] sm:$0xf]
        %v6602 = vld [vmem:[%s315 + $0x120] sm:$0xf]
        %v6603 = vld [vmem:[%s315 + $0x124] sm:$0xf]
        %v6604 = vld [vmem:[%s315 + $0x128] sm:$0xf]
        %v6605 = vld [vmem:[%s315 + $0x12c] sm:$0xf]
        %v6606 = vld [vmem:[%s315 + $0x130] sm:$0xf]
        %v6607 = vld [vmem:[%s315 + $0x134] sm:$0xf]
        %v6608 = vld [vmem:[%s315 + $0x138] sm:$0xf]
        %v6609 = vld [vmem:[%s315 + $0x13c] sm:$0xf]
        %v6610 = vld [vmem:[%s315 + $0x140] sm:$0xf]
        %v6611 = vld [vmem:[%s315 + $0x144] sm:$0xf]
        %v6612 = vld [vmem:[%s315 + $0x148] sm:$0xf]
        %v6613 = vld [vmem:[%s315 + $0x14c] sm:$0xf]
        %v6614 = vld [vmem:[%s315 + $0x150] sm:$0xf]
        %v6615 = vld [vmem:[%s315 + $0x154] sm:$0xf]
        %v6616 = vld [vmem:[%s315 + $0x158] sm:$0xf]
        %v6617 = vld [vmem:[%s315 + $0x15c] sm:$0xf]
        %v6618 = vld [vmem:[%s315 + $0x160] sm:$0xf]
        %v6619 = vld [vmem:[%s315 + $0x164] sm:$0xf]
        %v6620 = vld [vmem:[%s315 + $0x168] sm:$0xf]
        %v6621 = vld [vmem:[%s315 + $0x16c] sm:$0xf]
        %v6622 = vld [vmem:[%s315 + $0x170] sm:$0xf]
        %v6623 = vld [vmem:[%s315 + $0x174] sm:$0xf]
        %v6624 = vld [vmem:[%s315 + $0x178] sm:$0xf]
        %v6625 = vld [vmem:[%s315 + $0x17c] sm:$0xf]
        %v6626 = vunpack.c.l.bf16 %v6530
        %v6627 = vunpack.c.l.bf16 %v6531
        %v6628 = vunpack.c.l.bf16 %v6532
        %v6629 = vunpack.c.l.bf16 %v6533
        %v6630 = vunpack.c.l.bf16 %v6534
        %v6631 = vunpack.c.l.bf16 %v6535
        %v6632 = vunpack.c.l.bf16 %v6536
        %v6633 = vunpack.c.l.bf16 %v6537
        %v6634 = vunpack.c.l.bf16 %v6538
        %v6635 = vunpack.c.l.bf16 %v6539
        %v6636 = vunpack.c.l.bf16 %v6540
        %v6637 = vunpack.c.l.bf16 %v6541
        %v6638 = vunpack.c.l.bf16 %v6542
        %v6639 = vunpack.c.l.bf16 %v6543
        %v6640 = vunpack.c.l.bf16 %v6544
        %v6641 = vunpack.c.l.bf16 %v6545
        %v6642 = vunpack.c.l.bf16 %v6546
        %v6643 = vunpack.c.l.bf16 %v6547
        %v6644 = vunpack.c.l.bf16 %v6548
        %v6645 = vunpack.c.l.bf16 %v6549
        %v6646 = vunpack.c.l.bf16 %v6550
        %v6647 = vunpack.c.l.bf16 %v6551
        %v6648 = vunpack.c.l.bf16 %v6552
        %v6649 = vunpack.c.l.bf16 %v6553
        %v6650 = vunpack.c.l.bf16 %v6554
        %v6651 = vunpack.c.l.bf16 %v6555
        %v6652 = vunpack.c.l.bf16 %v6556
        %v6653 = vunpack.c.l.bf16 %v6557
        %v6654 = vunpack.c.l.bf16 %v6558
        %v6655 = vunpack.c.l.bf16 %v6559
        %v6656 = vunpack.c.l.bf16 %v6560
        %v6657 = vunpack.c.l.bf16 %v6561
        %v6658 = vunpack.c.l.bf16 %v6562
        %v6659 = vunpack.c.l.bf16 %v6563
        %v6660 = vunpack.c.l.bf16 %v6564
        %v6661 = vunpack.c.l.bf16 %v6565
        %v6662 = vunpack.c.l.bf16 %v6566
        %v6663 = vunpack.c.l.bf16 %v6567
        %v6664 = vunpack.c.l.bf16 %v6568
        %v6665 = vunpack.c.l.bf16 %v6569
        %v6666 = vunpack.c.l.bf16 %v6570
        %v6667 = vunpack.c.l.bf16 %v6571
        %v6668 = vunpack.c.l.bf16 %v6572
        %v6669 = vunpack.c.l.bf16 %v6573
        %v6670 = vunpack.c.l.bf16 %v6574
        %v6671 = vunpack.c.l.bf16 %v6575
        %v6672 = vunpack.c.l.bf16 %v6576
        %v6673 = vunpack.c.l.bf16 %v6577
        %v6674 = vunpack.c.l.bf16 %v6578
        %v6675 = vunpack.c.l.bf16 %v6579
        %v6676 = vunpack.c.l.bf16 %v6580
        %v6677 = vunpack.c.l.bf16 %v6581
        %v6678 = vunpack.c.l.bf16 %v6582
        %v6679 = vunpack.c.l.bf16 %v6583
        %v6680 = vunpack.c.l.bf16 %v6584
        %v6681 = vunpack.c.l.bf16 %v6585
        %v6682 = vunpack.c.l.bf16 %v6586
        %v6683 = vunpack.c.l.bf16 %v6587
        %v6684 = vunpack.c.l.bf16 %v6588
        %v6685 = vunpack.c.l.bf16 %v6589
        %v6686 = vunpack.c.l.bf16 %v6590
        %v6687 = vunpack.c.l.bf16 %v6591
        %v6688 = vunpack.c.l.bf16 %v6592
        %v6689 = vunpack.c.l.bf16 %v6593
        %v6690 = vunpack.c.l.bf16 %v6594
        %v6691 = vunpack.c.l.bf16 %v6595
        %v6692 = vunpack.c.l.bf16 %v6596
        %v6693 = vunpack.c.l.bf16 %v6597
        %v6694 = vunpack.c.l.bf16 %v6598
        %v6695 = vunpack.c.l.bf16 %v6599
        %v6696 = vunpack.c.l.bf16 %v6600
        %v6697 = vunpack.c.l.bf16 %v6601
        %v6698 = vunpack.c.l.bf16 %v6602
        %v6699 = vunpack.c.l.bf16 %v6603
        %v6700 = vunpack.c.l.bf16 %v6604
        %v6701 = vunpack.c.l.bf16 %v6605
        %v6702 = vunpack.c.l.bf16 %v6606
        %v6703 = vunpack.c.l.bf16 %v6607
        %v6704 = vunpack.c.l.bf16 %v6608
        %v6705 = vunpack.c.l.bf16 %v6609
        %v6706 = vunpack.c.l.bf16 %v6610
        %v6707 = vunpack.c.l.bf16 %v6611
        %v6708 = vunpack.c.l.bf16 %v6612
        %v6709 = vunpack.c.l.bf16 %v6613
        %v6710 = vunpack.c.l.bf16 %v6614
        %v6711 = vunpack.c.l.bf16 %v6615
        %v6712 = vunpack.c.l.bf16 %v6616
        %v6713 = vunpack.c.l.bf16 %v6617
        %v6714 = vunpack.c.l.bf16 %v6618
        %v6715 = vunpack.c.l.bf16 %v6619
        %v6716 = vunpack.c.l.bf16 %v6620
        %v6717 = vunpack.c.l.bf16 %v6621
        %v6718 = vunpack.c.l.bf16 %v6622
        %v6719 = vunpack.c.l.bf16 %v6623
        %v6720 = vunpack.c.l.bf16 %v6624
        %v6721 = vunpack.c.l.bf16 %v6625
        %v6722 = vrot.slane %v6626, 7
        %v6723 = vrot.slane %v6627, 7
        %v6724 = vrot.slane %v6628, 7
        %v6725 = vrot.slane %v6629, 7
        %v6726 = vrot.slane %v6630, 7
        %v6727 = vrot.slane %v6631, 7
        %v6728 = vrot.slane %v6632, 7
        %v6729 = vrot.slane %v6633, 7
        %v6730 = vrot.slane %v6634, 7
        %v6731 = vrot.slane %v6635, 7
        %v6732 = vrot.slane %v6636, 7
        %v6733 = vrot.slane %v6637, 7
        %v6734 = vrot.slane %v6638, 7
        %v6735 = vrot.slane %v6639, 7
        %v6736 = vrot.slane %v6640, 7
        %v6737 = vrot.slane %v6641, 7
        %v6738 = vrot.slane %v6642, 7
        %v6739 = vrot.slane %v6643, 7
        %v6740 = vrot.slane %v6644, 7
        %v6741 = vrot.slane %v6645, 7
        %v6742 = vrot.slane %v6646, 7
        %v6743 = vrot.slane %v6647, 7
        %v6744 = vrot.slane %v6648, 7
        %v6745 = vrot.slane %v6649, 7
        %v6746 = vrot.slane %v6650, 7
        %v6747 = vrot.slane %v6651, 7
        %v6748 = vrot.slane %v6652, 7
        %v6749 = vrot.slane %v6653, 7
        %v6750 = vrot.slane %v6654, 7
        %v6751 = vrot.slane %v6655, 7
        %v6752 = vrot.slane %v6656, 7
        %v6753 = vrot.slane %v6657, 7
        %v6754 = vrot.slane %v6658, 7
        %v6755 = vrot.slane %v6659, 7
        %v6756 = vrot.slane %v6660, 7
        %v6757 = vrot.slane %v6661, 7
        %v6758 = vrot.slane %v6662, 7
        %v6759 = vrot.slane %v6663, 7
        %v6760 = vrot.slane %v6664, 7
        %v6761 = vrot.slane %v6665, 7
        %v6762 = vrot.slane %v6666, 7
        %v6763 = vrot.slane %v6667, 7
        %v6764 = vrot.slane %v6668, 7
        %v6765 = vrot.slane %v6669, 7
        %v6766 = vrot.slane %v6670, 7
        %v6767 = vrot.slane %v6671, 7
        %v6768 = vrot.slane %v6672, 7
        %v6769 = vrot.slane %v6673, 7
        %v6770 = vrot.slane %v6674, 7
        %v6771 = vrot.slane %v6675, 7
        %v6772 = vrot.slane %v6676, 7
        %v6773 = vrot.slane %v6677, 7
        %v6774 = vrot.slane %v6678, 7
        %v6775 = vrot.slane %v6679, 7
        %v6776 = vrot.slane %v6680, 7
        %v6777 = vrot.slane %v6681, 7
        %v6778 = vrot.slane %v6682, 7
        %v6779 = vrot.slane %v6683, 7
        %v6780 = vrot.slane %v6684, 7
        %v6781 = vrot.slane %v6685, 7
        %v6782 = vrot.slane %v6686, 7
        %v6783 = vrot.slane %v6687, 7
        %v6784 = vrot.slane %v6688, 7
        %v6785 = vrot.slane %v6689, 7
        %v6786 = vrot.slane %v6690, 7
        %v6787 = vrot.slane %v6691, 7
        %v6788 = vrot.slane %v6692, 7
        %v6789 = vrot.slane %v6693, 7
        %v6790 = vrot.slane %v6694, 7
        %v6791 = vrot.slane %v6695, 7
        %v6792 = vrot.slane %v6696, 7
        %v6793 = vrot.slane %v6697, 7
        %v6794 = vrot.slane %v6698, 7
        %v6795 = vrot.slane %v6699, 7
        %v6796 = vrot.slane %v6700, 7
        %v6797 = vrot.slane %v6701, 7
        %v6798 = vrot.slane %v6702, 7
        %v6799 = vrot.slane %v6703, 7
        %v6800 = vrot.slane %v6704, 7
        %v6801 = vrot.slane %v6705, 7
        %v6802 = vrot.slane %v6706, 7
        %v6803 = vrot.slane %v6707, 7
        %v6804 = vrot.slane %v6708, 7
        %v6805 = vrot.slane %v6709, 7
        %v6806 = vrot.slane %v6710, 7
        %v6807 = vrot.slane %v6711, 7
        %v6808 = vrot.slane %v6712, 7
        %v6809 = vrot.slane %v6713, 7
        %v6810 = vrot.slane %v6714, 7
        %v6811 = vrot.slane %v6715, 7
        %v6812 = vrot.slane %v6716, 7
        %v6813 = vrot.slane %v6717, 7
        %v6814 = vrot.slane %v6718, 7
        %v6815 = vrot.slane %v6719, 7
        %v6816 = vrot.slane %v6720, 7
        %v6817 = vrot.slane %v6721, 7
        %v6818 = vsel %vm760, %v6816, %v6817
        %v6819 = vsel %vm760, %v6815, %v6816
        %v6820 = vsel %vm760, %v6814, %v6815
        %v6821 = vsel %vm760, %v6813, %v6814
        %v6822 = vsel %vm760, %v6812, %v6813
        %v6823 = vsel %vm760, %v6811, %v6812
        %v6824 = vsel %vm760, %v6810, %v6811
        %v6825 = vsel %vm760, %v6809, %v6810
        %v6826 = vsel %vm760, %v6808, %v6809
        %v6827 = vsel %vm760, %v6807, %v6808
        %v6828 = vsel %vm760, %v6806, %v6807
        %v6829 = vsel %vm760, %v6805, %v6806
        %v6830 = vsel %vm760, %v6804, %v6805
        %v6831 = vsel %vm760, %v6803, %v6804
        %v6832 = vsel %vm760, %v6802, %v6803
        %v6833 = vsel %vm760, %v6801, %v6802
        %v6834 = vsel %vm760, %v6800, %v6801
        %v6835 = vsel %vm760, %v6799, %v6800
        %v6836 = vsel %vm760, %v6798, %v6799
        %v6837 = vsel %vm760, %v6797, %v6798
        %v6838 = vsel %vm760, %v6796, %v6797
        %v6839 = vsel %vm760, %v6795, %v6796
        %v6840 = vsel %vm760, %v6794, %v6795
        %v6841 = vsel %vm760, %v6793, %v6794
        %v6842 = vsel %vm760, %v6792, %v6793
        %v6843 = vsel %vm760, %v6791, %v6792
        %v6844 = vsel %vm760, %v6790, %v6791
        %v6845 = vsel %vm760, %v6789, %v6790
        %v6846 = vsel %vm760, %v6788, %v6789
        %v6847 = vsel %vm760, %v6787, %v6788
        %v6848 = vsel %vm760, %v6786, %v6787
        %v6849 = vsel %vm760, %v6785, %v6786
        %v6850 = vsel %vm760, %v6784, %v6785
        %v6851 = vsel %vm760, %v6783, %v6784
        %v6852 = vsel %vm760, %v6782, %v6783
        %v6853 = vsel %vm760, %v6781, %v6782
        %v6854 = vsel %vm760, %v6780, %v6781
        %v6855 = vsel %vm760, %v6779, %v6780
        %v6856 = vsel %vm760, %v6778, %v6779
        %v6857 = vsel %vm760, %v6777, %v6778
        %v6858 = vsel %vm760, %v6776, %v6777
        %v6859 = vsel %vm760, %v6775, %v6776
        %v6860 = vsel %vm760, %v6774, %v6775
        %v6861 = vsel %vm760, %v6773, %v6774
        %v6862 = vsel %vm760, %v6772, %v6773
        %v6863 = vsel %vm760, %v6771, %v6772
        %v6864 = vsel %vm760, %v6770, %v6771
        %v6865 = vsel %vm760, %v6769, %v6770
        %v6866 = vsel %vm760, %v6768, %v6769
        %v6867 = vsel %vm760, %v6767, %v6768
        %v6868 = vsel %vm760, %v6766, %v6767
        %v6869 = vsel %vm760, %v6765, %v6766
        %v6870 = vsel %vm760, %v6764, %v6765
        %v6871 = vsel %vm760, %v6763, %v6764
        %v6872 = vsel %vm760, %v6762, %v6763
        %v6873 = vsel %vm760, %v6761, %v6762
        %v6874 = vsel %vm760, %v6760, %v6761
        %v6875 = vsel %vm760, %v6759, %v6760
        %v6876 = vsel %vm760, %v6758, %v6759
        %v6877 = vsel %vm760, %v6757, %v6758
        %v6878 = vsel %vm760, %v6756, %v6757
        %v6879 = vsel %vm760, %v6755, %v6756
        %v6880 = vsel %vm760, %v6754, %v6755
        %v6881 = vsel %vm760, %v6753, %v6754
        %v6882 = vsel %vm760, %v6752, %v6753
        %v6883 = vsel %vm760, %v6751, %v6752
        %v6884 = vsel %vm760, %v6750, %v6751
        %v6885 = vsel %vm760, %v6749, %v6750
        %v6886 = vsel %vm760, %v6748, %v6749
        %v6887 = vsel %vm760, %v6747, %v6748
        %v6888 = vsel %vm760, %v6746, %v6747
        %v6889 = vsel %vm760, %v6745, %v6746
        %v6890 = vsel %vm760, %v6744, %v6745
        %v6891 = vsel %vm760, %v6743, %v6744
        %v6892 = vsel %vm760, %v6742, %v6743
        %v6893 = vsel %vm760, %v6741, %v6742
        %v6894 = vsel %vm760, %v6740, %v6741
        %v6895 = vsel %vm760, %v6739, %v6740
        %v6896 = vsel %vm760, %v6738, %v6739
        %v6897 = vsel %vm760, %v6737, %v6738
        %v6898 = vsel %vm760, %v6736, %v6737
        %v6899 = vsel %vm760, %v6735, %v6736
        %v6900 = vsel %vm760, %v6734, %v6735
        %v6901 = vsel %vm760, %v6733, %v6734
        %v6902 = vsel %vm760, %v6732, %v6733
        %v6903 = vsel %vm760, %v6731, %v6732
        %v6904 = vsel %vm760, %v6730, %v6731
        %v6905 = vsel %vm760, %v6729, %v6730
        %v6906 = vsel %vm760, %v6728, %v6729
        %v6907 = vsel %vm760, %v6727, %v6728
        %v6908 = vsel %vm760, %v6726, %v6727
        %v6909 = vsel %vm760, %v6725, %v6726
        %v6910 = vsel %vm760, %v6724, %v6725
        %v6911 = vsel %vm760, %v6723, %v6724
        %v6912 = vsel %vm760, %v6722, %v6723
        %v6913 = vsel %vm760, %v6817, %v6722
        %v6914 = vrot.slane %v6626, 1
        %v6915 = vrot.slane %v6627, 1
        %v6916 = vrot.slane %v6628, 1
        %v6917 = vrot.slane %v6629, 1
        %v6918 = vrot.slane %v6630, 1
        %v6919 = vrot.slane %v6631, 1
        %v6920 = vrot.slane %v6632, 1
        %v6921 = vrot.slane %v6633, 1
        %v6922 = vrot.slane %v6634, 1
        %v6923 = vrot.slane %v6635, 1
        %v6924 = vrot.slane %v6636, 1
        %v6925 = vrot.slane %v6637, 1
        %v6926 = vrot.slane %v6638, 1
        %v6927 = vrot.slane %v6639, 1
        %v6928 = vrot.slane %v6640, 1
        %v6929 = vrot.slane %v6641, 1
        %v6930 = vrot.slane %v6642, 1
        %v6931 = vrot.slane %v6643, 1
        %v6932 = vrot.slane %v6644, 1
        %v6933 = vrot.slane %v6645, 1
        %v6934 = vrot.slane %v6646, 1
        %v6935 = vrot.slane %v6647, 1
        %v6936 = vrot.slane %v6648, 1
        %v6937 = vrot.slane %v6649, 1
        %v6938 = vrot.slane %v6650, 1
        %v6939 = vrot.slane %v6651, 1
        %v6940 = vrot.slane %v6652, 1
        %v6941 = vrot.slane %v6653, 1
        %v6942 = vrot.slane %v6654, 1
        %v6943 = vrot.slane %v6655, 1
        %v6944 = vrot.slane %v6656, 1
        %v6945 = vrot.slane %v6657, 1
        %v6946 = vrot.slane %v6658, 1
        %v6947 = vrot.slane %v6659, 1
        %v6948 = vrot.slane %v6660, 1
        %v6949 = vrot.slane %v6661, 1
        %v6950 = vrot.slane %v6662, 1
        %v6951 = vrot.slane %v6663, 1
        %v6952 = vrot.slane %v6664, 1
        %v6953 = vrot.slane %v6665, 1
        %v6954 = vrot.slane %v6666, 1
        %v6955 = vrot.slane %v6667, 1
        %v6956 = vrot.slane %v6668, 1
        %v6957 = vrot.slane %v6669, 1
        %v6958 = vrot.slane %v6670, 1
        %v6959 = vrot.slane %v6671, 1
        %v6960 = vrot.slane %v6672, 1
        %v6961 = vrot.slane %v6673, 1
        %v6962 = vrot.slane %v6674, 1
        %v6963 = vrot.slane %v6675, 1
        %v6964 = vrot.slane %v6676, 1
        %v6965 = vrot.slane %v6677, 1
        %v6966 = vrot.slane %v6678, 1
        %v6967 = vrot.slane %v6679, 1
        %v6968 = vrot.slane %v6680, 1
        %v6969 = vrot.slane %v6681, 1
        %v6970 = vrot.slane %v6682, 1
        %v6971 = vrot.slane %v6683, 1
        %v6972 = vrot.slane %v6684, 1
        %v6973 = vrot.slane %v6685, 1
        %v6974 = vrot.slane %v6686, 1
        %v6975 = vrot.slane %v6687, 1
        %v6976 = vrot.slane %v6688, 1
        %v6977 = vrot.slane %v6689, 1
        %v6978 = vrot.slane %v6690, 1
        %v6979 = vrot.slane %v6691, 1
        %v6980 = vrot.slane %v6692, 1
        %v6981 = vrot.slane %v6693, 1
        %v6982 = vrot.slane %v6694, 1
        %v6983 = vrot.slane %v6695, 1
        %v6984 = vrot.slane %v6696, 1
        %v6985 = vrot.slane %v6697, 1
        %v6986 = vrot.slane %v6698, 1
        %v6987 = vrot.slane %v6699, 1
        %v6988 = vrot.slane %v6700, 1
        %v6989 = vrot.slane %v6701, 1
        %v6990 = vrot.slane %v6702, 1
        %v6991 = vrot.slane %v6703, 1
        %v6992 = vrot.slane %v6704, 1
        %v6993 = vrot.slane %v6705, 1
        %v6994 = vrot.slane %v6706, 1
        %v6995 = vrot.slane %v6707, 1
        %v6996 = vrot.slane %v6708, 1
        %v6997 = vrot.slane %v6709, 1
        %v6998 = vrot.slane %v6710, 1
        %v6999 = vrot.slane %v6711, 1
        %v7000 = vrot.slane %v6712, 1
        %v7001 = vrot.slane %v6713, 1
        %v7002 = vrot.slane %v6714, 1
        %v7003 = vrot.slane %v6715, 1
        %v7004 = vrot.slane %v6716, 1
        %v7005 = vrot.slane %v6717, 1
        %v7006 = vrot.slane %v6718, 1
        %v7007 = vrot.slane %v6719, 1
        %v7008 = vrot.slane %v6720, 1
        %v7009 = vrot.slane %v6721, 1
        %v7010 = vsel %vm1017, %v7008, %v7009
        %v7011 = vsel %vm1017, %v7007, %v7008
        %v7012 = vsel %vm1017, %v7006, %v7007
        %v7013 = vsel %vm1017, %v7005, %v7006
        %v7014 = vsel %vm1017, %v7004, %v7005
        %v7015 = vsel %vm1017, %v7003, %v7004
        %v7016 = vsel %vm1017, %v7002, %v7003
        %v7017 = vsel %vm1017, %v7001, %v7002
        %v7018 = vsel %vm1017, %v7000, %v7001
        %v7019 = vsel %vm1017, %v6999, %v7000
        %v7020 = vsel %vm1017, %v6998, %v6999
        %v7021 = vsel %vm1017, %v6997, %v6998
        %v7022 = vsel %vm1017, %v6996, %v6997
        %v7023 = vsel %vm1017, %v6995, %v6996
        %v7024 = vsel %vm1017, %v6994, %v6995
        %v7025 = vsel %vm1017, %v6993, %v6994
        %v7026 = vsel %vm1017, %v6992, %v6993
        %v7027 = vsel %vm1017, %v6991, %v6992
        %v7028 = vsel %vm1017, %v6990, %v6991
        %v7029 = vsel %vm1017, %v6989, %v6990
        %v7030 = vsel %vm1017, %v6988, %v6989
        %v7031 = vsel %vm1017, %v6987, %v6988
        %v7032 = vsel %vm1017, %v6986, %v6987
        %v7033 = vsel %vm1017, %v6985, %v6986
        %v7034 = vsel %vm1017, %v6984, %v6985
        %v7035 = vsel %vm1017, %v6983, %v6984
        %v7036 = vsel %vm1017, %v6982, %v6983
        %v7037 = vsel %vm1017, %v6981, %v6982
        %v7038 = vsel %vm1017, %v6980, %v6981
        %v7039 = vsel %vm1017, %v6979, %v6980
        %v7040 = vsel %vm1017, %v6978, %v6979
        %v7041 = vsel %vm1017, %v6977, %v6978
        %v7042 = vsel %vm1017, %v6976, %v6977
        %v7043 = vsel %vm1017, %v6975, %v6976
        %v7044 = vsel %vm1017, %v6974, %v6975
        %v7045 = vsel %vm1017, %v6973, %v6974
        %v7046 = vsel %vm1017, %v6972, %v6973
        %v7047 = vsel %vm1017, %v6971, %v6972
        %v7048 = vsel %vm1017, %v6970, %v6971
        %v7049 = vsel %vm1017, %v6969, %v6970
        %v7050 = vsel %vm1017, %v6968, %v6969
        %v7051 = vsel %vm1017, %v6967, %v6968
        %v7052 = vsel %vm1017, %v6966, %v6967
        %v7053 = vsel %vm1017, %v6965, %v6966
        %v7054 = vsel %vm1017, %v6964, %v6965
        %v7055 = vsel %vm1017, %v6963, %v6964
        %v7056 = vsel %vm1017, %v6962, %v6963
        %v7057 = vsel %vm1017, %v6961, %v6962
        %v7058 = vsel %vm1017, %v6960, %v6961
        %v7059 = vsel %vm1017, %v6959, %v6960
        %v7060 = vsel %vm1017, %v6958, %v6959
        %v7061 = vsel %vm1017, %v6957, %v6958
        %v7062 = vsel %vm1017, %v6956, %v6957
        %v7063 = vsel %vm1017, %v6955, %v6956
        %v7064 = vsel %vm1017, %v6954, %v6955
        %v7065 = vsel %vm1017, %v6953, %v6954
        %v7066 = vsel %vm1017, %v6952, %v6953
        %v7067 = vsel %vm1017, %v6951, %v6952
        %v7068 = vsel %vm1017, %v6950, %v6951
        %v7069 = vsel %vm1017, %v6949, %v6950
        %v7070 = vsel %vm1017, %v6948, %v6949
        %v7071 = vsel %vm1017, %v6947, %v6948
        %v7072 = vsel %vm1017, %v6946, %v6947
        %v7073 = vsel %vm1017, %v6945, %v6946
        %v7074 = vsel %vm1017, %v6944, %v6945
        %v7075 = vsel %vm1017, %v6943, %v6944
        %v7076 = vsel %vm1017, %v6942, %v6943
        %v7077 = vsel %vm1017, %v6941, %v6942
        %v7078 = vsel %vm1017, %v6940, %v6941
        %v7079 = vsel %vm1017, %v6939, %v6940
        %v7080 = vsel %vm1017, %v6938, %v6939
        %v7081 = vsel %vm1017, %v6937, %v6938
        %v7082 = vsel %vm1017, %v6936, %v6937
        %v7083 = vsel %vm1017, %v6935, %v6936
        %v7084 = vsel %vm1017, %v6934, %v6935
        %v7085 = vsel %vm1017, %v6933, %v6934
        %v7086 = vsel %vm1017, %v6932, %v6933
        %v7087 = vsel %vm1017, %v6931, %v6932
        %v7088 = vsel %vm1017, %v6930, %v6931
        %v7089 = vsel %vm1017, %v6929, %v6930
        %v7090 = vsel %vm1017, %v6928, %v6929
        %v7091 = vsel %vm1017, %v6927, %v6928
        %v7092 = vsel %vm1017, %v6926, %v6927
        %v7093 = vsel %vm1017, %v6925, %v6926
        %v7094 = vsel %vm1017, %v6924, %v6925
        %v7095 = vsel %vm1017, %v6923, %v6924
        %v7096 = vsel %vm1017, %v6922, %v6923
        %v7097 = vsel %vm1017, %v6921, %v6922
        %v7098 = vsel %vm1017, %v6920, %v6921
        %v7099 = vsel %vm1017, %v6919, %v6920
        %v7100 = vsel %vm1017, %v6918, %v6919
        %v7101 = vsel %vm1017, %v6917, %v6918
        %v7102 = vsel %vm1017, %v6916, %v6917
        %v7103 = vsel %vm1017, %v6915, %v6916
        %v7104 = vsel %vm1017, %v6914, %v6915
        %v7105 = vsel %vm1017, %v7009, %v6914
        %7202 = vrot.lane.b32.xlu0 %v6626, 32
        %v7203 = vpop.permute.xlu0 %7202
        %7204 = vrot.lane.b32.xlu0 %v6627, 32
        %v7205 = vpop.permute.xlu0 %7204
        %7206 = vrot.lane.b32.xlu0 %v6628, 32
        %v7207 = vpop.permute.xlu0 %7206
        %7208 = vrot.lane.b32.xlu0 %v6629, 32
        %v7209 = vpop.permute.xlu0 %7208
        %7210 = vrot.lane.b32.xlu0 %v6630, 32
        %v7211 = vpop.permute.xlu0 %7210
        %7212 = vrot.lane.b32.xlu0 %v6631, 32
        %v7213 = vpop.permute.xlu0 %7212
        %7214 = vrot.lane.b32.xlu0 %v6632, 32
        %v7215 = vpop.permute.xlu0 %7214
        %7216 = vrot.lane.b32.xlu0 %v6633, 32
        %v7217 = vpop.permute.xlu0 %7216
        %7218 = vrot.lane.b32.xlu0 %v6634, 32
        %v7219 = vpop.permute.xlu0 %7218
        %7220 = vrot.lane.b32.xlu0 %v6635, 32
        %v7221 = vpop.permute.xlu0 %7220
        %7222 = vrot.lane.b32.xlu0 %v6636, 32
        %v7223 = vpop.permute.xlu0 %7222
        %7224 = vrot.lane.b32.xlu0 %v6637, 32
        %v7225 = vpop.permute.xlu0 %7224
        %7226 = vrot.lane.b32.xlu0 %v6638, 32
        %v7227 = vpop.permute.xlu0 %7226
        %7228 = vrot.lane.b32.xlu0 %v6639, 32
        %v7229 = vpop.permute.xlu0 %7228
        %7230 = vrot.lane.b32.xlu0 %v6640, 32
        %v7231 = vpop.permute.xlu0 %7230
        %7232 = vrot.lane.b32.xlu0 %v6641, 32
        %v7233 = vpop.permute.xlu0 %7232
        %7234 = vrot.lane.b32.xlu0 %v6642, 32
        %v7235 = vpop.permute.xlu0 %7234
        %7236 = vrot.lane.b32.xlu0 %v6643, 32
        %v7237 = vpop.permute.xlu0 %7236
        %7238 = vrot.lane.b32.xlu0 %v6644, 32
        %v7239 = vpop.permute.xlu0 %7238
        %7240 = vrot.lane.b32.xlu0 %v6645, 32
        %v7241 = vpop.permute.xlu0 %7240
        %7242 = vrot.lane.b32.xlu0 %v6646, 32
        %v7243 = vpop.permute.xlu0 %7242
        %7244 = vrot.lane.b32.xlu0 %v6647, 32
        %v7245 = vpop.permute.xlu0 %7244
        %7246 = vrot.lane.b32.xlu0 %v6648, 32
        %v7247 = vpop.permute.xlu0 %7246
        %7248 = vrot.lane.b32.xlu0 %v6649, 32
        %v7249 = vpop.permute.xlu0 %7248
        %7250 = vrot.lane.b32.xlu0 %v6650, 32
        %v7251 = vpop.permute.xlu0 %7250
        %7252 = vrot.lane.b32.xlu0 %v6651, 32
        %v7253 = vpop.permute.xlu0 %7252
        %7254 = vrot.lane.b32.xlu0 %v6652, 32
        %v7255 = vpop.permute.xlu0 %7254
        %7256 = vrot.lane.b32.xlu0 %v6653, 32
        %v7257 = vpop.permute.xlu0 %7256
        %7258 = vrot.lane.b32.xlu0 %v6654, 32
        %v7259 = vpop.permute.xlu0 %7258
        %7260 = vrot.lane.b32.xlu0 %v6655, 32
        %v7261 = vpop.permute.xlu0 %7260
        %7262 = vrot.lane.b32.xlu0 %v6656, 32
        %v7263 = vpop.permute.xlu0 %7262
        %7264 = vrot.lane.b32.xlu0 %v6657, 32
        %v7265 = vpop.permute.xlu0 %7264
        %7266 = vrot.lane.b32.xlu0 %v6658, 32
        %v7267 = vpop.permute.xlu0 %7266
        %7268 = vrot.lane.b32.xlu0 %v6659, 32
        %v7269 = vpop.permute.xlu0 %7268
        %7270 = vrot.lane.b32.xlu0 %v6660, 32
        %v7271 = vpop.permute.xlu0 %7270
        %7272 = vrot.lane.b32.xlu0 %v6661, 32
        %v7273 = vpop.permute.xlu0 %7272
        %7274 = vrot.lane.b32.xlu0 %v6662, 32
        %v7275 = vpop.permute.xlu0 %7274
        %7276 = vrot.lane.b32.xlu0 %v6663, 32
        %v7277 = vpop.permute.xlu0 %7276
        %7278 = vrot.lane.b32.xlu0 %v6664, 32
        %v7279 = vpop.permute.xlu0 %7278
        %7280 = vrot.lane.b32.xlu0 %v6665, 32
        %v7281 = vpop.permute.xlu0 %7280
        %7282 = vrot.lane.b32.xlu0 %v6666, 32
        %v7283 = vpop.permute.xlu0 %7282
        %7284 = vrot.lane.b32.xlu0 %v6667, 32
        %v7285 = vpop.permute.xlu0 %7284
        %7286 = vrot.lane.b32.xlu0 %v6668, 32
        %v7287 = vpop.permute.xlu0 %7286
        %7288 = vrot.lane.b32.xlu0 %v6669, 32
        %v7289 = vpop.permute.xlu0 %7288
        %7290 = vrot.lane.b32.xlu0 %v6670, 32
        %v7291 = vpop.permute.xlu0 %7290
        %7292 = vrot.lane.b32.xlu0 %v6671, 32
        %v7293 = vpop.permute.xlu0 %7292
        %7294 = vrot.lane.b32.xlu0 %v6672, 32
        %v7295 = vpop.permute.xlu0 %7294
        %7296 = vrot.lane.b32.xlu0 %v6673, 32
        %v7297 = vpop.permute.xlu0 %7296
        %7298 = vrot.lane.b32.xlu0 %v6674, 32
        %v7299 = vpop.permute.xlu0 %7298
        %7300 = vrot.lane.b32.xlu0 %v6675, 32
        %v7301 = vpop.permute.xlu0 %7300
        %7302 = vrot.lane.b32.xlu0 %v6676, 32
        %v7303 = vpop.permute.xlu0 %7302
        %7304 = vrot.lane.b32.xlu0 %v6677, 32
        %v7305 = vpop.permute.xlu0 %7304
        %7306 = vrot.lane.b32.xlu0 %v6678, 32
        %v7307 = vpop.permute.xlu0 %7306
        %7308 = vrot.lane.b32.xlu0 %v6679, 32
        %v7309 = vpop.permute.xlu0 %7308
        %7310 = vrot.lane.b32.xlu0 %v6680, 32
        %v7311 = vpop.permute.xlu0 %7310
        %7312 = vrot.lane.b32.xlu0 %v6681, 32
        %v7313 = vpop.permute.xlu0 %7312
        %7314 = vrot.lane.b32.xlu0 %v6682, 32
        %v7315 = vpop.permute.xlu0 %7314
        %7316 = vrot.lane.b32.xlu0 %v6683, 32
        %v7317 = vpop.permute.xlu0 %7316
        %7318 = vrot.lane.b32.xlu0 %v6684, 32
        %v7319 = vpop.permute.xlu0 %7318
        %7320 = vrot.lane.b32.xlu0 %v6685, 32
        %v7321 = vpop.permute.xlu0 %7320
        %7322 = vrot.lane.b32.xlu0 %v6686, 32
        %v7323 = vpop.permute.xlu0 %7322
        %7324 = vrot.lane.b32.xlu0 %v6687, 32
        %v7325 = vpop.permute.xlu0 %7324
        %7326 = vrot.lane.b32.xlu0 %v6688, 32
        %v7327 = vpop.permute.xlu0 %7326
        %7328 = vrot.lane.b32.xlu0 %v6689, 32
        %v7329 = vpop.permute.xlu0 %7328
        %7330 = vrot.lane.b32.xlu0 %v6690, 32
        %v7331 = vpop.permute.xlu0 %7330
        %7332 = vrot.lane.b32.xlu0 %v6691, 32
        %v7333 = vpop.permute.xlu0 %7332
        %7334 = vrot.lane.b32.xlu0 %v6692, 32
        %v7335 = vpop.permute.xlu0 %7334
        %7336 = vrot.lane.b32.xlu0 %v6693, 32
        %v7337 = vpop.permute.xlu0 %7336
        %7338 = vrot.lane.b32.xlu0 %v6694, 32
        %v7339 = vpop.permute.xlu0 %7338
        %7340 = vrot.lane.b32.xlu0 %v6695, 32
        %v7341 = vpop.permute.xlu0 %7340
        %7342 = vrot.lane.b32.xlu0 %v6696, 32
        %v7343 = vpop.permute.xlu0 %7342
        %7344 = vrot.lane.b32.xlu0 %v6697, 32
        %v7345 = vpop.permute.xlu0 %7344
        %7346 = vrot.lane.b32.xlu0 %v6698, 32
        %v7347 = vpop.permute.xlu0 %7346
        %7348 = vrot.lane.b32.xlu0 %v6699, 32
        %v7349 = vpop.permute.xlu0 %7348
        %7350 = vrot.lane.b32.xlu0 %v6700, 32
        %v7351 = vpop.permute.xlu0 %7350
        %7352 = vrot.lane.b32.xlu0 %v6701, 32
        %v7353 = vpop.permute.xlu0 %7352
        %7354 = vrot.lane.b32.xlu0 %v6702, 32
        %v7355 = vpop.permute.xlu0 %7354
        %7356 = vrot.lane.b32.xlu0 %v6703, 32
        %v7357 = vpop.permute.xlu0 %7356
        %7358 = vrot.lane.b32.xlu0 %v6704, 32
        %v7359 = vpop.permute.xlu0 %7358
        %7360 = vrot.lane.b32.xlu0 %v6705, 32
        %v7361 = vpop.permute.xlu0 %7360
        %7362 = vrot.lane.b32.xlu0 %v6706, 32
        %v7363 = vpop.permute.xlu0 %7362
        %7364 = vrot.lane.b32.xlu0 %v6707, 32
        %v7365 = vpop.permute.xlu0 %7364
        %7366 = vrot.lane.b32.xlu0 %v6708, 32
        %v7367 = vpop.permute.xlu0 %7366
        %7368 = vrot.lane.b32.xlu0 %v6709, 32
        %v7369 = vpop.permute.xlu0 %7368
        %7370 = vrot.lane.b32.xlu0 %v6710, 32
        %v7371 = vpop.permute.xlu0 %7370
        %7372 = vrot.lane.b32.xlu0 %v6711, 32
        %v7373 = vpop.permute.xlu0 %7372
        %7374 = vrot.lane.b32.xlu0 %v6712, 32
        %v7375 = vpop.permute.xlu0 %7374
        %7376 = vrot.lane.b32.xlu0 %v6713, 32
        %v7377 = vpop.permute.xlu0 %7376
        %7378 = vrot.lane.b32.xlu0 %v6714, 32
        %v7379 = vpop.permute.xlu0 %7378
        %7380 = vrot.lane.b32.xlu0 %v6715, 32
        %v7381 = vpop.permute.xlu0 %7380
        %7382 = vrot.lane.b32.xlu0 %v6716, 32
        %v7383 = vpop.permute.xlu0 %7382
        %7384 = vrot.lane.b32.xlu0 %v6717, 32
        %v7385 = vpop.permute.xlu0 %7384
        %7386 = vrot.lane.b32.xlu0 %v6718, 32
        %v7387 = vpop.permute.xlu0 %7386
        %7388 = vrot.lane.b32.xlu0 %v6719, 32
        %v7389 = vpop.permute.xlu0 %7388
        %7390 = vrot.lane.b32.xlu0 %v6720, 32
        %v7391 = vpop.permute.xlu0 %7390
        %7392 = vrot.lane.b32.xlu0 %v6721, 32
        %v7393 = vpop.permute.xlu0 %7392
        %7586 = vrot.lane.b32.xlu0 %v7104, 64
        %v7587 = vpop.permute.xlu0 %7586
        %7588 = vrot.lane.b32.xlu0 %v7103, 64
        %v7589 = vpop.permute.xlu0 %7588
        %7590 = vrot.lane.b32.xlu0 %v7102, 64
        %v7591 = vpop.permute.xlu0 %7590
        %7592 = vrot.lane.b32.xlu0 %v7101, 64
        %v7593 = vpop.permute.xlu0 %7592
        %7594 = vrot.lane.b32.xlu0 %v7100, 64
        %v7595 = vpop.permute.xlu0 %7594
        %7596 = vrot.lane.b32.xlu0 %v7099, 64
        %v7597 = vpop.permute.xlu0 %7596
        %7598 = vrot.lane.b32.xlu0 %v7098, 64
        %v7599 = vpop.permute.xlu0 %7598
        %7600 = vrot.lane.b32.xlu0 %v7097, 64
        %v7601 = vpop.permute.xlu0 %7600
        %7602 = vrot.lane.b32.xlu0 %v7096, 64
        %v7603 = vpop.permute.xlu0 %7602
        %7604 = vrot.lane.b32.xlu0 %v7095, 64
        %v7605 = vpop.permute.xlu0 %7604
        %7606 = vrot.lane.b32.xlu0 %v7094, 64
        %v7607 = vpop.permute.xlu0 %7606
        %7608 = vrot.lane.b32.xlu0 %v7093, 64
        %v7609 = vpop.permute.xlu0 %7608
        %7610 = vrot.lane.b32.xlu0 %v7092, 64
        %v7611 = vpop.permute.xlu0 %7610
        %7612 = vrot.lane.b32.xlu0 %v7091, 64
        %v7613 = vpop.permute.xlu0 %7612
        %7614 = vrot.lane.b32.xlu0 %v7090, 64
        %v7615 = vpop.permute.xlu0 %7614
        %7616 = vrot.lane.b32.xlu0 %v7089, 64
        %v7617 = vpop.permute.xlu0 %7616
        %7618 = vrot.lane.b32.xlu0 %v7088, 64
        %v7619 = vpop.permute.xlu0 %7618
        %7620 = vrot.lane.b32.xlu0 %v7087, 64
        %v7621 = vpop.permute.xlu0 %7620
        %7622 = vrot.lane.b32.xlu0 %v7086, 64
        %v7623 = vpop.permute.xlu0 %7622
        %7624 = vrot.lane.b32.xlu0 %v7085, 64
        %v7625 = vpop.permute.xlu0 %7624
        %7626 = vrot.lane.b32.xlu0 %v7084, 64
        %v7627 = vpop.permute.xlu0 %7626
        %7628 = vrot.lane.b32.xlu0 %v7083, 64
        %v7629 = vpop.permute.xlu0 %7628
        %7630 = vrot.lane.b32.xlu0 %v7082, 64
        %v7631 = vpop.permute.xlu0 %7630
        %7632 = vrot.lane.b32.xlu0 %v7081, 64
        %v7633 = vpop.permute.xlu0 %7632
        %7634 = vrot.lane.b32.xlu0 %v7080, 64
        %v7635 = vpop.permute.xlu0 %7634
        %7636 = vrot.lane.b32.xlu0 %v7079, 64
        %v7637 = vpop.permute.xlu0 %7636
        %7638 = vrot.lane.b32.xlu0 %v7078, 64
        %v7639 = vpop.permute.xlu0 %7638
        %7640 = vrot.lane.b32.xlu0 %v7077, 64
        %v7641 = vpop.permute.xlu0 %7640
        %7642 = vrot.lane.b32.xlu0 %v7076, 64
        %v7643 = vpop.permute.xlu0 %7642
        %7644 = vrot.lane.b32.xlu0 %v7075, 64
        %v7645 = vpop.permute.xlu0 %7644
        %7646 = vrot.lane.b32.xlu0 %v7074, 64
        %v7647 = vpop.permute.xlu0 %7646
        %7648 = vrot.lane.b32.xlu0 %v7073, 64
        %v7649 = vpop.permute.xlu0 %7648
        %7650 = vrot.lane.b32.xlu0 %v7072, 64
        %v7651 = vpop.permute.xlu0 %7650
        %7652 = vrot.lane.b32.xlu0 %v7071, 64
        %v7653 = vpop.permute.xlu0 %7652
        %7654 = vrot.lane.b32.xlu0 %v7070, 64
        %v7655 = vpop.permute.xlu0 %7654
        %7656 = vrot.lane.b32.xlu0 %v7069, 64
        %v7657 = vpop.permute.xlu0 %7656
        %7658 = vrot.lane.b32.xlu0 %v7068, 64
        %v7659 = vpop.permute.xlu0 %7658
        %7660 = vrot.lane.b32.xlu0 %v7067, 64
        %v7661 = vpop.permute.xlu0 %7660
        %7662 = vrot.lane.b32.xlu0 %v7066, 64
        %v7663 = vpop.permute.xlu0 %7662
        %7664 = vrot.lane.b32.xlu0 %v7065, 64
        %v7665 = vpop.permute.xlu0 %7664
        %7666 = vrot.lane.b32.xlu0 %v7064, 64
        %v7667 = vpop.permute.xlu0 %7666
        %7668 = vrot.lane.b32.xlu0 %v7063, 64
        %v7669 = vpop.permute.xlu0 %7668
        %7670 = vrot.lane.b32.xlu0 %v7062, 64
        %v7671 = vpop.permute.xlu0 %7670
        %7672 = vrot.lane.b32.xlu0 %v7061, 64
        %v7673 = vpop.permute.xlu0 %7672
        %7674 = vrot.lane.b32.xlu0 %v7060, 64
        %v7675 = vpop.permute.xlu0 %7674
        %7676 = vrot.lane.b32.xlu0 %v7059, 64
        %v7677 = vpop.permute.xlu0 %7676
        %7678 = vrot.lane.b32.xlu0 %v7058, 64
        %v7679 = vpop.permute.xlu0 %7678
        %7680 = vrot.lane.b32.xlu0 %v7057, 64
        %v7681 = vpop.permute.xlu0 %7680
        %7682 = vrot.lane.b32.xlu0 %v7056, 64
        %v7683 = vpop.permute.xlu0 %7682
        %7684 = vrot.lane.b32.xlu0 %v7055, 64
        %v7685 = vpop.permute.xlu0 %7684
        %7686 = vrot.lane.b32.xlu0 %v7054, 64
        %v7687 = vpop.permute.xlu0 %7686
        %7688 = vrot.lane.b32.xlu0 %v7053, 64
        %v7689 = vpop.permute.xlu0 %7688
        %7690 = vrot.lane.b32.xlu0 %v7052, 64
        %v7691 = vpop.permute.xlu0 %7690
        %7692 = vrot.lane.b32.xlu0 %v7051, 64
        %v7693 = vpop.permute.xlu0 %7692
        %7694 = vrot.lane.b32.xlu0 %v7050, 64
        %v7695 = vpop.permute.xlu0 %7694
        %7696 = vrot.lane.b32.xlu0 %v7049, 64
        %v7697 = vpop.permute.xlu0 %7696
        %7698 = vrot.lane.b32.xlu0 %v7048, 64
        %v7699 = vpop.permute.xlu0 %7698
        %7700 = vrot.lane.b32.xlu0 %v7047, 64
        %v7701 = vpop.permute.xlu0 %7700
        %7702 = vrot.lane.b32.xlu0 %v7046, 64
        %v7703 = vpop.permute.xlu0 %7702
        %7704 = vrot.lane.b32.xlu0 %v7045, 64
        %v7705 = vpop.permute.xlu0 %7704
        %7706 = vrot.lane.b32.xlu0 %v7044, 64
        %v7707 = vpop.permute.xlu0 %7706
        %7708 = vrot.lane.b32.xlu0 %v7043, 64
        %v7709 = vpop.permute.xlu0 %7708
        %7710 = vrot.lane.b32.xlu0 %v7042, 64
        %v7711 = vpop.permute.xlu0 %7710
        %7712 = vrot.lane.b32.xlu0 %v7041, 64
        %v7713 = vpop.permute.xlu0 %7712
        %7714 = vrot.lane.b32.xlu0 %v7040, 64
        %v7715 = vpop.permute.xlu0 %7714
        %7716 = vrot.lane.b32.xlu0 %v7039, 64
        %v7717 = vpop.permute.xlu0 %7716
        %7718 = vrot.lane.b32.xlu0 %v7038, 64
        %v7719 = vpop.permute.xlu0 %7718
        %7720 = vrot.lane.b32.xlu0 %v7037, 64
        %v7721 = vpop.permute.xlu0 %7720
        %7722 = vrot.lane.b32.xlu0 %v7036, 64
        %v7723 = vpop.permute.xlu0 %7722
        %7724 = vrot.lane.b32.xlu0 %v7035, 64
        %v7725 = vpop.permute.xlu0 %7724
        %7726 = vrot.lane.b32.xlu0 %v7034, 64
        %v7727 = vpop.permute.xlu0 %7726
        %7728 = vrot.lane.b32.xlu0 %v7033, 64
        %v7729 = vpop.permute.xlu0 %7728
        %7730 = vrot.lane.b32.xlu0 %v7032, 64
        %v7731 = vpop.permute.xlu0 %7730
        %7732 = vrot.lane.b32.xlu0 %v7031, 64
        %v7733 = vpop.permute.xlu0 %7732
        %7734 = vrot.lane.b32.xlu0 %v7030, 64
        %v7735 = vpop.permute.xlu0 %7734
        %7736 = vrot.lane.b32.xlu0 %v7029, 64
        %v7737 = vpop.permute.xlu0 %7736
        %7738 = vrot.lane.b32.xlu0 %v7028, 64
        %v7739 = vpop.permute.xlu0 %7738
        %7740 = vrot.lane.b32.xlu0 %v7027, 64
        %v7741 = vpop.permute.xlu0 %7740
        %7742 = vrot.lane.b32.xlu0 %v7026, 64
        %v7743 = vpop.permute.xlu0 %7742
        %7744 = vrot.lane.b32.xlu0 %v7025, 64
        %v7745 = vpop.permute.xlu0 %7744
        %7746 = vrot.lane.b32.xlu0 %v7024, 64
        %v7747 = vpop.permute.xlu0 %7746
        %7748 = vrot.lane.b32.xlu0 %v7023, 64
        %v7749 = vpop.permute.xlu0 %7748
        %7750 = vrot.lane.b32.xlu0 %v7022, 64
        %v7751 = vpop.permute.xlu0 %7750
        %7752 = vrot.lane.b32.xlu0 %v7021, 64
        %v7753 = vpop.permute.xlu0 %7752
        %7754 = vrot.lane.b32.xlu0 %v7020, 64
        %v7755 = vpop.permute.xlu0 %7754
        %7756 = vrot.lane.b32.xlu0 %v7019, 64
        %v7757 = vpop.permute.xlu0 %7756
        %7758 = vrot.lane.b32.xlu0 %v7018, 64
        %v7759 = vpop.permute.xlu0 %7758
        %7760 = vrot.lane.b32.xlu0 %v7017, 64
        %v7761 = vpop.permute.xlu0 %7760
        %7762 = vrot.lane.b32.xlu0 %v7016, 64
        %v7763 = vpop.permute.xlu0 %7762
        %7764 = vrot.lane.b32.xlu0 %v7015, 64
        %v7765 = vpop.permute.xlu0 %7764
        %7766 = vrot.lane.b32.xlu0 %v7014, 64
        %v7767 = vpop.permute.xlu0 %7766
        %7768 = vrot.lane.b32.xlu0 %v7013, 64
        %v7769 = vpop.permute.xlu0 %7768
        %7770 = vrot.lane.b32.xlu0 %v7012, 64
        %v7771 = vpop.permute.xlu0 %7770
        %7772 = vrot.lane.b32.xlu0 %v7011, 64
        %v7773 = vpop.permute.xlu0 %7772
        %7774 = vrot.lane.b32.xlu0 %v7010, 64
        %v7775 = vpop.permute.xlu0 %7774
        %7776 = vrot.lane.b32.xlu0 %v7105, 64
        %v7777 = vpop.permute.xlu0 %7776
        %v7874 = vsel %vm2170, %v6913, %v7203
        %v7875 = vsel %vm2170, %v6912, %v7205
        %v7876 = vsel %vm2170, %v6911, %v7207
        %v7877 = vsel %vm2170, %v6910, %v7209
        %v7878 = vsel %vm2170, %v6909, %v7211
        %v7879 = vsel %vm2170, %v6908, %v7213
        %v7880 = vsel %vm2170, %v6907, %v7215
        %v7881 = vsel %vm2170, %v6906, %v7217
        %v7882 = vsel %vm2170, %v6905, %v7219
        %v7883 = vsel %vm2170, %v6904, %v7221
        %v7884 = vsel %vm2170, %v6903, %v7223
        %v7885 = vsel %vm2170, %v6902, %v7225
        %v7886 = vsel %vm2170, %v6901, %v7227
        %v7887 = vsel %vm2170, %v6900, %v7229
        %v7888 = vsel %vm2170, %v6899, %v7231
        %v7889 = vsel %vm2170, %v6898, %v7233
        %v7890 = vsel %vm2170, %v6897, %v7235
        %v7891 = vsel %vm2170, %v6896, %v7237
        %v7892 = vsel %vm2170, %v6895, %v7239
        %v7893 = vsel %vm2170, %v6894, %v7241
        %v7894 = vsel %vm2170, %v6893, %v7243
        %v7895 = vsel %vm2170, %v6892, %v7245
        %v7896 = vsel %vm2170, %v6891, %v7247
        %v7897 = vsel %vm2170, %v6890, %v7249
        %v7898 = vsel %vm2170, %v6889, %v7251
        %v7899 = vsel %vm2170, %v6888, %v7253
        %v7900 = vsel %vm2170, %v6887, %v7255
        %v7901 = vsel %vm2170, %v6886, %v7257
        %v7902 = vsel %vm2170, %v6885, %v7259
        %v7903 = vsel %vm2170, %v6884, %v7261
        %v7904 = vsel %vm2170, %v6883, %v7263
        %v7905 = vsel %vm2170, %v6882, %v7265
        %v7906 = vsel %vm2170, %v6881, %v7267
        %v7907 = vsel %vm2170, %v6880, %v7269
        %v7908 = vsel %vm2170, %v6879, %v7271
        %v7909 = vsel %vm2170, %v6878, %v7273
        %v7910 = vsel %vm2170, %v6877, %v7275
        %v7911 = vsel %vm2170, %v6876, %v7277
        %v7912 = vsel %vm2170, %v6875, %v7279
        %v7913 = vsel %vm2170, %v6874, %v7281
        %v7914 = vsel %vm2170, %v6873, %v7283
        %v7915 = vsel %vm2170, %v6872, %v7285
        %v7916 = vsel %vm2170, %v6871, %v7287
        %v7917 = vsel %vm2170, %v6870, %v7289
        %v7918 = vsel %vm2170, %v6869, %v7291
        %v7919 = vsel %vm2170, %v6868, %v7293
        %v7920 = vsel %vm2170, %v6867, %v7295
        %v7921 = vsel %vm2170, %v6866, %v7297
        %v7922 = vsel %vm2170, %v6865, %v7299
        %v7923 = vsel %vm2170, %v6864, %v7301
        %v7924 = vsel %vm2170, %v6863, %v7303
        %v7925 = vsel %vm2170, %v6862, %v7305
        %v7926 = vsel %vm2170, %v6861, %v7307
        %v7927 = vsel %vm2170, %v6860, %v7309
        %v7928 = vsel %vm2170, %v6859, %v7311
        %v7929 = vsel %vm2170, %v6858, %v7313
        %v7930 = vsel %vm2170, %v6857, %v7315
        %v7931 = vsel %vm2170, %v6856, %v7317
        %v7932 = vsel %vm2170, %v6855, %v7319
        %v7933 = vsel %vm2170, %v6854, %v7321
        %v7934 = vsel %vm2170, %v6853, %v7323
        %v7935 = vsel %vm2170, %v6852, %v7325
        %v7936 = vsel %vm2170, %v6851, %v7327
        %v7937 = vsel %vm2170, %v6850, %v7329
        %v7938 = vsel %vm2170, %v6849, %v7331
        %v7939 = vsel %vm2170, %v6848, %v7333
        %v7940 = vsel %vm2170, %v6847, %v7335
        %v7941 = vsel %vm2170, %v6846, %v7337
        %v7942 = vsel %vm2170, %v6845, %v7339
        %v7943 = vsel %vm2170, %v6844, %v7341
        %v7944 = vsel %vm2170, %v6843, %v7343
        %v7945 = vsel %vm2170, %v6842, %v7345
        %v7946 = vsel %vm2170, %v6841, %v7347
        %v7947 = vsel %vm2170, %v6840, %v7349
        %v7948 = vsel %vm2170, %v6839, %v7351
        %v7949 = vsel %vm2170, %v6838, %v7353
        %v7950 = vsel %vm2170, %v6837, %v7355
        %v7951 = vsel %vm2170, %v6836, %v7357
        %v7952 = vsel %vm2170, %v6835, %v7359
        %v7953 = vsel %vm2170, %v6834, %v7361
        %v7954 = vsel %vm2170, %v6833, %v7363
        %v7955 = vsel %vm2170, %v6832, %v7365
        %v7956 = vsel %vm2170, %v6831, %v7367
        %v7957 = vsel %vm2170, %v6830, %v7369
        %v7958 = vsel %vm2170, %v6829, %v7371
        %v7959 = vsel %vm2170, %v6828, %v7373
        %v7960 = vsel %vm2170, %v6827, %v7375
        %v7961 = vsel %vm2170, %v6826, %v7377
        %v7962 = vsel %vm2170, %v6825, %v7379
        %v7963 = vsel %vm2170, %v6824, %v7381
        %v7964 = vsel %vm2170, %v6823, %v7383
        %v7965 = vsel %vm2170, %v6822, %v7385
        %v7966 = vsel %vm2170, %v6821, %v7387
        %v7967 = vsel %vm2170, %v6820, %v7389
        %v7968 = vsel %vm2170, %v6819, %v7391
        %v7969 = vsel %vm2170, %v6818, %v7393
        %v7970 = vsel %vm2299, %v7874, %v7587
        %v7971 = vsel %vm2299, %v7875, %v7589
        %v7972 = vsel %vm2299, %v7876, %v7591
        %v7973 = vsel %vm2299, %v7877, %v7593
        %v7974 = vsel %vm2299, %v7878, %v7595
        %v7975 = vsel %vm2299, %v7879, %v7597
        %v7976 = vsel %vm2299, %v7880, %v7599
        %v7977 = vsel %vm2299, %v7881, %v7601
        %v7978 = vsel %vm2299, %v7882, %v7603
        %v7979 = vsel %vm2299, %v7883, %v7605
        %v7980 = vsel %vm2299, %v7884, %v7607
        %v7981 = vsel %vm2299, %v7885, %v7609
        %v7982 = vsel %vm2299, %v7886, %v7611
        %v7983 = vsel %vm2299, %v7887, %v7613
        %v7984 = vsel %vm2299, %v7888, %v7615
        %v7985 = vsel %vm2299, %v7889, %v7617
        %v7986 = vsel %vm2299, %v7890, %v7619
        %v7987 = vsel %vm2299, %v7891, %v7621
        %v7988 = vsel %vm2299, %v7892, %v7623
        %v7989 = vsel %vm2299, %v7893, %v7625
        %v7990 = vsel %vm2299, %v7894, %v7627
        %v7991 = vsel %vm2299, %v7895, %v7629
        %v7992 = vsel %vm2299, %v7896, %v7631
        %v7993 = vsel %vm2299, %v7897, %v7633
        %v7994 = vsel %vm2299, %v7898, %v7635
        %v7995 = vsel %vm2299, %v7899, %v7637
        %v7996 = vsel %vm2299, %v7900, %v7639
        %v7997 = vsel %vm2299, %v7901, %v7641
        %v7998 = vsel %vm2299, %v7902, %v7643
        %v7999 = vsel %vm2299, %v7903, %v7645
        %v8000 = vsel %vm2299, %v7904, %v7647
        %v8001 = vsel %vm2299, %v7905, %v7649
        %v8002 = vsel %vm2299, %v7906, %v7651
        %v8003 = vsel %vm2299, %v7907, %v7653
        %v8004 = vsel %vm2299, %v7908, %v7655
        %v8005 = vsel %vm2299, %v7909, %v7657
        %v8006 = vsel %vm2299, %v7910, %v7659
        %v8007 = vsel %vm2299, %v7911, %v7661
        %v8008 = vsel %vm2299, %v7912, %v7663
        %v8009 = vsel %vm2299, %v7913, %v7665
        %v8010 = vsel %vm2299, %v7914, %v7667
        %v8011 = vsel %vm2299, %v7915, %v7669
        %v8012 = vsel %vm2299, %v7916, %v7671
        %v8013 = vsel %vm2299, %v7917, %v7673
        %v8014 = vsel %vm2299, %v7918, %v7675
        %v8015 = vsel %vm2299, %v7919, %v7677
        %v8016 = vsel %vm2299, %v7920, %v7679
        %v8017 = vsel %vm2299, %v7921, %v7681
        %v8018 = vsel %vm2299, %v7922, %v7683
        %v8019 = vsel %vm2299, %v7923, %v7685
        %v8020 = vsel %vm2299, %v7924, %v7687
        %v8021 = vsel %vm2299, %v7925, %v7689
        %v8022 = vsel %vm2299, %v7926, %v7691
        %v8023 = vsel %vm2299, %v7927, %v7693
        %v8024 = vsel %vm2299, %v7928, %v7695
        %v8025 = vsel %vm2299, %v7929, %v7697
        %v8026 = vsel %vm2299, %v7930, %v7699
        %v8027 = vsel %vm2299, %v7931, %v7701
        %v8028 = vsel %vm2299, %v7932, %v7703
        %v8029 = vsel %vm2299, %v7933, %v7705
        %v8030 = vsel %vm2299, %v7934, %v7707
        %v8031 = vsel %vm2299, %v7935, %v7709
        %v8032 = vsel %vm2299, %v7936, %v7711
        %v8033 = vsel %vm2299, %v7937, %v7713
        %v8034 = vsel %vm2299, %v7938, %v7715
        %v8035 = vsel %vm2299, %v7939, %v7717
        %v8036 = vsel %vm2299, %v7940, %v7719
        %v8037 = vsel %vm2299, %v7941, %v7721
        %v8038 = vsel %vm2299, %v7942, %v7723
        %v8039 = vsel %vm2299, %v7943, %v7725
        %v8040 = vsel %vm2299, %v7944, %v7727
        %v8041 = vsel %vm2299, %v7945, %v7729
        %v8042 = vsel %vm2299, %v7946, %v7731
        %v8043 = vsel %vm2299, %v7947, %v7733
        %v8044 = vsel %vm2299, %v7948, %v7735
        %v8045 = vsel %vm2299, %v7949, %v7737
        %v8046 = vsel %vm2299, %v7950, %v7739
        %v8047 = vsel %vm2299, %v7951, %v7741
        %v8048 = vsel %vm2299, %v7952, %v7743
        %v8049 = vsel %vm2299, %v7953, %v7745
        %v8050 = vsel %vm2299, %v7954, %v7747
        %v8051 = vsel %vm2299, %v7955, %v7749
        %v8052 = vsel %vm2299, %v7956, %v7751
        %v8053 = vsel %vm2299, %v7957, %v7753
        %v8054 = vsel %vm2299, %v7958, %v7755
        %v8055 = vsel %vm2299, %v7959, %v7757
        %v8056 = vsel %vm2299, %v7960, %v7759
        %v8057 = vsel %vm2299, %v7961, %v7761
        %v8058 = vsel %vm2299, %v7962, %v7763
        %v8059 = vsel %vm2299, %v7963, %v7765
        %v8060 = vsel %vm2299, %v7964, %v7767
        %v8061 = vsel %vm2299, %v7965, %v7769
        %v8062 = vsel %vm2299, %v7966, %v7771
        %v8063 = vsel %vm2299, %v7967, %v7773
        %v8064 = vsel %vm2299, %v7968, %v7775
        %v8065 = vsel %vm2299, %v7969, %v7777
        %v8066 = vpack.c.bf16 %v7971, %v7970
        %v8067 = vpack.c.bf16 %v7973, %v7972
        %v8068 = vpack.c.bf16 %v7975, %v7974
        %v8069 = vpack.c.bf16 %v7977, %v7976
        %v8070 = vpack.c.bf16 %v7979, %v7978
        %v8071 = vpack.c.bf16 %v7981, %v7980
        %v8072 = vpack.c.bf16 %v7983, %v7982
        %v8073 = vpack.c.bf16 %v7985, %v7984
        %v8074 = vpack.c.bf16 %v7987, %v7986
        %v8075 = vpack.c.bf16 %v7989, %v7988
        %v8076 = vpack.c.bf16 %v7991, %v7990
        %v8077 = vpack.c.bf16 %v7993, %v7992
        %v8078 = vpack.c.bf16 %v7995, %v7994
        %v8079 = vpack.c.bf16 %v7997, %v7996
        %v8080 = vpack.c.bf16 %v7999, %v7998
        %v8081 = vpack.c.bf16 %v8001, %v8000
        %v8082 = vpack.c.bf16 %v8003, %v8002
        %v8083 = vpack.c.bf16 %v8005, %v8004
        %v8084 = vpack.c.bf16 %v8007, %v8006
        %v8085 = vpack.c.bf16 %v8009, %v8008
        %v8086 = vpack.c.bf16 %v8011, %v8010
        %v8087 = vpack.c.bf16 %v8013, %v8012
        %v8088 = vpack.c.bf16 %v8015, %v8014
        %v8089 = vpack.c.bf16 %v8017, %v8016
        %v8090 = vpack.c.bf16 %v8019, %v8018
        %v8091 = vpack.c.bf16 %v8021, %v8020
        %v8092 = vpack.c.bf16 %v8023, %v8022
        %v8093 = vpack.c.bf16 %v8025, %v8024
        %v8094 = vpack.c.bf16 %v8027, %v8026
        %v8095 = vpack.c.bf16 %v8029, %v8028
        %v8096 = vpack.c.bf16 %v8031, %v8030
        %v8097 = vpack.c.bf16 %v8033, %v8032
        %v8098 = vpack.c.bf16 %v8035, %v8034
        %v8099 = vpack.c.bf16 %v8037, %v8036
        %v8100 = vpack.c.bf16 %v8039, %v8038
        %v8101 = vpack.c.bf16 %v8041, %v8040
        %v8102 = vpack.c.bf16 %v8043, %v8042
        %v8103 = vpack.c.bf16 %v8045, %v8044
        %v8104 = vpack.c.bf16 %v8047, %v8046
        %v8105 = vpack.c.bf16 %v8049, %v8048
        %v8106 = vpack.c.bf16 %v8051, %v8050
        %v8107 = vpack.c.bf16 %v8053, %v8052
        %v8108 = vpack.c.bf16 %v8055, %v8054
        %v8109 = vpack.c.bf16 %v8057, %v8056
        %v8110 = vpack.c.bf16 %v8059, %v8058
        %v8111 = vpack.c.bf16 %v8061, %v8060
        %v8112 = vpack.c.bf16 %v8063, %v8062
        %v8113 = vpack.c.bf16 %v8065, %v8064
        %v8114 = vlaneseq
        %v8115 = vshrl.u32 %v8114, 7
        %v8116 = vsub.s32 0, %v8115
        %v8117 = vrot.slane %v365, %v8116
        %v8130 = vunpack.c.l.b16 %v336
        %v8131 = vunpack.c.l.b16 %v337
        %v8132 = vunpack.c.l.b16 %v338
        %v8133 = vunpack.c.l.b16 %v339
        %v8134 = vunpack.c.l.b16 %v340
        %v8135 = vunpack.c.l.b16 %v341
        %v8136 = vunpack.c.l.b16 %v342
        %v8137 = vunpack.c.l.b16 %v343
        %v8138 = vunpack.c.l.b16 %v344
        %v8139 = vunpack.c.l.b16 %v345
        %v8140 = vunpack.c.l.b16 %v346
        %v8141 = vunpack.c.l.b16 %v347
        %v8142 = vpack.c.b16 %v8131, %v8130
        %v8143 = vpack.c.b16 %v8133, %v8132
        %v8144 = vpack.c.b16 %v8135, %v8134
        %v8145 = vpack.c.b16 %v8137, %v8136
        %v8146 = vpack.c.b16 %v8139, %v8138
        %v8147 = vpack.c.b16 %v8141, %v8140
        %v8155 = vsel %vm2532, %v8066, 0
        %v8158 = vsel %vm2532, %v8067, 0
        %v8161 = vsel %vm2532, %v8068, 0
        %v8164 = vsel %vm2532, %v8069, 0
        %v8167 = vsel %vm2532, %v8070, 0
        %v8170 = vsel %vm2532, %v8071, 0
        %v8173 = vsel %vm2532, %v8072, 0
        %v8176 = vsel %vm2532, %v8073, 0
        %v8179 = vsel %vm2532, %v8074, 0
        %v8182 = vsel %vm2532, %v8075, 0
        %v8185 = vsel %vm2532, %v8076, 0
        %v8188 = vsel %vm2532, %v8077, 0
        %v8191 = vsel %vm2532, %v8078, 0
        %v8194 = vsel %vm2532, %v8079, 0
        %v8197 = vsel %vm2532, %v8080, 0
        %v8200 = vsel %vm2532, %v8081, 0
        %v8203 = vsel %vm2532, %v8082, 0
        %v8206 = vsel %vm2532, %v8083, 0
        %v8209 = vsel %vm2532, %v8084, 0
        %v8212 = vsel %vm2532, %v8085, 0
        %v8215 = vsel %vm2532, %v8086, 0
        %v8218 = vsel %vm2532, %v8087, 0
        %v8221 = vsel %vm2532, %v8088, 0
        %v8224 = vsel %vm2532, %v8089, 0
        %v8227 = vsel %vm2532, %v8090, 0
        %v8230 = vsel %vm2532, %v8091, 0
        %v8233 = vsel %vm2532, %v8092, 0
        %v8236 = vsel %vm2532, %v8093, 0
        %v8239 = vsel %vm2532, %v8094, 0
        %v8242 = vsel %vm2532, %v8095, 0
        %v8245 = vsel %vm2532, %v8096, 0
        %v8248 = vsel %vm2532, %v8097, 0
        %v8251 = vsel %vm2532, %v8098, 0
        %v8254 = vsel %vm2532, %v8099, 0
        %v8257 = vsel %vm2532, %v8100, 0
        %v8260 = vsel %vm2532, %v8101, 0
        %v8263 = vsel %vm2532, %v8102, 0
        %v8266 = vsel %vm2532, %v8103, 0
        %v8269 = vsel %vm2532, %v8104, 0
        %v8272 = vsel %vm2532, %v8105, 0
        %v8275 = vsel %vm2532, %v8106, 0
        %v8278 = vsel %vm2532, %v8107, 0
        %v8281 = vsel %vm2532, %v8108, 0
        %v8284 = vsel %vm2532, %v8109, 0
        %v8287 = vsel %vm2532, %v8110, 0
        %v8290 = vsel %vm2532, %v8111, 0
        %v8293 = vsel %vm2532, %v8112, 0
        %v8296 = vsel %vm2532, %v8113, 0
        %8298 = vmatprep.subr.bf16.mxu0 0
        %8299 = vmatpush1.bf16.msra.mxu0 0
        %8300 = vmatprep.subr.bf16.mxu0 0
        %8301 = vmatpush1.bf16.msra.mxu0 0
        %8302 = vmatprep.subr.bf16.mxu0 0
        %8303 = vmatpush1.bf16.msra.mxu0 %v8147
        %8304 = vmatprep.subr.bf16.mxu0 0
        %8305 = vmatpush1.bf16.msra.mxu0 %v8146
        %8306 = vmatprep.subr.bf16.mxu0 0
        %8307 = vmatpush1.bf16.msra.mxu0 %v8145
        %8308 = vmatprep.subr.bf16.mxu0 0
        %8309 = vmatpush1.bf16.msra.mxu0 %v8144
        %8310 = vmatprep.subr.bf16.mxu0 0
        %8311 = vmatpush1.bf16.msra.mxu0 %v8143
        %8312 = vmatprep.subr.bf16.mxu0 0
        %8313 = vmatpush1.bf16.msra.mxu0 %v8142
        %8314 = vmatprep.subr.bf16.mxu0 0
        %8315 = vmatpush2.bf16.msra.mxu0 0
        %8316 = vmatprep.subr.bf16.mxu0 0
        %8317 = vmatpush2.bf16.msra.mxu0 0
        %8318 = vmatprep.subr.bf16.mxu0 0
        %8319 = vmatpush2.bf16.msra.mxu0 0
        %8320 = vmatprep.subr.bf16.mxu0 0
        %8321 = vmatpush2.bf16.msra.mxu0 0
        %8322 = vmatprep.subr.bf16.mxu0 0
        %8323 = vmatpush2.bf16.msra.mxu0 0
        %8324 = vmatprep.subr.bf16.mxu0 0
        %8325 = vmatpush2.bf16.msra.mxu0 0
        %8326 = vmatprep.subr.bf16.mxu0 0
        %8327 = vmatpush2.bf16.msra.mxu0 0
        %8328 = vmatprep.subr.bf16.mxu0 0
        %8329 = vmatpush2.bf16.msra.mxu0 0
        %8330 = vmatprep.mubr.bf16.mxu0 0
        %8331 = vmatmul.mubr.bf16.gmra.mxu0 %v8155
        %v8332 = vpop.f32.mrf.mxu0
        %v8333 = vadd.f32 %v8117, %v8332
        %v8334 = vpop.f32.mrf.mxu0
        %v8335 = vpop.f32.mrf.mxu0
        %v8336 = vadd.f32 %v8117, %v8335
        %v8337 = vpop.f32.mrf.mxu0
        %8338 = vmatprep.mubr.bf16.mxu0 0
        %8339 = vmatmul.mubr.bf16.gmra.mxu0 %v8158
        %v8340 = vpop.f32.mrf.mxu0
        %v8341 = vadd.f32 %v8117, %v8340
        %v8342 = vpop.f32.mrf.mxu0
        %v8343 = vpop.f32.mrf.mxu0
        %v8344 = vadd.f32 %v8117, %v8343
        %v8345 = vpop.f32.mrf.mxu0
        %8346 = vmatprep.mubr.bf16.mxu0 0
        %8347 = vmatmul.mubr.bf16.gmra.mxu0 %v8161
        %v8348 = vpop.f32.mrf.mxu0
        %v8349 = vadd.f32 %v8117, %v8348
        %v8350 = vpop.f32.mrf.mxu0
        %v8351 = vpop.f32.mrf.mxu0
        %v8352 = vadd.f32 %v8117, %v8351
        %v8353 = vpop.f32.mrf.mxu0
        %8354 = vmatprep.mubr.bf16.mxu0 0
        %8355 = vmatmul.mubr.bf16.gmra.mxu0 %v8164
        %v8356 = vpop.f32.mrf.mxu0
        %v8357 = vadd.f32 %v8117, %v8356
        %v8358 = vpop.f32.mrf.mxu0
        %v8359 = vpop.f32.mrf.mxu0
        %v8360 = vadd.f32 %v8117, %v8359
        %v8361 = vpop.f32.mrf.mxu0
        %8362 = vmatprep.mubr.bf16.mxu0 0
        %8363 = vmatmul.mubr.bf16.gmra.mxu0 %v8167
        %v8364 = vpop.f32.mrf.mxu0
        %v8365 = vadd.f32 %v8117, %v8364
        %v8366 = vpop.f32.mrf.mxu0
        %v8367 = vpop.f32.mrf.mxu0
        %v8368 = vadd.f32 %v8117, %v8367
        %v8369 = vpop.f32.mrf.mxu0
        %8370 = vmatprep.mubr.bf16.mxu0 0
        %8371 = vmatmul.mubr.bf16.gmra.mxu0 %v8170
        %v8372 = vpop.f32.mrf.mxu0
        %v8373 = vadd.f32 %v8117, %v8372
        %v8374 = vpop.f32.mrf.mxu0
        %v8375 = vpop.f32.mrf.mxu0
        %v8376 = vadd.f32 %v8117, %v8375
        %v8377 = vpop.f32.mrf.mxu0
        %8378 = vmatprep.mubr.bf16.mxu0 0
        %8379 = vmatmul.mubr.bf16.gmra.mxu0 %v8173
        %v8380 = vpop.f32.mrf.mxu0
        %v8381 = vadd.f32 %v8117, %v8380
        %v8382 = vpop.f32.mrf.mxu0
        %v8383 = vpop.f32.mrf.mxu0
        %v8384 = vadd.f32 %v8117, %v8383
        %v8385 = vpop.f32.mrf.mxu0
        %8386 = vmatprep.mubr.bf16.mxu0 0
        %8387 = vmatmul.mubr.bf16.gmra.mxu0 %v8176
        %v8388 = vpop.f32.mrf.mxu0
        %v8389 = vadd.f32 %v8117, %v8388
        %v8390 = vpop.f32.mrf.mxu0
        %v8391 = vpop.f32.mrf.mxu0
        %v8392 = vadd.f32 %v8117, %v8391
        %v8393 = vpop.f32.mrf.mxu0
        %8394 = vmatprep.mubr.bf16.mxu0 0
        %8395 = vmatmul.mubr.bf16.gmra.mxu0 %v8179
        %v8396 = vpop.f32.mrf.mxu0
        %v8397 = vadd.f32 %v8117, %v8396
        %v8398 = vpop.f32.mrf.mxu0
        %v8399 = vpop.f32.mrf.mxu0
        %v8400 = vadd.f32 %v8117, %v8399
        %v8401 = vpop.f32.mrf.mxu0
        %8402 = vmatprep.mubr.bf16.mxu0 0
        %8403 = vmatmul.mubr.bf16.gmra.mxu0 %v8182
        %v8404 = vpop.f32.mrf.mxu0
        %v8405 = vadd.f32 %v8117, %v8404
        %v8406 = vpop.f32.mrf.mxu0
        %v8407 = vpop.f32.mrf.mxu0
        %v8408 = vadd.f32 %v8117, %v8407
        %v8409 = vpop.f32.mrf.mxu0
        %8410 = vmatprep.mubr.bf16.mxu0 0
        %8411 = vmatmul.mubr.bf16.gmra.mxu0 %v8185
        %v8412 = vpop.f32.mrf.mxu0
        %v8413 = vadd.f32 %v8117, %v8412
        %v8414 = vpop.f32.mrf.mxu0
        %v8415 = vpop.f32.mrf.mxu0
        %v8416 = vadd.f32 %v8117, %v8415
        %v8417 = vpop.f32.mrf.mxu0
        %8418 = vmatprep.mubr.bf16.mxu0 0
        %8419 = vmatmul.mubr.bf16.gmra.mxu0 %v8188
        %v8420 = vpop.f32.mrf.mxu0
        %v8421 = vadd.f32 %v8117, %v8420
        %v8422 = vpop.f32.mrf.mxu0
        %v8423 = vpop.f32.mrf.mxu0
        %v8424 = vadd.f32 %v8117, %v8423
        %v8425 = vpop.f32.mrf.mxu0
        %8426 = vmatprep.mubr.bf16.mxu0 0
        %8427 = vmatmul.mubr.bf16.gmra.mxu0 %v8191
        %v8428 = vpop.f32.mrf.mxu0
        %v8429 = vadd.f32 %v8117, %v8428
        %v8430 = vpop.f32.mrf.mxu0
        %v8431 = vpop.f32.mrf.mxu0
        %v8432 = vadd.f32 %v8117, %v8431
        %v8433 = vpop.f32.mrf.mxu0
        %8434 = vmatprep.mubr.bf16.mxu0 0
        %8435 = vmatmul.mubr.bf16.gmra.mxu0 %v8194
        %v8436 = vpop.f32.mrf.mxu0
        %v8437 = vadd.f32 %v8117, %v8436
        %v8438 = vpop.f32.mrf.mxu0
        %v8439 = vpop.f32.mrf.mxu0
        %v8440 = vadd.f32 %v8117, %v8439
        %v8441 = vpop.f32.mrf.mxu0
        %8442 = vmatprep.mubr.bf16.mxu0 0
        %8443 = vmatmul.mubr.bf16.gmra.mxu0 %v8197
        %v8444 = vpop.f32.mrf.mxu0
        %v8445 = vadd.f32 %v8117, %v8444
        %v8446 = vpop.f32.mrf.mxu0
        %v8447 = vpop.f32.mrf.mxu0
        %v8448 = vadd.f32 %v8117, %v8447
        %v8449 = vpop.f32.mrf.mxu0
        %8450 = vmatprep.mubr.bf16.mxu0 0
        %8451 = vmatmul.mubr.bf16.gmra.mxu0 %v8200
        %v8452 = vpop.f32.mrf.mxu0
        %v8453 = vadd.f32 %v8117, %v8452
        %v8454 = vpop.f32.mrf.mxu0
        %v8455 = vpop.f32.mrf.mxu0
        %v8456 = vadd.f32 %v8117, %v8455
        %v8457 = vpop.f32.mrf.mxu0
        %8458 = vmatprep.mubr.bf16.mxu0 0
        %8459 = vmatmul.mubr.bf16.gmra.mxu0 %v8203
        %v8460 = vpop.f32.mrf.mxu0
        %v8461 = vadd.f32 %v8117, %v8460
        %v8462 = vpop.f32.mrf.mxu0
        %v8463 = vpop.f32.mrf.mxu0
        %v8464 = vadd.f32 %v8117, %v8463
        %v8465 = vpop.f32.mrf.mxu0
        %8466 = vmatprep.mubr.bf16.mxu0 0
        %8467 = vmatmul.mubr.bf16.gmra.mxu0 %v8206
        %v8468 = vpop.f32.mrf.mxu0
        %v8469 = vadd.f32 %v8117, %v8468
        %v8470 = vpop.f32.mrf.mxu0
        %v8471 = vpop.f32.mrf.mxu0
        %v8472 = vadd.f32 %v8117, %v8471
        %v8473 = vpop.f32.mrf.mxu0
        %8474 = vmatprep.mubr.bf16.mxu0 0
        %8475 = vmatmul.mubr.bf16.gmra.mxu0 %v8209
        %v8476 = vpop.f32.mrf.mxu0
        %v8477 = vadd.f32 %v8117, %v8476
        %v8478 = vpop.f32.mrf.mxu0
        %v8479 = vpop.f32.mrf.mxu0
        %v8480 = vadd.f32 %v8117, %v8479
        %v8481 = vpop.f32.mrf.mxu0
        %8482 = vmatprep.mubr.bf16.mxu0 0
        %8483 = vmatmul.mubr.bf16.gmra.mxu0 %v8212
        %v8484 = vpop.f32.mrf.mxu0
        %v8485 = vadd.f32 %v8117, %v8484
        %v8486 = vpop.f32.mrf.mxu0
        %v8487 = vpop.f32.mrf.mxu0
        %v8488 = vadd.f32 %v8117, %v8487
        %v8489 = vpop.f32.mrf.mxu0
        %8490 = vmatprep.mubr.bf16.mxu0 0
        %8491 = vmatmul.mubr.bf16.gmra.mxu0 %v8215
        %v8492 = vpop.f32.mrf.mxu0
        %v8493 = vadd.f32 %v8117, %v8492
        %v8494 = vpop.f32.mrf.mxu0
        %v8495 = vpop.f32.mrf.mxu0
        %v8496 = vadd.f32 %v8117, %v8495
        %v8497 = vpop.f32.mrf.mxu0
        %8498 = vmatprep.mubr.bf16.mxu0 0
        %8499 = vmatmul.mubr.bf16.gmra.mxu0 %v8218
        %v8500 = vpop.f32.mrf.mxu0
        %v8501 = vadd.f32 %v8117, %v8500
        %v8502 = vpop.f32.mrf.mxu0
        %v8503 = vpop.f32.mrf.mxu0
        %v8504 = vadd.f32 %v8117, %v8503
        %v8505 = vpop.f32.mrf.mxu0
        %8506 = vmatprep.mubr.bf16.mxu0 0
        %8507 = vmatmul.mubr.bf16.gmra.mxu0 %v8221
        %v8508 = vpop.f32.mrf.mxu0
        %v8509 = vadd.f32 %v8117, %v8508
        %v8510 = vpop.f32.mrf.mxu0
        %v8511 = vpop.f32.mrf.mxu0
        %v8512 = vadd.f32 %v8117, %v8511
        %v8513 = vpop.f32.mrf.mxu0
        %8514 = vmatprep.mubr.bf16.mxu0 0
        %8515 = vmatmul.mubr.bf16.gmra.mxu0 %v8224
        %v8516 = vpop.f32.mrf.mxu0
        %v8517 = vadd.f32 %v8117, %v8516
        %v8518 = vpop.f32.mrf.mxu0
        %v8519 = vpop.f32.mrf.mxu0
        %v8520 = vadd.f32 %v8117, %v8519
        %v8521 = vpop.f32.mrf.mxu0
        %8522 = vmatprep.mubr.bf16.mxu0 0
        %8523 = vmatmul.mubr.bf16.gmra.mxu0 %v8227
        %v8524 = vpop.f32.mrf.mxu0
        %v8525 = vadd.f32 %v8117, %v8524
        %v8526 = vpop.f32.mrf.mxu0
        %v8527 = vpop.f32.mrf.mxu0
        %v8528 = vadd.f32 %v8117, %v8527
        %v8529 = vpop.f32.mrf.mxu0
        %8530 = vmatprep.mubr.bf16.mxu0 0
        %8531 = vmatmul.mubr.bf16.gmra.mxu0 %v8230
        %v8532 = vpop.f32.mrf.mxu0
        %v8533 = vadd.f32 %v8117, %v8532
        %v8534 = vpop.f32.mrf.mxu0
        %v8535 = vpop.f32.mrf.mxu0
        %v8536 = vadd.f32 %v8117, %v8535
        %v8537 = vpop.f32.mrf.mxu0
        %8538 = vmatprep.mubr.bf16.mxu0 0
        %8539 = vmatmul.mubr.bf16.gmra.mxu0 %v8233
        %v8540 = vpop.f32.mrf.mxu0
        %v8541 = vadd.f32 %v8117, %v8540
        %v8542 = vpop.f32.mrf.mxu0
        %v8543 = vpop.f32.mrf.mxu0
        %v8544 = vadd.f32 %v8117, %v8543
        %v8545 = vpop.f32.mrf.mxu0
        %8546 = vmatprep.mubr.bf16.mxu0 0
        %8547 = vmatmul.mubr.bf16.gmra.mxu0 %v8236
        %v8548 = vpop.f32.mrf.mxu0
        %v8549 = vadd.f32 %v8117, %v8548
        %v8550 = vpop.f32.mrf.mxu0
        %v8551 = vpop.f32.mrf.mxu0
        %v8552 = vadd.f32 %v8117, %v8551
        %v8553 = vpop.f32.mrf.mxu0
        %8554 = vmatprep.mubr.bf16.mxu0 0
        %8555 = vmatmul.mubr.bf16.gmra.mxu0 %v8239
        %v8556 = vpop.f32.mrf.mxu0
        %v8557 = vadd.f32 %v8117, %v8556
        %v8558 = vpop.f32.mrf.mxu0
        %v8559 = vpop.f32.mrf.mxu0
        %v8560 = vadd.f32 %v8117, %v8559
        %v8561 = vpop.f32.mrf.mxu0
        %8562 = vmatprep.mubr.bf16.mxu0 0
        %8563 = vmatmul.mubr.bf16.gmra.mxu0 %v8242
        %v8564 = vpop.f32.mrf.mxu0
        %v8565 = vadd.f32 %v8117, %v8564
        %v8566 = vpop.f32.mrf.mxu0
        %v8567 = vpop.f32.mrf.mxu0
        %v8568 = vadd.f32 %v8117, %v8567
        %v8569 = vpop.f32.mrf.mxu0
        %8570 = vmatprep.mubr.bf16.mxu0 0
        %8571 = vmatmul.mubr.bf16.gmra.mxu0 %v8245
        %v8572 = vpop.f32.mrf.mxu0
        %v8573 = vadd.f32 %v8117, %v8572
        %v8574 = vpop.f32.mrf.mxu0
        %v8575 = vpop.f32.mrf.mxu0
        %v8576 = vadd.f32 %v8117, %v8575
        %v8577 = vpop.f32.mrf.mxu0
        %8578 = vmatprep.mubr.bf16.mxu0 0
        %8579 = vmatmul.mubr.bf16.gmra.mxu0 %v8248
        %v8580 = vpop.f32.mrf.mxu0
        %v8581 = vadd.f32 %v8117, %v8580
        %v8582 = vpop.f32.mrf.mxu0
        %v8583 = vpop.f32.mrf.mxu0
        %v8584 = vadd.f32 %v8117, %v8583
        %v8585 = vpop.f32.mrf.mxu0
        %8586 = vmatprep.mubr.bf16.mxu0 0
        %8587 = vmatmul.mubr.bf16.gmra.mxu0 %v8251
        %v8588 = vpop.f32.mrf.mxu0
        %v8589 = vadd.f32 %v8117, %v8588
        %v8590 = vpop.f32.mrf.mxu0
        %v8591 = vpop.f32.mrf.mxu0
        %v8592 = vadd.f32 %v8117, %v8591
        %v8593 = vpop.f32.mrf.mxu0
        %8594 = vmatprep.mubr.bf16.mxu0 0
        %8595 = vmatmul.mubr.bf16.gmra.mxu0 %v8254
        %v8596 = vpop.f32.mrf.mxu0
        %v8597 = vadd.f32 %v8117, %v8596
        %v8598 = vpop.f32.mrf.mxu0
        %v8599 = vpop.f32.mrf.mxu0
        %v8600 = vadd.f32 %v8117, %v8599
        %v8601 = vpop.f32.mrf.mxu0
        %8602 = vmatprep.mubr.bf16.mxu0 0
        %8603 = vmatmul.mubr.bf16.gmra.mxu0 %v8257
        %v8604 = vpop.f32.mrf.mxu0
        %v8605 = vadd.f32 %v8117, %v8604
        %v8606 = vpop.f32.mrf.mxu0
        %v8607 = vpop.f32.mrf.mxu0
        %v8608 = vadd.f32 %v8117, %v8607
        %v8609 = vpop.f32.mrf.mxu0
        %8610 = vmatprep.mubr.bf16.mxu0 0
        %8611 = vmatmul.mubr.bf16.gmra.mxu0 %v8260
        %v8612 = vpop.f32.mrf.mxu0
        %v8613 = vadd.f32 %v8117, %v8612
        %v8614 = vpop.f32.mrf.mxu0
        %v8615 = vpop.f32.mrf.mxu0
        %v8616 = vadd.f32 %v8117, %v8615
        %v8617 = vpop.f32.mrf.mxu0
        %8618 = vmatprep.mubr.bf16.mxu0 0
        %8619 = vmatmul.mubr.bf16.gmra.mxu0 %v8263
        %v8620 = vpop.f32.mrf.mxu0
        %v8621 = vadd.f32 %v8117, %v8620
        %v8622 = vpop.f32.mrf.mxu0
        %v8623 = vpop.f32.mrf.mxu0
        %v8624 = vadd.f32 %v8117, %v8623
        %v8625 = vpop.f32.mrf.mxu0
        %8626 = vmatprep.mubr.bf16.mxu0 0
        %8627 = vmatmul.mubr.bf16.gmra.mxu0 %v8266
        %v8628 = vpop.f32.mrf.mxu0
        %v8629 = vadd.f32 %v8117, %v8628
        %v8630 = vpop.f32.mrf.mxu0
        %v8631 = vpop.f32.mrf.mxu0
        %v8632 = vadd.f32 %v8117, %v8631
        %v8633 = vpop.f32.mrf.mxu0
        %8634 = vmatprep.mubr.bf16.mxu0 0
        %8635 = vmatmul.mubr.bf16.gmra.mxu0 %v8269
        %v8636 = vpop.f32.mrf.mxu0
        %v8637 = vadd.f32 %v8117, %v8636
        %v8638 = vpop.f32.mrf.mxu0
        %v8639 = vpop.f32.mrf.mxu0
        %v8640 = vadd.f32 %v8117, %v8639
        %v8641 = vpop.f32.mrf.mxu0
        %8642 = vmatprep.mubr.bf16.mxu0 0
        %8643 = vmatmul.mubr.bf16.gmra.mxu0 %v8272
        %v8644 = vpop.f32.mrf.mxu0
        %v8645 = vadd.f32 %v8117, %v8644
        %v8646 = vpop.f32.mrf.mxu0
        %v8647 = vpop.f32.mrf.mxu0
        %v8648 = vadd.f32 %v8117, %v8647
        %v8649 = vpop.f32.mrf.mxu0
        %8650 = vmatprep.mubr.bf16.mxu0 0
        %8651 = vmatmul.mubr.bf16.gmra.mxu0 %v8275
        %v8652 = vpop.f32.mrf.mxu0
        %v8653 = vadd.f32 %v8117, %v8652
        %v8654 = vpop.f32.mrf.mxu0
        %v8655 = vpop.f32.mrf.mxu0
        %v8656 = vadd.f32 %v8117, %v8655
        %v8657 = vpop.f32.mrf.mxu0
        %8658 = vmatprep.mubr.bf16.mxu0 0
        %8659 = vmatmul.mubr.bf16.gmra.mxu0 %v8278
        %v8660 = vpop.f32.mrf.mxu0
        %v8661 = vadd.f32 %v8117, %v8660
        %v8662 = vpop.f32.mrf.mxu0
        %v8663 = vpop.f32.mrf.mxu0
        %v8664 = vadd.f32 %v8117, %v8663
        %v8665 = vpop.f32.mrf.mxu0
        %8666 = vmatprep.mubr.bf16.mxu0 0
        %8667 = vmatmul.mubr.bf16.gmra.mxu0 %v8281
        %v8668 = vpop.f32.mrf.mxu0
        %v8669 = vadd.f32 %v8117, %v8668
        %v8670 = vpop.f32.mrf.mxu0
        %v8671 = vpop.f32.mrf.mxu0
        %v8672 = vadd.f32 %v8117, %v8671
        %v8673 = vpop.f32.mrf.mxu0
        %8674 = vmatprep.mubr.bf16.mxu0 0
        %8675 = vmatmul.mubr.bf16.gmra.mxu0 %v8284
        %v8676 = vpop.f32.mrf.mxu0
        %v8677 = vadd.f32 %v8117, %v8676
        %v8678 = vpop.f32.mrf.mxu0
        %v8679 = vpop.f32.mrf.mxu0
        %v8680 = vadd.f32 %v8117, %v8679
        %v8681 = vpop.f32.mrf.mxu0
        %8682 = vmatprep.mubr.bf16.mxu0 0
        %8683 = vmatmul.mubr.bf16.gmra.mxu0 %v8287
        %v8684 = vpop.f32.mrf.mxu0
        %v8685 = vadd.f32 %v8117, %v8684
        %v8686 = vpop.f32.mrf.mxu0
        %v8687 = vpop.f32.mrf.mxu0
        %v8688 = vadd.f32 %v8117, %v8687
        %v8689 = vpop.f32.mrf.mxu0
        %8690 = vmatprep.mubr.bf16.mxu0 0
        %8691 = vmatmul.mubr.bf16.gmra.mxu0 %v8290
        %v8692 = vpop.f32.mrf.mxu0
        %v8693 = vadd.f32 %v8117, %v8692
        %v8694 = vpop.f32.mrf.mxu0
        %v8695 = vpop.f32.mrf.mxu0
        %v8696 = vadd.f32 %v8117, %v8695
        %v8697 = vpop.f32.mrf.mxu0
        %8698 = vmatprep.mubr.bf16.mxu0 0
        %8699 = vmatmul.mubr.bf16.gmra.mxu0 %v8293
        %v8700 = vpop.f32.mrf.mxu0
        %v8701 = vadd.f32 %v8117, %v8700
        %v8702 = vpop.f32.mrf.mxu0
        %v8703 = vpop.f32.mrf.mxu0
        %v8704 = vadd.f32 %v8117, %v8703
        %v8705 = vpop.f32.mrf.mxu0
        %8706 = vmatprep.mubr.bf16.mxu0 0
        %8707 = vmatmul.mubr.bf16.gmra.mxu0 %v8296
        %v8708 = vpop.f32.mrf.mxu0
        %v8709 = vadd.f32 %v8117, %v8708
        %v8710 = vpop.f32.mrf.mxu0
        %v8711 = vpop.f32.mrf.mxu0
        %v8712 = vadd.f32 %v8117, %v8711
        %v8713 = vpop.f32.mrf.mxu0
        %8714 = vdwg.mxu0
        %v8715 = vpack.c.bf16 %v8336, %v8333
        %v8716 = vpack.c.bf16 %v8344, %v8341
        %v8717 = vpack.c.bf16 %v8352, %v8349
        %v8718 = vpack.c.bf16 %v8360, %v8357
        %v8719 = vpack.c.bf16 %v8368, %v8365
        %v8720 = vpack.c.bf16 %v8376, %v8373
        %v8721 = vpack.c.bf16 %v8384, %v8381
        %v8722 = vpack.c.bf16 %v8392, %v8389
        %v8723 = vpack.c.bf16 %v8400, %v8397
        %v8724 = vpack.c.bf16 %v8408, %v8405
        %v8725 = vpack.c.bf16 %v8416, %v8413
        %v8726 = vpack.c.bf16 %v8424, %v8421
        %v8727 = vpack.c.bf16 %v8432, %v8429
        %v8728 = vpack.c.bf16 %v8440, %v8437
        %v8729 = vpack.c.bf16 %v8448, %v8445
        %v8730 = vpack.c.bf16 %v8456, %v8453
        %v8731 = vpack.c.bf16 %v8464, %v8461
        %v8732 = vpack.c.bf16 %v8472, %v8469
        %v8733 = vpack.c.bf16 %v8480, %v8477
        %v8734 = vpack.c.bf16 %v8488, %v8485
        %v8735 = vpack.c.bf16 %v8496, %v8493
        %v8736 = vpack.c.bf16 %v8504, %v8501
        %v8737 = vpack.c.bf16 %v8512, %v8509
        %v8738 = vpack.c.bf16 %v8520, %v8517
        %v8739 = vpack.c.bf16 %v8528, %v8525
        %v8740 = vpack.c.bf16 %v8536, %v8533
        %v8741 = vpack.c.bf16 %v8544, %v8541
        %v8742 = vpack.c.bf16 %v8552, %v8549
        %v8743 = vpack.c.bf16 %v8560, %v8557
        %v8744 = vpack.c.bf16 %v8568, %v8565
        %v8745 = vpack.c.bf16 %v8576, %v8573
        %v8746 = vpack.c.bf16 %v8584, %v8581
        %v8747 = vpack.c.bf16 %v8592, %v8589
        %v8748 = vpack.c.bf16 %v8600, %v8597
        %v8749 = vpack.c.bf16 %v8608, %v8605
        %v8750 = vpack.c.bf16 %v8616, %v8613
        %v8751 = vpack.c.bf16 %v8624, %v8621
        %v8752 = vpack.c.bf16 %v8632, %v8629
        %v8753 = vpack.c.bf16 %v8640, %v8637
        %v8754 = vpack.c.bf16 %v8648, %v8645
        %v8755 = vpack.c.bf16 %v8656, %v8653
        %v8756 = vpack.c.bf16 %v8664, %v8661
        %v8757 = vpack.c.bf16 %v8672, %v8669
        %v8758 = vpack.c.bf16 %v8680, %v8677
        %v8759 = vpack.c.bf16 %v8688, %v8685
        %v8760 = vpack.c.bf16 %v8696, %v8693
        %v8761 = vpack.c.bf16 %v8704, %v8701
        %v8762 = vpack.c.bf16 %v8712, %v8709
        %v8763 = vlaneseq
        %v8764 = vshrl.u32 %v8763, 7
        %v8765 = vsub.s32 0, %v8764
        %v8766 = vrot.slane %v370, %v8765
        %v8771 = vunpack.c.l.b16 %v356
        %v8772 = vunpack.c.l.b16 %v357
        %v8773 = vunpack.c.l.b16 %v358
        %v8774 = vunpack.c.l.b16 %v359
        %v8775 = vpack.c.b16 %v8772, %v8771
        %v8776 = vpack.c.b16 %v8774, %v8773
        %v8780 = vsel %vm2170, %v8715, 0
        %v8783 = vsel %vm2170, %v8716, 0
        %v8786 = vsel %vm2170, %v8717, 0
        %v8789 = vsel %vm2170, %v8718, 0
        %v8792 = vsel %vm2170, %v8719, 0
        %v8795 = vsel %vm2170, %v8720, 0
        %v8798 = vsel %vm2170, %v8721, 0
        %v8801 = vsel %vm2170, %v8722, 0
        %v8804 = vsel %vm2170, %v8723, 0
        %v8807 = vsel %vm2170, %v8724, 0
        %v8810 = vsel %vm2170, %v8725, 0
        %v8813 = vsel %vm2170, %v8726, 0
        %v8816 = vsel %vm2170, %v8727, 0
        %v8819 = vsel %vm2170, %v8728, 0
        %v8822 = vsel %vm2170, %v8729, 0
        %v8825 = vsel %vm2170, %v8730, 0
        %v8828 = vsel %vm2170, %v8731, 0
        %v8831 = vsel %vm2170, %v8732, 0
        %v8834 = vsel %vm2170, %v8733, 0
        %v8837 = vsel %vm2170, %v8734, 0
        %v8840 = vsel %vm2170, %v8735, 0
        %v8843 = vsel %vm2170, %v8736, 0
        %v8846 = vsel %vm2170, %v8737, 0
        %v8849 = vsel %vm2170, %v8738, 0
        %v8852 = vsel %vm2170, %v8739, 0
        %v8855 = vsel %vm2170, %v8740, 0
        %v8858 = vsel %vm2170, %v8741, 0
        %v8861 = vsel %vm2170, %v8742, 0
        %v8864 = vsel %vm2170, %v8743, 0
        %v8867 = vsel %vm2170, %v8744, 0
        %v8870 = vsel %vm2170, %v8745, 0
        %v8873 = vsel %vm2170, %v8746, 0
        %v8876 = vsel %vm2170, %v8747, 0
        %v8879 = vsel %vm2170, %v8748, 0
        %v8882 = vsel %vm2170, %v8749, 0
        %v8885 = vsel %vm2170, %v8750, 0
        %v8888 = vsel %vm2170, %v8751, 0
        %v8891 = vsel %vm2170, %v8752, 0
        %v8894 = vsel %vm2170, %v8753, 0
        %v8897 = vsel %vm2170, %v8754, 0
        %v8900 = vsel %vm2170, %v8755, 0
        %v8903 = vsel %vm2170, %v8756, 0
        %v8906 = vsel %vm2170, %v8757, 0
        %v8909 = vsel %vm2170, %v8758, 0
        %v8912 = vsel %vm2170, %v8759, 0
        %v8915 = vsel %vm2170, %v8760, 0
        %v8918 = vsel %vm2170, %v8761, 0
        %v8921 = vsel %vm2170, %v8762, 0
        %8923 = vmatprep.subr.bf16.mxu0 0
        %8924 = vmatpush1.bf16.msra.mxu0 0
        %8925 = vmatprep.subr.bf16.mxu0 0
        %8926 = vmatpush1.bf16.msra.mxu0 0
        %8927 = vmatprep.subr.bf16.mxu0 0
        %8928 = vmatpush1.bf16.msra.mxu0 0
        %8929 = vmatprep.subr.bf16.mxu0 0
        %8930 = vmatpush1.bf16.msra.mxu0 0
        %8931 = vmatprep.subr.bf16.mxu0 0
        %8932 = vmatpush1.bf16.msra.mxu0 0
        %8933 = vmatprep.subr.bf16.mxu0 0
        %8934 = vmatpush1.bf16.msra.mxu0 0
        %8935 = vmatprep.subr.bf16.mxu0 0
        %8936 = vmatpush1.bf16.msra.mxu0 %v8776
        %8937 = vmatprep.subr.bf16.mxu0 0
        %8938 = vmatpush1.bf16.msra.mxu0 %v8775
        %8939 = vmatprep.subr.bf16.mxu0 0
        %8940 = vmatpush2.bf16.msra.mxu0 0
        %8941 = vmatprep.subr.bf16.mxu0 0
        %8942 = vmatpush2.bf16.msra.mxu0 0
        %8943 = vmatprep.subr.bf16.mxu0 0
        %8944 = vmatpush2.bf16.msra.mxu0 0
        %8945 = vmatprep.subr.bf16.mxu0 0
        %8946 = vmatpush2.bf16.msra.mxu0 0
        %8947 = vmatprep.subr.bf16.mxu0 0
        %8948 = vmatpush2.bf16.msra.mxu0 0
        %8949 = vmatprep.subr.bf16.mxu0 0
        %8950 = vmatpush2.bf16.msra.mxu0 0
        %8951 = vmatprep.subr.bf16.mxu0 0
        %8952 = vmatpush2.bf16.msra.mxu0 0
        %8953 = vmatprep.subr.bf16.mxu0 0
        %8954 = vmatpush2.bf16.msra.mxu0 0
        %8955 = vmatprep.mubr.bf16.mxu0 0
        %8956 = vmatmul.mubr.bf16.gmra.mxu0 %v8780
        %v8957 = vpop.f32.mrf.mxu0
        %v8958 = vadd.f32 %v8766, %v8957
        %v8959 = vpop.f32.mrf.mxu0
        %v8960 = vpop.f32.mrf.mxu0
        %v8961 = vadd.f32 %v8766, %v8960
        %v8962 = vpop.f32.mrf.mxu0
        %8963 = vmatprep.mubr.bf16.mxu0 0
        %8964 = vmatmul.mubr.bf16.gmra.mxu0 %v8783
        %v8965 = vpop.f32.mrf.mxu0
        %v8966 = vadd.f32 %v8766, %v8965
        %v8967 = vpop.f32.mrf.mxu0
        %v8968 = vpop.f32.mrf.mxu0
        %v8969 = vadd.f32 %v8766, %v8968
        %v8970 = vpop.f32.mrf.mxu0
        %8971 = vmatprep.mubr.bf16.mxu0 0
        %8972 = vmatmul.mubr.bf16.gmra.mxu0 %v8786
        %v8973 = vpop.f32.mrf.mxu0
        %v8974 = vadd.f32 %v8766, %v8973
        %v8975 = vpop.f32.mrf.mxu0
        %v8976 = vpop.f32.mrf.mxu0
        %v8977 = vadd.f32 %v8766, %v8976
        %v8978 = vpop.f32.mrf.mxu0
        %8979 = vmatprep.mubr.bf16.mxu0 0
        %8980 = vmatmul.mubr.bf16.gmra.mxu0 %v8789
        %v8981 = vpop.f32.mrf.mxu0
        %v8982 = vadd.f32 %v8766, %v8981
        %v8983 = vpop.f32.mrf.mxu0
        %v8984 = vpop.f32.mrf.mxu0
        %v8985 = vadd.f32 %v8766, %v8984
        %v8986 = vpop.f32.mrf.mxu0
        %8987 = vmatprep.mubr.bf16.mxu0 0
        %8988 = vmatmul.mubr.bf16.gmra.mxu0 %v8792
        %v8989 = vpop.f32.mrf.mxu0
        %v8990 = vadd.f32 %v8766, %v8989
        %v8991 = vpop.f32.mrf.mxu0
        %v8992 = vpop.f32.mrf.mxu0
        %v8993 = vadd.f32 %v8766, %v8992
        %v8994 = vpop.f32.mrf.mxu0
        %8995 = vmatprep.mubr.bf16.mxu0 0
        %8996 = vmatmul.mubr.bf16.gmra.mxu0 %v8795
        %v8997 = vpop.f32.mrf.mxu0
        %v8998 = vadd.f32 %v8766, %v8997
        %v8999 = vpop.f32.mrf.mxu0
        %v9000 = vpop.f32.mrf.mxu0
        %v9001 = vadd.f32 %v8766, %v9000
        %v9002 = vpop.f32.mrf.mxu0
        %9003 = vmatprep.mubr.bf16.mxu0 0
        %9004 = vmatmul.mubr.bf16.gmra.mxu0 %v8798
        %v9005 = vpop.f32.mrf.mxu0
        %v9006 = vadd.f32 %v8766, %v9005
        %v9007 = vpop.f32.mrf.mxu0
        %v9008 = vpop.f32.mrf.mxu0
        %v9009 = vadd.f32 %v8766, %v9008
        %v9010 = vpop.f32.mrf.mxu0
        %9011 = vmatprep.mubr.bf16.mxu0 0
        %9012 = vmatmul.mubr.bf16.gmra.mxu0 %v8801
        %v9013 = vpop.f32.mrf.mxu0
        %v9014 = vadd.f32 %v8766, %v9013
        %v9015 = vpop.f32.mrf.mxu0
        %v9016 = vpop.f32.mrf.mxu0
        %v9017 = vadd.f32 %v8766, %v9016
        %v9018 = vpop.f32.mrf.mxu0
        %9019 = vmatprep.mubr.bf16.mxu0 0
        %9020 = vmatmul.mubr.bf16.gmra.mxu0 %v8804
        %v9021 = vpop.f32.mrf.mxu0
        %v9022 = vadd.f32 %v8766, %v9021
        %v9023 = vpop.f32.mrf.mxu0
        %v9024 = vpop.f32.mrf.mxu0
        %v9025 = vadd.f32 %v8766, %v9024
        %v9026 = vpop.f32.mrf.mxu0
        %9027 = vmatprep.mubr.bf16.mxu0 0
        %9028 = vmatmul.mubr.bf16.gmra.mxu0 %v8807
        %v9029 = vpop.f32.mrf.mxu0
        %v9030 = vadd.f32 %v8766, %v9029
        %v9031 = vpop.f32.mrf.mxu0
        %v9032 = vpop.f32.mrf.mxu0
        %v9033 = vadd.f32 %v8766, %v9032
        %v9034 = vpop.f32.mrf.mxu0
        %9035 = vmatprep.mubr.bf16.mxu0 0
        %9036 = vmatmul.mubr.bf16.gmra.mxu0 %v8810
        %v9037 = vpop.f32.mrf.mxu0
        %v9038 = vadd.f32 %v8766, %v9037
        %v9039 = vpop.f32.mrf.mxu0
        %v9040 = vpop.f32.mrf.mxu0
        %v9041 = vadd.f32 %v8766, %v9040
        %v9042 = vpop.f32.mrf.mxu0
        %9043 = vmatprep.mubr.bf16.mxu0 0
        %9044 = vmatmul.mubr.bf16.gmra.mxu0 %v8813
        %v9045 = vpop.f32.mrf.mxu0
        %v9046 = vadd.f32 %v8766, %v9045
        %v9047 = vpop.f32.mrf.mxu0
        %v9048 = vpop.f32.mrf.mxu0
        %v9049 = vadd.f32 %v8766, %v9048
        %v9050 = vpop.f32.mrf.mxu0
        %9051 = vmatprep.mubr.bf16.mxu0 0
        %9052 = vmatmul.mubr.bf16.gmra.mxu0 %v8816
        %v9053 = vpop.f32.mrf.mxu0
        %v9054 = vadd.f32 %v8766, %v9053
        %v9055 = vpop.f32.mrf.mxu0
        %v9056 = vpop.f32.mrf.mxu0
        %v9057 = vadd.f32 %v8766, %v9056
        %v9058 = vpop.f32.mrf.mxu0
        %9059 = vmatprep.mubr.bf16.mxu0 0
        %9060 = vmatmul.mubr.bf16.gmra.mxu0 %v8819
        %v9061 = vpop.f32.mrf.mxu0
        %v9062 = vadd.f32 %v8766, %v9061
        %v9063 = vpop.f32.mrf.mxu0
        %v9064 = vpop.f32.mrf.mxu0
        %v9065 = vadd.f32 %v8766, %v9064
        %v9066 = vpop.f32.mrf.mxu0
        %9067 = vmatprep.mubr.bf16.mxu0 0
        %9068 = vmatmul.mubr.bf16.gmra.mxu0 %v8822
        %v9069 = vpop.f32.mrf.mxu0
        %v9070 = vadd.f32 %v8766, %v9069
        %v9071 = vpop.f32.mrf.mxu0
        %v9072 = vpop.f32.mrf.mxu0
        %v9073 = vadd.f32 %v8766, %v9072
        %v9074 = vpop.f32.mrf.mxu0
        %9075 = vmatprep.mubr.bf16.mxu0 0
        %9076 = vmatmul.mubr.bf16.gmra.mxu0 %v8825
        %v9077 = vpop.f32.mrf.mxu0
        %v9078 = vadd.f32 %v8766, %v9077
        %v9079 = vpop.f32.mrf.mxu0
        %v9080 = vpop.f32.mrf.mxu0
        %v9081 = vadd.f32 %v8766, %v9080
        %v9082 = vpop.f32.mrf.mxu0
        %9083 = vmatprep.mubr.bf16.mxu0 0
        %9084 = vmatmul.mubr.bf16.gmra.mxu0 %v8828
        %v9085 = vpop.f32.mrf.mxu0
        %v9086 = vadd.f32 %v8766, %v9085
        %v9087 = vpop.f32.mrf.mxu0
        %v9088 = vpop.f32.mrf.mxu0
        %v9089 = vadd.f32 %v8766, %v9088
        %v9090 = vpop.f32.mrf.mxu0
        %9091 = vmatprep.mubr.bf16.mxu0 0
        %9092 = vmatmul.mubr.bf16.gmra.mxu0 %v8831
        %v9093 = vpop.f32.mrf.mxu0
        %v9094 = vadd.f32 %v8766, %v9093
        %v9095 = vpop.f32.mrf.mxu0
        %v9096 = vpop.f32.mrf.mxu0
        %v9097 = vadd.f32 %v8766, %v9096
        %v9098 = vpop.f32.mrf.mxu0
        %9099 = vmatprep.mubr.bf16.mxu0 0
        %9100 = vmatmul.mubr.bf16.gmra.mxu0 %v8834
        %v9101 = vpop.f32.mrf.mxu0
        %v9102 = vadd.f32 %v8766, %v9101
        %v9103 = vpop.f32.mrf.mxu0
        %v9104 = vpop.f32.mrf.mxu0
        %v9105 = vadd.f32 %v8766, %v9104
        %v9106 = vpop.f32.mrf.mxu0
        %9107 = vmatprep.mubr.bf16.mxu0 0
        %9108 = vmatmul.mubr.bf16.gmra.mxu0 %v8837
        %v9109 = vpop.f32.mrf.mxu0
        %v9110 = vadd.f32 %v8766, %v9109
        %v9111 = vpop.f32.mrf.mxu0
        %v9112 = vpop.f32.mrf.mxu0
        %v9113 = vadd.f32 %v8766, %v9112
        %v9114 = vpop.f32.mrf.mxu0
        %9115 = vmatprep.mubr.bf16.mxu0 0
        %9116 = vmatmul.mubr.bf16.gmra.mxu0 %v8840
        %v9117 = vpop.f32.mrf.mxu0
        %v9118 = vadd.f32 %v8766, %v9117
        %v9119 = vpop.f32.mrf.mxu0
        %v9120 = vpop.f32.mrf.mxu0
        %v9121 = vadd.f32 %v8766, %v9120
        %v9122 = vpop.f32.mrf.mxu0
        %9123 = vmatprep.mubr.bf16.mxu0 0
        %9124 = vmatmul.mubr.bf16.gmra.mxu0 %v8843
        %v9125 = vpop.f32.mrf.mxu0
        %v9126 = vadd.f32 %v8766, %v9125
        %v9127 = vpop.f32.mrf.mxu0
        %v9128 = vpop.f32.mrf.mxu0
        %v9129 = vadd.f32 %v8766, %v9128
        %v9130 = vpop.f32.mrf.mxu0
        %9131 = vmatprep.mubr.bf16.mxu0 0
        %9132 = vmatmul.mubr.bf16.gmra.mxu0 %v8846
        %v9133 = vpop.f32.mrf.mxu0
        %v9134 = vadd.f32 %v8766, %v9133
        %v9135 = vpop.f32.mrf.mxu0
        %v9136 = vpop.f32.mrf.mxu0
        %v9137 = vadd.f32 %v8766, %v9136
        %v9138 = vpop.f32.mrf.mxu0
        %9139 = vmatprep.mubr.bf16.mxu0 0
        %9140 = vmatmul.mubr.bf16.gmra.mxu0 %v8849
        %v9141 = vpop.f32.mrf.mxu0
        %v9142 = vadd.f32 %v8766, %v9141
        %v9143 = vpop.f32.mrf.mxu0
        %v9144 = vpop.f32.mrf.mxu0
        %v9145 = vadd.f32 %v8766, %v9144
        %v9146 = vpop.f32.mrf.mxu0
        %9147 = vmatprep.mubr.bf16.mxu0 0
        %9148 = vmatmul.mubr.bf16.gmra.mxu0 %v8852
        %v9149 = vpop.f32.mrf.mxu0
        %v9150 = vadd.f32 %v8766, %v9149
        %v9151 = vpop.f32.mrf.mxu0
        %v9152 = vpop.f32.mrf.mxu0
        %v9153 = vadd.f32 %v8766, %v9152
        %v9154 = vpop.f32.mrf.mxu0
        %9155 = vmatprep.mubr.bf16.mxu0 0
        %9156 = vmatmul.mubr.bf16.gmra.mxu0 %v8855
        %v9157 = vpop.f32.mrf.mxu0
        %v9158 = vadd.f32 %v8766, %v9157
        %v9159 = vpop.f32.mrf.mxu0
        %v9160 = vpop.f32.mrf.mxu0
        %v9161 = vadd.f32 %v8766, %v9160
        %v9162 = vpop.f32.mrf.mxu0
        %9163 = vmatprep.mubr.bf16.mxu0 0
        %9164 = vmatmul.mubr.bf16.gmra.mxu0 %v8858
        %v9165 = vpop.f32.mrf.mxu0
        %v9166 = vadd.f32 %v8766, %v9165
        %v9167 = vpop.f32.mrf.mxu0
        %v9168 = vpop.f32.mrf.mxu0
        %v9169 = vadd.f32 %v8766, %v9168
        %v9170 = vpop.f32.mrf.mxu0
        %9171 = vmatprep.mubr.bf16.mxu0 0
        %9172 = vmatmul.mubr.bf16.gmra.mxu0 %v8861
        %v9173 = vpop.f32.mrf.mxu0
        %v9174 = vadd.f32 %v8766, %v9173
        %v9175 = vpop.f32.mrf.mxu0
        %v9176 = vpop.f32.mrf.mxu0
        %v9177 = vadd.f32 %v8766, %v9176
        %v9178 = vpop.f32.mrf.mxu0
        %9179 = vmatprep.mubr.bf16.mxu0 0
        %9180 = vmatmul.mubr.bf16.gmra.mxu0 %v8864
        %v9181 = vpop.f32.mrf.mxu0
        %v9182 = vadd.f32 %v8766, %v9181
        %v9183 = vpop.f32.mrf.mxu0
        %v9184 = vpop.f32.mrf.mxu0
        %v9185 = vadd.f32 %v8766, %v9184
        %v9186 = vpop.f32.mrf.mxu0
        %9187 = vmatprep.mubr.bf16.mxu0 0
        %9188 = vmatmul.mubr.bf16.gmra.mxu0 %v8867
        %v9189 = vpop.f32.mrf.mxu0
        %v9190 = vadd.f32 %v8766, %v9189
        %v9191 = vpop.f32.mrf.mxu0
        %v9192 = vpop.f32.mrf.mxu0
        %v9193 = vadd.f32 %v8766, %v9192
        %v9194 = vpop.f32.mrf.mxu0
        %9195 = vmatprep.mubr.bf16.mxu0 0
        %9196 = vmatmul.mubr.bf16.gmra.mxu0 %v8870
        %v9197 = vpop.f32.mrf.mxu0
        %v9198 = vadd.f32 %v8766, %v9197
        %v9199 = vpop.f32.mrf.mxu0
        %v9200 = vpop.f32.mrf.mxu0
        %v9201 = vadd.f32 %v8766, %v9200
        %v9202 = vpop.f32.mrf.mxu0
        %9203 = vmatprep.mubr.bf16.mxu0 0
        %9204 = vmatmul.mubr.bf16.gmra.mxu0 %v8873
        %v9205 = vpop.f32.mrf.mxu0
        %v9206 = vadd.f32 %v8766, %v9205
        %v9207 = vpop.f32.mrf.mxu0
        %v9208 = vpop.f32.mrf.mxu0
        %v9209 = vadd.f32 %v8766, %v9208
        %v9210 = vpop.f32.mrf.mxu0
        %9211 = vmatprep.mubr.bf16.mxu0 0
        %9212 = vmatmul.mubr.bf16.gmra.mxu0 %v8876
        %v9213 = vpop.f32.mrf.mxu0
        %v9214 = vadd.f32 %v8766, %v9213
        %v9215 = vpop.f32.mrf.mxu0
        %v9216 = vpop.f32.mrf.mxu0
        %v9217 = vadd.f32 %v8766, %v9216
        %v9218 = vpop.f32.mrf.mxu0
        %9219 = vmatprep.mubr.bf16.mxu0 0
        %9220 = vmatmul.mubr.bf16.gmra.mxu0 %v8879
        %v9221 = vpop.f32.mrf.mxu0
        %v9222 = vadd.f32 %v8766, %v9221
        %v9223 = vpop.f32.mrf.mxu0
        %v9224 = vpop.f32.mrf.mxu0
        %v9225 = vadd.f32 %v8766, %v9224
        %v9226 = vpop.f32.mrf.mxu0
        %9227 = vmatprep.mubr.bf16.mxu0 0
        %9228 = vmatmul.mubr.bf16.gmra.mxu0 %v8882
        %v9229 = vpop.f32.mrf.mxu0
        %v9230 = vadd.f32 %v8766, %v9229
        %v9231 = vpop.f32.mrf.mxu0
        %v9232 = vpop.f32.mrf.mxu0
        %v9233 = vadd.f32 %v8766, %v9232
        %v9234 = vpop.f32.mrf.mxu0
        %9235 = vmatprep.mubr.bf16.mxu0 0
        %9236 = vmatmul.mubr.bf16.gmra.mxu0 %v8885
        %v9237 = vpop.f32.mrf.mxu0
        %v9238 = vadd.f32 %v8766, %v9237
        %v9239 = vpop.f32.mrf.mxu0
        %v9240 = vpop.f32.mrf.mxu0
        %v9241 = vadd.f32 %v8766, %v9240
        %v9242 = vpop.f32.mrf.mxu0
        %9243 = vmatprep.mubr.bf16.mxu0 0
        %9244 = vmatmul.mubr.bf16.gmra.mxu0 %v8888
        %v9245 = vpop.f32.mrf.mxu0
        %v9246 = vadd.f32 %v8766, %v9245
        %v9247 = vpop.f32.mrf.mxu0
        %v9248 = vpop.f32.mrf.mxu0
        %v9249 = vadd.f32 %v8766, %v9248
        %v9250 = vpop.f32.mrf.mxu0
        %9251 = vmatprep.mubr.bf16.mxu0 0
        %9252 = vmatmul.mubr.bf16.gmra.mxu0 %v8891
        %v9253 = vpop.f32.mrf.mxu0
        %v9254 = vadd.f32 %v8766, %v9253
        %v9255 = vpop.f32.mrf.mxu0
        %v9256 = vpop.f32.mrf.mxu0
        %v9257 = vadd.f32 %v8766, %v9256
        %v9258 = vpop.f32.mrf.mxu0
        %9259 = vmatprep.mubr.bf16.mxu0 0
        %9260 = vmatmul.mubr.bf16.gmra.mxu0 %v8894
        %v9261 = vpop.f32.mrf.mxu0
        %v9262 = vadd.f32 %v8766, %v9261
        %v9263 = vpop.f32.mrf.mxu0
        %v9264 = vpop.f32.mrf.mxu0
        %v9265 = vadd.f32 %v8766, %v9264
        %v9266 = vpop.f32.mrf.mxu0
        %9267 = vmatprep.mubr.bf16.mxu0 0
        %9268 = vmatmul.mubr.bf16.gmra.mxu0 %v8897
        %v9269 = vpop.f32.mrf.mxu0
        %v9270 = vadd.f32 %v8766, %v9269
        %v9271 = vpop.f32.mrf.mxu0
        %v9272 = vpop.f32.mrf.mxu0
        %v9273 = vadd.f32 %v8766, %v9272
        %v9274 = vpop.f32.mrf.mxu0
        %9275 = vmatprep.mubr.bf16.mxu0 0
        %9276 = vmatmul.mubr.bf16.gmra.mxu0 %v8900
        %v9277 = vpop.f32.mrf.mxu0
        %v9278 = vadd.f32 %v8766, %v9277
        %v9279 = vpop.f32.mrf.mxu0
        %v9280 = vpop.f32.mrf.mxu0
        %v9281 = vadd.f32 %v8766, %v9280
        %v9282 = vpop.f32.mrf.mxu0
        %9283 = vmatprep.mubr.bf16.mxu0 0
        %9284 = vmatmul.mubr.bf16.gmra.mxu0 %v8903
        %v9285 = vpop.f32.mrf.mxu0
        %v9286 = vadd.f32 %v8766, %v9285
        %v9287 = vpop.f32.mrf.mxu0
        %v9288 = vpop.f32.mrf.mxu0
        %v9289 = vadd.f32 %v8766, %v9288
        %v9290 = vpop.f32.mrf.mxu0
        %9291 = vmatprep.mubr.bf16.mxu0 0
        %9292 = vmatmul.mubr.bf16.gmra.mxu0 %v8906
        %v9293 = vpop.f32.mrf.mxu0
        %v9294 = vadd.f32 %v8766, %v9293
        %v9295 = vpop.f32.mrf.mxu0
        %v9296 = vpop.f32.mrf.mxu0
        %v9297 = vadd.f32 %v8766, %v9296
        %v9298 = vpop.f32.mrf.mxu0
        %9299 = vmatprep.mubr.bf16.mxu0 0
        %9300 = vmatmul.mubr.bf16.gmra.mxu0 %v8909
        %v9301 = vpop.f32.mrf.mxu0
        %v9302 = vadd.f32 %v8766, %v9301
        %v9303 = vpop.f32.mrf.mxu0
        %v9304 = vpop.f32.mrf.mxu0
        %v9305 = vadd.f32 %v8766, %v9304
        %v9306 = vpop.f32.mrf.mxu0
        %9307 = vmatprep.mubr.bf16.mxu0 0
        %9308 = vmatmul.mubr.bf16.gmra.mxu0 %v8912
        %v9309 = vpop.f32.mrf.mxu0
        %v9310 = vadd.f32 %v8766, %v9309
        %v9311 = vpop.f32.mrf.mxu0
        %v9312 = vpop.f32.mrf.mxu0
        %v9313 = vadd.f32 %v8766, %v9312
        %v9314 = vpop.f32.mrf.mxu0
        %9315 = vmatprep.mubr.bf16.mxu0 0
        %9316 = vmatmul.mubr.bf16.gmra.mxu0 %v8915
        %v9317 = vpop.f32.mrf.mxu0
        %v9318 = vadd.f32 %v8766, %v9317
        %v9319 = vpop.f32.mrf.mxu0
        %v9320 = vpop.f32.mrf.mxu0
        %v9321 = vadd.f32 %v8766, %v9320
        %v9322 = vpop.f32.mrf.mxu0
        %9323 = vmatprep.mubr.bf16.mxu0 0
        %9324 = vmatmul.mubr.bf16.gmra.mxu0 %v8918
        %v9325 = vpop.f32.mrf.mxu0
        %v9326 = vadd.f32 %v8766, %v9325
        %v9327 = vpop.f32.mrf.mxu0
        %v9328 = vpop.f32.mrf.mxu0
        %v9329 = vadd.f32 %v8766, %v9328
        %v9330 = vpop.f32.mrf.mxu0
        %9331 = vmatprep.mubr.bf16.mxu0 0
        %9332 = vmatmul.mubr.bf16.gmra.mxu0 %v8921
        %v9333 = vpop.f32.mrf.mxu0
        %v9334 = vadd.f32 %v8766, %v9333
        %v9335 = vpop.f32.mrf.mxu0
        %v9336 = vpop.f32.mrf.mxu0
        %v9337 = vadd.f32 %v8766, %v9336
        %v9338 = vpop.f32.mrf.mxu0
        %9339 = vdwg.mxu0
        %v9340 = vtanh.pop %v8958
        %v9341 = vtanh.pop %v8961
        %v9342 = vtanh.pop %v8966
        %v9343 = vtanh.pop %v8969
        %v9344 = vtanh.pop %v8974
        %v9345 = vtanh.pop %v8977
        %v9346 = vtanh.pop %v8982
        %v9347 = vtanh.pop %v8985
        %v9348 = vtanh.pop %v8990
        %v9349 = vtanh.pop %v8993
        %v9350 = vtanh.pop %v8998
        %v9351 = vtanh.pop %v9001
        %v9352 = vtanh.pop %v9006
        %v9353 = vtanh.pop %v9009
        %v9354 = vtanh.pop %v9014
        %v9355 = vtanh.pop %v9017
        %v9356 = vtanh.pop %v9022
        %v9357 = vtanh.pop %v9025
        %v9358 = vtanh.pop %v9030
        %v9359 = vtanh.pop %v9033
        %v9360 = vtanh.pop %v9038
        %v9361 = vtanh.pop %v9041
        %v9362 = vtanh.pop %v9046
        %v9363 = vtanh.pop %v9049
        %v9364 = vtanh.pop %v9054
        %v9365 = vtanh.pop %v9057
        %v9366 = vtanh.pop %v9062
        %v9367 = vtanh.pop %v9065
        %v9368 = vtanh.pop %v9070
        %v9369 = vtanh.pop %v9073
        %v9370 = vtanh.pop %v9078
        %v9371 = vtanh.pop %v9081
        %v9372 = vtanh.pop %v9086
        %v9373 = vtanh.pop %v9089
        %v9374 = vtanh.pop %v9094
        %v9375 = vtanh.pop %v9097
        %v9376 = vtanh.pop %v9102
        %v9377 = vtanh.pop %v9105
        %v9378 = vtanh.pop %v9110
        %v9379 = vtanh.pop %v9113
        %v9380 = vtanh.pop %v9118
        %v9381 = vtanh.pop %v9121
        %v9382 = vtanh.pop %v9126
        %v9383 = vtanh.pop %v9129
        %v9384 = vtanh.pop %v9134
        %v9385 = vtanh.pop %v9137
        %v9386 = vtanh.pop %v9142
        %v9387 = vtanh.pop %v9145
        %v9388 = vtanh.pop %v9150
        %v9389 = vtanh.pop %v9153
        %v9390 = vtanh.pop %v9158
        %v9391 = vtanh.pop %v9161
        %v9392 = vtanh.pop %v9166
        %v9393 = vtanh.pop %v9169
        %v9394 = vtanh.pop %v9174
        %v9395 = vtanh.pop %v9177
        %v9396 = vtanh.pop %v9182
        %v9397 = vtanh.pop %v9185
        %v9398 = vtanh.pop %v9190
        %v9399 = vtanh.pop %v9193
        %v9400 = vtanh.pop %v9198
        %v9401 = vtanh.pop %v9201
        %v9402 = vtanh.pop %v9206
        %v9403 = vtanh.pop %v9209
        %v9404 = vtanh.pop %v9214
        %v9405 = vtanh.pop %v9217
        %v9406 = vtanh.pop %v9222
        %v9407 = vtanh.pop %v9225
        %v9408 = vtanh.pop %v9230
        %v9409 = vtanh.pop %v9233
        %v9410 = vtanh.pop %v9238
        %v9411 = vtanh.pop %v9241
        %v9412 = vtanh.pop %v9246
        %v9413 = vtanh.pop %v9249
        %v9414 = vtanh.pop %v9254
        %v9415 = vtanh.pop %v9257
        %v9416 = vtanh.pop %v9262
        %v9417 = vtanh.pop %v9265
        %v9418 = vtanh.pop %v9270
        %v9419 = vtanh.pop %v9273
        %v9420 = vtanh.pop %v9278
        %v9421 = vtanh.pop %v9281
        %v9422 = vtanh.pop %v9286
        %v9423 = vtanh.pop %v9289
        %v9424 = vtanh.pop %v9294
        %v9425 = vtanh.pop %v9297
        %v9426 = vtanh.pop %v9302
        %v9427 = vtanh.pop %v9305
        %v9428 = vtanh.pop %v9310
        %v9429 = vtanh.pop %v9313
        %v9430 = vtanh.pop %v9318
        %v9431 = vtanh.pop %v9321
        %v9432 = vtanh.pop %v9326
        %v9433 = vtanh.pop %v9329
        %v9434 = vtanh.pop %v9334
        %v9435 = vtanh.pop %v9337
        %v9436 = vlaneseq
        %v9437 = vshrl.u32 %v9436, 7
        %v9438 = vsub.s32 0, %v9437
        %v9439 = vrot.slane %v371, %v9438
        %v9440 = vmul.f32 %v9340, %v9439
        %v9441 = vmul.f32 %v9341, %v9439
        %v9442 = vmul.f32 %v9342, %v9439
        %v9443 = vmul.f32 %v9343, %v9439
        %v9444 = vmul.f32 %v9344, %v9439
        %v9445 = vmul.f32 %v9345, %v9439
        %v9446 = vmul.f32 %v9346, %v9439
        %v9447 = vmul.f32 %v9347, %v9439
        %v9448 = vmul.f32 %v9348, %v9439
        %v9449 = vmul.f32 %v9349, %v9439
        %v9450 = vmul.f32 %v9350, %v9439
        %v9451 = vmul.f32 %v9351, %v9439
        %v9452 = vmul.f32 %v9352, %v9439
        %v9453 = vmul.f32 %v9353, %v9439
        %v9454 = vmul.f32 %v9354, %v9439
        %v9455 = vmul.f32 %v9355, %v9439
        %v9456 = vmul.f32 %v9356, %v9439
        %v9457 = vmul.f32 %v9357, %v9439
        %v9458 = vmul.f32 %v9358, %v9439
        %v9459 = vmul.f32 %v9359, %v9439
        %v9460 = vmul.f32 %v9360, %v9439
        %v9461 = vmul.f32 %v9361, %v9439
        %v9462 = vmul.f32 %v9362, %v9439
        %v9463 = vmul.f32 %v9363, %v9439
        %v9464 = vmul.f32 %v9364, %v9439
        %v9465 = vmul.f32 %v9365, %v9439
        %v9466 = vmul.f32 %v9366, %v9439
        %v9467 = vmul.f32 %v9367, %v9439
        %v9468 = vmul.f32 %v9368, %v9439
        %v9469 = vmul.f32 %v9369, %v9439
        %v9470 = vmul.f32 %v9370, %v9439
        %v9471 = vmul.f32 %v9371, %v9439
        %v9472 = vmul.f32 %v9372, %v9439
        %v9473 = vmul.f32 %v9373, %v9439
        %v9474 = vmul.f32 %v9374, %v9439
        %v9475 = vmul.f32 %v9375, %v9439
        %v9476 = vmul.f32 %v9376, %v9439
        %v9477 = vmul.f32 %v9377, %v9439
        %v9478 = vmul.f32 %v9378, %v9439
        %v9479 = vmul.f32 %v9379, %v9439
        %v9480 = vmul.f32 %v9380, %v9439
        %v9481 = vmul.f32 %v9381, %v9439
        %v9482 = vmul.f32 %v9382, %v9439
        %v9483 = vmul.f32 %v9383, %v9439
        %v9484 = vmul.f32 %v9384, %v9439
        %v9485 = vmul.f32 %v9385, %v9439
        %v9486 = vmul.f32 %v9386, %v9439
        %v9487 = vmul.f32 %v9387, %v9439
        %v9488 = vmul.f32 %v9388, %v9439
        %v9489 = vmul.f32 %v9389, %v9439
        %v9490 = vmul.f32 %v9390, %v9439
        %v9491 = vmul.f32 %v9391, %v9439
        %v9492 = vmul.f32 %v9392, %v9439
        %v9493 = vmul.f32 %v9393, %v9439
        %v9494 = vmul.f32 %v9394, %v9439
        %v9495 = vmul.f32 %v9395, %v9439
        %v9496 = vmul.f32 %v9396, %v9439
        %v9497 = vmul.f32 %v9397, %v9439
        %v9498 = vmul.f32 %v9398, %v9439
        %v9499 = vmul.f32 %v9399, %v9439
        %v9500 = vmul.f32 %v9400, %v9439
        %v9501 = vmul.f32 %v9401, %v9439
        %v9502 = vmul.f32 %v9402, %v9439
        %v9503 = vmul.f32 %v9403, %v9439
        %v9504 = vmul.f32 %v9404, %v9439
        %v9505 = vmul.f32 %v9405, %v9439
        %v9506 = vmul.f32 %v9406, %v9439
        %v9507 = vmul.f32 %v9407, %v9439
        %v9508 = vmul.f32 %v9408, %v9439
        %v9509 = vmul.f32 %v9409, %v9439
        %v9510 = vmul.f32 %v9410, %v9439
        %v9511 = vmul.f32 %v9411, %v9439
        %v9512 = vmul.f32 %v9412, %v9439
        %v9513 = vmul.f32 %v9413, %v9439
        %v9514 = vmul.f32 %v9414, %v9439
        %v9515 = vmul.f32 %v9415, %v9439
        %v9516 = vmul.f32 %v9416, %v9439
        %v9517 = vmul.f32 %v9417, %v9439
        %v9518 = vmul.f32 %v9418, %v9439
        %v9519 = vmul.f32 %v9419, %v9439
        %v9520 = vmul.f32 %v9420, %v9439
        %v9521 = vmul.f32 %v9421, %v9439
        %v9522 = vmul.f32 %v9422, %v9439
        %v9523 = vmul.f32 %v9423, %v9439
        %v9524 = vmul.f32 %v9424, %v9439
        %v9525 = vmul.f32 %v9425, %v9439
        %v9526 = vmul.f32 %v9426, %v9439
        %v9527 = vmul.f32 %v9427, %v9439
        %v9528 = vmul.f32 %v9428, %v9439
        %v9529 = vmul.f32 %v9429, %v9439
        %v9530 = vmul.f32 %v9430, %v9439
        %v9531 = vmul.f32 %v9431, %v9439
        %v9532 = vmul.f32 %v9432, %v9439
        %v9533 = vmul.f32 %v9433, %v9439
        %v9534 = vmul.f32 %v9434, %v9439
        %v9535 = vmul.f32 %v9435, %v9439
        %v9536 = vsel %vm2170, %v9440, 0.0
        %9537 = vadd.xlane.f32.xlu0 %v9536
        %v9538 = vpop.xlane.xlu0 %9537
        %v9539 = vsel %vm2170, %v9441, 0.0
        %9540 = vadd.xlane.f32.xlu0 %v9539
        %v9541 = vpop.xlane.xlu0 %9540
        %v9542 = vsel %vm2170, %v9442, 0.0
        %9543 = vadd.xlane.f32.xlu0 %v9542
        %v9544 = vpop.xlane.xlu0 %9543
        %v9545 = vsel %vm2170, %v9443, 0.0
        %9546 = vadd.xlane.f32.xlu0 %v9545
        %v9547 = vpop.xlane.xlu0 %9546
        %v9548 = vsel %vm2170, %v9444, 0.0
        %9549 = vadd.xlane.f32.xlu0 %v9548
        %v9550 = vpop.xlane.xlu0 %9549
        %v9551 = vsel %vm2170, %v9445, 0.0
        %9552 = vadd.xlane.f32.xlu0 %v9551
        %v9553 = vpop.xlane.xlu0 %9552
        %v9554 = vsel %vm2170, %v9446, 0.0
        %9555 = vadd.xlane.f32.xlu0 %v9554
        %v9556 = vpop.xlane.xlu0 %9555
        %v9557 = vsel %vm2170, %v9447, 0.0
        %9558 = vadd.xlane.f32.xlu0 %v9557
        %v9559 = vpop.xlane.xlu0 %9558
        %v9560 = vsel %vm2170, %v9448, 0.0
        %9561 = vadd.xlane.f32.xlu0 %v9560
        %v9562 = vpop.xlane.xlu0 %9561
        %v9563 = vsel %vm2170, %v9449, 0.0
        %9564 = vadd.xlane.f32.xlu0 %v9563
        %v9565 = vpop.xlane.xlu0 %9564
        %v9566 = vsel %vm2170, %v9450, 0.0
        %9567 = vadd.xlane.f32.xlu0 %v9566
        %v9568 = vpop.xlane.xlu0 %9567
        %v9569 = vsel %vm2170, %v9451, 0.0
        %9570 = vadd.xlane.f32.xlu0 %v9569
        %v9571 = vpop.xlane.xlu0 %9570
        %v9572 = vsel %vm2170, %v9452, 0.0
        %9573 = vadd.xlane.f32.xlu0 %v9572
        %v9574 = vpop.xlane.xlu0 %9573
        %v9575 = vsel %vm2170, %v9453, 0.0
        %9576 = vadd.xlane.f32.xlu0 %v9575
        %v9577 = vpop.xlane.xlu0 %9576
        %v9578 = vsel %vm2170, %v9454, 0.0
        %9579 = vadd.xlane.f32.xlu0 %v9578
        %v9580 = vpop.xlane.xlu0 %9579
        %v9581 = vsel %vm2170, %v9455, 0.0
        %9582 = vadd.xlane.f32.xlu0 %v9581
        %v9583 = vpop.xlane.xlu0 %9582
        %v9584 = vsel %vm2170, %v9456, 0.0
        %9585 = vadd.xlane.f32.xlu0 %v9584
        %v9586 = vpop.xlane.xlu0 %9585
        %v9587 = vsel %vm2170, %v9457, 0.0
        %9588 = vadd.xlane.f32.xlu0 %v9587
        %v9589 = vpop.xlane.xlu0 %9588
        %v9590 = vsel %vm2170, %v9458, 0.0
        %9591 = vadd.xlane.f32.xlu0 %v9590
        %v9592 = vpop.xlane.xlu0 %9591
        %v9593 = vsel %vm2170, %v9459, 0.0
        %9594 = vadd.xlane.f32.xlu0 %v9593
        %v9595 = vpop.xlane.xlu0 %9594
        %v9596 = vsel %vm2170, %v9460, 0.0
        %9597 = vadd.xlane.f32.xlu0 %v9596
        %v9598 = vpop.xlane.xlu0 %9597
        %v9599 = vsel %vm2170, %v9461, 0.0
        %9600 = vadd.xlane.f32.xlu0 %v9599
        %v9601 = vpop.xlane.xlu0 %9600
        %v9602 = vsel %vm2170, %v9462, 0.0
        %9603 = vadd.xlane.f32.xlu0 %v9602
        %v9604 = vpop.xlane.xlu0 %9603
        %v9605 = vsel %vm2170, %v9463, 0.0
        %9606 = vadd.xlane.f32.xlu0 %v9605
        %v9607 = vpop.xlane.xlu0 %9606
        %v9608 = vsel %vm2170, %v9464, 0.0
        %9609 = vadd.xlane.f32.xlu0 %v9608
        %v9610 = vpop.xlane.xlu0 %9609
        %v9611 = vsel %vm2170, %v9465, 0.0
        %9612 = vadd.xlane.f32.xlu0 %v9611
        %v9613 = vpop.xlane.xlu0 %9612
        %v9614 = vsel %vm2170, %v9466, 0.0
        %9615 = vadd.xlane.f32.xlu0 %v9614
        %v9616 = vpop.xlane.xlu0 %9615
        %v9617 = vsel %vm2170, %v9467, 0.0
        %9618 = vadd.xlane.f32.xlu0 %v9617
        %v9619 = vpop.xlane.xlu0 %9618
        %v9620 = vsel %vm2170, %v9468, 0.0
        %9621 = vadd.xlane.f32.xlu0 %v9620
        %v9622 = vpop.xlane.xlu0 %9621
        %v9623 = vsel %vm2170, %v9469, 0.0
        %9624 = vadd.xlane.f32.xlu0 %v9623
        %v9625 = vpop.xlane.xlu0 %9624
        %v9626 = vsel %vm2170, %v9470, 0.0
        %9627 = vadd.xlane.f32.xlu0 %v9626
        %v9628 = vpop.xlane.xlu0 %9627
        %v9629 = vsel %vm2170, %v9471, 0.0
        %9630 = vadd.xlane.f32.xlu0 %v9629
        %v9631 = vpop.xlane.xlu0 %9630
        %v9632 = vsel %vm2170, %v9472, 0.0
        %9633 = vadd.xlane.f32.xlu0 %v9632
        %v9634 = vpop.xlane.xlu0 %9633
        %v9635 = vsel %vm2170, %v9473, 0.0
        %9636 = vadd.xlane.f32.xlu0 %v9635
        %v9637 = vpop.xlane.xlu0 %9636
        %v9638 = vsel %vm2170, %v9474, 0.0
        %9639 = vadd.xlane.f32.xlu0 %v9638
        %v9640 = vpop.xlane.xlu0 %9639
        %v9641 = vsel %vm2170, %v9475, 0.0
        %9642 = vadd.xlane.f32.xlu0 %v9641
        %v9643 = vpop.xlane.xlu0 %9642
        %v9644 = vsel %vm2170, %v9476, 0.0
        %9645 = vadd.xlane.f32.xlu0 %v9644
        %v9646 = vpop.xlane.xlu0 %9645
        %v9647 = vsel %vm2170, %v9477, 0.0
        %9648 = vadd.xlane.f32.xlu0 %v9647
        %v9649 = vpop.xlane.xlu0 %9648
        %v9650 = vsel %vm2170, %v9478, 0.0
        %9651 = vadd.xlane.f32.xlu0 %v9650
        %v9652 = vpop.xlane.xlu0 %9651
        %v9653 = vsel %vm2170, %v9479, 0.0
        %9654 = vadd.xlane.f32.xlu0 %v9653
        %v9655 = vpop.xlane.xlu0 %9654
        %v9656 = vsel %vm2170, %v9480, 0.0
        %9657 = vadd.xlane.f32.xlu0 %v9656
        %v9658 = vpop.xlane.xlu0 %9657
        %v9659 = vsel %vm2170, %v9481, 0.0
        %9660 = vadd.xlane.f32.xlu0 %v9659
        %v9661 = vpop.xlane.xlu0 %9660
        %v9662 = vsel %vm2170, %v9482, 0.0
        %9663 = vadd.xlane.f32.xlu0 %v9662
        %v9664 = vpop.xlane.xlu0 %9663
        %v9665 = vsel %vm2170, %v9483, 0.0
        %9666 = vadd.xlane.f32.xlu0 %v9665
        %v9667 = vpop.xlane.xlu0 %9666
        %v9668 = vsel %vm2170, %v9484, 0.0
        %9669 = vadd.xlane.f32.xlu0 %v9668
        %v9670 = vpop.xlane.xlu0 %9669
        %v9671 = vsel %vm2170, %v9485, 0.0
        %9672 = vadd.xlane.f32.xlu0 %v9671
        %v9673 = vpop.xlane.xlu0 %9672
        %v9674 = vsel %vm2170, %v9486, 0.0
        %9675 = vadd.xlane.f32.xlu0 %v9674
        %v9676 = vpop.xlane.xlu0 %9675
        %v9677 = vsel %vm2170, %v9487, 0.0
        %9678 = vadd.xlane.f32.xlu0 %v9677
        %v9679 = vpop.xlane.xlu0 %9678
        %v9680 = vsel %vm2170, %v9488, 0.0
        %9681 = vadd.xlane.f32.xlu0 %v9680
        %v9682 = vpop.xlane.xlu0 %9681
        %v9683 = vsel %vm2170, %v9489, 0.0
        %9684 = vadd.xlane.f32.xlu0 %v9683
        %v9685 = vpop.xlane.xlu0 %9684
        %v9686 = vsel %vm2170, %v9490, 0.0
        %9687 = vadd.xlane.f32.xlu0 %v9686
        %v9688 = vpop.xlane.xlu0 %9687
        %v9689 = vsel %vm2170, %v9491, 0.0
        %9690 = vadd.xlane.f32.xlu0 %v9689
        %v9691 = vpop.xlane.xlu0 %9690
        %v9692 = vsel %vm2170, %v9492, 0.0
        %9693 = vadd.xlane.f32.xlu0 %v9692
        %v9694 = vpop.xlane.xlu0 %9693
        %v9695 = vsel %vm2170, %v9493, 0.0
        %9696 = vadd.xlane.f32.xlu0 %v9695
        %v9697 = vpop.xlane.xlu0 %9696
        %v9698 = vsel %vm2170, %v9494, 0.0
        %9699 = vadd.xlane.f32.xlu0 %v9698
        %v9700 = vpop.xlane.xlu0 %9699
        %v9701 = vsel %vm2170, %v9495, 0.0
        %9702 = vadd.xlane.f32.xlu0 %v9701
        %v9703 = vpop.xlane.xlu0 %9702
        %v9704 = vsel %vm2170, %v9496, 0.0
        %9705 = vadd.xlane.f32.xlu0 %v9704
        %v9706 = vpop.xlane.xlu0 %9705
        %v9707 = vsel %vm2170, %v9497, 0.0
        %9708 = vadd.xlane.f32.xlu0 %v9707
        %v9709 = vpop.xlane.xlu0 %9708
        %v9710 = vsel %vm2170, %v9498, 0.0
        %9711 = vadd.xlane.f32.xlu0 %v9710
        %v9712 = vpop.xlane.xlu0 %9711
        %v9713 = vsel %vm2170, %v9499, 0.0
        %9714 = vadd.xlane.f32.xlu0 %v9713
        %v9715 = vpop.xlane.xlu0 %9714
        %v9716 = vsel %vm2170, %v9500, 0.0
        %9717 = vadd.xlane.f32.xlu0 %v9716
        %v9718 = vpop.xlane.xlu0 %9717
        %v9719 = vsel %vm2170, %v9501, 0.0
        %9720 = vadd.xlane.f32.xlu0 %v9719
        %v9721 = vpop.xlane.xlu0 %9720
        %v9722 = vsel %vm2170, %v9502, 0.0
        %9723 = vadd.xlane.f32.xlu0 %v9722
        %v9724 = vpop.xlane.xlu0 %9723
        %v9725 = vsel %vm2170, %v9503, 0.0
        %9726 = vadd.xlane.f32.xlu0 %v9725
        %v9727 = vpop.xlane.xlu0 %9726
        %v9728 = vsel %vm2170, %v9504, 0.0
        %9729 = vadd.xlane.f32.xlu0 %v9728
        %v9730 = vpop.xlane.xlu0 %9729
        %v9731 = vsel %vm2170, %v9505, 0.0
        %9732 = vadd.xlane.f32.xlu0 %v9731
        %v9733 = vpop.xlane.xlu0 %9732
        %v9734 = vsel %vm2170, %v9506, 0.0
        %9735 = vadd.xlane.f32.xlu0 %v9734
        %v9736 = vpop.xlane.xlu0 %9735
        %v9737 = vsel %vm2170, %v9507, 0.0
        %9738 = vadd.xlane.f32.xlu0 %v9737
        %v9739 = vpop.xlane.xlu0 %9738
        %v9740 = vsel %vm2170, %v9508, 0.0
        %9741 = vadd.xlane.f32.xlu0 %v9740
        %v9742 = vpop.xlane.xlu0 %9741
        %v9743 = vsel %vm2170, %v9509, 0.0
        %9744 = vadd.xlane.f32.xlu0 %v9743
        %v9745 = vpop.xlane.xlu0 %9744
        %v9746 = vsel %vm2170, %v9510, 0.0
        %9747 = vadd.xlane.f32.xlu0 %v9746
        %v9748 = vpop.xlane.xlu0 %9747
        %v9749 = vsel %vm2170, %v9511, 0.0
        %9750 = vadd.xlane.f32.xlu0 %v9749
        %v9751 = vpop.xlane.xlu0 %9750
        %v9752 = vsel %vm2170, %v9512, 0.0
        %9753 = vadd.xlane.f32.xlu0 %v9752
        %v9754 = vpop.xlane.xlu0 %9753
        %v9755 = vsel %vm2170, %v9513, 0.0
        %9756 = vadd.xlane.f32.xlu0 %v9755
        %v9757 = vpop.xlane.xlu0 %9756
        %v9758 = vsel %vm2170, %v9514, 0.0
        %9759 = vadd.xlane.f32.xlu0 %v9758
        %v9760 = vpop.xlane.xlu0 %9759
        %v9761 = vsel %vm2170, %v9515, 0.0
        %9762 = vadd.xlane.f32.xlu0 %v9761
        %v9763 = vpop.xlane.xlu0 %9762
        %v9764 = vsel %vm2170, %v9516, 0.0
        %9765 = vadd.xlane.f32.xlu0 %v9764
        %v9766 = vpop.xlane.xlu0 %9765
        %v9767 = vsel %vm2170, %v9517, 0.0
        %9768 = vadd.xlane.f32.xlu0 %v9767
        %v9769 = vpop.xlane.xlu0 %9768
        %v9770 = vsel %vm2170, %v9518, 0.0
        %9771 = vadd.xlane.f32.xlu0 %v9770
        %v9772 = vpop.xlane.xlu0 %9771
        %v9773 = vsel %vm2170, %v9519, 0.0
        %9774 = vadd.xlane.f32.xlu0 %v9773
        %v9775 = vpop.xlane.xlu0 %9774
        %v9776 = vsel %vm2170, %v9520, 0.0
        %9777 = vadd.xlane.f32.xlu0 %v9776
        %v9778 = vpop.xlane.xlu0 %9777
        %v9779 = vsel %vm2170, %v9521, 0.0
        %9780 = vadd.xlane.f32.xlu0 %v9779
        %v9781 = vpop.xlane.xlu0 %9780
        %v9782 = vsel %vm2170, %v9522, 0.0
        %9783 = vadd.xlane.f32.xlu0 %v9782
        %v9784 = vpop.xlane.xlu0 %9783
        %v9785 = vsel %vm2170, %v9523, 0.0
        %9786 = vadd.xlane.f32.xlu0 %v9785
        %v9787 = vpop.xlane.xlu0 %9786
        %v9788 = vsel %vm2170, %v9524, 0.0
        %9789 = vadd.xlane.f32.xlu0 %v9788
        %v9790 = vpop.xlane.xlu0 %9789
        %v9791 = vsel %vm2170, %v9525, 0.0
        %9792 = vadd.xlane.f32.xlu0 %v9791
        %v9793 = vpop.xlane.xlu0 %9792
        %v9794 = vsel %vm2170, %v9526, 0.0
        %9795 = vadd.xlane.f32.xlu0 %v9794
        %v9796 = vpop.xlane.xlu0 %9795
        %v9797 = vsel %vm2170, %v9527, 0.0
        %9798 = vadd.xlane.f32.xlu0 %v9797
        %v9799 = vpop.xlane.xlu0 %9798
        %v9800 = vsel %vm2170, %v9528, 0.0
        %9801 = vadd.xlane.f32.xlu0 %v9800
        %v9802 = vpop.xlane.xlu0 %9801
        %v9803 = vsel %vm2170, %v9529, 0.0
        %9804 = vadd.xlane.f32.xlu0 %v9803
        %v9805 = vpop.xlane.xlu0 %9804
        %v9806 = vsel %vm2170, %v9530, 0.0
        %9807 = vadd.xlane.f32.xlu0 %v9806
        %v9808 = vpop.xlane.xlu0 %9807
        %v9809 = vsel %vm2170, %v9531, 0.0
        %9810 = vadd.xlane.f32.xlu0 %v9809
        %v9811 = vpop.xlane.xlu0 %9810
        %v9812 = vsel %vm2170, %v9532, 0.0
        %9813 = vadd.xlane.f32.xlu0 %v9812
        %v9814 = vpop.xlane.xlu0 %9813
        %v9815 = vsel %vm2170, %v9533, 0.0
        %9816 = vadd.xlane.f32.xlu0 %v9815
        %v9817 = vpop.xlane.xlu0 %9816
        %v9818 = vsel %vm2170, %v9534, 0.0
        %9819 = vadd.xlane.f32.xlu0 %v9818
        %v9820 = vpop.xlane.xlu0 %9819
        %v9821 = vsel %vm2170, %v9535, 0.0
        %9822 = vadd.xlane.f32.xlu0 %v9821
        %v9823 = vpop.xlane.xlu0 %9822
        %vm9824 = vcmp.lt.s32.totalorder %v759, 16
        %vm9825 = vcmp.lt.s32.totalorder %v4731, 16
        %vm9826 = vcmp.lt.s32.totalorder %v4732, 16
        %v9827 = vsel %vm9824, %v9538, -1e+09
        %v9828 = vsel %vm9825, %v9541, -1e+09
        %v9829 = vsel %vm9826, %v9544, -1e+09
        %v9830 = vsel %vm9824, %v9547, -1e+09
        %v9831 = vsel %vm9825, %v9550, -1e+09
        %v9832 = vsel %vm9826, %v9553, -1e+09
        %v9833 = vsel %vm9824, %v9556, -1e+09
        %v9834 = vsel %vm9825, %v9559, -1e+09
        %v9835 = vsel %vm9826, %v9562, -1e+09
        %v9836 = vsel %vm9824, %v9565, -1e+09
        %v9837 = vsel %vm9825, %v9568, -1e+09
        %v9838 = vsel %vm9826, %v9571, -1e+09
        %v9839 = vsel %vm9824, %v9574, -1e+09
        %v9840 = vsel %vm9825, %v9577, -1e+09
        %v9841 = vsel %vm9826, %v9580, -1e+09
        %v9842 = vsel %vm9824, %v9583, -1e+09
        %v9843 = vsel %vm9825, %v9586, -1e+09
        %v9844 = vsel %vm9826, %v9589, -1e+09
        %v9845 = vsel %vm9824, %v9592, -1e+09
        %v9846 = vsel %vm9825, %v9595, -1e+09
        %v9847 = vsel %vm9826, %v9598, -1e+09
        %v9848 = vsel %vm9824, %v9601, -1e+09
        %v9849 = vsel %vm9825, %v9604, -1e+09
        %v9850 = vsel %vm9826, %v9607, -1e+09
        %v9851 = vsel %vm9824, %v9610, -1e+09
        %v9852 = vsel %vm9825, %v9613, -1e+09
        %v9853 = vsel %vm9826, %v9616, -1e+09
        %v9854 = vsel %vm9824, %v9619, -1e+09
        %v9855 = vsel %vm9825, %v9622, -1e+09
        %v9856 = vsel %vm9826, %v9625, -1e+09
        %v9857 = vsel %vm9824, %v9628, -1e+09
        %v9858 = vsel %vm9825, %v9631, -1e+09
        %v9859 = vsel %vm9826, %v9634, -1e+09
        %v9860 = vsel %vm9824, %v9637, -1e+09
        %v9861 = vsel %vm9825, %v9640, -1e+09
        %v9862 = vsel %vm9826, %v9643, -1e+09
        %v9863 = vsel %vm9824, %v9646, -1e+09
        %v9864 = vsel %vm9825, %v9649, -1e+09
        %v9865 = vsel %vm9826, %v9652, -1e+09
        %v9866 = vsel %vm9824, %v9655, -1e+09
        %v9867 = vsel %vm9825, %v9658, -1e+09
        %v9868 = vsel %vm9826, %v9661, -1e+09
        %v9869 = vsel %vm9824, %v9664, -1e+09
        %v9870 = vsel %vm9825, %v9667, -1e+09
        %v9871 = vsel %vm9826, %v9670, -1e+09
        %v9872 = vsel %vm9824, %v9673, -1e+09
        %v9873 = vsel %vm9825, %v9676, -1e+09
        %v9874 = vsel %vm9826, %v9679, -1e+09
        %v9875 = vsel %vm9824, %v9682, -1e+09
        %v9876 = vsel %vm9825, %v9685, -1e+09
        %v9877 = vsel %vm9826, %v9688, -1e+09
        %v9878 = vsel %vm9824, %v9691, -1e+09
        %v9879 = vsel %vm9825, %v9694, -1e+09
        %v9880 = vsel %vm9826, %v9697, -1e+09
        %v9881 = vsel %vm9824, %v9700, -1e+09
        %v9882 = vsel %vm9825, %v9703, -1e+09
        %v9883 = vsel %vm9826, %v9706, -1e+09
        %v9884 = vsel %vm9824, %v9709, -1e+09
        %v9885 = vsel %vm9825, %v9712, -1e+09
        %v9886 = vsel %vm9826, %v9715, -1e+09
        %v9887 = vsel %vm9824, %v9718, -1e+09
        %v9888 = vsel %vm9825, %v9721, -1e+09
        %v9889 = vsel %vm9826, %v9724, -1e+09
        %v9890 = vsel %vm9824, %v9727, -1e+09
        %v9891 = vsel %vm9825, %v9730, -1e+09
        %v9892 = vsel %vm9826, %v9733, -1e+09
        %v9893 = vsel %vm9824, %v9736, -1e+09
        %v9894 = vsel %vm9825, %v9739, -1e+09
        %v9895 = vsel %vm9826, %v9742, -1e+09
        %v9896 = vsel %vm9824, %v9745, -1e+09
        %v9897 = vsel %vm9825, %v9748, -1e+09
        %v9898 = vsel %vm9826, %v9751, -1e+09
        %v9899 = vsel %vm9824, %v9754, -1e+09
        %v9900 = vsel %vm9825, %v9757, -1e+09
        %v9901 = vsel %vm9826, %v9760, -1e+09
        %v9902 = vsel %vm9824, %v9763, -1e+09
        %v9903 = vsel %vm9825, %v9766, -1e+09
        %v9904 = vsel %vm9826, %v9769, -1e+09
        %v9905 = vsel %vm9824, %v9772, -1e+09
        %v9906 = vsel %vm9825, %v9775, -1e+09
        %v9907 = vsel %vm9826, %v9778, -1e+09
        %v9908 = vsel %vm9824, %v9781, -1e+09
        %v9909 = vsel %vm9825, %v9784, -1e+09
        %v9910 = vsel %vm9826, %v9787, -1e+09
        %v9911 = vsel %vm9824, %v9790, -1e+09
        %v9912 = vsel %vm9825, %v9793, -1e+09
        %v9913 = vsel %vm9826, %v9796, -1e+09
        %v9914 = vsel %vm9824, %v9799, -1e+09
        %v9915 = vsel %vm9825, %v9802, -1e+09
        %v9916 = vsel %vm9826, %v9805, -1e+09
        %v9917 = vsel %vm9824, %v9808, -1e+09
        %v9918 = vsel %vm9825, %v9811, -1e+09
        %v9919 = vsel %vm9826, %v9814, -1e+09
        %v9920 = vsel %vm9824, %v9817, -1e+09
        %v9921 = vsel %vm9825, %v9820, -1e+09
        %v9922 = vsel %vm9826, %v9823, -1e+09
        %v9923 = vmax.f32 %v9827, %v9828
        %v9924 = vmax.f32 %v9923, %v9829
        %v9925 = vrot.slane %v9924, 4
        %v9926 = vmax.f32 %v9924, %v9925
        %v9927 = vrot.slane %v9926, 2
        %v9928 = vmax.f32 %v9926, %v9927
        %v9929 = vrot.slane %v9928, 1
        %v9930 = vmax.f32 %v9928, %v9929
        %v9931 = vmax.f32 %v9830, %v9831
        %v9932 = vmax.f32 %v9931, %v9832
        %v9933 = vrot.slane %v9932, 4
        %v9934 = vmax.f32 %v9932, %v9933
        %v9935 = vrot.slane %v9934, 2
        %v9936 = vmax.f32 %v9934, %v9935
        %v9937 = vrot.slane %v9936, 1
        %v9938 = vmax.f32 %v9936, %v9937
        %v9939 = vmax.f32 %v9833, %v9834
        %v9940 = vmax.f32 %v9939, %v9835
        %v9941 = vrot.slane %v9940, 4
        %v9942 = vmax.f32 %v9940, %v9941
        %v9943 = vrot.slane %v9942, 2
        %v9944 = vmax.f32 %v9942, %v9943
        %v9945 = vrot.slane %v9944, 1
        %v9946 = vmax.f32 %v9944, %v9945
        %v9947 = vmax.f32 %v9836, %v9837
        %v9948 = vmax.f32 %v9947, %v9838
        %v9949 = vrot.slane %v9948, 4
        %v9950 = vmax.f32 %v9948, %v9949
        %v9951 = vrot.slane %v9950, 2
        %v9952 = vmax.f32 %v9950, %v9951
        %v9953 = vrot.slane %v9952, 1
        %v9954 = vmax.f32 %v9952, %v9953
        %v9955 = vmax.f32 %v9839, %v9840
        %v9956 = vmax.f32 %v9955, %v9841
        %v9957 = vrot.slane %v9956, 4
        %v9958 = vmax.f32 %v9956, %v9957
        %v9959 = vrot.slane %v9958, 2
        %v9960 = vmax.f32 %v9958, %v9959
        %v9961 = vrot.slane %v9960, 1
        %v9962 = vmax.f32 %v9960, %v9961
        %v9963 = vmax.f32 %v9842, %v9843
        %v9964 = vmax.f32 %v9963, %v9844
        %v9965 = vrot.slane %v9964, 4
        %v9966 = vmax.f32 %v9964, %v9965
        %v9967 = vrot.slane %v9966, 2
        %v9968 = vmax.f32 %v9966, %v9967
        %v9969 = vrot.slane %v9968, 1
        %v9970 = vmax.f32 %v9968, %v9969
        %v9971 = vmax.f32 %v9845, %v9846
        %v9972 = vmax.f32 %v9971, %v9847
        %v9973 = vrot.slane %v9972, 4
        %v9974 = vmax.f32 %v9972, %v9973
        %v9975 = vrot.slane %v9974, 2
        %v9976 = vmax.f32 %v9974, %v9975
        %v9977 = vrot.slane %v9976, 1
        %v9978 = vmax.f32 %v9976, %v9977
        %v9979 = vmax.f32 %v9848, %v9849
        %v9980 = vmax.f32 %v9979, %v9850
        %v9981 = vrot.slane %v9980, 4
        %v9982 = vmax.f32 %v9980, %v9981
        %v9983 = vrot.slane %v9982, 2
        %v9984 = vmax.f32 %v9982, %v9983
        %v9985 = vrot.slane %v9984, 1
        %v9986 = vmax.f32 %v9984, %v9985
        %v9987 = vmax.f32 %v9851, %v9852
        %v9988 = vmax.f32 %v9987, %v9853
        %v9989 = vrot.slane %v9988, 4
        %v9990 = vmax.f32 %v9988, %v9989
        %v9991 = vrot.slane %v9990, 2
        %v9992 = vmax.f32 %v9990, %v9991
        %v9993 = vrot.slane %v9992, 1
        %v9994 = vmax.f32 %v9992, %v9993
        %v9995 = vmax.f32 %v9854, %v9855
        %v9996 = vmax.f32 %v9995, %v9856
        %v9997 = vrot.slane %v9996, 4
        %v9998 = vmax.f32 %v9996, %v9997
        %v9999 = vrot.slane %v9998, 2
        %v10000 = vmax.f32 %v9998, %v9999
        %v10001 = vrot.slane %v10000, 1
        %v10002 = vmax.f32 %v10000, %v10001
        %v10003 = vmax.f32 %v9857, %v9858
        %v10004 = vmax.f32 %v10003, %v9859
        %v10005 = vrot.slane %v10004, 4
        %v10006 = vmax.f32 %v10004, %v10005
        %v10007 = vrot.slane %v10006, 2
        %v10008 = vmax.f32 %v10006, %v10007
        %v10009 = vrot.slane %v10008, 1
        %v10010 = vmax.f32 %v10008, %v10009
        %v10011 = vmax.f32 %v9860, %v9861
        %v10012 = vmax.f32 %v10011, %v9862
        %v10013 = vrot.slane %v10012, 4
        %v10014 = vmax.f32 %v10012, %v10013
        %v10015 = vrot.slane %v10014, 2
        %v10016 = vmax.f32 %v10014, %v10015
        %v10017 = vrot.slane %v10016, 1
        %v10018 = vmax.f32 %v10016, %v10017
        %v10019 = vmax.f32 %v9863, %v9864
        %v10020 = vmax.f32 %v10019, %v9865
        %v10021 = vrot.slane %v10020, 4
        %v10022 = vmax.f32 %v10020, %v10021
        %v10023 = vrot.slane %v10022, 2
        %v10024 = vmax.f32 %v10022, %v10023
        %v10025 = vrot.slane %v10024, 1
        %v10026 = vmax.f32 %v10024, %v10025
        %v10027 = vmax.f32 %v9866, %v9867
        %v10028 = vmax.f32 %v10027, %v9868
        %v10029 = vrot.slane %v10028, 4
        %v10030 = vmax.f32 %v10028, %v10029
        %v10031 = vrot.slane %v10030, 2
        %v10032 = vmax.f32 %v10030, %v10031
        %v10033 = vrot.slane %v10032, 1
        %v10034 = vmax.f32 %v10032, %v10033
        %v10035 = vmax.f32 %v9869, %v9870
        %v10036 = vmax.f32 %v10035, %v9871
        %v10037 = vrot.slane %v10036, 4
        %v10038 = vmax.f32 %v10036, %v10037
        %v10039 = vrot.slane %v10038, 2
        %v10040 = vmax.f32 %v10038, %v10039
        %v10041 = vrot.slane %v10040, 1
        %v10042 = vmax.f32 %v10040, %v10041
        %v10043 = vmax.f32 %v9872, %v9873
        %v10044 = vmax.f32 %v10043, %v9874
        %v10045 = vrot.slane %v10044, 4
        %v10046 = vmax.f32 %v10044, %v10045
        %v10047 = vrot.slane %v10046, 2
        %v10048 = vmax.f32 %v10046, %v10047
        %v10049 = vrot.slane %v10048, 1
        %v10050 = vmax.f32 %v10048, %v10049
        %v10051 = vmax.f32 %v9875, %v9876
        %v10052 = vmax.f32 %v10051, %v9877
        %v10053 = vrot.slane %v10052, 4
        %v10054 = vmax.f32 %v10052, %v10053
        %v10055 = vrot.slane %v10054, 2
        %v10056 = vmax.f32 %v10054, %v10055
        %v10057 = vrot.slane %v10056, 1
        %v10058 = vmax.f32 %v10056, %v10057
        %v10059 = vmax.f32 %v9878, %v9879
        %v10060 = vmax.f32 %v10059, %v9880
        %v10061 = vrot.slane %v10060, 4
        %v10062 = vmax.f32 %v10060, %v10061
        %v10063 = vrot.slane %v10062, 2
        %v10064 = vmax.f32 %v10062, %v10063
        %v10065 = vrot.slane %v10064, 1
        %v10066 = vmax.f32 %v10064, %v10065
        %v10067 = vmax.f32 %v9881, %v9882
        %v10068 = vmax.f32 %v10067, %v9883
        %v10069 = vrot.slane %v10068, 4
        %v10070 = vmax.f32 %v10068, %v10069
        %v10071 = vrot.slane %v10070, 2
        %v10072 = vmax.f32 %v10070, %v10071
        %v10073 = vrot.slane %v10072, 1
        %v10074 = vmax.f32 %v10072, %v10073
        %v10075 = vmax.f32 %v9884, %v9885
        %v10076 = vmax.f32 %v10075, %v9886
        %v10077 = vrot.slane %v10076, 4
        %v10078 = vmax.f32 %v10076, %v10077
        %v10079 = vrot.slane %v10078, 2
        %v10080 = vmax.f32 %v10078, %v10079
        %v10081 = vrot.slane %v10080, 1
        %v10082 = vmax.f32 %v10080, %v10081
        %v10083 = vmax.f32 %v9887, %v9888
        %v10084 = vmax.f32 %v10083, %v9889
        %v10085 = vrot.slane %v10084, 4
        %v10086 = vmax.f32 %v10084, %v10085
        %v10087 = vrot.slane %v10086, 2
        %v10088 = vmax.f32 %v10086, %v10087
        %v10089 = vrot.slane %v10088, 1
        %v10090 = vmax.f32 %v10088, %v10089
        %v10091 = vmax.f32 %v9890, %v9891
        %v10092 = vmax.f32 %v10091, %v9892
        %v10093 = vrot.slane %v10092, 4
        %v10094 = vmax.f32 %v10092, %v10093
        %v10095 = vrot.slane %v10094, 2
        %v10096 = vmax.f32 %v10094, %v10095
        %v10097 = vrot.slane %v10096, 1
        %v10098 = vmax.f32 %v10096, %v10097
        %v10099 = vmax.f32 %v9893, %v9894
        %v10100 = vmax.f32 %v10099, %v9895
        %v10101 = vrot.slane %v10100, 4
        %v10102 = vmax.f32 %v10100, %v10101
        %v10103 = vrot.slane %v10102, 2
        %v10104 = vmax.f32 %v10102, %v10103
        %v10105 = vrot.slane %v10104, 1
        %v10106 = vmax.f32 %v10104, %v10105
        %v10107 = vmax.f32 %v9896, %v9897
        %v10108 = vmax.f32 %v10107, %v9898
        %v10109 = vrot.slane %v10108, 4
        %v10110 = vmax.f32 %v10108, %v10109
        %v10111 = vrot.slane %v10110, 2
        %v10112 = vmax.f32 %v10110, %v10111
        %v10113 = vrot.slane %v10112, 1
        %v10114 = vmax.f32 %v10112, %v10113
        %v10115 = vmax.f32 %v9899, %v9900
        %v10116 = vmax.f32 %v10115, %v9901
        %v10117 = vrot.slane %v10116, 4
        %v10118 = vmax.f32 %v10116, %v10117
        %v10119 = vrot.slane %v10118, 2
        %v10120 = vmax.f32 %v10118, %v10119
        %v10121 = vrot.slane %v10120, 1
        %v10122 = vmax.f32 %v10120, %v10121
        %v10123 = vmax.f32 %v9902, %v9903
        %v10124 = vmax.f32 %v10123, %v9904
        %v10125 = vrot.slane %v10124, 4
        %v10126 = vmax.f32 %v10124, %v10125
        %v10127 = vrot.slane %v10126, 2
        %v10128 = vmax.f32 %v10126, %v10127
        %v10129 = vrot.slane %v10128, 1
        %v10130 = vmax.f32 %v10128, %v10129
        %v10131 = vmax.f32 %v9905, %v9906
        %v10132 = vmax.f32 %v10131, %v9907
        %v10133 = vrot.slane %v10132, 4
        %v10134 = vmax.f32 %v10132, %v10133
        %v10135 = vrot.slane %v10134, 2
        %v10136 = vmax.f32 %v10134, %v10135
        %v10137 = vrot.slane %v10136, 1
        %v10138 = vmax.f32 %v10136, %v10137
        %v10139 = vmax.f32 %v9908, %v9909
        %v10140 = vmax.f32 %v10139, %v9910
        %v10141 = vrot.slane %v10140, 4
        %v10142 = vmax.f32 %v10140, %v10141
        %v10143 = vrot.slane %v10142, 2
        %v10144 = vmax.f32 %v10142, %v10143
        %v10145 = vrot.slane %v10144, 1
        %v10146 = vmax.f32 %v10144, %v10145
        %v10147 = vmax.f32 %v9911, %v9912
        %v10148 = vmax.f32 %v10147, %v9913
        %v10149 = vrot.slane %v10148, 4
        %v10150 = vmax.f32 %v10148, %v10149
        %v10151 = vrot.slane %v10150, 2
        %v10152 = vmax.f32 %v10150, %v10151
        %v10153 = vrot.slane %v10152, 1
        %v10154 = vmax.f32 %v10152, %v10153
        %v10155 = vmax.f32 %v9914, %v9915
        %v10156 = vmax.f32 %v10155, %v9916
        %v10157 = vrot.slane %v10156, 4
        %v10158 = vmax.f32 %v10156, %v10157
        %v10159 = vrot.slane %v10158, 2
        %v10160 = vmax.f32 %v10158, %v10159
        %v10161 = vrot.slane %v10160, 1
        %v10162 = vmax.f32 %v10160, %v10161
        %v10163 = vmax.f32 %v9917, %v9918
        %v10164 = vmax.f32 %v10163, %v9919
        %v10165 = vrot.slane %v10164, 4
        %v10166 = vmax.f32 %v10164, %v10165
        %v10167 = vrot.slane %v10166, 2
        %v10168 = vmax.f32 %v10166, %v10167
        %v10169 = vrot.slane %v10168, 1
        %v10170 = vmax.f32 %v10168, %v10169
        %v10171 = vmax.f32 %v9920, %v9921
        %v10172 = vmax.f32 %v10171, %v9922
        %v10173 = vrot.slane %v10172, 4
        %v10174 = vmax.f32 %v10172, %v10173
        %v10175 = vrot.slane %v10174, 2
        %v10176 = vmax.f32 %v10174, %v10175
        %v10177 = vrot.slane %v10176, 1
        %v10178 = vmax.f32 %v10176, %v10177
        %v10179 = vsub.f32 %v9827, %v9930
        %v10180 = vsub.f32 %v9828, %v9930
        %v10181 = vsub.f32 %v9829, %v9930
        %v10182 = vsub.f32 %v9830, %v9938
        %v10183 = vsub.f32 %v9831, %v9938
        %v10184 = vsub.f32 %v9832, %v9938
        %v10185 = vsub.f32 %v9833, %v9946
        %v10186 = vsub.f32 %v9834, %v9946
        %v10187 = vsub.f32 %v9835, %v9946
        %v10188 = vsub.f32 %v9836, %v9954
        %v10189 = vsub.f32 %v9837, %v9954
        %v10190 = vsub.f32 %v9838, %v9954
        %v10191 = vsub.f32 %v9839, %v9962
        %v10192 = vsub.f32 %v9840, %v9962
        %v10193 = vsub.f32 %v9841, %v9962
        %v10194 = vsub.f32 %v9842, %v9970
        %v10195 = vsub.f32 %v9843, %v9970
        %v10196 = vsub.f32 %v9844, %v9970
        %v10197 = vsub.f32 %v9845, %v9978
        %v10198 = vsub.f32 %v9846, %v9978
        %v10199 = vsub.f32 %v9847, %v9978
        %v10200 = vsub.f32 %v9848, %v9986
        %v10201 = vsub.f32 %v9849, %v9986
        %v10202 = vsub.f32 %v9850, %v9986
        %v10203 = vsub.f32 %v9851, %v9994
        %v10204 = vsub.f32 %v9852, %v9994
        %v10205 = vsub.f32 %v9853, %v9994
        %v10206 = vsub.f32 %v9854, %v10002
        %v10207 = vsub.f32 %v9855, %v10002
        %v10208 = vsub.f32 %v9856, %v10002
        %v10209 = vsub.f32 %v9857, %v10010
        %v10210 = vsub.f32 %v9858, %v10010
        %v10211 = vsub.f32 %v9859, %v10010
        %v10212 = vsub.f32 %v9860, %v10018
        %v10213 = vsub.f32 %v9861, %v10018
        %v10214 = vsub.f32 %v9862, %v10018
        %v10215 = vsub.f32 %v9863, %v10026
        %v10216 = vsub.f32 %v9864, %v10026
        %v10217 = vsub.f32 %v9865, %v10026
        %v10218 = vsub.f32 %v9866, %v10034
        %v10219 = vsub.f32 %v9867, %v10034
        %v10220 = vsub.f32 %v9868, %v10034
        %v10221 = vsub.f32 %v9869, %v10042
        %v10222 = vsub.f32 %v9870, %v10042
        %v10223 = vsub.f32 %v9871, %v10042
        %v10224 = vsub.f32 %v9872, %v10050
        %v10225 = vsub.f32 %v9873, %v10050
        %v10226 = vsub.f32 %v9874, %v10050
        %v10227 = vsub.f32 %v9875, %v10058
        %v10228 = vsub.f32 %v9876, %v10058
        %v10229 = vsub.f32 %v9877, %v10058
        %v10230 = vsub.f32 %v9878, %v10066
        %v10231 = vsub.f32 %v9879, %v10066
        %v10232 = vsub.f32 %v9880, %v10066
        %v10233 = vsub.f32 %v9881, %v10074
        %v10234 = vsub.f32 %v9882, %v10074
        %v10235 = vsub.f32 %v9883, %v10074
        %v10236 = vsub.f32 %v9884, %v10082
        %v10237 = vsub.f32 %v9885, %v10082
        %v10238 = vsub.f32 %v9886, %v10082
        %v10239 = vsub.f32 %v9887, %v10090
        %v10240 = vsub.f32 %v9888, %v10090
        %v10241 = vsub.f32 %v9889, %v10090
        %v10242 = vsub.f32 %v9890, %v10098
        %v10243 = vsub.f32 %v9891, %v10098
        %v10244 = vsub.f32 %v9892, %v10098
        %v10245 = vsub.f32 %v9893, %v10106
        %v10246 = vsub.f32 %v9894, %v10106
        %v10247 = vsub.f32 %v9895, %v10106
        %v10248 = vsub.f32 %v9896, %v10114
        %v10249 = vsub.f32 %v9897, %v10114
        %v10250 = vsub.f32 %v9898, %v10114
        %v10251 = vsub.f32 %v9899, %v10122
        %v10252 = vsub.f32 %v9900, %v10122
        %v10253 = vsub.f32 %v9901, %v10122
        %v10254 = vsub.f32 %v9902, %v10130
        %v10255 = vsub.f32 %v9903, %v10130
        %v10256 = vsub.f32 %v9904, %v10130
        %v10257 = vsub.f32 %v9905, %v10138
        %v10258 = vsub.f32 %v9906, %v10138
        %v10259 = vsub.f32 %v9907, %v10138
        %v10260 = vsub.f32 %v9908, %v10146
        %v10261 = vsub.f32 %v9909, %v10146
        %v10262 = vsub.f32 %v9910, %v10146
        %v10263 = vsub.f32 %v9911, %v10154
        %v10264 = vsub.f32 %v9912, %v10154
        %v10265 = vsub.f32 %v9913, %v10154
        %v10266 = vsub.f32 %v9914, %v10162
        %v10267 = vsub.f32 %v9915, %v10162
        %v10268 = vsub.f32 %v9916, %v10162
        %v10269 = vsub.f32 %v9917, %v10170
        %v10270 = vsub.f32 %v9918, %v10170
        %v10271 = vsub.f32 %v9919, %v10170
        %v10272 = vsub.f32 %v9920, %v10178
        %v10273 = vsub.f32 %v9921, %v10178
        %v10274 = vsub.f32 %v9922, %v10178
        %v10275 = vmul.f32 %v10179, 1.442695
        %v10276 = vpow.pop %v10275
        %v10277 = vmul.f32 %v10180, 1.442695
        %v10278 = vpow.pop %v10277
        %v10279 = vmul.f32 %v10181, 1.442695
        %v10280 = vpow.pop %v10279
        %v10281 = vmul.f32 %v10182, 1.442695
        %v10282 = vpow.pop %v10281
        %v10283 = vmul.f32 %v10183, 1.442695
        %v10284 = vpow.pop %v10283
        %v10285 = vmul.f32 %v10184, 1.442695
        %v10286 = vpow.pop %v10285
        %v10287 = vmul.f32 %v10185, 1.442695
        %v10288 = vpow.pop %v10287
        %v10289 = vmul.f32 %v10186, 1.442695
        %v10290 = vpow.pop %v10289
        %v10291 = vmul.f32 %v10187, 1.442695
        %v10292 = vpow.pop %v10291
        %v10293 = vmul.f32 %v10188, 1.442695
        %v10294 = vpow.pop %v10293
        %v10295 = vmul.f32 %v10189, 1.442695
        %v10296 = vpow.pop %v10295
        %v10297 = vmul.f32 %v10190, 1.442695
        %v10298 = vpow.pop %v10297
        %v10299 = vmul.f32 %v10191, 1.442695
        %v10300 = vpow.pop %v10299
        %v10301 = vmul.f32 %v10192, 1.442695
        %v10302 = vpow.pop %v10301
        %v10303 = vmul.f32 %v10193, 1.442695
        %v10304 = vpow.pop %v10303
        %v10305 = vmul.f32 %v10194, 1.442695
        %v10306 = vpow.pop %v10305
        %v10307 = vmul.f32 %v10195, 1.442695
        %v10308 = vpow.pop %v10307
        %v10309 = vmul.f32 %v10196, 1.442695
        %v10310 = vpow.pop %v10309
        %v10311 = vmul.f32 %v10197, 1.442695
        %v10312 = vpow.pop %v10311
        %v10313 = vmul.f32 %v10198, 1.442695
        %v10314 = vpow.pop %v10313
        %v10315 = vmul.f32 %v10199, 1.442695
        %v10316 = vpow.pop %v10315
        %v10317 = vmul.f32 %v10200, 1.442695
        %v10318 = vpow.pop %v10317
        %v10319 = vmul.f32 %v10201, 1.442695
        %v10320 = vpow.pop %v10319
        %v10321 = vmul.f32 %v10202, 1.442695
        %v10322 = vpow.pop %v10321
        %v10323 = vmul.f32 %v10203, 1.442695
        %v10324 = vpow.pop %v10323
        %v10325 = vmul.f32 %v10204, 1.442695
        %v10326 = vpow.pop %v10325
        %v10327 = vmul.f32 %v10205, 1.442695
        %v10328 = vpow.pop %v10327
        %v10329 = vmul.f32 %v10206, 1.442695
        %v10330 = vpow.pop %v10329
        %v10331 = vmul.f32 %v10207, 1.442695
        %v10332 = vpow.pop %v10331
        %v10333 = vmul.f32 %v10208, 1.442695
        %v10334 = vpow.pop %v10333
        %v10335 = vmul.f32 %v10209, 1.442695
        %v10336 = vpow.pop %v10335
        %v10337 = vmul.f32 %v10210, 1.442695
        %v10338 = vpow.pop %v10337
        %v10339 = vmul.f32 %v10211, 1.442695
        %v10340 = vpow.pop %v10339
        %v10341 = vmul.f32 %v10212, 1.442695
        %v10342 = vpow.pop %v10341
        %v10343 = vmul.f32 %v10213, 1.442695
        %v10344 = vpow.pop %v10343
        %v10345 = vmul.f32 %v10214, 1.442695
        %v10346 = vpow.pop %v10345
        %v10347 = vmul.f32 %v10215, 1.442695
        %v10348 = vpow.pop %v10347
        %v10349 = vmul.f32 %v10216, 1.442695
        %v10350 = vpow.pop %v10349
        %v10351 = vmul.f32 %v10217, 1.442695
        %v10352 = vpow.pop %v10351
        %v10353 = vmul.f32 %v10218, 1.442695
        %v10354 = vpow.pop %v10353
        %v10355 = vmul.f32 %v10219, 1.442695
        %v10356 = vpow.pop %v10355
        %v10357 = vmul.f32 %v10220, 1.442695
        %v10358 = vpow.pop %v10357
        %v10359 = vmul.f32 %v10221, 1.442695
        %v10360 = vpow.pop %v10359
        %v10361 = vmul.f32 %v10222, 1.442695
        %v10362 = vpow.pop %v10361
        %v10363 = vmul.f32 %v10223, 1.442695
        %v10364 = vpow.pop %v10363
        %v10365 = vmul.f32 %v10224, 1.442695
        %v10366 = vpow.pop %v10365
        %v10367 = vmul.f32 %v10225, 1.442695
        %v10368 = vpow.pop %v10367
        %v10369 = vmul.f32 %v10226, 1.442695
        %v10370 = vpow.pop %v10369
        %v10371 = vmul.f32 %v10227, 1.442695
        %v10372 = vpow.pop %v10371
        %v10373 = vmul.f32 %v10228, 1.442695
        %v10374 = vpow.pop %v10373
        %v10375 = vmul.f32 %v10229, 1.442695
        %v10376 = vpow.pop %v10375
        %v10377 = vmul.f32 %v10230, 1.442695
        %v10378 = vpow.pop %v10377
        %v10379 = vmul.f32 %v10231, 1.442695
        %v10380 = vpow.pop %v10379
        %v10381 = vmul.f32 %v10232, 1.442695
        %v10382 = vpow.pop %v10381
        %v10383 = vmul.f32 %v10233, 1.442695
        %v10384 = vpow.pop %v10383
        %v10385 = vmul.f32 %v10234, 1.442695
        %v10386 = vpow.pop %v10385
        %v10387 = vmul.f32 %v10235, 1.442695
        %v10388 = vpow.pop %v10387
        %v10389 = vmul.f32 %v10236, 1.442695
        %v10390 = vpow.pop %v10389
        %v10391 = vmul.f32 %v10237, 1.442695
        %v10392 = vpow.pop %v10391
        %v10393 = vmul.f32 %v10238, 1.442695
        %v10394 = vpow.pop %v10393
        %v10395 = vmul.f32 %v10239, 1.442695
        %v10396 = vpow.pop %v10395
        %v10397 = vmul.f32 %v10240, 1.442695
        %v10398 = vpow.pop %v10397
        %v10399 = vmul.f32 %v10241, 1.442695
        %v10400 = vpow.pop %v10399
        %v10401 = vmul.f32 %v10242, 1.442695
        %v10402 = vpow.pop %v10401
        %v10403 = vmul.f32 %v10243, 1.442695
        %v10404 = vpow.pop %v10403
        %v10405 = vmul.f32 %v10244, 1.442695
        %v10406 = vpow.pop %v10405
        %v10407 = vmul.f32 %v10245, 1.442695
        %v10408 = vpow.pop %v10407
        %v10409 = vmul.f32 %v10246, 1.442695
        %v10410 = vpow.pop %v10409
        %v10411 = vmul.f32 %v10247, 1.442695
        %v10412 = vpow.pop %v10411
        %v10413 = vmul.f32 %v10248, 1.442695
        %v10414 = vpow.pop %v10413
        %v10415 = vmul.f32 %v10249, 1.442695
        %v10416 = vpow.pop %v10415
        %v10417 = vmul.f32 %v10250, 1.442695
        %v10418 = vpow.pop %v10417
        %v10419 = vmul.f32 %v10251, 1.442695
        %v10420 = vpow.pop %v10419
        %v10421 = vmul.f32 %v10252, 1.442695
        %v10422 = vpow.pop %v10421
        %v10423 = vmul.f32 %v10253, 1.442695
        %v10424 = vpow.pop %v10423
        %v10425 = vmul.f32 %v10254, 1.442695
        %v10426 = vpow.pop %v10425
        %v10427 = vmul.f32 %v10255, 1.442695
        %v10428 = vpow.pop %v10427
        %v10429 = vmul.f32 %v10256, 1.442695
        %v10430 = vpow.pop %v10429
        %v10431 = vmul.f32 %v10257, 1.442695
        %v10432 = vpow.pop %v10431
        %v10433 = vmul.f32 %v10258, 1.442695
        %v10434 = vpow.pop %v10433
        %v10435 = vmul.f32 %v10259, 1.442695
        %v10436 = vpow.pop %v10435
        %v10437 = vmul.f32 %v10260, 1.442695
        %v10438 = vpow.pop %v10437
        %v10439 = vmul.f32 %v10261, 1.442695
        %v10440 = vpow.pop %v10439
        %v10441 = vmul.f32 %v10262, 1.442695
        %v10442 = vpow.pop %v10441
        %v10443 = vmul.f32 %v10263, 1.442695
        %v10444 = vpow.pop %v10443
        %v10445 = vmul.f32 %v10264, 1.442695
        %v10446 = vpow.pop %v10445
        %v10447 = vmul.f32 %v10265, 1.442695
        %v10448 = vpow.pop %v10447
        %v10449 = vmul.f32 %v10266, 1.442695
        %v10450 = vpow.pop %v10449
        %v10451 = vmul.f32 %v10267, 1.442695
        %v10452 = vpow.pop %v10451
        %v10453 = vmul.f32 %v10268, 1.442695
        %v10454 = vpow.pop %v10453
        %v10455 = vmul.f32 %v10269, 1.442695
        %v10456 = vpow.pop %v10455
        %v10457 = vmul.f32 %v10270, 1.442695
        %v10458 = vpow.pop %v10457
        %v10459 = vmul.f32 %v10271, 1.442695
        %v10460 = vpow.pop %v10459
        %v10461 = vmul.f32 %v10272, 1.442695
        %v10462 = vpow.pop %v10461
        %v10463 = vmul.f32 %v10273, 1.442695
        %v10464 = vpow.pop %v10463
        %v10465 = vmul.f32 %v10274, 1.442695
        %v10466 = vpow.pop %v10465
        %v10467 = vadd.f32 %v10276, %v10278
        %v10468 = vadd.f32 %v10467, %v10280
        %v10469 = vrot.slane %v10468, 4
        %v10470 = vadd.f32 %v10468, %v10469
        %v10471 = vrot.slane %v10470, 2
        %v10472 = vadd.f32 %v10470, %v10471
        %v10473 = vrot.slane %v10472, 1
        %v10474 = vadd.f32 %v10472, %v10473
        %v10475 = vadd.f32 %v10282, %v10284
        %v10476 = vadd.f32 %v10475, %v10286
        %v10477 = vrot.slane %v10476, 4
        %v10478 = vadd.f32 %v10476, %v10477
        %v10479 = vrot.slane %v10478, 2
        %v10480 = vadd.f32 %v10478, %v10479
        %v10481 = vrot.slane %v10480, 1
        %v10482 = vadd.f32 %v10480, %v10481
        %v10483 = vadd.f32 %v10288, %v10290
        %v10484 = vadd.f32 %v10483, %v10292
        %v10485 = vrot.slane %v10484, 4
        %v10486 = vadd.f32 %v10484, %v10485
        %v10487 = vrot.slane %v10486, 2
        %v10488 = vadd.f32 %v10486, %v10487
        %v10489 = vrot.slane %v10488, 1
        %v10490 = vadd.f32 %v10488, %v10489
        %v10491 = vadd.f32 %v10294, %v10296
        %v10492 = vadd.f32 %v10491, %v10298
        %v10493 = vrot.slane %v10492, 4
        %v10494 = vadd.f32 %v10492, %v10493
        %v10495 = vrot.slane %v10494, 2
        %v10496 = vadd.f32 %v10494, %v10495
        %v10497 = vrot.slane %v10496, 1
        %v10498 = vadd.f32 %v10496, %v10497
        %v10499 = vadd.f32 %v10300, %v10302
        %v10500 = vadd.f32 %v10499, %v10304
        %v10501 = vrot.slane %v10500, 4
        %v10502 = vadd.f32 %v10500, %v10501
        %v10503 = vrot.slane %v10502, 2
        %v10504 = vadd.f32 %v10502, %v10503
        %v10505 = vrot.slane %v10504, 1
        %v10506 = vadd.f32 %v10504, %v10505
        %v10507 = vadd.f32 %v10306, %v10308
        %v10508 = vadd.f32 %v10507, %v10310
        %v10509 = vrot.slane %v10508, 4
        %v10510 = vadd.f32 %v10508, %v10509
        %v10511 = vrot.slane %v10510, 2
        %v10512 = vadd.f32 %v10510, %v10511
        %v10513 = vrot.slane %v10512, 1
        %v10514 = vadd.f32 %v10512, %v10513
        %v10515 = vadd.f32 %v10312, %v10314
        %v10516 = vadd.f32 %v10515, %v10316
        %v10517 = vrot.slane %v10516, 4
        %v10518 = vadd.f32 %v10516, %v10517
        %v10519 = vrot.slane %v10518, 2
        %v10520 = vadd.f32 %v10518, %v10519
        %v10521 = vrot.slane %v10520, 1
        %v10522 = vadd.f32 %v10520, %v10521
        %v10523 = vadd.f32 %v10318, %v10320
        %v10524 = vadd.f32 %v10523, %v10322
        %v10525 = vrot.slane %v10524, 4
        %v10526 = vadd.f32 %v10524, %v10525
        %v10527 = vrot.slane %v10526, 2
        %v10528 = vadd.f32 %v10526, %v10527
        %v10529 = vrot.slane %v10528, 1
        %v10530 = vadd.f32 %v10528, %v10529
        %v10531 = vadd.f32 %v10324, %v10326
        %v10532 = vadd.f32 %v10531, %v10328
        %v10533 = vrot.slane %v10532, 4
        %v10534 = vadd.f32 %v10532, %v10533
        %v10535 = vrot.slane %v10534, 2
        %v10536 = vadd.f32 %v10534, %v10535
        %v10537 = vrot.slane %v10536, 1
        %v10538 = vadd.f32 %v10536, %v10537
        %v10539 = vadd.f32 %v10330, %v10332
        %v10540 = vadd.f32 %v10539, %v10334
        %v10541 = vrot.slane %v10540, 4
        %v10542 = vadd.f32 %v10540, %v10541
        %v10543 = vrot.slane %v10542, 2
        %v10544 = vadd.f32 %v10542, %v10543
        %v10545 = vrot.slane %v10544, 1
        %v10546 = vadd.f32 %v10544, %v10545
        %v10547 = vadd.f32 %v10336, %v10338
        %v10548 = vadd.f32 %v10547, %v10340
        %v10549 = vrot.slane %v10548, 4
        %v10550 = vadd.f32 %v10548, %v10549
        %v10551 = vrot.slane %v10550, 2
        %v10552 = vadd.f32 %v10550, %v10551
        %v10553 = vrot.slane %v10552, 1
        %v10554 = vadd.f32 %v10552, %v10553
        %v10555 = vadd.f32 %v10342, %v10344
        %v10556 = vadd.f32 %v10555, %v10346
        %v10557 = vrot.slane %v10556, 4
        %v10558 = vadd.f32 %v10556, %v10557
        %v10559 = vrot.slane %v10558, 2
        %v10560 = vadd.f32 %v10558, %v10559
        %v10561 = vrot.slane %v10560, 1
        %v10562 = vadd.f32 %v10560, %v10561
        %v10563 = vadd.f32 %v10348, %v10350
        %v10564 = vadd.f32 %v10563, %v10352
        %v10565 = vrot.slane %v10564, 4
        %v10566 = vadd.f32 %v10564, %v10565
        %v10567 = vrot.slane %v10566, 2
        %v10568 = vadd.f32 %v10566, %v10567
        %v10569 = vrot.slane %v10568, 1
        %v10570 = vadd.f32 %v10568, %v10569
        %v10571 = vadd.f32 %v10354, %v10356
        %v10572 = vadd.f32 %v10571, %v10358
        %v10573 = vrot.slane %v10572, 4
        %v10574 = vadd.f32 %v10572, %v10573
        %v10575 = vrot.slane %v10574, 2
        %v10576 = vadd.f32 %v10574, %v10575
        %v10577 = vrot.slane %v10576, 1
        %v10578 = vadd.f32 %v10576, %v10577
        %v10579 = vadd.f32 %v10360, %v10362
        %v10580 = vadd.f32 %v10579, %v10364
        %v10581 = vrot.slane %v10580, 4
        %v10582 = vadd.f32 %v10580, %v10581
        %v10583 = vrot.slane %v10582, 2
        %v10584 = vadd.f32 %v10582, %v10583
        %v10585 = vrot.slane %v10584, 1
        %v10586 = vadd.f32 %v10584, %v10585
        %v10587 = vadd.f32 %v10366, %v10368
        %v10588 = vadd.f32 %v10587, %v10370
        %v10589 = vrot.slane %v10588, 4
        %v10590 = vadd.f32 %v10588, %v10589
        %v10591 = vrot.slane %v10590, 2
        %v10592 = vadd.f32 %v10590, %v10591
        %v10593 = vrot.slane %v10592, 1
        %v10594 = vadd.f32 %v10592, %v10593
        %v10595 = vadd.f32 %v10372, %v10374
        %v10596 = vadd.f32 %v10595, %v10376
        %v10597 = vrot.slane %v10596, 4
        %v10598 = vadd.f32 %v10596, %v10597
        %v10599 = vrot.slane %v10598, 2
        %v10600 = vadd.f32 %v10598, %v10599
        %v10601 = vrot.slane %v10600, 1
        %v10602 = vadd.f32 %v10600, %v10601
        %v10603 = vadd.f32 %v10378, %v10380
        %v10604 = vadd.f32 %v10603, %v10382
        %v10605 = vrot.slane %v10604, 4
        %v10606 = vadd.f32 %v10604, %v10605
        %v10607 = vrot.slane %v10606, 2
        %v10608 = vadd.f32 %v10606, %v10607
        %v10609 = vrot.slane %v10608, 1
        %v10610 = vadd.f32 %v10608, %v10609
        %v10611 = vadd.f32 %v10384, %v10386
        %v10612 = vadd.f32 %v10611, %v10388
        %v10613 = vrot.slane %v10612, 4
        %v10614 = vadd.f32 %v10612, %v10613
        %v10615 = vrot.slane %v10614, 2
        %v10616 = vadd.f32 %v10614, %v10615
        %v10617 = vrot.slane %v10616, 1
        %v10618 = vadd.f32 %v10616, %v10617
        %v10619 = vadd.f32 %v10390, %v10392
        %v10620 = vadd.f32 %v10619, %v10394
        %v10621 = vrot.slane %v10620, 4
        %v10622 = vadd.f32 %v10620, %v10621
        %v10623 = vrot.slane %v10622, 2
        %v10624 = vadd.f32 %v10622, %v10623
        %v10625 = vrot.slane %v10624, 1
        %v10626 = vadd.f32 %v10624, %v10625
        %v10627 = vadd.f32 %v10396, %v10398
        %v10628 = vadd.f32 %v10627, %v10400
        %v10629 = vrot.slane %v10628, 4
        %v10630 = vadd.f32 %v10628, %v10629
        %v10631 = vrot.slane %v10630, 2
        %v10632 = vadd.f32 %v10630, %v10631
        %v10633 = vrot.slane %v10632, 1
        %v10634 = vadd.f32 %v10632, %v10633
        %v10635 = vadd.f32 %v10402, %v10404
        %v10636 = vadd.f32 %v10635, %v10406
        %v10637 = vrot.slane %v10636, 4
        %v10638 = vadd.f32 %v10636, %v10637
        %v10639 = vrot.slane %v10638, 2
        %v10640 = vadd.f32 %v10638, %v10639
        %v10641 = vrot.slane %v10640, 1
        %v10642 = vadd.f32 %v10640, %v10641
        %v10643 = vadd.f32 %v10408, %v10410
        %v10644 = vadd.f32 %v10643, %v10412
        %v10645 = vrot.slane %v10644, 4
        %v10646 = vadd.f32 %v10644, %v10645
        %v10647 = vrot.slane %v10646, 2
        %v10648 = vadd.f32 %v10646, %v10647
        %v10649 = vrot.slane %v10648, 1
        %v10650 = vadd.f32 %v10648, %v10649
        %v10651 = vadd.f32 %v10414, %v10416
        %v10652 = vadd.f32 %v10651, %v10418
        %v10653 = vrot.slane %v10652, 4
        %v10654 = vadd.f32 %v10652, %v10653
        %v10655 = vrot.slane %v10654, 2
        %v10656 = vadd.f32 %v10654, %v10655
        %v10657 = vrot.slane %v10656, 1
        %v10658 = vadd.f32 %v10656, %v10657
        %v10659 = vadd.f32 %v10420, %v10422
        %v10660 = vadd.f32 %v10659, %v10424
        %v10661 = vrot.slane %v10660, 4
        %v10662 = vadd.f32 %v10660, %v10661
        %v10663 = vrot.slane %v10662, 2
        %v10664 = vadd.f32 %v10662, %v10663
        %v10665 = vrot.slane %v10664, 1
        %v10666 = vadd.f32 %v10664, %v10665
        %v10667 = vadd.f32 %v10426, %v10428
        %v10668 = vadd.f32 %v10667, %v10430
        %v10669 = vrot.slane %v10668, 4
        %v10670 = vadd.f32 %v10668, %v10669
        %v10671 = vrot.slane %v10670, 2
        %v10672 = vadd.f32 %v10670, %v10671
        %v10673 = vrot.slane %v10672, 1
        %v10674 = vadd.f32 %v10672, %v10673
        %v10675 = vadd.f32 %v10432, %v10434
        %v10676 = vadd.f32 %v10675, %v10436
        %v10677 = vrot.slane %v10676, 4
        %v10678 = vadd.f32 %v10676, %v10677
        %v10679 = vrot.slane %v10678, 2
        %v10680 = vadd.f32 %v10678, %v10679
        %v10681 = vrot.slane %v10680, 1
        %v10682 = vadd.f32 %v10680, %v10681
        %v10683 = vadd.f32 %v10438, %v10440
        %v10684 = vadd.f32 %v10683, %v10442
        %v10685 = vrot.slane %v10684, 4
        %v10686 = vadd.f32 %v10684, %v10685
        %v10687 = vrot.slane %v10686, 2
        %v10688 = vadd.f32 %v10686, %v10687
        %v10689 = vrot.slane %v10688, 1
        %v10690 = vadd.f32 %v10688, %v10689
        %v10691 = vadd.f32 %v10444, %v10446
        %v10692 = vadd.f32 %v10691, %v10448
        %v10693 = vrot.slane %v10692, 4
        %v10694 = vadd.f32 %v10692, %v10693
        %v10695 = vrot.slane %v10694, 2
        %v10696 = vadd.f32 %v10694, %v10695
        %v10697 = vrot.slane %v10696, 1
        %v10698 = vadd.f32 %v10696, %v10697
        %v10699 = vadd.f32 %v10450, %v10452
        %v10700 = vadd.f32 %v10699, %v10454
        %v10701 = vrot.slane %v10700, 4
        %v10702 = vadd.f32 %v10700, %v10701
        %v10703 = vrot.slane %v10702, 2
        %v10704 = vadd.f32 %v10702, %v10703
        %v10705 = vrot.slane %v10704, 1
        %v10706 = vadd.f32 %v10704, %v10705
        %v10707 = vadd.f32 %v10456, %v10458
        %v10708 = vadd.f32 %v10707, %v10460
        %v10709 = vrot.slane %v10708, 4
        %v10710 = vadd.f32 %v10708, %v10709
        %v10711 = vrot.slane %v10710, 2
        %v10712 = vadd.f32 %v10710, %v10711
        %v10713 = vrot.slane %v10712, 1
        %v10714 = vadd.f32 %v10712, %v10713
        %v10715 = vadd.f32 %v10462, %v10464
        %v10716 = vadd.f32 %v10715, %v10466
        %v10717 = vrot.slane %v10716, 4
        %v10718 = vadd.f32 %v10716, %v10717
        %v10719 = vrot.slane %v10718, 2
        %v10720 = vadd.f32 %v10718, %v10719
        %v10721 = vrot.slane %v10720, 1
        %v10722 = vadd.f32 %v10720, %v10721
        %v10723 = vrcp.pop %v10474
        %v10724 = vrcp.pop %v10482
        %v10725 = vrcp.pop %v10490
        %v10726 = vrcp.pop %v10498
        %v10727 = vrcp.pop %v10506
        %v10728 = vrcp.pop %v10514
        %v10729 = vrcp.pop %v10522
        %v10730 = vrcp.pop %v10530
        %v10731 = vrcp.pop %v10538
        %v10732 = vrcp.pop %v10546
        %v10733 = vrcp.pop %v10554
        %v10734 = vrcp.pop %v10562
        %v10735 = vrcp.pop %v10570
        %v10736 = vrcp.pop %v10578
        %v10737 = vrcp.pop %v10586
        %v10738 = vrcp.pop %v10594
        %v10739 = vrcp.pop %v10602
        %v10740 = vrcp.pop %v10610
        %v10741 = vrcp.pop %v10618
        %v10742 = vrcp.pop %v10626
        %v10743 = vrcp.pop %v10634
        %v10744 = vrcp.pop %v10642
        %v10745 = vrcp.pop %v10650
        %v10746 = vrcp.pop %v10658
        %v10747 = vrcp.pop %v10666
        %v10748 = vrcp.pop %v10674
        %v10749 = vrcp.pop %v10682
        %v10750 = vrcp.pop %v10690
        %v10751 = vrcp.pop %v10698
        %v10752 = vrcp.pop %v10706
        %v10753 = vrcp.pop %v10714
        %v10754 = vrcp.pop %v10722
        %v10755 = vmul.f32 %v10276, %v10723
        %v10756 = vmul.f32 %v10278, %v10723
        %v10757 = vmul.f32 %v10280, %v10723
        %v10758 = vmul.f32 %v10282, %v10724
        %v10759 = vmul.f32 %v10284, %v10724
        %v10760 = vmul.f32 %v10286, %v10724
        %v10761 = vmul.f32 %v10288, %v10725
        %v10762 = vmul.f32 %v10290, %v10725
        %v10763 = vmul.f32 %v10292, %v10725
        %v10764 = vmul.f32 %v10294, %v10726
        %v10765 = vmul.f32 %v10296, %v10726
        %v10766 = vmul.f32 %v10298, %v10726
        %v10767 = vmul.f32 %v10300, %v10727
        %v10768 = vmul.f32 %v10302, %v10727
        %v10769 = vmul.f32 %v10304, %v10727
        %v10770 = vmul.f32 %v10306, %v10728
        %v10771 = vmul.f32 %v10308, %v10728
        %v10772 = vmul.f32 %v10310, %v10728
        %v10773 = vmul.f32 %v10312, %v10729
        %v10774 = vmul.f32 %v10314, %v10729
        %v10775 = vmul.f32 %v10316, %v10729
        %v10776 = vmul.f32 %v10318, %v10730
        %v10777 = vmul.f32 %v10320, %v10730
        %v10778 = vmul.f32 %v10322, %v10730
        %v10779 = vmul.f32 %v10324, %v10731
        %v10780 = vmul.f32 %v10326, %v10731
        %v10781 = vmul.f32 %v10328, %v10731
        %v10782 = vmul.f32 %v10330, %v10732
        %v10783 = vmul.f32 %v10332, %v10732
        %v10784 = vmul.f32 %v10334, %v10732
        %v10785 = vmul.f32 %v10336, %v10733
        %v10786 = vmul.f32 %v10338, %v10733
        %v10787 = vmul.f32 %v10340, %v10733
        %v10788 = vmul.f32 %v10342, %v10734
        %v10789 = vmul.f32 %v10344, %v10734
        %v10790 = vmul.f32 %v10346, %v10734
        %v10791 = vmul.f32 %v10348, %v10735
        %v10792 = vmul.f32 %v10350, %v10735
        %v10793 = vmul.f32 %v10352, %v10735
        %v10794 = vmul.f32 %v10354, %v10736
        %v10795 = vmul.f32 %v10356, %v10736
        %v10796 = vmul.f32 %v10358, %v10736
        %v10797 = vmul.f32 %v10360, %v10737
        %v10798 = vmul.f32 %v10362, %v10737
        %v10799 = vmul.f32 %v10364, %v10737
        %v10800 = vmul.f32 %v10366, %v10738
        %v10801 = vmul.f32 %v10368, %v10738
        %v10802 = vmul.f32 %v10370, %v10738
        %v10803 = vmul.f32 %v10372, %v10739
        %v10804 = vmul.f32 %v10374, %v10739
        %v10805 = vmul.f32 %v10376, %v10739
        %v10806 = vmul.f32 %v10378, %v10740
        %v10807 = vmul.f32 %v10380, %v10740
        %v10808 = vmul.f32 %v10382, %v10740
        %v10809 = vmul.f32 %v10384, %v10741
        %v10810 = vmul.f32 %v10386, %v10741
        %v10811 = vmul.f32 %v10388, %v10741
        %v10812 = vmul.f32 %v10390, %v10742
        %v10813 = vmul.f32 %v10392, %v10742
        %v10814 = vmul.f32 %v10394, %v10742
        %v10815 = vmul.f32 %v10396, %v10743
        %v10816 = vmul.f32 %v10398, %v10743
        %v10817 = vmul.f32 %v10400, %v10743
        %v10818 = vmul.f32 %v10402, %v10744
        %v10819 = vmul.f32 %v10404, %v10744
        %v10820 = vmul.f32 %v10406, %v10744
        %v10821 = vmul.f32 %v10408, %v10745
        %v10822 = vmul.f32 %v10410, %v10745
        %v10823 = vmul.f32 %v10412, %v10745
        %v10824 = vmul.f32 %v10414, %v10746
        %v10825 = vmul.f32 %v10416, %v10746
        %v10826 = vmul.f32 %v10418, %v10746
        %v10827 = vmul.f32 %v10420, %v10747
        %v10828 = vmul.f32 %v10422, %v10747
        %v10829 = vmul.f32 %v10424, %v10747
        %v10830 = vmul.f32 %v10426, %v10748
        %v10831 = vmul.f32 %v10428, %v10748
        %v10832 = vmul.f32 %v10430, %v10748
        %v10833 = vmul.f32 %v10432, %v10749
        %v10834 = vmul.f32 %v10434, %v10749
        %v10835 = vmul.f32 %v10436, %v10749
        %v10836 = vmul.f32 %v10438, %v10750
        %v10837 = vmul.f32 %v10440, %v10750
        %v10838 = vmul.f32 %v10442, %v10750
        %v10839 = vmul.f32 %v10444, %v10751
        %v10840 = vmul.f32 %v10446, %v10751
        %v10841 = vmul.f32 %v10448, %v10751
        %v10842 = vmul.f32 %v10450, %v10752
        %v10843 = vmul.f32 %v10452, %v10752
        %v10844 = vmul.f32 %v10454, %v10752
        %v10845 = vmul.f32 %v10456, %v10753
        %v10846 = vmul.f32 %v10458, %v10753
        %v10847 = vmul.f32 %v10460, %v10753
        %v10848 = vmul.f32 %v10462, %v10754
        %v10849 = vmul.f32 %v10464, %v10754
        %v10850 = vmul.f32 %v10466, %v10754
        %v10851 = vmul.f32 %v10755, %v8333
        %v10852 = vmul.f32 %v10756, %v8336
        %v10853 = vmul.f32 %v10757, %v8341
        %v10854 = vmul.f32 %v10758, %v8344
        %v10855 = vmul.f32 %v10759, %v8349
        %v10856 = vmul.f32 %v10760, %v8352
        %v10857 = vmul.f32 %v10761, %v8357
        %v10858 = vmul.f32 %v10762, %v8360
        %v10859 = vmul.f32 %v10763, %v8365
        %v10860 = vmul.f32 %v10764, %v8368
        %v10861 = vmul.f32 %v10765, %v8373
        %v10862 = vmul.f32 %v10766, %v8376
        %v10863 = vmul.f32 %v10767, %v8381
        %v10864 = vmul.f32 %v10768, %v8384
        %v10865 = vmul.f32 %v10769, %v8389
        %v10866 = vmul.f32 %v10770, %v8392
        %v10867 = vmul.f32 %v10771, %v8397
        %v10868 = vmul.f32 %v10772, %v8400
        %v10869 = vmul.f32 %v10773, %v8405
        %v10870 = vmul.f32 %v10774, %v8408
        %v10871 = vmul.f32 %v10775, %v8413
        %v10872 = vmul.f32 %v10776, %v8416
        %v10873 = vmul.f32 %v10777, %v8421
        %v10874 = vmul.f32 %v10778, %v8424
        %v10875 = vmul.f32 %v10779, %v8429
        %v10876 = vmul.f32 %v10780, %v8432
        %v10877 = vmul.f32 %v10781, %v8437
        %v10878 = vmul.f32 %v10782, %v8440
        %v10879 = vmul.f32 %v10783, %v8445
        %v10880 = vmul.f32 %v10784, %v8448
        %v10881 = vmul.f32 %v10785, %v8453
        %v10882 = vmul.f32 %v10786, %v8456
        %v10883 = vmul.f32 %v10787, %v8461
        %v10884 = vmul.f32 %v10788, %v8464
        %v10885 = vmul.f32 %v10789, %v8469
        %v10886 = vmul.f32 %v10790, %v8472
        %v10887 = vmul.f32 %v10791, %v8477
        %v10888 = vmul.f32 %v10792, %v8480
        %v10889 = vmul.f32 %v10793, %v8485
        %v10890 = vmul.f32 %v10794, %v8488
        %v10891 = vmul.f32 %v10795, %v8493
        %v10892 = vmul.f32 %v10796, %v8496
        %v10893 = vmul.f32 %v10797, %v8501
        %v10894 = vmul.f32 %v10798, %v8504
        %v10895 = vmul.f32 %v10799, %v8509
        %v10896 = vmul.f32 %v10800, %v8512
        %v10897 = vmul.f32 %v10801, %v8517
        %v10898 = vmul.f32 %v10802, %v8520
        %v10899 = vmul.f32 %v10803, %v8525
        %v10900 = vmul.f32 %v10804, %v8528
        %v10901 = vmul.f32 %v10805, %v8533
        %v10902 = vmul.f32 %v10806, %v8536
        %v10903 = vmul.f32 %v10807, %v8541
        %v10904 = vmul.f32 %v10808, %v8544
        %v10905 = vmul.f32 %v10809, %v8549
        %v10906 = vmul.f32 %v10810, %v8552
        %v10907 = vmul.f32 %v10811, %v8557
        %v10908 = vmul.f32 %v10812, %v8560
        %v10909 = vmul.f32 %v10813, %v8565
        %v10910 = vmul.f32 %v10814, %v8568
        %v10911 = vmul.f32 %v10815, %v8573
        %v10912 = vmul.f32 %v10816, %v8576
        %v10913 = vmul.f32 %v10817, %v8581
        %v10914 = vmul.f32 %v10818, %v8584
        %v10915 = vmul.f32 %v10819, %v8589
        %v10916 = vmul.f32 %v10820, %v8592
        %v10917 = vmul.f32 %v10821, %v8597
        %v10918 = vmul.f32 %v10822, %v8600
        %v10919 = vmul.f32 %v10823, %v8605
        %v10920 = vmul.f32 %v10824, %v8608
        %v10921 = vmul.f32 %v10825, %v8613
        %v10922 = vmul.f32 %v10826, %v8616
        %v10923 = vmul.f32 %v10827, %v8621
        %v10924 = vmul.f32 %v10828, %v8624
        %v10925 = vmul.f32 %v10829, %v8629
        %v10926 = vmul.f32 %v10830, %v8632
        %v10927 = vmul.f32 %v10831, %v8637
        %v10928 = vmul.f32 %v10832, %v8640
        %v10929 = vmul.f32 %v10833, %v8645
        %v10930 = vmul.f32 %v10834, %v8648
        %v10931 = vmul.f32 %v10835, %v8653
        %v10932 = vmul.f32 %v10836, %v8656
        %v10933 = vmul.f32 %v10837, %v8661
        %v10934 = vmul.f32 %v10838, %v8664
        %v10935 = vmul.f32 %v10839, %v8669
        %v10936 = vmul.f32 %v10840, %v8672
        %v10937 = vmul.f32 %v10841, %v8677
        %v10938 = vmul.f32 %v10842, %v8680
        %v10939 = vmul.f32 %v10843, %v8685
        %v10940 = vmul.f32 %v10844, %v8688
        %v10941 = vmul.f32 %v10845, %v8693
        %v10942 = vmul.f32 %v10846, %v8696
        %v10943 = vmul.f32 %v10847, %v8701
        %v10944 = vmul.f32 %v10848, %v8704
        %v10945 = vmul.f32 %v10849, %v8709
        %v10946 = vmul.f32 %v10850, %v8712
        %v10947 = vsel %vm2170, %v10851, 0.0
        %v10948 = vsel %vm2170, %v10852, 0.0
        %v10949 = vadd.f32 %v10947, %v10948
        %v10950 = vsel %vm2170, %v10853, 0.0
        %v10951 = vadd.f32 %v10949, %v10950
        %v10952 = vrot.slane %v10951, 4
        %v10953 = vadd.f32 %v10951, %v10952
        %v10954 = vrot.slane %v10953, 2
        %v10955 = vadd.f32 %v10953, %v10954
        %v10956 = vrot.slane %v10955, 1
        %v10957 = vadd.f32 %v10955, %v10956
        %v10958 = vsel %vm2170, %v10854, 0.0
        %v10959 = vsel %vm2170, %v10855, 0.0
        %v10960 = vadd.f32 %v10958, %v10959
        %v10961 = vsel %vm2170, %v10856, 0.0
        %v10962 = vadd.f32 %v10960, %v10961
        %v10963 = vrot.slane %v10962, 4
        %v10964 = vadd.f32 %v10962, %v10963
        %v10965 = vrot.slane %v10964, 2
        %v10966 = vadd.f32 %v10964, %v10965
        %v10967 = vrot.slane %v10966, 1
        %v10968 = vadd.f32 %v10966, %v10967
        %v10969 = vsel %vm2170, %v10857, 0.0
        %v10970 = vsel %vm2170, %v10858, 0.0
        %v10971 = vadd.f32 %v10969, %v10970
        %v10972 = vsel %vm2170, %v10859, 0.0
        %v10973 = vadd.f32 %v10971, %v10972
        %v10974 = vrot.slane %v10973, 4
        %v10975 = vadd.f32 %v10973, %v10974
        %v10976 = vrot.slane %v10975, 2
        %v10977 = vadd.f32 %v10975, %v10976
        %v10978 = vrot.slane %v10977, 1
        %v10979 = vadd.f32 %v10977, %v10978
        %v10980 = vsel %vm2170, %v10860, 0.0
        %v10981 = vsel %vm2170, %v10861, 0.0
        %v10982 = vadd.f32 %v10980, %v10981
        %v10983 = vsel %vm2170, %v10862, 0.0
        %v10984 = vadd.f32 %v10982, %v10983
        %v10985 = vrot.slane %v10984, 4
        %v10986 = vadd.f32 %v10984, %v10985
        %v10987 = vrot.slane %v10986, 2
        %v10988 = vadd.f32 %v10986, %v10987
        %v10989 = vrot.slane %v10988, 1
        %v10990 = vadd.f32 %v10988, %v10989
        %v10991 = vsel %vm2170, %v10863, 0.0
        %v10992 = vsel %vm2170, %v10864, 0.0
        %v10993 = vadd.f32 %v10991, %v10992
        %v10994 = vsel %vm2170, %v10865, 0.0
        %v10995 = vadd.f32 %v10993, %v10994
        %v10996 = vrot.slane %v10995, 4
        %v10997 = vadd.f32 %v10995, %v10996
        %v10998 = vrot.slane %v10997, 2
        %v10999 = vadd.f32 %v10997, %v10998
        %v11000 = vrot.slane %v10999, 1
        %v11001 = vadd.f32 %v10999, %v11000
        %v11002 = vsel %vm2170, %v10866, 0.0
        %v11003 = vsel %vm2170, %v10867, 0.0
        %v11004 = vadd.f32 %v11002, %v11003
        %v11005 = vsel %vm2170, %v10868, 0.0
        %v11006 = vadd.f32 %v11004, %v11005
        %v11007 = vrot.slane %v11006, 4
        %v11008 = vadd.f32 %v11006, %v11007
        %v11009 = vrot.slane %v11008, 2
        %v11010 = vadd.f32 %v11008, %v11009
        %v11011 = vrot.slane %v11010, 1
        %v11012 = vadd.f32 %v11010, %v11011
        %v11013 = vsel %vm2170, %v10869, 0.0
        %v11014 = vsel %vm2170, %v10870, 0.0
        %v11015 = vadd.f32 %v11013, %v11014
        %v11016 = vsel %vm2170, %v10871, 0.0
        %v11017 = vadd.f32 %v11015, %v11016
        %v11018 = vrot.slane %v11017, 4
        %v11019 = vadd.f32 %v11017, %v11018
        %v11020 = vrot.slane %v11019, 2
        %v11021 = vadd.f32 %v11019, %v11020
        %v11022 = vrot.slane %v11021, 1
        %v11023 = vadd.f32 %v11021, %v11022
        %v11024 = vsel %vm2170, %v10872, 0.0
        %v11025 = vsel %vm2170, %v10873, 0.0
        %v11026 = vadd.f32 %v11024, %v11025
        %v11027 = vsel %vm2170, %v10874, 0.0
        %v11028 = vadd.f32 %v11026, %v11027
        %v11029 = vrot.slane %v11028, 4
        %v11030 = vadd.f32 %v11028, %v11029
        %v11031 = vrot.slane %v11030, 2
        %v11032 = vadd.f32 %v11030, %v11031
        %v11033 = vrot.slane %v11032, 1
        %v11034 = vadd.f32 %v11032, %v11033
        %v11035 = vsel %vm2170, %v10875, 0.0
        %v11036 = vsel %vm2170, %v10876, 0.0
        %v11037 = vadd.f32 %v11035, %v11036
        %v11038 = vsel %vm2170, %v10877, 0.0
        %v11039 = vadd.f32 %v11037, %v11038
        %v11040 = vrot.slane %v11039, 4
        %v11041 = vadd.f32 %v11039, %v11040
        %v11042 = vrot.slane %v11041, 2
        %v11043 = vadd.f32 %v11041, %v11042
        %v11044 = vrot.slane %v11043, 1
        %v11045 = vadd.f32 %v11043, %v11044
        %v11046 = vsel %vm2170, %v10878, 0.0
        %v11047 = vsel %vm2170, %v10879, 0.0
        %v11048 = vadd.f32 %v11046, %v11047
        %v11049 = vsel %vm2170, %v10880, 0.0
        %v11050 = vadd.f32 %v11048, %v11049
        %v11051 = vrot.slane %v11050, 4
        %v11052 = vadd.f32 %v11050, %v11051
        %v11053 = vrot.slane %v11052, 2
        %v11054 = vadd.f32 %v11052, %v11053
        %v11055 = vrot.slane %v11054, 1
        %v11056 = vadd.f32 %v11054, %v11055
        %v11057 = vsel %vm2170, %v10881, 0.0
        %v11058 = vsel %vm2170, %v10882, 0.0
        %v11059 = vadd.f32 %v11057, %v11058
        %v11060 = vsel %vm2170, %v10883, 0.0
        %v11061 = vadd.f32 %v11059, %v11060
        %v11062 = vrot.slane %v11061, 4
        %v11063 = vadd.f32 %v11061, %v11062
        %v11064 = vrot.slane %v11063, 2
        %v11065 = vadd.f32 %v11063, %v11064
        %v11066 = vrot.slane %v11065, 1
        %v11067 = vadd.f32 %v11065, %v11066
        %v11068 = vsel %vm2170, %v10884, 0.0
        %v11069 = vsel %vm2170, %v10885, 0.0
        %v11070 = vadd.f32 %v11068, %v11069
        %v11071 = vsel %vm2170, %v10886, 0.0
        %v11072 = vadd.f32 %v11070, %v11071
        %v11073 = vrot.slane %v11072, 4
        %v11074 = vadd.f32 %v11072, %v11073
        %v11075 = vrot.slane %v11074, 2
        %v11076 = vadd.f32 %v11074, %v11075
        %v11077 = vrot.slane %v11076, 1
        %v11078 = vadd.f32 %v11076, %v11077
        %v11079 = vsel %vm2170, %v10887, 0.0
        %v11080 = vsel %vm2170, %v10888, 0.0
        %v11081 = vadd.f32 %v11079, %v11080
        %v11082 = vsel %vm2170, %v10889, 0.0
        %v11083 = vadd.f32 %v11081, %v11082
        %v11084 = vrot.slane %v11083, 4
        %v11085 = vadd.f32 %v11083, %v11084
        %v11086 = vrot.slane %v11085, 2
        %v11087 = vadd.f32 %v11085, %v11086
        %v11088 = vrot.slane %v11087, 1
        %v11089 = vadd.f32 %v11087, %v11088
        %v11090 = vsel %vm2170, %v10890, 0.0
        %v11091 = vsel %vm2170, %v10891, 0.0
        %v11092 = vadd.f32 %v11090, %v11091
        %v11093 = vsel %vm2170, %v10892, 0.0
        %v11094 = vadd.f32 %v11092, %v11093
        %v11095 = vrot.slane %v11094, 4
        %v11096 = vadd.f32 %v11094, %v11095
        %v11097 = vrot.slane %v11096, 2
        %v11098 = vadd.f32 %v11096, %v11097
        %v11099 = vrot.slane %v11098, 1
        %v11100 = vadd.f32 %v11098, %v11099
        %v11101 = vsel %vm2170, %v10893, 0.0
        %v11102 = vsel %vm2170, %v10894, 0.0
        %v11103 = vadd.f32 %v11101, %v11102
        %v11104 = vsel %vm2170, %v10895, 0.0
        %v11105 = vadd.f32 %v11103, %v11104
        %v11106 = vrot.slane %v11105, 4
        %v11107 = vadd.f32 %v11105, %v11106
        %v11108 = vrot.slane %v11107, 2
        %v11109 = vadd.f32 %v11107, %v11108
        %v11110 = vrot.slane %v11109, 1
        %v11111 = vadd.f32 %v11109, %v11110
        %v11112 = vsel %vm2170, %v10896, 0.0
        %v11113 = vsel %vm2170, %v10897, 0.0
        %v11114 = vadd.f32 %v11112, %v11113
        %v11115 = vsel %vm2170, %v10898, 0.0
        %v11116 = vadd.f32 %v11114, %v11115
        %v11117 = vrot.slane %v11116, 4
        %v11118 = vadd.f32 %v11116, %v11117
        %v11119 = vrot.slane %v11118, 2
        %v11120 = vadd.f32 %v11118, %v11119
        %v11121 = vrot.slane %v11120, 1
        %v11122 = vadd.f32 %v11120, %v11121
        %v11123 = vsel %vm2170, %v10899, 0.0
        %v11124 = vsel %vm2170, %v10900, 0.0
        %v11125 = vadd.f32 %v11123, %v11124
        %v11126 = vsel %vm2170, %v10901, 0.0
        %v11127 = vadd.f32 %v11125, %v11126
        %v11128 = vrot.slane %v11127, 4
        %v11129 = vadd.f32 %v11127, %v11128
        %v11130 = vrot.slane %v11129, 2
        %v11131 = vadd.f32 %v11129, %v11130
        %v11132 = vrot.slane %v11131, 1
        %v11133 = vadd.f32 %v11131, %v11132
        %v11134 = vsel %vm2170, %v10902, 0.0
        %v11135 = vsel %vm2170, %v10903, 0.0
        %v11136 = vadd.f32 %v11134, %v11135
        %v11137 = vsel %vm2170, %v10904, 0.0
        %v11138 = vadd.f32 %v11136, %v11137
        %v11139 = vrot.slane %v11138, 4
        %v11140 = vadd.f32 %v11138, %v11139
        %v11141 = vrot.slane %v11140, 2
        %v11142 = vadd.f32 %v11140, %v11141
        %v11143 = vrot.slane %v11142, 1
        %v11144 = vadd.f32 %v11142, %v11143
        %v11145 = vsel %vm2170, %v10905, 0.0
        %v11146 = vsel %vm2170, %v10906, 0.0
        %v11147 = vadd.f32 %v11145, %v11146
        %v11148 = vsel %vm2170, %v10907, 0.0
        %v11149 = vadd.f32 %v11147, %v11148
        %v11150 = vrot.slane %v11149, 4
        %v11151 = vadd.f32 %v11149, %v11150
        %v11152 = vrot.slane %v11151, 2
        %v11153 = vadd.f32 %v11151, %v11152
        %v11154 = vrot.slane %v11153, 1
        %v11155 = vadd.f32 %v11153, %v11154
        %v11156 = vsel %vm2170, %v10908, 0.0
        %v11157 = vsel %vm2170, %v10909, 0.0
        %v11158 = vadd.f32 %v11156, %v11157
        %v11159 = vsel %vm2170, %v10910, 0.0
        %v11160 = vadd.f32 %v11158, %v11159
        %v11161 = vrot.slane %v11160, 4
        %v11162 = vadd.f32 %v11160, %v11161
        %v11163 = vrot.slane %v11162, 2
        %v11164 = vadd.f32 %v11162, %v11163
        %v11165 = vrot.slane %v11164, 1
        %v11166 = vadd.f32 %v11164, %v11165
        %v11167 = vsel %vm2170, %v10911, 0.0
        %v11168 = vsel %vm2170, %v10912, 0.0
        %v11169 = vadd.f32 %v11167, %v11168
        %v11170 = vsel %vm2170, %v10913, 0.0
        %v11171 = vadd.f32 %v11169, %v11170
        %v11172 = vrot.slane %v11171, 4
        %v11173 = vadd.f32 %v11171, %v11172
        %v11174 = vrot.slane %v11173, 2
        %v11175 = vadd.f32 %v11173, %v11174
        %v11176 = vrot.slane %v11175, 1
        %v11177 = vadd.f32 %v11175, %v11176
        %v11178 = vsel %vm2170, %v10914, 0.0
        %v11179 = vsel %vm2170, %v10915, 0.0
        %v11180 = vadd.f32 %v11178, %v11179
        %v11181 = vsel %vm2170, %v10916, 0.0
        %v11182 = vadd.f32 %v11180, %v11181
        %v11183 = vrot.slane %v11182, 4
        %v11184 = vadd.f32 %v11182, %v11183
        %v11185 = vrot.slane %v11184, 2
        %v11186 = vadd.f32 %v11184, %v11185
        %v11187 = vrot.slane %v11186, 1
        %v11188 = vadd.f32 %v11186, %v11187
        %v11189 = vsel %vm2170, %v10917, 0.0
        %v11190 = vsel %vm2170, %v10918, 0.0
        %v11191 = vadd.f32 %v11189, %v11190
        %v11192 = vsel %vm2170, %v10919, 0.0
        %v11193 = vadd.f32 %v11191, %v11192
        %v11194 = vrot.slane %v11193, 4
        %v11195 = vadd.f32 %v11193, %v11194
        %v11196 = vrot.slane %v11195, 2
        %v11197 = vadd.f32 %v11195, %v11196
        %v11198 = vrot.slane %v11197, 1
        %v11199 = vadd.f32 %v11197, %v11198
        %v11200 = vsel %vm2170, %v10920, 0.0
        %v11201 = vsel %vm2170, %v10921, 0.0
        %v11202 = vadd.f32 %v11200, %v11201
        %v11203 = vsel %vm2170, %v10922, 0.0
        %v11204 = vadd.f32 %v11202, %v11203
        %v11205 = vrot.slane %v11204, 4
        %v11206 = vadd.f32 %v11204, %v11205
        %v11207 = vrot.slane %v11206, 2
        %v11208 = vadd.f32 %v11206, %v11207
        %v11209 = vrot.slane %v11208, 1
        %v11210 = vadd.f32 %v11208, %v11209
        %v11211 = vsel %vm2170, %v10923, 0.0
        %v11212 = vsel %vm2170, %v10924, 0.0
        %v11213 = vadd.f32 %v11211, %v11212
        %v11214 = vsel %vm2170, %v10925, 0.0
        %v11215 = vadd.f32 %v11213, %v11214
        %v11216 = vrot.slane %v11215, 4
        %v11217 = vadd.f32 %v11215, %v11216
        %v11218 = vrot.slane %v11217, 2
        %v11219 = vadd.f32 %v11217, %v11218
        %v11220 = vrot.slane %v11219, 1
        %v11221 = vadd.f32 %v11219, %v11220
        %v11222 = vsel %vm2170, %v10926, 0.0
        %v11223 = vsel %vm2170, %v10927, 0.0
        %v11224 = vadd.f32 %v11222, %v11223
        %v11225 = vsel %vm2170, %v10928, 0.0
        %v11226 = vadd.f32 %v11224, %v11225
        %v11227 = vrot.slane %v11226, 4
        %v11228 = vadd.f32 %v11226, %v11227
        %v11229 = vrot.slane %v11228, 2
        %v11230 = vadd.f32 %v11228, %v11229
        %v11231 = vrot.slane %v11230, 1
        %v11232 = vadd.f32 %v11230, %v11231
        %v11233 = vsel %vm2170, %v10929, 0.0
        %v11234 = vsel %vm2170, %v10930, 0.0
        %v11235 = vadd.f32 %v11233, %v11234
        %v11236 = vsel %vm2170, %v10931, 0.0
        %v11237 = vadd.f32 %v11235, %v11236
        %v11238 = vrot.slane %v11237, 4
        %v11239 = vadd.f32 %v11237, %v11238
        %v11240 = vrot.slane %v11239, 2
        %v11241 = vadd.f32 %v11239, %v11240
        %v11242 = vrot.slane %v11241, 1
        %v11243 = vadd.f32 %v11241, %v11242
        %v11244 = vsel %vm2170, %v10932, 0.0
        %v11245 = vsel %vm2170, %v10933, 0.0
        %v11246 = vadd.f32 %v11244, %v11245
        %v11247 = vsel %vm2170, %v10934, 0.0
        %v11248 = vadd.f32 %v11246, %v11247
        %v11249 = vrot.slane %v11248, 4
        %v11250 = vadd.f32 %v11248, %v11249
        %v11251 = vrot.slane %v11250, 2
        %v11252 = vadd.f32 %v11250, %v11251
        %v11253 = vrot.slane %v11252, 1
        %v11254 = vadd.f32 %v11252, %v11253
        %v11255 = vsel %vm2170, %v10935, 0.0
        %v11256 = vsel %vm2170, %v10936, 0.0
        %v11257 = vadd.f32 %v11255, %v11256
        %v11258 = vsel %vm2170, %v10937, 0.0
        %v11259 = vadd.f32 %v11257, %v11258
        %v11260 = vrot.slane %v11259, 4
        %v11261 = vadd.f32 %v11259, %v11260
        %v11262 = vrot.slane %v11261, 2
        %v11263 = vadd.f32 %v11261, %v11262
        %v11264 = vrot.slane %v11263, 1
        %v11265 = vadd.f32 %v11263, %v11264
        %v11266 = vsel %vm2170, %v10938, 0.0
        %v11267 = vsel %vm2170, %v10939, 0.0
        %v11268 = vadd.f32 %v11266, %v11267
        %v11269 = vsel %vm2170, %v10940, 0.0
        %v11270 = vadd.f32 %v11268, %v11269
        %v11271 = vrot.slane %v11270, 4
        %v11272 = vadd.f32 %v11270, %v11271
        %v11273 = vrot.slane %v11272, 2
        %v11274 = vadd.f32 %v11272, %v11273
        %v11275 = vrot.slane %v11274, 1
        %v11276 = vadd.f32 %v11274, %v11275
        %v11277 = vsel %vm2170, %v10941, 0.0
        %v11278 = vsel %vm2170, %v10942, 0.0
        %v11279 = vadd.f32 %v11277, %v11278
        %v11280 = vsel %vm2170, %v10943, 0.0
        %v11281 = vadd.f32 %v11279, %v11280
        %v11282 = vrot.slane %v11281, 4
        %v11283 = vadd.f32 %v11281, %v11282
        %v11284 = vrot.slane %v11283, 2
        %v11285 = vadd.f32 %v11283, %v11284
        %v11286 = vrot.slane %v11285, 1
        %v11287 = vadd.f32 %v11285, %v11286
        %v11288 = vsel %vm2170, %v10944, 0.0
        %v11289 = vsel %vm2170, %v10945, 0.0
        %v11290 = vadd.f32 %v11288, %v11289
        %v11291 = vsel %vm2170, %v10946, 0.0
        %v11292 = vadd.f32 %v11290, %v11291
        %v11293 = vrot.slane %v11292, 4
        %v11294 = vadd.f32 %v11292, %v11293
        %v11295 = vrot.slane %v11294, 2
        %v11296 = vadd.f32 %v11294, %v11295
        %v11297 = vrot.slane %v11296, 1
        %v11298 = vadd.f32 %v11296, %v11297
        %v11299 = vld [vmem:[%s321] sm:$0xf]
        %v11300 = vld [vmem:[%s321 + $0x4] sm:$0xf]
        %v11301 = vld [vmem:[%s321 + $0x8] sm:$0xf]
        %v11302 = vld [vmem:[%s321 + $0xc] sm:$0xf]
        %v11303 = vlaneseq
        %v11304 = vshrl.u32 %v11303, 7
        %v11305 = vsub.s32 0, %v11304
        %v11306 = vrot.slane %v366, %v11305
        %v11311 = vunpack.c.l.b16 %v11299
        %v11312 = vunpack.c.l.b16 %v11300
        %v11313 = vunpack.c.l.b16 %v11301
        %v11314 = vunpack.c.l.b16 %v11302
        %v11315 = vpack.c.b16 %v11312, %v11311
        %v11316 = vpack.c.b16 %v11314, %v11313
        %v11319 = vunpack.c.l.b16 %v348
        %v11320 = vunpack.c.l.b16 %v349
        %v11321 = vpack.c.b16 %v11320, %v11319
        %vm11323 = vcmask 130048
        %v11325 = vsel %vm11323, %v11315, 0
        %v11328 = vsel %vm11323, %v11316, 0
        %11330 = vmatprep.subr.bf16.mxu0 0
        %11331 = vmatpush1.bf16.msra.mxu0 0
        %11332 = vmatprep.subr.bf16.mxu0 0
        %11333 = vmatpush1.bf16.msra.mxu0 0
        %11334 = vmatprep.subr.bf16.mxu0 0
        %11335 = vmatpush1.bf16.msra.mxu0 0
        %11336 = vmatprep.subr.bf16.mxu0 0
        %11337 = vmatpush1.bf16.msra.mxu0 0
        %11338 = vmatprep.subr.bf16.mxu0 0
        %11339 = vmatpush1.bf16.msra.mxu0 0
        %11340 = vmatprep.subr.bf16.mxu0 0
        %11341 = vmatpush1.bf16.msra.mxu0 0
        %11342 = vmatprep.subr.bf16.mxu0 0
        %11343 = vmatpush1.bf16.msra.mxu0 0
        %11344 = vmatprep.subr.bf16.mxu0 0
        %11345 = vmatpush1.bf16.msra.mxu0 %v11321
        %11346 = vmatprep.subr.bf16.mxu0 0
        %11347 = vmatpush2.bf16.msra.mxu0 0
        %11348 = vmatprep.subr.bf16.mxu0 0
        %11349 = vmatpush2.bf16.msra.mxu0 0
        %11350 = vmatprep.subr.bf16.mxu0 0
        %11351 = vmatpush2.bf16.msra.mxu0 0
        %11352 = vmatprep.subr.bf16.mxu0 0
        %11353 = vmatpush2.bf16.msra.mxu0 0
        %11354 = vmatprep.subr.bf16.mxu0 0
        %11355 = vmatpush2.bf16.msra.mxu0 0
        %11356 = vmatprep.subr.bf16.mxu0 0
        %11357 = vmatpush2.bf16.msra.mxu0 0
        %11358 = vmatprep.subr.bf16.mxu0 0
        %11359 = vmatpush2.bf16.msra.mxu0 0
        %11360 = vmatprep.subr.bf16.mxu0 0
        %11361 = vmatpush2.bf16.msra.mxu0 0
        %11362 = vmatprep.mubr.bf16.mxu0 0
        %11363 = vmatmul.mubr.bf16.gmra.mxu0 %v11325
        %v11364 = vpop.f32.mrf.mxu0
        %v11365 = vadd.f32 %v11306, %v11364
        %v11366 = vpop.f32.mrf.mxu0
        %v11367 = vpop.f32.mrf.mxu0
        %v11368 = vadd.f32 %v11306, %v11367
        %v11369 = vpop.f32.mrf.mxu0
        %11370 = vmatprep.mubr.bf16.mxu0 0
        %11371 = vmatmul.mubr.bf16.gmra.mxu0 %v11328
        %v11372 = vpop.f32.mrf.mxu0
        %v11373 = vadd.f32 %v11306, %v11372
        %v11374 = vpop.f32.mrf.mxu0
        %v11375 = vpop.f32.mrf.mxu0
        %v11376 = vadd.f32 %v11306, %v11375
        %v11377 = vpop.f32.mrf.mxu0
        %11378 = vdwg.mxu0
        %v11379 = vmax.f32 %v11365, 0.0
        %v11380 = vmax.f32 %v11368, 0.0
        %v11381 = vmax.f32 %v11373, 0.0
        %v11382 = vmax.f32 %v11376, 0.0
        %v11383 = vlaneseq
        %v11384 = vshrl.u32 %v11383, 7
        %v11385 = vsub.s32 0, %v11384
        %v11386 = vrot.slane %v367, %v11385
        %11387 = vrot.lane.b32.xlu0 %v11315, 112
        %v11388 = vpop.permute.xlu0 %11387
        %11389 = vrot.lane.b32.xlu0 %v11316, 112
        %v11390 = vpop.permute.xlu0 %11389
        %v11393 = vunpack.c.l.b16 %v350
        %v11394 = vunpack.c.l.b16 %v351
        %v11395 = vpack.c.b16 %v11394, %v11393
        %v11398 = vsel %vm11323, %v11388, 0
        %v11401 = vsel %vm11323, %v11390, 0
        %11403 = vmatprep.subr.bf16.mxu0 0
        %11404 = vmatpush1.bf16.msra.mxu0 0
        %11405 = vmatprep.subr.bf16.mxu0 0
        %11406 = vmatpush1.bf16.msra.mxu0 0
        %11407 = vmatprep.subr.bf16.mxu0 0
        %11408 = vmatpush1.bf16.msra.mxu0 0
        %11409 = vmatprep.subr.bf16.mxu0 0
        %11410 = vmatpush1.bf16.msra.mxu0 0
        %11411 = vmatprep.subr.bf16.mxu0 0
        %11412 = vmatpush1.bf16.msra.mxu0 0
        %11413 = vmatprep.subr.bf16.mxu0 0
        %11414 = vmatpush1.bf16.msra.mxu0 0
        %11415 = vmatprep.subr.bf16.mxu0 0
        %11416 = vmatpush1.bf16.msra.mxu0 0
        %11417 = vmatprep.subr.bf16.mxu0 0
        %11418 = vmatpush1.bf16.msra.mxu0 %v11395
        %11419 = vmatprep.subr.bf16.mxu0 0
        %11420 = vmatpush2.bf16.msra.mxu0 0
        %11421 = vmatprep.subr.bf16.mxu0 0
        %11422 = vmatpush2.bf16.msra.mxu0 0
        %11423 = vmatprep.subr.bf16.mxu0 0
        %11424 = vmatpush2.bf16.msra.mxu0 0
        %11425 = vmatprep.subr.bf16.mxu0 0
        %11426 = vmatpush2.bf16.msra.mxu0 0
        %11427 = vmatprep.subr.bf16.mxu0 0
        %11428 = vmatpush2.bf16.msra.mxu0 0
        %11429 = vmatprep.subr.bf16.mxu0 0
        %11430 = vmatpush2.bf16.msra.mxu0 0
        %11431 = vmatprep.subr.bf16.mxu0 0
        %11432 = vmatpush2.bf16.msra.mxu0 0
        %11433 = vmatprep.subr.bf16.mxu0 0
        %11434 = vmatpush2.bf16.msra.mxu0 0
        %11435 = vmatprep.mubr.bf16.mxu0 0
        %11436 = vmatmul.mubr.bf16.gmra.mxu0 %v11398
        %v11437 = vpop.f32.mrf.mxu0
        %v11438 = vadd.f32 %v11386, %v11437
        %v11439 = vpop.f32.mrf.mxu0
        %v11440 = vpop.f32.mrf.mxu0
        %v11441 = vadd.f32 %v11386, %v11440
        %v11442 = vpop.f32.mrf.mxu0
        %11443 = vmatprep.mubr.bf16.mxu0 0
        %11444 = vmatmul.mubr.bf16.gmra.mxu0 %v11401
        %v11445 = vpop.f32.mrf.mxu0
        %v11446 = vadd.f32 %v11386, %v11445
        %v11447 = vpop.f32.mrf.mxu0
        %v11448 = vpop.f32.mrf.mxu0
        %v11449 = vadd.f32 %v11386, %v11448
        %v11450 = vpop.f32.mrf.mxu0
        %11451 = vdwg.mxu0
        %v11452 = vmax.f32 %v11438, 0.0
        %v11453 = vmax.f32 %v11441, 0.0
        %v11454 = vmax.f32 %v11446, 0.0
        %v11455 = vmax.f32 %v11449, 0.0
        %vm11488 = vcmask 1041409
        %v11489 = vsel %vm11488, %v6139, %v6126
        %vm11490 = vcmask 1042434
        %v11491 = vsel %vm11490, %v6152, %v11489
        %vm11492 = vcmask 1043459
        %v11493 = vsel %vm11492, %v6165, %v11491
        %vm11494 = vcmask 1044484
        %v11495 = vsel %vm11494, %v6178, %v11493
        %vm11496 = vcmask 1045509
        %v11497 = vsel %vm11496, %v6191, %v11495
        %vm11498 = vcmask 1046534
        %v11499 = vsel %vm11498, %v6204, %v11497
        %vm11500 = vcmask 1047559
        %v11501 = vsel %vm11500, %v6217, %v11499
        %v11502 = vsel %vm11488, %v6243, %v6230
        %v11503 = vsel %vm11490, %v6256, %v11502
        %v11504 = vsel %vm11492, %v6269, %v11503
        %v11505 = vsel %vm11494, %v6282, %v11504
        %v11506 = vsel %vm11496, %v6295, %v11505
        %v11507 = vsel %vm11498, %v6308, %v11506
        %v11508 = vsel %vm11500, %v6321, %v11507
        %v11509 = vsel %vm11488, %v6347, %v6334
        %v11510 = vsel %vm11490, %v6360, %v11509
        %v11511 = vsel %vm11492, %v6373, %v11510
        %v11512 = vsel %vm11494, %v6386, %v11511
        %v11513 = vsel %vm11496, %v6399, %v11512
        %v11514 = vsel %vm11498, %v6412, %v11513
        %v11515 = vsel %vm11500, %v6425, %v11514
        %v11516 = vsel %vm11488, %v6451, %v6438
        %v11517 = vsel %vm11490, %v6464, %v11516
        %v11518 = vsel %vm11492, %v6477, %v11517
        %v11519 = vsel %vm11494, %v6490, %v11518
        %v11520 = vsel %vm11496, %v6503, %v11519
        %v11521 = vsel %vm11498, %v6516, %v11520
        %v11522 = vsel %vm11500, %v6529, %v11521
        %v11559 = vsel %vm11488, %v10968, %v10957
        %v11560 = vsel %vm11490, %v10979, %v11559
        %v11561 = vsel %vm11492, %v10990, %v11560
        %v11562 = vsel %vm11494, %v11001, %v11561
        %v11563 = vsel %vm11496, %v11012, %v11562
        %v11564 = vsel %vm11498, %v11023, %v11563
        %v11565 = vsel %vm11500, %v11034, %v11564
        %v11566 = vsel %vm11488, %v11056, %v11045
        %v11567 = vsel %vm11490, %v11067, %v11566
        %v11568 = vsel %vm11492, %v11078, %v11567
        %v11569 = vsel %vm11494, %v11089, %v11568
        %v11570 = vsel %vm11496, %v11100, %v11569
        %v11571 = vsel %vm11498, %v11111, %v11570
        %v11572 = vsel %vm11500, %v11122, %v11571
        %v11573 = vsel %vm11488, %v11144, %v11133
        %v11574 = vsel %vm11490, %v11155, %v11573
        %v11575 = vsel %vm11492, %v11166, %v11574
        %v11576 = vsel %vm11494, %v11177, %v11575
        %v11577 = vsel %vm11496, %v11188, %v11576
        %v11578 = vsel %vm11498, %v11199, %v11577
        %v11579 = vsel %vm11500, %v11210, %v11578
        %v11580 = vsel %vm11488, %v11232, %v11221
        %v11581 = vsel %vm11490, %v11243, %v11580
        %v11582 = vsel %vm11492, %v11254, %v11581
        %v11583 = vsel %vm11494, %v11265, %v11582
        %v11584 = vsel %vm11496, %v11276, %v11583
        %v11585 = vsel %vm11498, %v11287, %v11584
        %v11586 = vsel %vm11500, %v11298, %v11585
        %v11591 = vpack.c.bf16 %v11508, %v11501
        %v11592 = vpack.c.bf16 %v11522, %v11515
        %v11593 = vpack.c.bf16 %v11572, %v11565
        %v11594 = vpack.c.bf16 %v11586, %v11579
        %v11595 = vpack.c.bf16 %v11380, %v11379
        %v11596 = vpack.c.bf16 %v11382, %v11381
        %v11597 = vpack.c.bf16 %v11453, %v11452
        %v11598 = vpack.c.bf16 %v11455, %v11454
        %v11599 = vlaneseq
        %v11600 = vshrl.u32 %v11599, 7
        %v11601 = vsub.s32 0, %v11600
        %v11602 = vrot.slane %v372, %v11601
        %v11607 = vunpack.c.l.b16 %v360
        %v11608 = vunpack.c.l.b16 %v361
        %v11609 = vunpack.c.l.b16 %v362
        %v11610 = vunpack.c.l.b16 %v363
        %v11611 = vpack.c.b16 %v11608, %v11607
        %v11612 = vpack.c.b16 %v11610, %v11609
        %v11616 = vsel %vm2170, %v11591, 0
        %v11619 = vsel %vm2170, %v11592, 0
        %v11622 = vsel %vm2170, %v11593, 0
        %v11625 = vsel %vm2170, %v11594, 0
        %v11628 = vsel %vm2170, %v11595, 0
        %v11631 = vsel %vm2170, %v11596, 0
        %v11634 = vsel %vm2170, %v11597, 0
        %v11637 = vsel %vm2170, %v11598, 0
        %11639 = vmatprep.subr.bf16.mxu0 0
        %11640 = vmatpush1.bf16.msra.mxu0 0
        %11641 = vmatprep.subr.bf16.mxu0 0
        %11642 = vmatpush1.bf16.msra.mxu0 0
        %11643 = vmatprep.subr.bf16.mxu0 0
        %11644 = vmatpush1.bf16.msra.mxu0 0
        %11645 = vmatprep.subr.bf16.mxu0 0
        %11646 = vmatpush1.bf16.msra.mxu0 0
        %11647 = vmatprep.subr.bf16.mxu0 0
        %11648 = vmatpush1.bf16.msra.mxu0 0
        %11649 = vmatprep.subr.bf16.mxu0 0
        %11650 = vmatpush1.bf16.msra.mxu0 0
        %11651 = vmatprep.subr.bf16.mxu0 0
        %11652 = vmatpush1.bf16.msra.mxu0 %v11612
        %11653 = vmatprep.subr.bf16.mxu0 0
        %11654 = vmatpush1.bf16.msra.mxu0 %v11611
        %11655 = vmatprep.subr.bf16.mxu0 0
        %11656 = vmatpush2.bf16.msra.mxu0 0
        %11657 = vmatprep.subr.bf16.mxu0 0
        %11658 = vmatpush2.bf16.msra.mxu0 0
        %11659 = vmatprep.subr.bf16.mxu0 0
        %11660 = vmatpush2.bf16.msra.mxu0 0
        %11661 = vmatprep.subr.bf16.mxu0 0
        %11662 = vmatpush2.bf16.msra.mxu0 0
        %11663 = vmatprep.subr.bf16.mxu0 0
        %11664 = vmatpush2.bf16.msra.mxu0 0
        %11665 = vmatprep.subr.bf16.mxu0 0
        %11666 = vmatpush2.bf16.msra.mxu0 0
        %11667 = vmatprep.subr.bf16.mxu0 0
        %11668 = vmatpush2.bf16.msra.mxu0 0
        %11669 = vmatprep.subr.bf16.mxu0 0
        %11670 = vmatpush2.bf16.msra.mxu0 0
        %11671 = vmatprep.mubr.bf16.mxu0 0
        %11672 = vmatmul.mubr.bf16.gmra.mxu0 %v11616
        %v11673 = vpop.f32.mrf.mxu0
        %v11674 = vadd.f32 %v11602, %v11673
        %v11675 = vpop.f32.mrf.mxu0
        %v11676 = vpop.f32.mrf.mxu0
        %v11677 = vadd.f32 %v11602, %v11676
        %v11678 = vpop.f32.mrf.mxu0
        %11679 = vmatprep.mubr.bf16.mxu0 0
        %11680 = vmatmul.mubr.bf16.gmra.mxu0 %v11619
        %v11681 = vpop.f32.mrf.mxu0
        %v11682 = vadd.f32 %v11602, %v11681
        %v11683 = vpop.f32.mrf.mxu0
        %v11684 = vpop.f32.mrf.mxu0
        %v11685 = vadd.f32 %v11602, %v11684
        %v11686 = vpop.f32.mrf.mxu0
        %11687 = vmatprep.mubr.bf16.mxu0 0
        %11688 = vmatmul.mubr.bf16.gmra.mxu0 %v11622
        %v11689 = vpop.f32.mrf.mxu0
        %v11690 = vadd.f32 %v11602, %v11689
        %v11691 = vpop.f32.mrf.mxu0
        %v11692 = vpop.f32.mrf.mxu0
        %v11693 = vadd.f32 %v11602, %v11692
        %v11694 = vpop.f32.mrf.mxu0
        %11695 = vmatprep.mubr.bf16.mxu0 0
        %11696 = vmatmul.mubr.bf16.gmra.mxu0 %v11625
        %v11697 = vpop.f32.mrf.mxu0
        %v11698 = vadd.f32 %v11602, %v11697
        %v11699 = vpop.f32.mrf.mxu0
        %v11700 = vpop.f32.mrf.mxu0
        %v11701 = vadd.f32 %v11602, %v11700
        %v11702 = vpop.f32.mrf.mxu0
        %11703 = vmatprep.mubr.bf16.mxu0 0
        %11704 = vmatmul.mubr.bf16.gmra.mxu0 %v11628
        %v11705 = vpop.f32.mrf.mxu0
        %v11706 = vadd.f32 %v11602, %v11705
        %v11707 = vpop.f32.mrf.mxu0
        %v11708 = vpop.f32.mrf.mxu0
        %v11709 = vadd.f32 %v11602, %v11708
        %v11710 = vpop.f32.mrf.mxu0
        %11711 = vmatprep.mubr.bf16.mxu0 0
        %11712 = vmatmul.mubr.bf16.gmra.mxu0 %v11631
        %v11713 = vpop.f32.mrf.mxu0
        %v11714 = vadd.f32 %v11602, %v11713
        %v11715 = vpop.f32.mrf.mxu0
        %v11716 = vpop.f32.mrf.mxu0
        %v11717 = vadd.f32 %v11602, %v11716
        %v11718 = vpop.f32.mrf.mxu0
        %11719 = vmatprep.mubr.bf16.mxu0 0
        %11720 = vmatmul.mubr.bf16.gmra.mxu0 %v11634
        %v11721 = vpop.f32.mrf.mxu0
        %v11722 = vadd.f32 %v11602, %v11721
        %v11723 = vpop.f32.mrf.mxu0
        %v11724 = vpop.f32.mrf.mxu0
        %v11725 = vadd.f32 %v11602, %v11724
        %v11726 = vpop.f32.mrf.mxu0
        %11727 = vmatprep.mubr.bf16.mxu0 0
        %11728 = vmatmul.mubr.bf16.gmra.mxu0 %v11637
        %v11729 = vpop.f32.mrf.mxu0
        %v11730 = vadd.f32 %v11602, %v11729
        %v11731 = vpop.f32.mrf.mxu0
        %v11732 = vpop.f32.mrf.mxu0
        %v11733 = vadd.f32 %v11602, %v11732
        %v11734 = vpop.f32.mrf.mxu0
        %11735 = vdwg.mxu0
        %v11736 = vtanh.pop %v11674
        %v11737 = vtanh.pop %v11677
        %v11738 = vtanh.pop %v11682
        %v11739 = vtanh.pop %v11685
        %v11740 = vtanh.pop %v11690
        %v11741 = vtanh.pop %v11693
        %v11742 = vtanh.pop %v11698
        %v11743 = vtanh.pop %v11701
        %v11744 = vtanh.pop %v11706
        %v11745 = vtanh.pop %v11709
        %v11746 = vtanh.pop %v11714
        %v11747 = vtanh.pop %v11717
        %v11748 = vtanh.pop %v11722
        %v11749 = vtanh.pop %v11725
        %v11750 = vtanh.pop %v11730
        %v11751 = vtanh.pop %v11733
        %v11752 = vlaneseq
        %v11753 = vshrl.u32 %v11752, 7
        %v11754 = vsub.s32 0, %v11753
        %v11755 = vrot.slane %v373, %v11754
        %v11756 = vmul.f32 %v11736, %v11755
        %v11757 = vmul.f32 %v11737, %v11755
        %v11758 = vmul.f32 %v11738, %v11755
        %v11759 = vmul.f32 %v11739, %v11755
        %v11760 = vmul.f32 %v11740, %v11755
        %v11761 = vmul.f32 %v11741, %v11755
        %v11762 = vmul.f32 %v11742, %v11755
        %v11763 = vmul.f32 %v11743, %v11755
        %v11764 = vmul.f32 %v11744, %v11755
        %v11765 = vmul.f32 %v11745, %v11755
        %v11766 = vmul.f32 %v11746, %v11755
        %v11767 = vmul.f32 %v11747, %v11755
        %v11768 = vmul.f32 %v11748, %v11755
        %v11769 = vmul.f32 %v11749, %v11755
        %v11770 = vmul.f32 %v11750, %v11755
        %v11771 = vmul.f32 %v11751, %v11755
        %v11772 = vsel %vm2170, %v11756, 0.0
        %11773 = vadd.xlane.f32.xlu0 %v11772
        %v11774 = vpop.xlane.xlu0 %11773
        %v11775 = vsel %vm2170, %v11757, 0.0
        %11776 = vadd.xlane.f32.xlu0 %v11775
        %v11777 = vpop.xlane.xlu0 %11776
        %v11778 = vsel %vm2170, %v11758, 0.0
        %11779 = vadd.xlane.f32.xlu0 %v11778
        %v11780 = vpop.xlane.xlu0 %11779
        %v11781 = vsel %vm2170, %v11759, 0.0
        %11782 = vadd.xlane.f32.xlu0 %v11781
        %v11783 = vpop.xlane.xlu0 %11782
        %v11784 = vsel %vm2170, %v11760, 0.0
        %11785 = vadd.xlane.f32.xlu0 %v11784
        %v11786 = vpop.xlane.xlu0 %11785
        %v11787 = vsel %vm2170, %v11761, 0.0
        %11788 = vadd.xlane.f32.xlu0 %v11787
        %v11789 = vpop.xlane.xlu0 %11788
        %v11790 = vsel %vm2170, %v11762, 0.0
        %11791 = vadd.xlane.f32.xlu0 %v11790
        %v11792 = vpop.xlane.xlu0 %11791
        %v11793 = vsel %vm2170, %v11763, 0.0
        %11794 = vadd.xlane.f32.xlu0 %v11793
        %v11795 = vpop.xlane.xlu0 %11794
        %v11796 = vsel %vm2170, %v11764, 0.0
        %11797 = vadd.xlane.f32.xlu0 %v11796
        %v11798 = vpop.xlane.xlu0 %11797
        %v11799 = vsel %vm2170, %v11765, 0.0
        %11800 = vadd.xlane.f32.xlu0 %v11799
        %v11801 = vpop.xlane.xlu0 %11800
        %v11802 = vsel %vm2170, %v11766, 0.0
        %11803 = vadd.xlane.f32.xlu0 %v11802
        %v11804 = vpop.xlane.xlu0 %11803
        %v11805 = vsel %vm2170, %v11767, 0.0
        %11806 = vadd.xlane.f32.xlu0 %v11805
        %v11807 = vpop.xlane.xlu0 %11806
        %v11808 = vsel %vm2170, %v11768, 0.0
        %11809 = vadd.xlane.f32.xlu0 %v11808
        %v11810 = vpop.xlane.xlu0 %11809
        %v11811 = vsel %vm2170, %v11769, 0.0
        %11812 = vadd.xlane.f32.xlu0 %v11811
        %v11813 = vpop.xlane.xlu0 %11812
        %v11814 = vsel %vm2170, %v11770, 0.0
        %11815 = vadd.xlane.f32.xlu0 %v11814
        %v11816 = vpop.xlane.xlu0 %11815
        %v11817 = vsel %vm2170, %v11771, 0.0
        %11818 = vadd.xlane.f32.xlu0 %v11817
        %v11819 = vpop.xlane.xlu0 %11818
        %v11820 = vmax.f32 %v11774, %v11786
        %v11821 = vmax.f32 %v11777, %v11789
        %v11822 = vmax.f32 %v11780, %v11792
        %v11823 = vmax.f32 %v11783, %v11795
        %v11824 = vmax.f32 %v11798, %v11810
        %v11825 = vmax.f32 %v11801, %v11813
        %v11826 = vmax.f32 %v11804, %v11816
        %v11827 = vmax.f32 %v11807, %v11819
        %v11828 = vmax.f32 %v11820, %v11824
        %v11829 = vmax.f32 %v11821, %v11825
        %v11830 = vmax.f32 %v11822, %v11826
        %v11831 = vmax.f32 %v11823, %v11827
        %v11832 = vsub.f32 %v11774, %v11828
        %v11833 = vsub.f32 %v11777, %v11829
        %v11834 = vsub.f32 %v11780, %v11830
        %v11835 = vsub.f32 %v11783, %v11831
        %v11836 = vmul.f32 %v11832, 1.442695
        %v11837 = vpow.pop %v11836
        %v11838 = vmul.f32 %v11833, 1.442695
        %v11839 = vpow.pop %v11838
        %v11840 = vmul.f32 %v11834, 1.442695
        %v11841 = vpow.pop %v11840
        %v11842 = vmul.f32 %v11835, 1.442695
        %v11843 = vpow.pop %v11842
        %v11844 = vsub.f32 %v11786, %v11828
        %v11845 = vsub.f32 %v11789, %v11829
        %v11846 = vsub.f32 %v11792, %v11830
        %v11847 = vsub.f32 %v11795, %v11831
        %v11848 = vmul.f32 %v11844, 1.442695
        %v11849 = vpow.pop %v11848
        %v11850 = vmul.f32 %v11845, 1.442695
        %v11851 = vpow.pop %v11850
        %v11852 = vmul.f32 %v11846, 1.442695
        %v11853 = vpow.pop %v11852
        %v11854 = vmul.f32 %v11847, 1.442695
        %v11855 = vpow.pop %v11854
        %v11856 = vsub.f32 %v11798, %v11828
        %v11857 = vsub.f32 %v11801, %v11829
        %v11858 = vsub.f32 %v11804, %v11830
        %v11859 = vsub.f32 %v11807, %v11831
        %v11860 = vmul.f32 %v11856, 1.442695
        %v11861 = vpow.pop %v11860
        %v11862 = vmul.f32 %v11857, 1.442695
        %v11863 = vpow.pop %v11862
        %v11864 = vmul.f32 %v11858, 1.442695
        %v11865 = vpow.pop %v11864
        %v11866 = vmul.f32 %v11859, 1.442695
        %v11867 = vpow.pop %v11866
        %v11868 = vsub.f32 %v11810, %v11828
        %v11869 = vsub.f32 %v11813, %v11829
        %v11870 = vsub.f32 %v11816, %v11830
        %v11871 = vsub.f32 %v11819, %v11831
        %v11872 = vmul.f32 %v11868, 1.442695
        %v11873 = vpow.pop %v11872
        %v11874 = vmul.f32 %v11869, 1.442695
        %v11875 = vpow.pop %v11874
        %v11876 = vmul.f32 %v11870, 1.442695
        %v11877 = vpow.pop %v11876
        %v11878 = vmul.f32 %v11871, 1.442695
        %v11879 = vpow.pop %v11878
        %v11880 = vmul.f32 %v11837, %v11501
        %v11881 = vmul.f32 %v11839, %v11508
        %v11882 = vmul.f32 %v11841, %v11515
        %v11883 = vmul.f32 %v11843, %v11522
        %v11884 = vmul.f32 %v11849, %v11565
        %v11885 = vmul.f32 %v11851, %v11572
        %v11886 = vmul.f32 %v11853, %v11579
        %v11887 = vmul.f32 %v11855, %v11586
        %v11888 = vadd.f32 %v11880, %v11884
        %v11889 = vadd.f32 %v11881, %v11885
        %v11890 = vadd.f32 %v11882, %v11886
        %v11891 = vadd.f32 %v11883, %v11887
        %v11892 = vmul.f32 %v11861, %v11379
        %v11893 = vmul.f32 %v11863, %v11380
        %v11894 = vmul.f32 %v11865, %v11381
        %v11895 = vmul.f32 %v11867, %v11382
        %v11896 = vadd.f32 %v11888, %v11892
        %v11897 = vadd.f32 %v11889, %v11893
        %v11898 = vadd.f32 %v11890, %v11894
        %v11899 = vadd.f32 %v11891, %v11895
        %v11900 = vmul.f32 %v11873, %v11452
        %v11901 = vmul.f32 %v11875, %v11453
        %v11902 = vmul.f32 %v11877, %v11454
        %v11903 = vmul.f32 %v11879, %v11455
        %v11904 = vadd.f32 %v11896, %v11900
        %v11905 = vadd.f32 %v11897, %v11901
        %v11906 = vadd.f32 %v11898, %v11902
        %v11907 = vadd.f32 %v11899, %v11903
        %v11908 = vadd.f32 %v11837, %v11849
        %v11909 = vadd.f32 %v11839, %v11851
        %v11910 = vadd.f32 %v11841, %v11853
        %v11911 = vadd.f32 %v11843, %v11855
        %v11912 = vadd.f32 %v11908, %v11861
        %v11913 = vadd.f32 %v11909, %v11863
        %v11914 = vadd.f32 %v11910, %v11865
        %v11915 = vadd.f32 %v11911, %v11867
        %v11916 = vadd.f32 %v11912, %v11873
        %v11917 = vadd.f32 %v11913, %v11875
        %v11918 = vadd.f32 %v11914, %v11877
        %v11919 = vadd.f32 %v11915, %v11879
        %v11920 = vrcp.pop %v11916
        %v11921 = vmul.f32 %v11904, %v11920
        %v11922 = vrcp.pop %v11917
        %v11923 = vmul.f32 %v11905, %v11922
        %v11924 = vrcp.pop %v11918
        %v11925 = vmul.f32 %v11906, %v11924
        %v11926 = vrcp.pop %v11919
        %v11927 = vmul.f32 %v11907, %v11926
        %11929 = vrot.lane.b32.xlu0 %v11923, 32
        %v11930 = vpop.permute.xlu0 %11929
        %11933 = vrot.lane.b32.xlu0 %v11925, 64
        %v11934 = vpop.permute.xlu0 %11933
        %11937 = vrot.lane.b32.xlu0 %v11927, 96
        %v11938 = vpop.permute.xlu0 %11937
        %v11940 = vsel %vm2170, %v11921, %v11930
        %v11941 = vsel %vm2299, %v11940, %v11934
        %v11942 = vsel %vm2532, %v11941, %v11938
        %11943 = vst [vmem:[%s304] sm:$0xff] %v11942
        %s11944 = sand.u32 %s191, 1
        %s11945 = scalar_lea.sflag [#allocation3], %s11944
        %s11946 = sand.u32 %s191, 1
        %s11947 = smul.addr %s11946, 8
        %s11948 = scalar_lea.vmem [#allocation2], %s11947
        // Predicated region
        $region49: #{tpu_custom_call.1} parent=47 // pred_check
          %p11949 = pneg %p201
        $region50: #{tpu_custom_call.1} parent=47 // pred_check_branch
          %11951 = sbr.rel (%p11949) target = $region52
        $region51: #{tpu_custom_call.1} parent=47 // pred_region
          %s11953 = ssub.s32 128, 128
          %11954 = vsyncadd %s11945, %s11953
          %s11955 = smul.addr %s21, 128
          %s11956 = scalar_lea.hbm %s7, %s11955
          %s11958 = sshll.u32 %s11948, 4
          %s11959 = int_to_ptr.vmem [resolvable:$true] %s11958
          %11961 = dma.vmem_to_hbm [thread:$0]  %s11959, 128, %s11956, %s11945
        $region52: #{tpu_custom_call.1} parent=47 // pred_fallthru
          _
      $region48: #{tpu_custom_call.1} parent=5 // pred_fallthru
        _
      %p11962 = scmp.le.s32.totalorder 2, %s16
      // Predicated region
      $region53: #{tpu_custom_call.1} parent=5 // pred_check
        %p11963 = pneg %p11962
      $region54: #{tpu_custom_call.1} parent=5 // pred_check_branch
        %11965 = sbr.rel (%p11963) target = $region56
      $region55: #{tpu_custom_call.1} parent=5 // pred_region
        %s11966 = ssub.s32 %s16, 2
        // Predicated region
        $region57: #{tpu_custom_call.1} parent=55 // pred_check
          %p11967 = pneg %p207
        $region58: #{tpu_custom_call.1} parent=55 // pred_check_branch
          %11969 = sbr.rel (%p11967) target = $region60
        $region59: #{tpu_custom_call.1} parent=55 // pred_region
          %s11970 = sand.u32 %s192, 1
          %s11971 = scalar_lea.sflag [#allocation3], %s11970
          %s11972 = sand.u32 %s192, 1
          %s11973 = smul.addr %s11972, 8
          %s11974 = scalar_lea.vmem [#allocation2], %s11973
          %11975 = dma.done %s11971, 128
        $region60: #{tpu_custom_call.1} parent=55 // pred_fallthru
          _
      $region56: #{tpu_custom_call.1} parent=5 // pred_fallthru
        _
    $region6: #{tpu_custom_call.1} parent=1 // loop_footer
      %s20 = sadd.s32 1, %s16
    $region7: #{tpu_custom_call.1} parent=1 // loop_footer_branch
      %15 = sbr.rel target = $region3
    $region8: #{tpu_custom_call.1} parent=1 // loop_exit
      _
    %11976 = vsyncpa [#allocation3], 1
    %s11977 = scalar_lea.sflag [#allocation3], 1
    %11978 = vsyncpa %s11977, 1

</llo_original>
